<compile_context>
chip_gen: v6e
topology: v6e:2x2x1
jax: 0.10.0
libtpu: 0.0.40
codegen_flags: <defaults>
</compile_context>

<pallas_src>
import functools
import math

import jax
import jax.numpy as jnp
import numpy as np
from jax.experimental import pallas as pl
from jax.experimental.pallas import tpu as pltpu


def _ddit_block_kernel(x_ref, ada_ref, cos_ref, sin_ref,
                       ln1_ref, wqkvT_ref, waT_ref,
                       ln2_ref, w1T_ref, b1_ref, w2T_ref, b2_ref,
                       out_ref, *, n_heads, block_b):
    f32 = jnp.float32
    bf16 = jnp.bfloat16

    _, S, D = x_ref.shape
    hd = D // n_heads
    half = hd // 2

    ln1_w = ln1_ref[...]                       # [1, D]
    ln2_w = ln2_ref[...]                       # [1, D]
    cos_m = cos_ref[...]                       # [block_b*S, hd]
    sin_m = sin_ref[...]                       # [block_b*S, hd], sign folded

    def ln_modulate(v, w, shift, scale):
        # F.layer_norm(v, [D]) (no affine) * w, then modulate(v, shift, scale)
        mu = jnp.mean(v, axis=-1, keepdims=True)
        var = jnp.mean(jnp.square(v - mu), axis=-1, keepdims=True)
        vn = (v - mu) * jax.lax.rsqrt(var + 1e-5) * w
        return vn * (1.0 + scale) + shift

    # ------------------------- attention branch -------------------------
    # layernorm + modulate per batch element (row-wise), then fold the batch
    # block into the matmul M dimension.
    xm_rows = []
    for b in range(block_b):                   # static, tiny loop
        ada_b = ada_ref[b]                     # [6, D]
        xm_rows.append(ln_modulate(x_ref[b], ln1_w,
                                   ada_b[0:1, :], ada_b[1:2, :]))
    xm = jnp.concatenate(xm_rows, axis=0).astype(bf16)          # [M, D] bf16

    # fused QKV projection: one bf16 MXU matmul with M = block_b * S rows.
    qkv = jnp.dot(xm, wqkvT_ref[...], preferred_element_type=f32)  # [M, 3D]
    q_f = qkv[:, :D]
    k_f = qkv[:, D:2 * D]
    v = qkv[:, 2 * D:].astype(bf16)            # v only ever consumed as bf16

    def apply_rotary(t):                       # f32 [M, D] -> bf16 [M, D]
        # rotate_half(t) == roll(t, hd/2) * sign; sign already folded in sin_m.
        parts = []
        for h in range(n_heads):
            th = t[:, h * hd:(h + 1) * hd]     # 128-lane aligned head block
            parts.append(th * cos_m + pltpu.roll(th, half, axis=1) * sin_m)
        return jnp.concatenate(parts, axis=-1).astype(bf16)

    q = apply_rotary(q_f)                      # bf16, f32 copies die here
    k = apply_rotary(k_f)

    inv_scale = 1.0 / math.sqrt(hd)
    x1_rows = []
    for b in range(block_b):
        r0 = b * S
        attn_b = jnp.zeros((S, D), f32)
        for h in range(n_heads):               # static, small loop
            lo = h * hd                        # 128-lane aligned slices
            qh = q[r0:r0 + S, lo:lo + hd]
            kh = k[r0:r0 + S, lo:lo + hd]
            vh = v[r0:r0 + S, lo:lo + hd]
            s = jax.lax.dot_general(qh, kh, (((1,), (1,)), ((), ())),
                                    preferred_element_type=f32) * inv_scale
            m = jnp.max(s, axis=-1, keepdims=True)
            e = jnp.exp(s - m)
            p = (e * pl.reciprocal(jnp.sum(e, axis=-1, keepdims=True),
                                   approx=True)).astype(bf16)
            ah = jnp.dot(p, vh, preferred_element_type=f32).astype(bf16)
            # accumulate this head's share of (attn @ W_attn^T); no concat.
            attn_b = attn_b + jnp.dot(ah, waT_ref[lo:lo + hd, :],
                                      preferred_element_type=f32)
        gate_msa = ada_ref[b][2:3, :]
        x1_rows.append(x_ref[b] + gate_msa * attn_b)   # dropout == identity

    # ----------------------------- MLP branch ---------------------------
    xm2_rows = []
    for b in range(block_b):
        ada_b = ada_ref[b]
        xm2_rows.append(ln_modulate(x1_rows[b], ln2_w,
                                    ada_b[3:4, :], ada_b[4:5, :]))
    xm2 = jnp.concatenate(xm2_rows, axis=0).astype(bf16)        # [M, D] bf16

    hidden = w1T_ref.shape[1]
    chunk = 512 if hidden % 512 == 0 else hidden
    M = block_b * S
    y = jnp.zeros((M, D), f32)
    for c0 in range(0, hidden, chunk):          # chunk hidden dim; accumulate
        hc = jnp.dot(xm2, w1T_ref[:, c0:c0 + chunk],
                     preferred_element_type=f32) + b1_ref[:, c0:c0 + chunk]
        g = jax.nn.gelu(hc, approximate=True).astype(bf16)      # tanh GELU
        y = y + jnp.dot(g, w2T_ref[c0:c0 + chunk, :],
                        preferred_element_type=f32)
    y = y + b2_ref[...]

    for b in range(block_b):
        gate_mlp = ada_ref[b][5:6, :]
        out_ref[b] = x1_rows[b] + gate_mlp * y[b * S:(b + 1) * S, :]


def prepare_ddit_params(params):
    """One-time conversion of PyTorch-layout weights to kernel layout
    ([in, out], bf16).  Call once, reuse for every forward step."""
    (ln1_w, wq, wk, wv, w_attn, ln2_w, w1, b1, w2, b2, w_ada, b_ada) = params
    f32, bf16 = jnp.float32, jnp.bfloat16
    D = wq.shape[0]
    hidden = w1.shape[0]
    return dict(
        ln1_w=ln1_w.reshape(1, D).astype(f32),
        wqkvT=jnp.concatenate([wq.T, wk.T, wv.T], axis=1).astype(bf16),
        waT=w_attn.T.astype(bf16),
        ln2_w=ln2_w.reshape(1, D).astype(f32),
        w1T=w1.T.astype(bf16),
        b1=b1.reshape(1, hidden).astype(f32),
        w2T=w2.T.astype(bf16),
        b2=b2.reshape(1, D).astype(f32),
        w_adaT=w_ada.T.astype(bf16),
        b_ada=b_ada.astype(f32),
    )


def ddit_block_forward(x, rotary_cos_sin, c, prepared, n_heads, block_b=None):
    """x: [B, S, D], rotary_cos_sin: ([S, hd/2], [S, hd/2]), c: [B, cond_dim]."""
    cos, sin = rotary_cos_sin
    B, S, D = x.shape
    hd = D // n_heads
    hidden = prepared["w1T"].shape[1]
    f32, bf16 = jnp.float32, jnp.bfloat16

    if block_b is None:
        # Fold batch into the matmul M dimension so M = block_b*S ~ 128 rows
        # (fills the MXU) while keeping >= 2 grid steps for v7x's 2 TCs.
        block_b = max(1, min(B, 128 // S)) if S < 128 else 1
        while B % block_b:
            block_b -= 1
    M = block_b * S

    # adaLN_modulation: bare Linear (no SiLU) on c, as in the spec module.
    ada = jnp.dot(c.astype(bf16), prepared["w_adaT"],
                  preferred_element_type=f32) + prepared["b_ada"]
    ada = ada.reshape(B, 6, D)    # rows: shift/scale/gate msa, shift/scale/gate mlp

    # Per-head rotary tables, tiled only over the batch block (not n_heads);
    # the rotate_half sign is folded into the sin table.
    cos_m = jnp.tile(jnp.concatenate([cos, cos], axis=-1),
                     (block_b, 1)).astype(f32)                  # [M, hd]
    sin_m = jnp.tile(jnp.concatenate([-sin, sin], axis=-1),
                     (block_b, 1)).astype(f32)                  # [M, hd]

    kernel = functools.partial(_ddit_block_kernel,
                               n_heads=n_heads, block_b=block_b)
    rep2 = lambda i: (0, 0)       # resident blocks (same index every step)

    out = pl.pallas_call(
        kernel,
        out_shape=jax.ShapeDtypeStruct((B, S, D), f32),
        grid=(B // block_b,),
        in_specs=[
            pl.BlockSpec((block_b, S, D), lambda i: (i, 0, 0)),  # x
            pl.BlockSpec((block_b, 6, D), lambda i: (i, 0, 0)),  # adaLN chunks
            pl.BlockSpec((M, hd), rep2),                         # cos
            pl.BlockSpec((M, hd), rep2),                         # sin (signed)
            pl.BlockSpec((1, D), rep2),                          # norm1 weight
            pl.BlockSpec((D, 3 * D), rep2),                      # Wqkv^T (bf16)
            pl.BlockSpec((D, D), rep2),                          # Wattn^T (bf16)
            pl.BlockSpec((1, D), rep2),                          # norm2 weight
            pl.BlockSpec((D, hidden), rep2),                     # W1^T (bf16)
            pl.BlockSpec((1, hidden), rep2),                     # b1
            pl.BlockSpec((hidden, D), rep2),                     # W2^T (bf16)
            pl.BlockSpec((1, D), rep2),                          # b2
        ],
        out_specs=pl.BlockSpec((block_b, S, D), lambda i: (i, 0, 0)),
        compiler_params=pltpu.CompilerParams(
            dimension_semantics=("parallel",)),
    )(x.astype(f32), ada, cos_m, sin_m,
      prepared["ln1_w"], prepared["wqkvT"], prepared["waT"],
      prepared["ln2_w"], prepared["w1T"], prepared["b1"],
      prepared["w2T"], prepared["b2"])
    return out


def ddit_block_reference(x, rotary_cos_sin, c, params, n_heads):
    """Pure-JAX mirror of DDiTBlock.forward (eval mode, bf16 MXU operands)."""
    (ln1_w, wq, wk, wv, w_attn, ln2_w, w1, b1, w2, b2, w_ada, b_ada) = params
    cos, sin = rotary_cos_sin
    B, S, D = x.shape
    hd = D // n_heads
    f32, bf16 = jnp.float32, jnp.bfloat16

    def mm(a, b):
        return jnp.dot(a.astype(bf16), b.astype(bf16), preferred_element_type=f32)

    ada = (mm(c, w_ada.T) + b_ada)[:, None, :]          # [B, 1, 6D]
    (shift_msa, scale_msa, gate_msa,
     shift_mlp, scale_mlp, gate_mlp) = jnp.split(ada, 6, axis=2)

    def layer_norm(v, w):
        mu = v.mean(-1, keepdims=True)
        var = jnp.square(v - mu).mean(-1, keepdims=True)
        return (v - mu) * jax.lax.rsqrt(var + 1e-5) * w[None, None, :]

    def modulate(v, shift, scale):
        return v * (1.0 + scale) + shift

    x_skip = x
    xm = modulate(layer_norm(x, ln1_w), shift_msa, scale_msa)
    q, k, v = mm(xm, wq.T), mm(xm, wk.T), mm(xm, wv.T)

    def rot(t):                                          # rotate_half rotary
        t = t.reshape(B, S, n_heads, hd)
        t1, t2 = t[..., :hd // 2], t[..., hd // 2:]
        cc, ss = cos[None, :, None, :], sin[None, :, None, :]
        return jnp.concatenate([t1 * cc - t2 * ss, t2 * cc + t1 * ss],
                               axis=-1).reshape(B, S, D)

    q, k = rot(q), rot(k)
    qh = q.reshape(B, S, n_heads, hd).transpose(0, 2, 1, 3).astype(bf16)
    kh = k.reshape(B, S, n_heads, hd).transpose(0, 2, 1, 3).astype(bf16)
    vh = v.reshape(B, S, n_heads, hd).transpose(0, 2, 1, 3).astype(bf16)
    s = jnp.einsum('bhqd,bhkd->bhqk', qh, kh,
                   preferred_element_type=f32) / math.sqrt(hd)
    p = jax.nn.softmax(s, axis=-1)
    a = jnp.einsum('bhqk,bhkd->bhqd', p.astype(bf16), vh,
                   preferred_element_type=f32)
    a = a.transpose(0, 2, 1, 3).reshape(B, S, D)
    x1 = x_skip + gate_msa * mm(a, w_attn.T)            # dropout == identity

    xm2 = modulate(layer_norm(x1, ln2_w), shift_mlp, scale_mlp)
    hmid = jax.nn.gelu(mm(xm2, w1.T) + b1, approximate=True)
    return x1 + gate_mlp * (mm(hmid, w2.T) + b2)


if __name__ == "__main__":
    # Small but TPU-friendly DDiTBlock hyper-parameters.
    B, S, D = 4, 64, 256          # batch, seq_len, dim
    n_heads = 2                   # head_dim = 128 -> lane-aligned head slices
    cond_dim = 128
    mlp_ratio = 4
    hd = D // n_heads
    half = hd // 2
    hidden = mlp_ratio * D

    key = jax.random.PRNGKey(0)
    ks = jax.random.split(key, 14)
    x = jax.random.normal(ks[0], (B, S, D), jnp.float32)
    c = jax.random.normal(ks[1], (B, cond_dim), jnp.float32)

    # rotary tables (standard non-interleaved rotate-half convention)
    pos = jnp.arange(S, dtype=jnp.float32)[:, None]
    inv_freq = 1.0 / (10000.0 ** (jnp.arange(half, dtype=jnp.float32) / half))
    theta = pos * inv_freq[None, :]
    rotary_cos_sin = (jnp.cos(theta), jnp.sin(theta))        # each [S, hd//2]

    sw = 1.0 / math.sqrt(D)
    ln1_w = 1.0 + 0.1 * jax.random.normal(ks[2], (D,), jnp.float32)
    wq = sw * jax.random.normal(ks[3], (D, D), jnp.float32)
    wk = sw * jax.random.normal(ks[4], (D, D), jnp.float32)
    wv = sw * jax.random.normal(ks[5], (D, D), jnp.float32)
    w_attn = sw * jax.random.normal(ks[6], (D, D), jnp.float32)
    ln2_w = 1.0 + 0.1 * jax.random.normal(ks[7], (D,), jnp.float32)
    w1 = sw * jax.random.normal(ks[8], (hidden, D), jnp.float32)
    b1 = 0.02 * jax.random.normal(ks[9], (hidden,), jnp.float32)
    w2 = (1.0 / math.sqrt(hidden)) * jax.random.normal(ks[10], (D, hidden),
                                                       jnp.float32)
    b2 = 0.02 * jax.random.normal(ks[11], (D,), jnp.float32)
    # (the module zero-inits adaLN; random values here so that path is tested)
    w_ada = 0.05 * jax.random.normal(ks[12], (6 * D, cond_dim), jnp.float32)
    b_ada = 0.05 * jax.random.normal(ks[13], (6 * D,), jnp.float32)

    params = (ln1_w, wq, wk, wv, w_attn, ln2_w, w1, b1, w2, b2, w_ada, b_ada)
    prepared = prepare_ddit_params(params)      # one-time weight prep

    out = ddit_block_forward(x, rotary_cos_sin, c, prepared, n_heads)
    out = jax.block_until_ready(out)

    ref = ddit_block_reference(x, rotary_cos_sin, c, params, n_heads)
    assert out.shape == (B, S, D)
    np.testing.assert_allclose(np.asarray(out), np.asarray(ref),
                               rtol=2e-2, atol=2e-2)
    print("KERNEL_OK")
</pallas_src>

<mosaic_0001>
module attributes {stable_mosaic.version = 11 : i64} {
  func.func @_ddit_block_kernel(%arg0: i32, %arg1: memref<2x64x256xf32, #tpu.memory_space<vmem>>, %arg2: memref<2x6x256xf32, #tpu.memory_space<vmem>>, %arg3: memref<128x128xf32, #tpu.memory_space<vmem>>, %arg4: memref<128x128xf32, #tpu.memory_space<vmem>>, %arg5: memref<1x256xf32, #tpu.memory_space<vmem>>, %arg6: memref<256x768xbf16, #tpu.memory_space<vmem>>, %arg7: memref<256x256xbf16, #tpu.memory_space<vmem>>, %arg8: memref<1x256xf32, #tpu.memory_space<vmem>>, %arg9: memref<256x1024xbf16, #tpu.memory_space<vmem>>, %arg10: memref<1x1024xf32, #tpu.memory_space<vmem>>, %arg11: memref<1024x256xbf16, #tpu.memory_space<vmem>>, %arg12: memref<1x256xf32, #tpu.memory_space<vmem>>, %arg13: memref<2x64x256xf32, #tpu.memory_space<vmem>>) attributes {dimension_semantics = [#tpu.dimension_semantics<parallel>], iteration_bounds = array<i64: 2>, scalar_prefetch = 0 : i64, scratch_operands = 0 : i64, tpu.core_type = #tpu.core_type<tc>, window_params = [{transform_indices = @transform_0, window_bounds = array<i64: 2, 64, 256>}, {transform_indices = @transform_1, window_bounds = array<i64: 2, 6, 256>}, {pipeline_mode = #tpu.pipeline_mode<synchronous>, transform_indices = @transform_2, window_bounds = array<i64: 128, 128>}, {pipeline_mode = #tpu.pipeline_mode<synchronous>, transform_indices = @transform_3, window_bounds = array<i64: 128, 128>}, {pipeline_mode = #tpu.pipeline_mode<synchronous>, transform_indices = @transform_4, window_bounds = array<i64: 1, 256>}, {pipeline_mode = #tpu.pipeline_mode<synchronous>, transform_indices = @transform_5, window_bounds = array<i64: 256, 768>}, {pipeline_mode = #tpu.pipeline_mode<synchronous>, transform_indices = @transform_6, window_bounds = array<i64: 256, 256>}, {pipeline_mode = #tpu.pipeline_mode<synchronous>, transform_indices = @transform_7, window_bounds = array<i64: 1, 256>}, {pipeline_mode = #tpu.pipeline_mode<synchronous>, transform_indices = @transform_8, window_bounds = array<i64: 256, 1024>}, {pipeline_mode = #tpu.pipeline_mode<synchronous>, transform_indices = @transform_9, window_bounds = array<i64: 1, 1024>}, {pipeline_mode = #tpu.pipeline_mode<synchronous>, transform_indices = @transform_10, window_bounds = array<i64: 1024, 256>}, {pipeline_mode = #tpu.pipeline_mode<synchronous>, transform_indices = @transform_11, window_bounds = array<i64: 1, 256>}, {transform_indices = @transform_12, window_bounds = array<i64: 2, 64, 256>}]} {
    %c0 = arith.constant 0 : index
    %c0_0 = arith.constant 0 : index
    %0 = vector.load %arg5[%c0, %c0_0] : memref<1x256xf32, #tpu.memory_space<vmem>>, vector<1x256xf32>
    %c0_1 = arith.constant 0 : index
    %c0_2 = arith.constant 0 : index
    %1 = vector.load %arg8[%c0_1, %c0_2] : memref<1x256xf32, #tpu.memory_space<vmem>>, vector<1x256xf32>
    %c0_3 = arith.constant 0 : index
    %c0_4 = arith.constant 0 : index
    %2 = vector.load %arg3[%c0_3, %c0_4] : memref<128x128xf32, #tpu.memory_space<vmem>>, vector<128x128xf32>
    %c0_5 = arith.constant 0 : index
    %c0_6 = arith.constant 0 : index
    %3 = vector.load %arg4[%c0_5, %c0_6] : memref<128x128xf32, #tpu.memory_space<vmem>>, vector<128x128xf32>
    %c0_7 = arith.constant 0 : index
    %c0_8 = arith.constant 0 : index
    %c0_9 = arith.constant 0 : index
    %4 = vector.load %arg2[%c0_7, %c0_8, %c0_9] : memref<2x6x256xf32, #tpu.memory_space<vmem>>, vector<1x6x256xf32>
    %5 = vector.shape_cast %4 : vector<1x6x256xf32> to vector<6x256xf32>
    %c0_10 = arith.constant 0 : index
    %c0_11 = arith.constant 0 : index
    %c0_12 = arith.constant 0 : index
    %6 = vector.load %arg1[%c0_10, %c0_11, %c0_12] : memref<2x64x256xf32, #tpu.memory_space<vmem>>, vector<1x64x256xf32>
    %7 = vector.shape_cast %6 : vector<1x64x256xf32> to vector<64x256xf32>
    %8 = vector.extract_strided_slice %5 {offsets = [0, 0], sizes = [1, 256], strides = [1, 1]} : vector<6x256xf32> to vector<1x256xf32>
    %9 = vector.extract_strided_slice %5 {offsets = [1, 0], sizes = [1, 256], strides = [1, 1]} : vector<6x256xf32> to vector<1x256xf32>
    %cst = arith.constant dense<0.000000e+00> : vector<64xf32>
    %10 = vector.multi_reduction <add>, %7, %cst [1] : vector<64x256xf32> to vector<64xf32>
    %11 = vector.shape_cast %10 : vector<64xf32> to vector<64x1xf32>
    %cst_13 = arith.constant 2.560000e+02 : f32
    %12 = vector.broadcast %cst_13 : f32 to vector<64x1xf32>
    %13 = arith.divf %11, %12 : vector<64x1xf32>
    %14 = vector.broadcast %13 : vector<64x1xf32> to vector<64x256xf32>
    %15 = arith.subf %7, %14 : vector<64x256xf32>
    %16 = arith.mulf %15, %15 : vector<64x256xf32>
    %cst_14 = arith.constant dense<0.000000e+00> : vector<64xf32>
    %17 = vector.multi_reduction <add>, %16, %cst_14 [1] : vector<64x256xf32> to vector<64xf32>
    %18 = vector.shape_cast %17 : vector<64xf32> to vector<64x1xf32>
    %cst_15 = arith.constant 2.560000e+02 : f32
    %19 = vector.broadcast %cst_15 : f32 to vector<64x1xf32>
    %20 = arith.divf %18, %19 : vector<64x1xf32>
    %21 = vector.broadcast %13 : vector<64x1xf32> to vector<64x256xf32>
    %22 = arith.subf %7, %21 : vector<64x256xf32>
    %cst_16 = arith.constant 9.99999974E-6 : f32
    %23 = vector.broadcast %cst_16 : f32 to vector<64x1xf32>
    %24 = arith.addf %20, %23 : vector<64x1xf32>
    %25 = math.rsqrt %24 : vector<64x1xf32>
    %26 = vector.broadcast %25 : vector<64x1xf32> to vector<64x256xf32>
    %27 = arith.mulf %22, %26 : vector<64x256xf32>
    %28 = vector.broadcast %0 : vector<1x256xf32> to vector<64x256xf32>
    %29 = arith.mulf %27, %28 : vector<64x256xf32>
    %cst_17 = arith.constant 1.000000e+00 : f32
    %30 = vector.broadcast %cst_17 : f32 to vector<1x256xf32>
    %31 = arith.addf %30, %9 : vector<1x256xf32>
    %32 = vector.broadcast %31 : vector<1x256xf32> to vector<64x256xf32>
    %33 = arith.mulf %29, %32 : vector<64x256xf32>
    %34 = vector.broadcast %8 : vector<1x256xf32> to vector<64x256xf32>
    %35 = arith.addf %33, %34 : vector<64x256xf32>
    %c1 = arith.constant 1 : index
    %c0_18 = arith.constant 0 : index
    %c0_19 = arith.constant 0 : index
    %36 = vector.load %arg2[%c1, %c0_18, %c0_19] : memref<2x6x256xf32, #tpu.memory_space<vmem>>, vector<1x6x256xf32>
    %37 = vector.shape_cast %36 : vector<1x6x256xf32> to vector<6x256xf32>
    %c1_20 = arith.constant 1 : index
    %c0_21 = arith.constant 0 : index
    %c0_22 = arith.constant 0 : index
    %38 = vector.load %arg1[%c1_20, %c0_21, %c0_22] : memref<2x64x256xf32, #tpu.memory_space<vmem>>, vector<1x64x256xf32>
    %39 = vector.shape_cast %38 : vector<1x64x256xf32> to vector<64x256xf32>
    %40 = vector.extract_strided_slice %37 {offsets = [0, 0], sizes = [1, 256], strides = [1, 1]} : vector<6x256xf32> to vector<1x256xf32>
    %41 = vector.extract_strided_slice %37 {offsets = [1, 0], sizes = [1, 256], strides = [1, 1]} : vector<6x256xf32> to vector<1x256xf32>
    %cst_23 = arith.constant dense<0.000000e+00> : vector<64xf32>
    %42 = vector.multi_reduction <add>, %39, %cst_23 [1] : vector<64x256xf32> to vector<64xf32>
    %43 = vector.shape_cast %42 : vector<64xf32> to vector<64x1xf32>
    %cst_24 = arith.constant 2.560000e+02 : f32
    %44 = vector.broadcast %cst_24 : f32 to vector<64x1xf32>
    %45 = arith.divf %43, %44 : vector<64x1xf32>
    %46 = vector.broadcast %45 : vector<64x1xf32> to vector<64x256xf32>
    %47 = arith.subf %39, %46 : vector<64x256xf32>
    %48 = arith.mulf %47, %47 : vector<64x256xf32>
    %cst_25 = arith.constant dense<0.000000e+00> : vector<64xf32>
    %49 = vector.multi_reduction <add>, %48, %cst_25 [1] : vector<64x256xf32> to vector<64xf32>
    %50 = vector.shape_cast %49 : vector<64xf32> to vector<64x1xf32>
    %cst_26 = arith.constant 2.560000e+02 : f32
    %51 = vector.broadcast %cst_26 : f32 to vector<64x1xf32>
    %52 = arith.divf %50, %51 : vector<64x1xf32>
    %53 = vector.broadcast %45 : vector<64x1xf32> to vector<64x256xf32>
    %54 = arith.subf %39, %53 : vector<64x256xf32>
    %cst_27 = arith.constant 9.99999974E-6 : f32
    %55 = vector.broadcast %cst_27 : f32 to vector<64x1xf32>
    %56 = arith.addf %52, %55 : vector<64x1xf32>
    %57 = math.rsqrt %56 : vector<64x1xf32>
    %58 = vector.broadcast %57 : vector<64x1xf32> to vector<64x256xf32>
    %59 = arith.mulf %54, %58 : vector<64x256xf32>
    %60 = vector.broadcast %0 : vector<1x256xf32> to vector<64x256xf32>
    %61 = arith.mulf %59, %60 : vector<64x256xf32>
    %cst_28 = arith.constant 1.000000e+00 : f32
    %62 = vector.broadcast %cst_28 : f32 to vector<1x256xf32>
    %63 = arith.addf %62, %41 : vector<1x256xf32>
    %64 = vector.broadcast %63 : vector<1x256xf32> to vector<64x256xf32>
    %65 = arith.mulf %61, %64 : vector<64x256xf32>
    %66 = vector.broadcast %40 : vector<1x256xf32> to vector<64x256xf32>
    %67 = arith.addf %65, %66 : vector<64x256xf32>
    %68 = tpu.concatenate %35, %67 in 0 : vector<64x256xf32>, vector<64x256xf32> -> vector<128x256xf32>
    %69 = arith.truncf %68 : vector<128x256xf32> to vector<128x256xbf16>
    %c0_29 = arith.constant 0 : index
    %c0_30 = arith.constant 0 : index
    %70 = vector.load %arg6[%c0_29, %c0_30] : memref<256x768xbf16, #tpu.memory_space<vmem>>, vector<256x768xbf16>
    %cst_31 = arith.constant dense<0.000000e+00> : vector<128x768xf32>
    %71 = tpu.matmul %69, %70, %cst_31 {dimension_numbers = #tpu.dot_dimension_numbers<[1], [0], [0], [1], [0, 0, 1, 1], [], []>} : vector<128x256xbf16>, vector<256x768xbf16>, vector<128x768xf32> -> vector<128x768xf32>
    %72 = vector.extract_strided_slice %71 {offsets = [0, 0], sizes = [128, 256], strides = [1, 1]} : vector<128x768xf32> to vector<128x256xf32>
    %73 = vector.extract_strided_slice %71 {offsets = [0, 256], sizes = [128, 256], strides = [1, 1]} : vector<128x768xf32> to vector<128x256xf32>
    %74 = vector.extract_strided_slice %71 {offsets = [0, 512], sizes = [128, 256], strides = [1, 1]} : vector<128x768xf32> to vector<128x256xf32>
    %75 = arith.truncf %74 : vector<128x256xf32> to vector<128x256xbf16>
    %76 = vector.extract_strided_slice %72 {offsets = [0, 0], sizes = [128, 128], strides = [1, 1]} : vector<128x256xf32> to vector<128x128xf32>
    %77 = arith.mulf %76, %2 : vector<128x128xf32>
    %c64_i32 = arith.constant 64 : i32
    %78 = tpu.dynamic_rotate %76 by %c64_i32 dim 1 : vector<128x128xf32>, i32 -> vector<128x128xf32>
    %79 = arith.mulf %78, %3 : vector<128x128xf32>
    %80 = arith.addf %77, %79 : vector<128x128xf32>
    %81 = vector.extract_strided_slice %72 {offsets = [0, 128], sizes = [128, 128], strides = [1, 1]} : vector<128x256xf32> to vector<128x128xf32>
    %82 = arith.mulf %81, %2 : vector<128x128xf32>
    %c64_i32_32 = arith.constant 64 : i32
    %83 = tpu.dynamic_rotate %81 by %c64_i32_32 dim 1 : vector<128x128xf32>, i32 -> vector<128x128xf32>
    %84 = arith.mulf %83, %3 : vector<128x128xf32>
    %85 = arith.addf %82, %84 : vector<128x128xf32>
    %86 = tpu.concatenate %80, %85 in 1 : vector<128x128xf32>, vector<128x128xf32> -> vector<128x256xf32>
    %87 = arith.truncf %86 : vector<128x256xf32> to vector<128x256xbf16>
    %88 = vector.extract_strided_slice %73 {offsets = [0, 0], sizes = [128, 128], strides = [1, 1]} : vector<128x256xf32> to vector<128x128xf32>
    %89 = arith.mulf %88, %2 : vector<128x128xf32>
    %c64_i32_33 = arith.constant 64 : i32
    %90 = tpu.dynamic_rotate %88 by %c64_i32_33 dim 1 : vector<128x128xf32>, i32 -> vector<128x128xf32>
    %91 = arith.mulf %90, %3 : vector<128x128xf32>
    %92 = arith.addf %89, %91 : vector<128x128xf32>
    %93 = vector.extract_strided_slice %73 {offsets = [0, 128], sizes = [128, 128], strides = [1, 1]} : vector<128x256xf32> to vector<128x128xf32>
    %94 = arith.mulf %93, %2 : vector<128x128xf32>
    %c64_i32_34 = arith.constant 64 : i32
    %95 = tpu.dynamic_rotate %93 by %c64_i32_34 dim 1 : vector<128x128xf32>, i32 -> vector<128x128xf32>
    %96 = arith.mulf %95, %3 : vector<128x128xf32>
    %97 = arith.addf %94, %96 : vector<128x128xf32>
    %98 = tpu.concatenate %92, %97 in 1 : vector<128x128xf32>, vector<128x128xf32> -> vector<128x256xf32>
    %99 = arith.truncf %98 : vector<128x256xf32> to vector<128x256xbf16>
    %cst_35 = arith.constant 0.000000e+00 : f32
    %100 = vector.broadcast %cst_35 : f32 to vector<64x256xf32>
    %101 = vector.extract_strided_slice %87 {offsets = [0, 0], sizes = [64, 128], strides = [1, 1]} : vector<128x256xbf16> to vector<64x128xbf16>
    %102 = vector.extract_strided_slice %99 {offsets = [0, 0], sizes = [64, 128], strides = [1, 1]} : vector<128x256xbf16> to vector<64x128xbf16>
    %103 = vector.extract_strided_slice %75 {offsets = [0, 0], sizes = [64, 128], strides = [1, 1]} : vector<128x256xbf16> to vector<64x128xbf16>
    %cst_36 = arith.constant dense<0.000000e+00> : vector<64x64xf32>
    %104 = tpu.matmul %101, %102, %cst_36 {dimension_numbers = #tpu.dot_dimension_numbers<[1], [1], [0], [0], [0, 0, 1, 0], [], []>} : vector<64x128xbf16>, vector<64x128xbf16>, vector<64x64xf32> -> vector<64x64xf32>
    %cst_37 = arith.constant 0.0883883461 : f32
    %105 = vector.broadcast %cst_37 : f32 to vector<64x64xf32>
    %106 = arith.mulf %104, %105 : vector<64x64xf32>
    %cst_38 = arith.constant dense<0xFF800000> : vector<64xf32>
    %107 = vector.multi_reduction <maximumf>, %106, %cst_38 [1] : vector<64x64xf32> to vector<64xf32>
    %108 = vector.shape_cast %107 : vector<64xf32> to vector<64x1xf32>
    %109 = vector.broadcast %108 : vector<64x1xf32> to vector<64x64xf32>
    %110 = arith.subf %106, %109 : vector<64x64xf32>
    %111 = math.exp %110 : vector<64x64xf32>
    %cst_39 = arith.constant dense<0.000000e+00> : vector<64xf32>
    %112 = vector.multi_reduction <add>, %111, %cst_39 [1] : vector<64x64xf32> to vector<64xf32>
    %113 = vector.shape_cast %112 : vector<64xf32> to vector<64x1xf32>
    %114 = tpu.reciprocal %113 {approx = true} : vector<64x1xf32> -> vector<64x1xf32>
    %115 = vector.broadcast %114 : vector<64x1xf32> to vector<64x64xf32>
    %116 = arith.mulf %111, %115 : vector<64x64xf32>
    %117 = arith.truncf %116 : vector<64x64xf32> to vector<64x64xbf16>
    %cst_40 = arith.constant dense<0.000000e+00> : vector<64x128xf32>
    %118 = tpu.matmul %117, %103, %cst_40 {dimension_numbers = #tpu.dot_dimension_numbers<[1], [0], [0], [1], [0, 0, 1, 1], [], []>} : vector<64x64xbf16>, vector<64x128xbf16>, vector<64x128xf32> -> vector<64x128xf32>
    %119 = arith.truncf %118 : vector<64x128xf32> to vector<64x128xbf16>
    %c0_41 = arith.constant 0 : index
    %c0_42 = arith.constant 0 : index
    %120 = vector.load %arg7[%c0_41, %c0_42] : memref<256x256xbf16, #tpu.memory_space<vmem>>, vector<128x256xbf16>
    %cst_43 = arith.constant dense<0.000000e+00> : vector<64x256xf32>
    %121 = tpu.matmul %119, %120, %cst_43 {dimension_numbers = #tpu.dot_dimension_numbers<[1], [0], [0], [1], [0, 0, 1, 1], [], []>} : vector<64x128xbf16>, vector<128x256xbf16>, vector<64x256xf32> -> vector<64x256xf32>
    %122 = arith.addf %100, %121 : vector<64x256xf32>
    %123 = vector.extract_strided_slice %87 {offsets = [0, 128], sizes = [64, 128], strides = [1, 1]} : vector<128x256xbf16> to vector<64x128xbf16>
    %124 = vector.extract_strided_slice %99 {offsets = [0, 128], sizes = [64, 128], strides = [1, 1]} : vector<128x256xbf16> to vector<64x128xbf16>
    %125 = vector.extract_strided_slice %75 {offsets = [0, 128], sizes = [64, 128], strides = [1, 1]} : vector<128x256xbf16> to vector<64x128xbf16>
    %cst_44 = arith.constant dense<0.000000e+00> : vector<64x64xf32>
    %126 = tpu.matmul %123, %124, %cst_44 {dimension_numbers = #tpu.dot_dimension_numbers<[1], [1], [0], [0], [0, 0, 1, 0], [], []>} : vector<64x128xbf16>, vector<64x128xbf16>, vector<64x64xf32> -> vector<64x64xf32>
    %cst_45 = arith.constant 0.0883883461 : f32
    %127 = vector.broadcast %cst_45 : f32 to vector<64x64xf32>
    %128 = arith.mulf %126, %127 : vector<64x64xf32>
    %cst_46 = arith.constant dense<0xFF800000> : vector<64xf32>
    %129 = vector.multi_reduction <maximumf>, %128, %cst_46 [1] : vector<64x64xf32> to vector<64xf32>
    %130 = vector.shape_cast %129 : vector<64xf32> to vector<64x1xf32>
    %131 = vector.broadcast %130 : vector<64x1xf32> to vector<64x64xf32>
    %132 = arith.subf %128, %131 : vector<64x64xf32>
    %133 = math.exp %132 : vector<64x64xf32>
    %cst_47 = arith.constant dense<0.000000e+00> : vector<64xf32>
    %134 = vector.multi_reduction <add>, %133, %cst_47 [1] : vector<64x64xf32> to vector<64xf32>
    %135 = vector.shape_cast %134 : vector<64xf32> to vector<64x1xf32>
    %136 = tpu.reciprocal %135 {approx = true} : vector<64x1xf32> -> vector<64x1xf32>
    %137 = vector.broadcast %136 : vector<64x1xf32> to vector<64x64xf32>
    %138 = arith.mulf %133, %137 : vector<64x64xf32>
    %139 = arith.truncf %138 : vector<64x64xf32> to vector<64x64xbf16>
    %cst_48 = arith.constant dense<0.000000e+00> : vector<64x128xf32>
    %140 = tpu.matmul %139, %125, %cst_48 {dimension_numbers = #tpu.dot_dimension_numbers<[1], [0], [0], [1], [0, 0, 1, 1], [], []>} : vector<64x64xbf16>, vector<64x128xbf16>, vector<64x128xf32> -> vector<64x128xf32>
    %141 = arith.truncf %140 : vector<64x128xf32> to vector<64x128xbf16>
    %c128 = arith.constant 128 : index
    %c0_49 = arith.constant 0 : index
    %142 = vector.load %arg7[%c128, %c0_49] : memref<256x256xbf16, #tpu.memory_space<vmem>>, vector<128x256xbf16>
    %cst_50 = arith.constant dense<0.000000e+00> : vector<64x256xf32>
    %143 = tpu.matmul %141, %142, %cst_50 {dimension_numbers = #tpu.dot_dimension_numbers<[1], [0], [0], [1], [0, 0, 1, 1], [], []>} : vector<64x128xbf16>, vector<128x256xbf16>, vector<64x256xf32> -> vector<64x256xf32>
    %144 = arith.addf %122, %143 : vector<64x256xf32>
    %c0_51 = arith.constant 0 : index
    %c0_52 = arith.constant 0 : index
    %c0_53 = arith.constant 0 : index
    %145 = vector.load %arg2[%c0_51, %c0_52, %c0_53] : memref<2x6x256xf32, #tpu.memory_space<vmem>>, vector<1x6x256xf32>
    %146 = vector.shape_cast %145 : vector<1x6x256xf32> to vector<6x256xf32>
    %147 = vector.extract_strided_slice %146 {offsets = [2, 0], sizes = [1, 256], strides = [1, 1]} : vector<6x256xf32> to vector<1x256xf32>
    %c0_54 = arith.constant 0 : index
    %c0_55 = arith.constant 0 : index
    %c0_56 = arith.constant 0 : index
    %148 = vector.load %arg1[%c0_54, %c0_55, %c0_56] : memref<2x64x256xf32, #tpu.memory_space<vmem>>, vector<1x64x256xf32>
    %149 = vector.shape_cast %148 : vector<1x64x256xf32> to vector<64x256xf32>
    %150 = vector.broadcast %147 : vector<1x256xf32> to vector<64x256xf32>
    %151 = arith.mulf %150, %144 : vector<64x256xf32>
    %152 = arith.addf %149, %151 : vector<64x256xf32>
    %cst_57 = arith.constant 0.000000e+00 : f32
    %153 = vector.broadcast %cst_57 : f32 to vector<64x256xf32>
    %154 = vector.extract_strided_slice %87 {offsets = [64, 0], sizes = [64, 128], strides = [1, 1]} : vector<128x256xbf16> to vector<64x128xbf16>
    %155 = vector.extract_strided_slice %99 {offsets = [64, 0], sizes = [64, 128], strides = [1, 1]} : vector<128x256xbf16> to vector<64x128xbf16>
    %156 = vector.extract_strided_slice %75 {offsets = [64, 0], sizes = [64, 128], strides = [1, 1]} : vector<128x256xbf16> to vector<64x128xbf16>
    %cst_58 = arith.constant dense<0.000000e+00> : vector<64x64xf32>
    %157 = tpu.matmul %154, %155, %cst_58 {dimension_numbers = #tpu.dot_dimension_numbers<[1], [1], [0], [0], [0, 0, 1, 0], [], []>} : vector<64x128xbf16>, vector<64x128xbf16>, vector<64x64xf32> -> vector<64x64xf32>
    %cst_59 = arith.constant 0.0883883461 : f32
    %158 = vector.broadcast %cst_59 : f32 to vector<64x64xf32>
    %159 = arith.mulf %157, %158 : vector<64x64xf32>
    %cst_60 = arith.constant dense<0xFF800000> : vector<64xf32>
    %160 = vector.multi_reduction <maximumf>, %159, %cst_60 [1] : vector<64x64xf32> to vector<64xf32>
    %161 = vector.shape_cast %160 : vector<64xf32> to vector<64x1xf32>
    %162 = vector.broadcast %161 : vector<64x1xf32> to vector<64x64xf32>
    %163 = arith.subf %159, %162 : vector<64x64xf32>
    %164 = math.exp %163 : vector<64x64xf32>
    %cst_61 = arith.constant dense<0.000000e+00> : vector<64xf32>
    %165 = vector.multi_reduction <add>, %164, %cst_61 [1] : vector<64x64xf32> to vector<64xf32>
    %166 = vector.shape_cast %165 : vector<64xf32> to vector<64x1xf32>
    %167 = tpu.reciprocal %166 {approx = true} : vector<64x1xf32> -> vector<64x1xf32>
    %168 = vector.broadcast %167 : vector<64x1xf32> to vector<64x64xf32>
    %169 = arith.mulf %164, %168 : vector<64x64xf32>
    %170 = arith.truncf %169 : vector<64x64xf32> to vector<64x64xbf16>
    %cst_62 = arith.constant dense<0.000000e+00> : vector<64x128xf32>
    %171 = tpu.matmul %170, %156, %cst_62 {dimension_numbers = #tpu.dot_dimension_numbers<[1], [0], [0], [1], [0, 0, 1, 1], [], []>} : vector<64x64xbf16>, vector<64x128xbf16>, vector<64x128xf32> -> vector<64x128xf32>
    %172 = arith.truncf %171 : vector<64x128xf32> to vector<64x128xbf16>
    %c0_63 = arith.constant 0 : index
    %c0_64 = arith.constant 0 : index
    %173 = vector.load %arg7[%c0_63, %c0_64] : memref<256x256xbf16, #tpu.memory_space<vmem>>, vector<128x256xbf16>
    %cst_65 = arith.constant dense<0.000000e+00> : vector<64x256xf32>
    %174 = tpu.matmul %172, %173, %cst_65 {dimension_numbers = #tpu.dot_dimension_numbers<[1], [0], [0], [1], [0, 0, 1, 1], [], []>} : vector<64x128xbf16>, vector<128x256xbf16>, vector<64x256xf32> -> vector<64x256xf32>
    %175 = arith.addf %153, %174 : vector<64x256xf32>
    %176 = vector.extract_strided_slice %87 {offsets = [64, 128], sizes = [64, 128], strides = [1, 1]} : vector<128x256xbf16> to vector<64x128xbf16>
    %177 = vector.extract_strided_slice %99 {offsets = [64, 128], sizes = [64, 128], strides = [1, 1]} : vector<128x256xbf16> to vector<64x128xbf16>
    %178 = vector.extract_strided_slice %75 {offsets = [64, 128], sizes = [64, 128], strides = [1, 1]} : vector<128x256xbf16> to vector<64x128xbf16>
    %cst_66 = arith.constant dense<0.000000e+00> : vector<64x64xf32>
    %179 = tpu.matmul %176, %177, %cst_66 {dimension_numbers = #tpu.dot_dimension_numbers<[1], [1], [0], [0], [0, 0, 1, 0], [], []>} : vector<64x128xbf16>, vector<64x128xbf16>, vector<64x64xf32> -> vector<64x64xf32>
    %cst_67 = arith.constant 0.0883883461 : f32
    %180 = vector.broadcast %cst_67 : f32 to vector<64x64xf32>
    %181 = arith.mulf %179, %180 : vector<64x64xf32>
    %cst_68 = arith.constant dense<0xFF800000> : vector<64xf32>
    %182 = vector.multi_reduction <maximumf>, %181, %cst_68 [1] : vector<64x64xf32> to vector<64xf32>
    %183 = vector.shape_cast %182 : vector<64xf32> to vector<64x1xf32>
    %184 = vector.broadcast %183 : vector<64x1xf32> to vector<64x64xf32>
    %185 = arith.subf %181, %184 : vector<64x64xf32>
    %186 = math.exp %185 : vector<64x64xf32>
    %cst_69 = arith.constant dense<0.000000e+00> : vector<64xf32>
    %187 = vector.multi_reduction <add>, %186, %cst_69 [1] : vector<64x64xf32> to vector<64xf32>
    %188 = vector.shape_cast %187 : vector<64xf32> to vector<64x1xf32>
    %189 = tpu.reciprocal %188 {approx = true} : vector<64x1xf32> -> vector<64x1xf32>
    %190 = vector.broadcast %189 : vector<64x1xf32> to vector<64x64xf32>
    %191 = arith.mulf %186, %190 : vector<64x64xf32>
    %192 = arith.truncf %191 : vector<64x64xf32> to vector<64x64xbf16>
    %cst_70 = arith.constant dense<0.000000e+00> : vector<64x128xf32>
    %193 = tpu.matmul %192, %178, %cst_70 {dimension_numbers = #tpu.dot_dimension_numbers<[1], [0], [0], [1], [0, 0, 1, 1], [], []>} : vector<64x64xbf16>, vector<64x128xbf16>, vector<64x128xf32> -> vector<64x128xf32>
    %194 = arith.truncf %193 : vector<64x128xf32> to vector<64x128xbf16>
    %c128_71 = arith.constant 128 : index
    %c0_72 = arith.constant 0 : index
    %195 = vector.load %arg7[%c128_71, %c0_72] : memref<256x256xbf16, #tpu.memory_space<vmem>>, vector<128x256xbf16>
    %cst_73 = arith.constant dense<0.000000e+00> : vector<64x256xf32>
    %196 = tpu.matmul %194, %195, %cst_73 {dimension_numbers = #tpu.dot_dimension_numbers<[1], [0], [0], [1], [0, 0, 1, 1], [], []>} : vector<64x128xbf16>, vector<128x256xbf16>, vector<64x256xf32> -> vector<64x256xf32>
    %197 = arith.addf %175, %196 : vector<64x256xf32>
    %c1_74 = arith.constant 1 : index
    %c0_75 = arith.constant 0 : index
    %c0_76 = arith.constant 0 : index
    %198 = vector.load %arg2[%c1_74, %c0_75, %c0_76] : memref<2x6x256xf32, #tpu.memory_space<vmem>>, vector<1x6x256xf32>
    %199 = vector.shape_cast %198 : vector<1x6x256xf32> to vector<6x256xf32>
    %200 = vector.extract_strided_slice %199 {offsets = [2, 0], sizes = [1, 256], strides = [1, 1]} : vector<6x256xf32> to vector<1x256xf32>
    %c1_77 = arith.constant 1 : index
    %c0_78 = arith.constant 0 : index
    %c0_79 = arith.constant 0 : index
    %201 = vector.load %arg1[%c1_77, %c0_78, %c0_79] : memref<2x64x256xf32, #tpu.memory_space<vmem>>, vector<1x64x256xf32>
    %202 = vector.shape_cast %201 : vector<1x64x256xf32> to vector<64x256xf32>
    %203 = vector.broadcast %200 : vector<1x256xf32> to vector<64x256xf32>
    %204 = arith.mulf %203, %197 : vector<64x256xf32>
    %205 = arith.addf %202, %204 : vector<64x256xf32>
    %c0_80 = arith.constant 0 : index
    %c0_81 = arith.constant 0 : index
    %c0_82 = arith.constant 0 : index
    %206 = vector.load %arg2[%c0_80, %c0_81, %c0_82] : memref<2x6x256xf32, #tpu.memory_space<vmem>>, vector<1x6x256xf32>
    %207 = vector.shape_cast %206 : vector<1x6x256xf32> to vector<6x256xf32>
    %208 = vector.extract_strided_slice %207 {offsets = [3, 0], sizes = [1, 256], strides = [1, 1]} : vector<6x256xf32> to vector<1x256xf32>
    %209 = vector.extract_strided_slice %207 {offsets = [4, 0], sizes = [1, 256], strides = [1, 1]} : vector<6x256xf32> to vector<1x256xf32>
    %cst_83 = arith.constant dense<0.000000e+00> : vector<64xf32>
    %210 = vector.multi_reduction <add>, %152, %cst_83 [1] : vector<64x256xf32> to vector<64xf32>
    %211 = vector.shape_cast %210 : vector<64xf32> to vector<64x1xf32>
    %cst_84 = arith.constant 2.560000e+02 : f32
    %212 = vector.broadcast %cst_84 : f32 to vector<64x1xf32>
    %213 = arith.divf %211, %212 : vector<64x1xf32>
    %214 = vector.broadcast %213 : vector<64x1xf32> to vector<64x256xf32>
    %215 = arith.subf %152, %214 : vector<64x256xf32>
    %216 = arith.mulf %215, %215 : vector<64x256xf32>
    %cst_85 = arith.constant dense<0.000000e+00> : vector<64xf32>
    %217 = vector.multi_reduction <add>, %216, %cst_85 [1] : vector<64x256xf32> to vector<64xf32>
    %218 = vector.shape_cast %217 : vector<64xf32> to vector<64x1xf32>
    %cst_86 = arith.constant 2.560000e+02 : f32
    %219 = vector.broadcast %cst_86 : f32 to vector<64x1xf32>
    %220 = arith.divf %218, %219 : vector<64x1xf32>
    %221 = vector.broadcast %213 : vector<64x1xf32> to vector<64x256xf32>
    %222 = arith.subf %152, %221 : vector<64x256xf32>
    %cst_87 = arith.constant 9.99999974E-6 : f32
    %223 = vector.broadcast %cst_87 : f32 to vector<64x1xf32>
    %224 = arith.addf %220, %223 : vector<64x1xf32>
    %225 = math.rsqrt %224 : vector<64x1xf32>
    %226 = vector.broadcast %225 : vector<64x1xf32> to vector<64x256xf32>
    %227 = arith.mulf %222, %226 : vector<64x256xf32>
    %228 = vector.broadcast %1 : vector<1x256xf32> to vector<64x256xf32>
    %229 = arith.mulf %227, %228 : vector<64x256xf32>
    %cst_88 = arith.constant 1.000000e+00 : f32
    %230 = vector.broadcast %cst_88 : f32 to vector<1x256xf32>
    %231 = arith.addf %230, %209 : vector<1x256xf32>
    %232 = vector.broadcast %231 : vector<1x256xf32> to vector<64x256xf32>
    %233 = arith.mulf %229, %232 : vector<64x256xf32>
    %234 = vector.broadcast %208 : vector<1x256xf32> to vector<64x256xf32>
    %235 = arith.addf %233, %234 : vector<64x256xf32>
    %c1_89 = arith.constant 1 : index
    %c0_90 = arith.constant 0 : index
    %c0_91 = arith.constant 0 : index
    %236 = vector.load %arg2[%c1_89, %c0_90, %c0_91] : memref<2x6x256xf32, #tpu.memory_space<vmem>>, vector<1x6x256xf32>
    %237 = vector.shape_cast %236 : vector<1x6x256xf32> to vector<6x256xf32>
    %238 = vector.extract_strided_slice %237 {offsets = [3, 0], sizes = [1, 256], strides = [1, 1]} : vector<6x256xf32> to vector<1x256xf32>
    %239 = vector.extract_strided_slice %237 {offsets = [4, 0], sizes = [1, 256], strides = [1, 1]} : vector<6x256xf32> to vector<1x256xf32>
    %cst_92 = arith.constant dense<0.000000e+00> : vector<64xf32>
    %240 = vector.multi_reduction <add>, %205, %cst_92 [1] : vector<64x256xf32> to vector<64xf32>
    %241 = vector.shape_cast %240 : vector<64xf32> to vector<64x1xf32>
    %cst_93 = arith.constant 2.560000e+02 : f32
    %242 = vector.broadcast %cst_93 : f32 to vector<64x1xf32>
    %243 = arith.divf %241, %242 : vector<64x1xf32>
    %244 = vector.broadcast %243 : vector<64x1xf32> to vector<64x256xf32>
    %245 = arith.subf %205, %244 : vector<64x256xf32>
    %246 = arith.mulf %245, %245 : vector<64x256xf32>
    %cst_94 = arith.constant dense<0.000000e+00> : vector<64xf32>
    %247 = vector.multi_reduction <add>, %246, %cst_94 [1] : vector<64x256xf32> to vector<64xf32>
    %248 = vector.shape_cast %247 : vector<64xf32> to vector<64x1xf32>
    %cst_95 = arith.constant 2.560000e+02 : f32
    %249 = vector.broadcast %cst_95 : f32 to vector<64x1xf32>
    %250 = arith.divf %248, %249 : vector<64x1xf32>
    %251 = vector.broadcast %243 : vector<64x1xf32> to vector<64x256xf32>
    %252 = arith.subf %205, %251 : vector<64x256xf32>
    %cst_96 = arith.constant 9.99999974E-6 : f32
    %253 = vector.broadcast %cst_96 : f32 to vector<64x1xf32>
    %254 = arith.addf %250, %253 : vector<64x1xf32>
    %255 = math.rsqrt %254 : vector<64x1xf32>
    %256 = vector.broadcast %255 : vector<64x1xf32> to vector<64x256xf32>
    %257 = arith.mulf %252, %256 : vector<64x256xf32>
    %258 = vector.broadcast %1 : vector<1x256xf32> to vector<64x256xf32>
    %259 = arith.mulf %257, %258 : vector<64x256xf32>
    %cst_97 = arith.constant 1.000000e+00 : f32
    %260 = vector.broadcast %cst_97 : f32 to vector<1x256xf32>
    %261 = arith.addf %260, %239 : vector<1x256xf32>
    %262 = vector.broadcast %261 : vector<1x256xf32> to vector<64x256xf32>
    %263 = arith.mulf %259, %262 : vector<64x256xf32>
    %264 = vector.broadcast %238 : vector<1x256xf32> to vector<64x256xf32>
    %265 = arith.addf %263, %264 : vector<64x256xf32>
    %266 = tpu.concatenate %235, %265 in 0 : vector<64x256xf32>, vector<64x256xf32> -> vector<128x256xf32>
    %267 = arith.truncf %266 : vector<128x256xf32> to vector<128x256xbf16>
    %cst_98 = arith.constant 0.000000e+00 : f32
    %268 = vector.broadcast %cst_98 : f32 to vector<128x256xf32>
    %c0_99 = arith.constant 0 : index
    %c0_100 = arith.constant 0 : index
    %269 = vector.load %arg9[%c0_99, %c0_100] : memref<256x1024xbf16, #tpu.memory_space<vmem>>, vector<256x512xbf16>
    %cst_101 = arith.constant dense<0.000000e+00> : vector<128x512xf32>
    %270 = tpu.matmul %267, %269, %cst_101 {dimension_numbers = #tpu.dot_dimension_numbers<[1], [0], [0], [1], [0, 0, 1, 1], [], []>} : vector<128x256xbf16>, vector<256x512xbf16>, vector<128x512xf32> -> vector<128x512xf32>
    %c0_102 = arith.constant 0 : index
    %c0_103 = arith.constant 0 : index
    %271 = vector.load %arg10[%c0_102, %c0_103] : memref<1x1024xf32, #tpu.memory_space<vmem>>, vector<1x512xf32>
    %272 = vector.broadcast %271 : vector<1x512xf32> to vector<128x512xf32>
    %273 = arith.addf %270, %272 : vector<128x512xf32>
    %274 = arith.mulf %273, %273 : vector<128x512xf32>
    %275 = arith.mulf %273, %274 : vector<128x512xf32>
    %cst_104 = arith.constant 4.471500e-02 : f32
    %276 = vector.broadcast %cst_104 : f32 to vector<128x512xf32>
    %277 = arith.mulf %276, %275 : vector<128x512xf32>
    %278 = arith.addf %273, %277 : vector<128x512xf32>
    %cst_105 = arith.constant 0.797884583 : f32
    %279 = vector.broadcast %cst_105 : f32 to vector<128x512xf32>
    %280 = arith.mulf %279, %278 : vector<128x512xf32>
    %281 = math.tanh %280 : vector<128x512xf32>
    %cst_106 = arith.constant 1.000000e+00 : f32
    %282 = vector.broadcast %cst_106 : f32 to vector<128x512xf32>
    %283 = arith.addf %282, %281 : vector<128x512xf32>
    %cst_107 = arith.constant 5.000000e-01 : f32
    %284 = vector.broadcast %cst_107 : f32 to vector<128x512xf32>
    %285 = arith.mulf %284, %283 : vector<128x512xf32>
    %286 = arith.mulf %273, %285 : vector<128x512xf32>
    %287 = arith.truncf %286 : vector<128x512xf32> to vector<128x512xbf16>
    %c0_108 = arith.constant 0 : index
    %c0_109 = arith.constant 0 : index
    %288 = vector.load %arg11[%c0_108, %c0_109] : memref<1024x256xbf16, #tpu.memory_space<vmem>>, vector<512x256xbf16>
    %cst_110 = arith.constant dense<0.000000e+00> : vector<128x256xf32>
    %289 = tpu.matmul %287, %288, %cst_110 {dimension_numbers = #tpu.dot_dimension_numbers<[1], [0], [0], [1], [0, 0, 1, 1], [], []>} : vector<128x512xbf16>, vector<512x256xbf16>, vector<128x256xf32> -> vector<128x256xf32>
    %290 = arith.addf %268, %289 : vector<128x256xf32>
    %c0_111 = arith.constant 0 : index
    %c512 = arith.constant 512 : index
    %291 = vector.load %arg9[%c0_111, %c512] : memref<256x1024xbf16, #tpu.memory_space<vmem>>, vector<256x512xbf16>
    %cst_112 = arith.constant dense<0.000000e+00> : vector<128x512xf32>
    %292 = tpu.matmul %267, %291, %cst_112 {dimension_numbers = #tpu.dot_dimension_numbers<[1], [0], [0], [1], [0, 0, 1, 1], [], []>} : vector<128x256xbf16>, vector<256x512xbf16>, vector<128x512xf32> -> vector<128x512xf32>
    %c0_113 = arith.constant 0 : index
    %c512_114 = arith.constant 512 : index
    %293 = vector.load %arg10[%c0_113, %c512_114] : memref<1x1024xf32, #tpu.memory_space<vmem>>, vector<1x512xf32>
    %294 = vector.broadcast %293 : vector<1x512xf32> to vector<128x512xf32>
    %295 = arith.addf %292, %294 : vector<128x512xf32>
    %296 = arith.mulf %295, %295 : vector<128x512xf32>
    %297 = arith.mulf %295, %296 : vector<128x512xf32>
    %cst_115 = arith.constant 4.471500e-02 : f32
    %298 = vector.broadcast %cst_115 : f32 to vector<128x512xf32>
    %299 = arith.mulf %298, %297 : vector<128x512xf32>
    %300 = arith.addf %295, %299 : vector<128x512xf32>
    %cst_116 = arith.constant 0.797884583 : f32
    %301 = vector.broadcast %cst_116 : f32 to vector<128x512xf32>
    %302 = arith.mulf %301, %300 : vector<128x512xf32>
    %303 = math.tanh %302 : vector<128x512xf32>
    %cst_117 = arith.constant 1.000000e+00 : f32
    %304 = vector.broadcast %cst_117 : f32 to vector<128x512xf32>
    %305 = arith.addf %304, %303 : vector<128x512xf32>
    %cst_118 = arith.constant 5.000000e-01 : f32
    %306 = vector.broadcast %cst_118 : f32 to vector<128x512xf32>
    %307 = arith.mulf %306, %305 : vector<128x512xf32>
    %308 = arith.mulf %295, %307 : vector<128x512xf32>
    %309 = arith.truncf %308 : vector<128x512xf32> to vector<128x512xbf16>
    %c512_119 = arith.constant 512 : index
    %c0_120 = arith.constant 0 : index
    %310 = vector.load %arg11[%c512_119, %c0_120] : memref<1024x256xbf16, #tpu.memory_space<vmem>>, vector<512x256xbf16>
    %cst_121 = arith.constant dense<0.000000e+00> : vector<128x256xf32>
    %311 = tpu.matmul %309, %310, %cst_121 {dimension_numbers = #tpu.dot_dimension_numbers<[1], [0], [0], [1], [0, 0, 1, 1], [], []>} : vector<128x512xbf16>, vector<512x256xbf16>, vector<128x256xf32> -> vector<128x256xf32>
    %312 = arith.addf %290, %311 : vector<128x256xf32>
    %c0_122 = arith.constant 0 : index
    %c0_123 = arith.constant 0 : index
    %313 = vector.load %arg12[%c0_122, %c0_123] : memref<1x256xf32, #tpu.memory_space<vmem>>, vector<1x256xf32>
    %314 = vector.broadcast %313 : vector<1x256xf32> to vector<128x256xf32>
    %315 = arith.addf %312, %314 : vector<128x256xf32>
    %c0_124 = arith.constant 0 : index
    %c0_125 = arith.constant 0 : index
    %c0_126 = arith.constant 0 : index
    %316 = vector.load %arg2[%c0_124, %c0_125, %c0_126] : memref<2x6x256xf32, #tpu.memory_space<vmem>>, vector<1x6x256xf32>
    %317 = vector.shape_cast %316 : vector<1x6x256xf32> to vector<6x256xf32>
    %318 = vector.extract_strided_slice %317 {offsets = [5, 0], sizes = [1, 256], strides = [1, 1]} : vector<6x256xf32> to vector<1x256xf32>
    %319 = vector.extract_strided_slice %315 {offsets = [0, 0], sizes = [64, 256], strides = [1, 1]} : vector<128x256xf32> to vector<64x256xf32>
    %320 = vector.broadcast %318 : vector<1x256xf32> to vector<64x256xf32>
    %321 = arith.mulf %320, %319 : vector<64x256xf32>
    %322 = arith.addf %152, %321 : vector<64x256xf32>
    %c0_127 = arith.constant 0 : index
    %c0_128 = arith.constant 0 : index
    %c0_129 = arith.constant 0 : index
    %323 = vector.load %arg13[%c0_127, %c0_128, %c0_129] : memref<2x64x256xf32, #tpu.memory_space<vmem>>, vector<1x64x256xf32>
    %324 = vector.shape_cast %323 : vector<1x64x256xf32> to vector<64x256xf32>
    %325 = vector.shape_cast %322 : vector<64x256xf32> to vector<1x64x256xf32>
    tpu.vector_store %arg13[%c0_127, %c0_128, %c0_129], %325 {strides = array<i32>} : memref<2x64x256xf32, #tpu.memory_space<vmem>>, vector<1x64x256xf32>,
    %c1_130 = arith.constant 1 : index
    %c0_131 = arith.constant 0 : index
    %c0_132 = arith.constant 0 : index
    %326 = vector.load %arg2[%c1_130, %c0_131, %c0_132] : memref<2x6x256xf32, #tpu.memory_space<vmem>>, vector<1x6x256xf32>
    %327 = vector.shape_cast %326 : vector<1x6x256xf32> to vector<6x256xf32>
    %328 = vector.extract_strided_slice %327 {offsets = [5, 0], sizes = [1, 256], strides = [1, 1]} : vector<6x256xf32> to vector<1x256xf32>
    %329 = vector.extract_strided_slice %315 {offsets = [64, 0], sizes = [64, 256], strides = [1, 1]} : vector<128x256xf32> to vector<64x256xf32>
    %330 = vector.broadcast %328 : vector<1x256xf32> to vector<64x256xf32>
    %331 = arith.mulf %330, %329 : vector<64x256xf32>
    %332 = arith.addf %205, %331 : vector<64x256xf32>
    %c1_133 = arith.constant 1 : index
    %c0_134 = arith.constant 0 : index
    %c0_135 = arith.constant 0 : index
    %333 = vector.load %arg13[%c1_133, %c0_134, %c0_135] : memref<2x64x256xf32, #tpu.memory_space<vmem>>, vector<1x64x256xf32>
    %334 = vector.shape_cast %333 : vector<1x64x256xf32> to vector<64x256xf32>
    %335 = vector.shape_cast %332 : vector<64x256xf32> to vector<1x64x256xf32>
    tpu.vector_store %arg13[%c1_133, %c0_134, %c0_135], %335 {strides = array<i32>} : memref<2x64x256xf32, #tpu.memory_space<vmem>>, vector<1x64x256xf32>,
    return
  }
  func.func @transform_0(%arg0: i32) -> (i32, i32, i32) {
    %c0_i32 = arith.constant 0 : i32
    %c0_i32_0 = arith.constant 0 : i32
    %c0_i32_1 = arith.constant 0 : i32
    return %arg0, %c0_i32, %c0_i32_0 : i32, i32, i32
  }
  func.func @transform_1(%arg0: i32) -> (i32, i32, i32) {
    %c0_i32 = arith.constant 0 : i32
    %c0_i32_0 = arith.constant 0 : i32
    %c0_i32_1 = arith.constant 0 : i32
    return %arg0, %c0_i32, %c0_i32_0 : i32, i32, i32
  }
  func.func @transform_2(%arg0: i32) -> (i32, i32) {
    %c0_i32 = arith.constant 0 : i32
    %c0_i32_0 = arith.constant 0 : i32
    %c0_i32_1 = arith.constant 0 : i32
    return %c0_i32, %c0_i32_0 : i32, i32
  }
  func.func @transform_3(%arg0: i32) -> (i32, i32) {
    %c0_i32 = arith.constant 0 : i32
    %c0_i32_0 = arith.constant 0 : i32
    %c0_i32_1 = arith.constant 0 : i32
    return %c0_i32, %c0_i32_0 : i32, i32
  }
  func.func @transform_4(%arg0: i32) -> (i32, i32) {
    %c0_i32 = arith.constant 0 : i32
    %c0_i32_0 = arith.constant 0 : i32
    %c0_i32_1 = arith.constant 0 : i32
    return %c0_i32, %c0_i32_0 : i32, i32
  }
  func.func @transform_5(%arg0: i32) -> (i32, i32) {
    %c0_i32 = arith.constant 0 : i32
    %c0_i32_0 = arith.constant 0 : i32
    %c0_i32_1 = arith.constant 0 : i32
    return %c0_i32, %c0_i32_0 : i32, i32
  }
  func.func @transform_6(%arg0: i32) -> (i32, i32) {
    %c0_i32 = arith.constant 0 : i32
    %c0_i32_0 = arith.constant 0 : i32
    %c0_i32_1 = arith.constant 0 : i32
    return %c0_i32, %c0_i32_0 : i32, i32
  }
  func.func @transform_7(%arg0: i32) -> (i32, i32) {
    %c0_i32 = arith.constant 0 : i32
    %c0_i32_0 = arith.constant 0 : i32
    %c0_i32_1 = arith.constant 0 : i32
    return %c0_i32, %c0_i32_0 : i32, i32
  }
  func.func @transform_8(%arg0: i32) -> (i32, i32) {
    %c0_i32 = arith.constant 0 : i32
    %c0_i32_0 = arith.constant 0 : i32
    %c0_i32_1 = arith.constant 0 : i32
    return %c0_i32, %c0_i32_0 : i32, i32
  }
  func.func @transform_9(%arg0: i32) -> (i32, i32) {
    %c0_i32 = arith.constant 0 : i32
    %c0_i32_0 = arith.constant 0 : i32
    %c0_i32_1 = arith.constant 0 : i32
    return %c0_i32, %c0_i32_0 : i32, i32
  }
  func.func @transform_10(%arg0: i32) -> (i32, i32) {
    %c0_i32 = arith.constant 0 : i32
    %c0_i32_0 = arith.constant 0 : i32
    %c0_i32_1 = arith.constant 0 : i32
    return %c0_i32, %c0_i32_0 : i32, i32
  }
  func.func @transform_11(%arg0: i32) -> (i32, i32) {
    %c0_i32 = arith.constant 0 : i32
    %c0_i32_0 = arith.constant 0 : i32
    %c0_i32_1 = arith.constant 0 : i32
    return %c0_i32, %c0_i32_0 : i32, i32
  }
  func.func @transform_12(%arg0: i32) -> (i32, i32, i32) {
    %c0_i32 = arith.constant 0 : i32
    %c0_i32_0 = arith.constant 0 : i32
    %c0_i32_1 = arith.constant 0 : i32
    return %arg0, %c0_i32, %c0_i32_0 : i32, i32, i32
  }
}

</mosaic_0001>

<llo_original>
// kernel: tpu_custom_call.1
$region0: #{tpu_custom_call.1}
  #allocation0 [shape = 'u32[]', space=smem, size = 0x4, offset = 0x4, fixed_abs, tag = 'smem constant byte address 0x4 - core index']
  #allocation1 [shape = 'u32[144,128]{1,0:T(1,128)}', space=vmem, size = 0x12000, scoped, tag = 'internal scratch']
  %s0 = inlined_call_operand.hbm [shape: f32[4,64,256], index: 0, kind: input, shape index: {}]
  %s1 = inlined_call_operand.vmem [shape: f32[4,6,256], index: 1, kind: input, shape index: {}]
  %s2 = inlined_call_operand.hbm [shape: f32[128,128], index: 2, kind: input, shape index: {}]
  %s3 = inlined_call_operand.hbm [shape: f32[128,128], index: 3, kind: input, shape index: {}]
  %s4 = inlined_call_operand.vmem [shape: f32[1,256], index: 4, kind: input, shape index: {}]
  %s5 = inlined_call_operand.hbm [shape: bf16[256,768], index: 5, kind: input, shape index: {}]
  %s6 = inlined_call_operand.hbm [shape: bf16[256,256], index: 6, kind: input, shape index: {}]
  %s7 = inlined_call_operand.vmem [shape: f32[1,256], index: 7, kind: input, shape index: {}]
  %s8 = inlined_call_operand.hbm [shape: bf16[256,1024], index: 8, kind: input, shape index: {}]
  %s9 = inlined_call_operand.vmem [shape: f32[1,1024], index: 9, kind: input, shape index: {}]
  %s10 = inlined_call_operand.hbm [shape: bf16[1024,256], index: 10, kind: input, shape index: {}]
  %s11 = inlined_call_operand.vmem [shape: f32[1,256], index: 11, kind: input, shape index: {}]
  %s12 = inlined_call_operand.hbm [shape: f32[4,64,256], index: 12, kind: output, shape index: {}]
  %s13 = sld [smem:[#allocation0]]
  $region109: #{tpu_custom_call.1} parent=0
    _
  %s15 = ssub.s32 1, %s13
  %s16 = scalar_select 0, %s15, %s13
  $region1: #{tpu_custom_call.1} parent=0
    #allocation2 [shape = 'u8[262144]{0}', space=vmem, size = 0x40000, scoped, tag = 'input window, operand 0']
    #allocation3 [shape = 's32[2]{0}', space=sflag, size = 0x8, scoped, tag = 'scoped memory for tpu_custom_call.1']
    #allocation4 [shape = 's32[2]{0}', space=sflag, size = 0x8, scoped, tag = 'scoped memory for tpu_custom_call.1']
    #allocation5 [shape = 'u8[65536]{0}', space=vmem, size = 0x10000, scoped, tag = 'input window, operand 2, single buffered']
    #allocation6 [shape = 's32[1]{0}', space=sflag, size = 0x4, scoped, tag = 'scoped memory for tpu_custom_call.1']
    #allocation7 [shape = 'u8[65536]{0}', space=vmem, size = 0x10000, scoped, tag = 'input window, operand 3, single buffered']
    #allocation8 [shape = 'u8[393216]{0}', space=vmem, size = 0x60000, scoped, tag = 'input window, operand 5, single buffered']
    #allocation9 [shape = 's32[1]{0}', space=sflag, size = 0x4, scoped, tag = 'scoped memory for tpu_custom_call.1']
    #allocation10 [shape = 'u8[131072]{0}', space=vmem, size = 0x20000, scoped, tag = 'input window, operand 6, single buffered']
    #allocation11 [shape = 'u8[524288]{0}', space=vmem, size = 0x80000, scoped, tag = 'input window, operand 8, single buffered']
    #allocation12 [shape = 's32[1]{0}', space=sflag, size = 0x4, scoped, tag = 'scoped memory for tpu_custom_call.1']
    #allocation13 [shape = 'u8[524288]{0}', space=vmem, size = 0x80000, scoped, tag = 'input window, operand 10, single buffered']
    #allocation14 [shape = 'u8[262144]{0}', space=vmem, size = 0x40000, scoped, tag = 'output window, operand 0']
    %17 = vsyncpa [#allocation3], 0
    %s18 = scalar_lea.sflag [#allocation3], 1
    %19 = vsyncpa %s18, 0
    %20 = vsyncpa [#allocation6], 0
    %21 = vsyncpa [#allocation9], 0
    %22 = vsyncpa [#allocation12], 0
    %23 = vsyncpa [#allocation4], 0
    %s24 = scalar_lea.sflag [#allocation4], 1
    %25 = vsyncpa %s24, 0
    loop: start=0, step=1, limit=4
    $region2: #{tpu_custom_call.1} parent=1 // loop_pre_header
      _
    $region3: #{tpu_custom_call.1} parent=1 // loop_header
      %s27 = sphi 0, %s31
      %p28 = scmp.ge.s32.totalorder %s27, 4
      %s37 = sphi 0, %s39
      %s40 = sphi 0, %s37
      %s41 = sphi 0, %s40
      %s57 = sphi 0, %s41
      %s63 = sphi 0, %s65
      %s66 = sphi 0, %s63
      %s67 = sphi 0, %s66
      %s83 = sphi 0, %s67
      %s87 = sphi 0, %s87
      %s89 = sphi 0, %s87
      %s90 = sphi 0, %s89
      %s104 = sphi 0, %s90
      %s108 = sphi 0, %s108
      %s110 = sphi 0, %s108
      %s111 = sphi 0, %s110
      %s125 = sphi 0, %s111
      %s129 = sphi 0, %s129
      %s131 = sphi 0, %s129
      %s132 = sphi 0, %s131
      %s146 = sphi 0, %s132
      %s150 = sphi 0, %s150
      %s152 = sphi 0, %s150
      %s153 = sphi 0, %s152
      %s167 = sphi 0, %s153
      %s171 = sphi 0, %s171
      %s173 = sphi 0, %s171
      %s174 = sphi 0, %s173
      %s188 = sphi 0, %s174
      %s192 = sphi 0, %s192
      %s194 = sphi 0, %s192
      %s195 = sphi 0, %s194
      %s209 = sphi 0, %s195
      %s213 = sphi 0, %s213
      %s215 = sphi 0, %s213
      %s216 = sphi 0, %s215
      %s230 = sphi 0, %s216
      %s234 = sphi 0, %s234
      %s236 = sphi 0, %s234
      %s237 = sphi 0, %s236
      %s251 = sphi 0, %s237
      %s255 = sphi 0, %s255
      %s257 = sphi 0, %s255
      %s258 = sphi 0, %s257
      %s272 = sphi 0, %s258
      %s276 = sphi 0, %s276
      %s278 = sphi 0, %s276
      %s279 = sphi 0, %s278
      %s293 = sphi 0, %s279
      %s299 = sphi 0, %s301
      %s302 = sphi 0, %s299
      %s303 = sphi 0, %s302
      %s319 = sphi 0, %s303
    $region4: #{tpu_custom_call.1} parent=1 // loop_header_branch
      %30 = sbr.rel (%p28) target = $region8
    $region5: #{tpu_custom_call.1} parent=1 // loop_body
      %s32 = ssub.s32 %s27, 1
      %s33 = ssub.s32 %s27, 2
      %s34 = sadd.s32 %s27, 1
      %s35 = ssub.s32 %s27, %s34
      %p36 = scmp.eq.s32.totalorder %s35, 0
      %s38 = sadd.s32 %s37, 1
      %s39 = scalar_select %p36, %s37, %s38
      %p42 = pneg %p36
      %p43 = scmp.eq.s32.totalorder %s27, 1
      %p44 = por %p42, %p43
      %p45 = scmp.ne.s32.totalorder %s37, %s40
      %p46 = scmp.eq.s32.totalorder %s27, 0
      %p47 = por %p45, %p46
      %p48 = scmp.ne.s32.totalorder %s37, %s40
      %p49 = scmp.eq.s32.totalorder %s32, 1
      %p50 = por %p48, %p49
      %p51 = scmp.ne.s32.totalorder %s40, %s41
      %p52 = scmp.eq.s32.totalorder %s32, 0
      %p53 = por %p51, %p52
      %p54 = scmp.ne.s32.totalorder %s40, %s41
      %p55 = scmp.eq.s32.totalorder %s33, 1
      %p56 = por %p54, %p55
      %p58 = scmp.ne.s32.totalorder %s41, %s57
      %p59 = scmp.eq.s32.totalorder %s33, 0
      %p60 = por %p58, %p59
      %s61 = ssub.s32 %s27, %s34
      %p62 = scmp.eq.s32.totalorder %s61, 0
      %s64 = sadd.s32 %s63, 1
      %s65 = scalar_select %p62, %s63, %s64
      %p68 = pneg %p62
      %p69 = scmp.eq.s32.totalorder %s27, 1
      %p70 = por %p68, %p69
      %p71 = scmp.ne.s32.totalorder %s63, %s66
      %p72 = scmp.eq.s32.totalorder %s27, 0
      %p73 = por %p71, %p72
      %p74 = scmp.ne.s32.totalorder %s63, %s66
      %p75 = scmp.eq.s32.totalorder %s32, 1
      %p76 = por %p74, %p75
      %p77 = scmp.ne.s32.totalorder %s66, %s67
      %p78 = scmp.eq.s32.totalorder %s32, 0
      %p79 = por %p77, %p78
      %p80 = scmp.ne.s32.totalorder %s66, %s67
      %p81 = scmp.eq.s32.totalorder %s33, 1
      %p82 = por %p80, %p81
      %p84 = scmp.ne.s32.totalorder %s67, %s83
      %p85 = scmp.eq.s32.totalorder %s33, 0
      %p86 = por %p84, %p85
      %s88 = sadd.s32 %s87, 1
      %p91 = scmp.eq.s32.totalorder %s27, 1
      %p92 = scmp.ne.s32.totalorder %s87, %s89
      %p93 = scmp.eq.s32.totalorder %s27, 0
      %p94 = por %p92, %p93
      %p95 = scmp.ne.s32.totalorder %s87, %s89
      %p96 = scmp.eq.s32.totalorder %s32, 1
      %p97 = por %p95, %p96
      %p98 = scmp.ne.s32.totalorder %s89, %s90
      %p99 = scmp.eq.s32.totalorder %s32, 0
      %p100 = por %p98, %p99
      %p101 = scmp.ne.s32.totalorder %s89, %s90
      %p102 = scmp.eq.s32.totalorder %s33, 1
      %p103 = por %p101, %p102
      %p105 = scmp.ne.s32.totalorder %s90, %s104
      %p106 = scmp.eq.s32.totalorder %s33, 0
      %p107 = por %p105, %p106
      %s109 = sadd.s32 %s108, 1
      %p112 = scmp.eq.s32.totalorder %s27, 1
      %p113 = scmp.ne.s32.totalorder %s108, %s110
      %p114 = scmp.eq.s32.totalorder %s27, 0
      %p115 = por %p113, %p114
      %p116 = scmp.ne.s32.totalorder %s108, %s110
      %p117 = scmp.eq.s32.totalorder %s32, 1
      %p118 = por %p116, %p117
      %p119 = scmp.ne.s32.totalorder %s110, %s111
      %p120 = scmp.eq.s32.totalorder %s32, 0
      %p121 = por %p119, %p120
      %p122 = scmp.ne.s32.totalorder %s110, %s111
      %p123 = scmp.eq.s32.totalorder %s33, 1
      %p124 = por %p122, %p123
      %p126 = scmp.ne.s32.totalorder %s111, %s125
      %p127 = scmp.eq.s32.totalorder %s33, 0
      %p128 = por %p126, %p127
      %s130 = sadd.s32 %s129, 1
      %p133 = scmp.eq.s32.totalorder %s27, 1
      %p134 = scmp.ne.s32.totalorder %s129, %s131
      %p135 = scmp.eq.s32.totalorder %s27, 0
      %p136 = por %p134, %p135
      %p137 = scmp.ne.s32.totalorder %s129, %s131
      %p138 = scmp.eq.s32.totalorder %s32, 1
      %p139 = por %p137, %p138
      %p140 = scmp.ne.s32.totalorder %s131, %s132
      %p141 = scmp.eq.s32.totalorder %s32, 0
      %p142 = por %p140, %p141
      %p143 = scmp.ne.s32.totalorder %s131, %s132
      %p144 = scmp.eq.s32.totalorder %s33, 1
      %p145 = por %p143, %p144
      %p147 = scmp.ne.s32.totalorder %s132, %s146
      %p148 = scmp.eq.s32.totalorder %s33, 0
      %p149 = por %p147, %p148
      %s151 = sadd.s32 %s150, 1
      %p154 = scmp.eq.s32.totalorder %s27, 1
      %p155 = scmp.ne.s32.totalorder %s150, %s152
      %p156 = scmp.eq.s32.totalorder %s27, 0
      %p157 = por %p155, %p156
      %p158 = scmp.ne.s32.totalorder %s150, %s152
      %p159 = scmp.eq.s32.totalorder %s32, 1
      %p160 = por %p158, %p159
      %p161 = scmp.ne.s32.totalorder %s152, %s153
      %p162 = scmp.eq.s32.totalorder %s32, 0
      %p163 = por %p161, %p162
      %p164 = scmp.ne.s32.totalorder %s152, %s153
      %p165 = scmp.eq.s32.totalorder %s33, 1
      %p166 = por %p164, %p165
      %p168 = scmp.ne.s32.totalorder %s153, %s167
      %p169 = scmp.eq.s32.totalorder %s33, 0
      %p170 = por %p168, %p169
      %s172 = sadd.s32 %s171, 1
      %p175 = scmp.eq.s32.totalorder %s27, 1
      %p176 = scmp.ne.s32.totalorder %s171, %s173
      %p177 = scmp.eq.s32.totalorder %s27, 0
      %p178 = por %p176, %p177
      %p179 = scmp.ne.s32.totalorder %s171, %s173
      %p180 = scmp.eq.s32.totalorder %s32, 1
      %p181 = por %p179, %p180
      %p182 = scmp.ne.s32.totalorder %s173, %s174
      %p183 = scmp.eq.s32.totalorder %s32, 0
      %p184 = por %p182, %p183
      %p185 = scmp.ne.s32.totalorder %s173, %s174
      %p186 = scmp.eq.s32.totalorder %s33, 1
      %p187 = por %p185, %p186
      %p189 = scmp.ne.s32.totalorder %s174, %s188
      %p190 = scmp.eq.s32.totalorder %s33, 0
      %p191 = por %p189, %p190
      %s193 = sadd.s32 %s192, 1
      %p196 = scmp.eq.s32.totalorder %s27, 1
      %p197 = scmp.ne.s32.totalorder %s192, %s194
      %p198 = scmp.eq.s32.totalorder %s27, 0
      %p199 = por %p197, %p198
      %p200 = scmp.ne.s32.totalorder %s192, %s194
      %p201 = scmp.eq.s32.totalorder %s32, 1
      %p202 = por %p200, %p201
      %p203 = scmp.ne.s32.totalorder %s194, %s195
      %p204 = scmp.eq.s32.totalorder %s32, 0
      %p205 = por %p203, %p204
      %p206 = scmp.ne.s32.totalorder %s194, %s195
      %p207 = scmp.eq.s32.totalorder %s33, 1
      %p208 = por %p206, %p207
      %p210 = scmp.ne.s32.totalorder %s195, %s209
      %p211 = scmp.eq.s32.totalorder %s33, 0
      %p212 = por %p210, %p211
      %s214 = sadd.s32 %s213, 1
      %p217 = scmp.eq.s32.totalorder %s27, 1
      %p218 = scmp.ne.s32.totalorder %s213, %s215
      %p219 = scmp.eq.s32.totalorder %s27, 0
      %p220 = por %p218, %p219
      %p221 = scmp.ne.s32.totalorder %s213, %s215
      %p222 = scmp.eq.s32.totalorder %s32, 1
      %p223 = por %p221, %p222
      %p224 = scmp.ne.s32.totalorder %s215, %s216
      %p225 = scmp.eq.s32.totalorder %s32, 0
      %p226 = por %p224, %p225
      %p227 = scmp.ne.s32.totalorder %s215, %s216
      %p228 = scmp.eq.s32.totalorder %s33, 1
      %p229 = por %p227, %p228
      %p231 = scmp.ne.s32.totalorder %s216, %s230
      %p232 = scmp.eq.s32.totalorder %s33, 0
      %p233 = por %p231, %p232
      %s235 = sadd.s32 %s234, 1
      %p238 = scmp.eq.s32.totalorder %s27, 1
      %p239 = scmp.ne.s32.totalorder %s234, %s236
      %p240 = scmp.eq.s32.totalorder %s27, 0
      %p241 = por %p239, %p240
      %p242 = scmp.ne.s32.totalorder %s234, %s236
      %p243 = scmp.eq.s32.totalorder %s32, 1
      %p244 = por %p242, %p243
      %p245 = scmp.ne.s32.totalorder %s236, %s237
      %p246 = scmp.eq.s32.totalorder %s32, 0
      %p247 = por %p245, %p246
      %p248 = scmp.ne.s32.totalorder %s236, %s237
      %p249 = scmp.eq.s32.totalorder %s33, 1
      %p250 = por %p248, %p249
      %p252 = scmp.ne.s32.totalorder %s237, %s251
      %p253 = scmp.eq.s32.totalorder %s33, 0
      %p254 = por %p252, %p253
      %s256 = sadd.s32 %s255, 1
      %p259 = scmp.eq.s32.totalorder %s27, 1
      %p260 = scmp.ne.s32.totalorder %s255, %s257
      %p261 = scmp.eq.s32.totalorder %s27, 0
      %p262 = por %p260, %p261
      %p263 = scmp.ne.s32.totalorder %s255, %s257
      %p264 = scmp.eq.s32.totalorder %s32, 1
      %p265 = por %p263, %p264
      %p266 = scmp.ne.s32.totalorder %s257, %s258
      %p267 = scmp.eq.s32.totalorder %s32, 0
      %p268 = por %p266, %p267
      %p269 = scmp.ne.s32.totalorder %s257, %s258
      %p270 = scmp.eq.s32.totalorder %s33, 1
      %p271 = por %p269, %p270
      %p273 = scmp.ne.s32.totalorder %s258, %s272
      %p274 = scmp.eq.s32.totalorder %s33, 0
      %p275 = por %p273, %p274
      %s277 = sadd.s32 %s276, 1
      %p280 = scmp.eq.s32.totalorder %s27, 1
      %p281 = scmp.ne.s32.totalorder %s276, %s278
      %p282 = scmp.eq.s32.totalorder %s27, 0
      %p283 = por %p281, %p282
      %p284 = scmp.ne.s32.totalorder %s276, %s278
      %p285 = scmp.eq.s32.totalorder %s32, 1
      %p286 = por %p284, %p285
      %p287 = scmp.ne.s32.totalorder %s278, %s279
      %p288 = scmp.eq.s32.totalorder %s32, 0
      %p289 = por %p287, %p288
      %p290 = scmp.ne.s32.totalorder %s278, %s279
      %p291 = scmp.eq.s32.totalorder %s33, 1
      %p292 = por %p290, %p291
      %p294 = scmp.ne.s32.totalorder %s279, %s293
      %p295 = scmp.eq.s32.totalorder %s33, 0
      %p296 = por %p294, %p295
      %s297 = ssub.s32 %s27, %s34
      %p298 = scmp.eq.s32.totalorder %s297, 0
      %s300 = sadd.s32 %s299, 1
      %s301 = scalar_select %p298, %s299, %s300
      %p304 = pneg %p298
      %p305 = scmp.eq.s32.totalorder %s27, 1
      %p306 = por %p304, %p305
      %p307 = scmp.ne.s32.totalorder %s299, %s302
      %p308 = scmp.eq.s32.totalorder %s27, 0
      %p309 = por %p307, %p308
      %p310 = scmp.ne.s32.totalorder %s299, %s302
      %p311 = scmp.eq.s32.totalorder %s32, 1
      %p312 = por %p310, %p311
      %p313 = scmp.ne.s32.totalorder %s302, %s303
      %p314 = scmp.eq.s32.totalorder %s32, 0
      %p315 = por %p313, %p314
      %p316 = scmp.ne.s32.totalorder %s302, %s303
      %p317 = scmp.eq.s32.totalorder %s33, 1
      %p318 = por %p316, %p317
      %p320 = scmp.ne.s32.totalorder %s303, %s319
      %p321 = scmp.eq.s32.totalorder %s33, 0
      %p322 = por %p320, %p321
      %p323 = scmp.le.s32.totalorder 1, %s27
      %p324 = scmp.lt.s32.totalorder %s27, 3
      %p325 = pnand %p323, %p324
      %p326 = pneg %p325
      // Predicated region
      $region9: #{tpu_custom_call.1} parent=5 // pred_check
        _
      $region10: #{tpu_custom_call.1} parent=5 // pred_check_branch
        %328 = sbr.rel (%p325) target = $region12
      $region11: #{tpu_custom_call.1} parent=5 // pred_region
        %s329 = ssub.s32 %s27, 1
        // Predicated region
        $region13: #{tpu_custom_call.1} parent=11 // pred_check
          %p330 = pneg %p100
        $region14: #{tpu_custom_call.1} parent=11 // pred_check_branch
          %332 = sbr.rel (%p330) target = $region16
        $region15: #{tpu_custom_call.1} parent=11 // pred_region
          %s334 = ssub.s32 2048, 2048
          %335 = vsyncadd [#allocation6], %s334
          %s336 = sshll.u32 [#allocation5], 4
          %s337 = int_to_ptr.vmem [resolvable:$true] %s336
          %342 = dma.hbm_to_vmem [thread:$0]  %s2, 2048, %s337, [#allocation6], 128, 128, 8
        $region16: #{tpu_custom_call.1} parent=11 // pred_fallthru
          _
        // Predicated region
        $region17: #{tpu_custom_call.1} parent=11 // pred_check
          %p343 = pneg %p121
        $region18: #{tpu_custom_call.1} parent=11 // pred_check_branch
          %345 = sbr.rel (%p343) target = $region20
        $region19: #{tpu_custom_call.1} parent=11 // pred_region
          %s347 = ssub.s32 2048, 2048
          %348 = vsyncadd [#allocation6], %s347
          %s349 = sshll.u32 [#allocation7], 4
          %s350 = int_to_ptr.vmem [resolvable:$true] %s349
          %355 = dma.hbm_to_vmem [thread:$0]  %s3, 2048, %s350, [#allocation6], 128, 128, 8
        $region20: #{tpu_custom_call.1} parent=11 // pred_fallthru
          _
        // Predicated region
        $region21: #{tpu_custom_call.1} parent=11 // pred_check
          %p356 = pneg %p142
        $region22: #{tpu_custom_call.1} parent=11 // pred_check_branch
          %358 = sbr.rel (%p356) target = $region24
        $region23: #{tpu_custom_call.1} parent=11 // pred_region
          _
        $region24: #{tpu_custom_call.1} parent=11 // pred_fallthru
          _
        // Predicated region
        $region25: #{tpu_custom_call.1} parent=11 // pred_check
          %p359 = pneg %p163
        $region26: #{tpu_custom_call.1} parent=11 // pred_check_branch
          %361 = sbr.rel (%p359) target = $region28
        $region27: #{tpu_custom_call.1} parent=11 // pred_region
          %s363 = ssub.s32 12288, 12288
          %364 = vsyncadd [#allocation9], %s363
          %s365 = sshll.u32 [#allocation8], 4
          %s366 = int_to_ptr.vmem [resolvable:$true] %s365
          %371 = dma.hbm_to_vmem [thread:$0]  %s5, 12288, %s366, [#allocation9], 384, 384, 24
        $region28: #{tpu_custom_call.1} parent=11 // pred_fallthru
          _
        // Predicated region
        $region29: #{tpu_custom_call.1} parent=11 // pred_check
          %p372 = pneg %p184
        $region30: #{tpu_custom_call.1} parent=11 // pred_check_branch
          %374 = sbr.rel (%p372) target = $region32
        $region31: #{tpu_custom_call.1} parent=11 // pred_region
          %s376 = ssub.s32 4096, 4096
          %377 = vsyncadd [#allocation9], %s376
          %s378 = sshll.u32 [#allocation10], 4
          %s379 = int_to_ptr.vmem [resolvable:$true] %s378
          %384 = dma.hbm_to_vmem [thread:$0]  %s6, 4096, %s379, [#allocation9], 128, 128, 8
        $region32: #{tpu_custom_call.1} parent=11 // pred_fallthru
          _
        // Predicated region
        $region33: #{tpu_custom_call.1} parent=11 // pred_check
          %p385 = pneg %p205
        $region34: #{tpu_custom_call.1} parent=11 // pred_check_branch
          %387 = sbr.rel (%p385) target = $region36
        $region35: #{tpu_custom_call.1} parent=11 // pred_region
          _
        $region36: #{tpu_custom_call.1} parent=11 // pred_fallthru
          _
        // Predicated region
        $region37: #{tpu_custom_call.1} parent=11 // pred_check
          %p388 = pneg %p226
        $region38: #{tpu_custom_call.1} parent=11 // pred_check_branch
          %390 = sbr.rel (%p388) target = $region40
        $region39: #{tpu_custom_call.1} parent=11 // pred_region
          %s392 = ssub.s32 16384, 16384
          %393 = vsyncadd [#allocation12], %s392
          %s394 = sshll.u32 [#allocation11], 4
          %s395 = int_to_ptr.vmem [resolvable:$true] %s394
          %400 = dma.hbm_to_vmem [thread:$0]  %s8, 16384, %s395, [#allocation12], 512, 512, 32
        $region40: #{tpu_custom_call.1} parent=11 // pred_fallthru
          _
        // Predicated region
        $region41: #{tpu_custom_call.1} parent=11 // pred_check
          %p401 = pneg %p247
        $region42: #{tpu_custom_call.1} parent=11 // pred_check_branch
          %403 = sbr.rel (%p401) target = $region44
        $region43: #{tpu_custom_call.1} parent=11 // pred_region
          _
        $region44: #{tpu_custom_call.1} parent=11 // pred_fallthru
          _
        // Predicated region
        $region45: #{tpu_custom_call.1} parent=11 // pred_check
          %p404 = pneg %p268
        $region46: #{tpu_custom_call.1} parent=11 // pred_check_branch
          %406 = sbr.rel (%p404) target = $region48
        $region47: #{tpu_custom_call.1} parent=11 // pred_region
          %s408 = ssub.s32 16384, 16384
          %409 = vsyncadd [#allocation12], %s408
          %s410 = sshll.u32 [#allocation13], 4
          %s411 = int_to_ptr.vmem [resolvable:$true] %s410
          %416 = dma.hbm_to_vmem [thread:$0]  %s10, 16384, %s411, [#allocation12], 128, 128, 8
        $region48: #{tpu_custom_call.1} parent=11 // pred_fallthru
          _
        // Predicated region
        $region49: #{tpu_custom_call.1} parent=11 // pred_check
          %p417 = pneg %p289
        $region50: #{tpu_custom_call.1} parent=11 // pred_check_branch
          %419 = sbr.rel (%p417) target = $region52
        $region51: #{tpu_custom_call.1} parent=11 // pred_region
          _
        $region52: #{tpu_custom_call.1} parent=11 // pred_fallthru
          _
      $region12: #{tpu_custom_call.1} parent=5 // pred_fallthru
        _
      %p420 = scmp.lt.s32.totalorder %s27, 2
      // Predicated region
      $region53: #{tpu_custom_call.1} parent=5 // pred_check
        %p421 = pneg %p420
      $region54: #{tpu_custom_call.1} parent=5 // pred_check_branch
        %423 = sbr.rel (%p421) target = $region56
      $region55: #{tpu_custom_call.1} parent=5 // pred_region
        // Predicated region
        $region57: #{tpu_custom_call.1} parent=55 // pred_check
          %p424 = pneg %p47
        $region58: #{tpu_custom_call.1} parent=55 // pred_check_branch
          %426 = sbr.rel (%p424) target = $region60
        $region59: #{tpu_custom_call.1} parent=55 // pred_region
          %s427 = sand.u32 %s37, 1
          %s428 = scalar_lea.sflag [#allocation3], %s427
          %s429 = sand.u32 %s37, 1
          %s430 = smul.addr %s429, 256
          %s431 = scalar_lea.vmem [#allocation2], %s430
          %s432 = smul.u32 2, %s27
          %s434 = ssub.s32 4096, 4096
          %435 = vsyncadd %s428, %s434
          %s436 = smul.addr %s432, 16
          %s437 = smul.addr %s436, 128
          %s438 = scalar_lea.hbm %s0, %s437
          %s439 = sshll.u32 %s431, 4
          %s440 = int_to_ptr.vmem [resolvable:$true] %s439
          %445 = dma.hbm_to_vmem [thread:$0]  %s438, 4096, %s440, %s428, 256, 256, 16
        $region60: #{tpu_custom_call.1} parent=55 // pred_fallthru
          _
        // Predicated region
        $region61: #{tpu_custom_call.1} parent=55 // pred_check
          %p446 = pneg %p73
        $region62: #{tpu_custom_call.1} parent=55 // pred_check_branch
          %448 = sbr.rel (%p446) target = $region64
        $region63: #{tpu_custom_call.1} parent=55 // pred_region
          %s449 = smul.u32 2, %s27
          %p450 = scmp.lt.s32.totalorder %s449, 3
          %s451 = scalar_select %p450, %s449, 3
          %s452 = smul.addr %s451, 2
          %s453 = smul.addr %s452, 8
          %s454 = scalar_lea.vmem %s1, %s453
          %s455 = smul.u32 2, %s27
        $region64: #{tpu_custom_call.1} parent=55 // pred_fallthru
          _
      $region56: #{tpu_custom_call.1} parent=5 // pred_fallthru
        _
      %p456 = scmp.le.s32.totalorder 1, %s27
      %p457 = scmp.lt.s32.totalorder %s27, 3
      %p458 = pnand %p456, %p457
      %p459 = pneg %p458
      // Predicated region
      $region65: #{tpu_custom_call.1} parent=5 // pred_check
        _
      $region66: #{tpu_custom_call.1} parent=5 // pred_check_branch
        %461 = sbr.rel (%p458) target = $region68
      $region67: #{tpu_custom_call.1} parent=5 // pred_region
        %s462 = ssub.s32 %s27, 1
        %s463 = sand.u32 %s40, 1
        %s464 = scalar_lea.sflag [#allocation3], %s463
        %s465 = sand.u32 %s40, 1
        %s466 = smul.addr %s465, 256
        %s467 = scalar_lea.vmem [#allocation2], %s466
        // Predicated region
        $region69: #{tpu_custom_call.1} parent=67 // pred_check
          %p468 = pneg %p53
        $region70: #{tpu_custom_call.1} parent=67 // pred_check_branch
          %470 = sbr.rel (%p468) target = $region72
        $region71: #{tpu_custom_call.1} parent=67 // pred_region
          %471 = dma.done %s464, 4096
        $region72: #{tpu_custom_call.1} parent=67 // pred_fallthru
          _
        // Predicated region
        $region73: #{tpu_custom_call.1} parent=67 // pred_check
          %p472 = pneg %p100
        $region74: #{tpu_custom_call.1} parent=67 // pred_check_branch
          %474 = sbr.rel (%p472) target = $region76
        $region75: #{tpu_custom_call.1} parent=67 // pred_region
          %475 = dma.done [#allocation6], 2048
        $region76: #{tpu_custom_call.1} parent=67 // pred_fallthru
          _
        // Predicated region
        $region77: #{tpu_custom_call.1} parent=67 // pred_check
          %p476 = pneg %p121
        $region78: #{tpu_custom_call.1} parent=67 // pred_check_branch
          %478 = sbr.rel (%p476) target = $region80
        $region79: #{tpu_custom_call.1} parent=67 // pred_region
          %479 = dma.done [#allocation6], 2048
        $region80: #{tpu_custom_call.1} parent=67 // pred_fallthru
          _
        // Predicated region
        $region81: #{tpu_custom_call.1} parent=67 // pred_check
          %p480 = pneg %p163
        $region82: #{tpu_custom_call.1} parent=67 // pred_check_branch
          %482 = sbr.rel (%p480) target = $region84
        $region83: #{tpu_custom_call.1} parent=67 // pred_region
          %483 = dma.done [#allocation9], 12288
        $region84: #{tpu_custom_call.1} parent=67 // pred_fallthru
          _
        // Predicated region
        $region85: #{tpu_custom_call.1} parent=67 // pred_check
          %p484 = pneg %p184
        $region86: #{tpu_custom_call.1} parent=67 // pred_check_branch
          %486 = sbr.rel (%p484) target = $region88
        $region87: #{tpu_custom_call.1} parent=67 // pred_region
          %487 = dma.done [#allocation9], 4096
        $region88: #{tpu_custom_call.1} parent=67 // pred_fallthru
          _
        // Predicated region
        $region89: #{tpu_custom_call.1} parent=67 // pred_check
          %p488 = pneg %p226
        $region90: #{tpu_custom_call.1} parent=67 // pred_check_branch
          %490 = sbr.rel (%p488) target = $region92
        $region91: #{tpu_custom_call.1} parent=67 // pred_region
          %491 = dma.done [#allocation12], 16384
        $region92: #{tpu_custom_call.1} parent=67 // pred_fallthru
          _
        // Predicated region
        $region93: #{tpu_custom_call.1} parent=67 // pred_check
          %p492 = pneg %p268
        $region94: #{tpu_custom_call.1} parent=67 // pred_check_branch
          %494 = sbr.rel (%p492) target = $region96
        $region95: #{tpu_custom_call.1} parent=67 // pred_region
          %495 = dma.done [#allocation12], 16384
        $region96: #{tpu_custom_call.1} parent=67 // pred_fallthru
          _
        %s496 = sand.u32 %s40, 1
        %s497 = scalar_lea.sflag [#allocation3], %s496
        %s498 = sand.u32 %s40, 1
        %s499 = smul.addr %s498, 256
        %s500 = scalar_lea.vmem [#allocation2], %s499
        %p501 = pneg %p53
        %p502 = pneg %p50
        %s503 = smul.u32 2, %s32
        %p504 = scmp.lt.s32.totalorder %s503, 3
        %s505 = scalar_select %p504, %s503, 3
        %s506 = smul.addr %s505, 2
        %s507 = smul.addr %s506, 8
        %s508 = scalar_lea.vmem %s1, %s507
        %p509 = pneg %p79
        %p510 = pneg %p76
        %p511 = pneg %p100
        %p512 = pneg %p97
        %p513 = pneg %p121
        %p514 = pneg %p118
        %p515 = pneg %p142
        %p516 = pneg %p139
        %p517 = pneg %p163
        %p518 = pneg %p160
        %p519 = pneg %p184
        %p520 = pneg %p181
        %p521 = pneg %p205
        %p522 = pneg %p202
        %p523 = pneg %p226
        %p524 = pneg %p223
        %p525 = pneg %p247
        %p526 = pneg %p244
        %p527 = pneg %p268
        %p528 = pneg %p265
        %p529 = pneg %p289
        %p530 = pneg %p286
        %p531 = pneg %p315
        %p532 = pneg %p312
        %s533 = sand.u32 %s302, 1
        %s534 = scalar_lea.sflag [#allocation4], %s533
        %s535 = sand.u32 %s302, 1
        %s536 = smul.addr %s535, 256
        %s537 = scalar_lea.vmem [#allocation14], %s536
        %s538 = smul.u32 2, %s32
        %s539 = smul.u32 2, %s32
        %p540 = scmp.lt.s32.totalorder %s539, 3
        %s541 = scalar_select %p540, %s539, 3
        %s542 = smul.addr %s541, 2
        %s543 = smul.addr %s542, 8
        %s544 = scalar_lea.vmem %s1, %s543
        %s545 = smul.u32 2, %s32
        %s546 = smul.u32 2, %s32
        %v548 = vld [vmem:[%s4] sm:$0x3]
        %v549 = vld [vmem:[%s7] sm:$0x3]
        %v550 = vld [vmem:[#allocation5] sm:$0xff]
        %v551 = vld [vmem:[#allocation5 + $0x8] sm:$0xff]
        %v552 = vld [vmem:[#allocation5 + $0x10] sm:$0xff]
        %v553 = vld [vmem:[#allocation5 + $0x18] sm:$0xff]
        %v554 = vld [vmem:[#allocation5 + $0x20] sm:$0xff]
        %v555 = vld [vmem:[#allocation5 + $0x28] sm:$0xff]
        %v556 = vld [vmem:[#allocation5 + $0x30] sm:$0xff]
        %v557 = vld [vmem:[#allocation5 + $0x38] sm:$0xff]
        %v558 = vld [vmem:[#allocation5 + $0x40] sm:$0xff]
        %v559 = vld [vmem:[#allocation5 + $0x48] sm:$0xff]
        %v560 = vld [vmem:[#allocation5 + $0x50] sm:$0xff]
        %v561 = vld [vmem:[#allocation5 + $0x58] sm:$0xff]
        %v562 = vld [vmem:[#allocation5 + $0x60] sm:$0xff]
        %v563 = vld [vmem:[#allocation5 + $0x68] sm:$0xff]
        %v564 = vld [vmem:[#allocation5 + $0x70] sm:$0xff]
        %v565 = vld [vmem:[#allocation5 + $0x78] sm:$0xff]
        %v566 = vld [vmem:[#allocation7] sm:$0xff]
        %v567 = vld [vmem:[#allocation7 + $0x8] sm:$0xff]
        %v568 = vld [vmem:[#allocation7 + $0x10] sm:$0xff]
        %v569 = vld [vmem:[#allocation7 + $0x18] sm:$0xff]
        %v570 = vld [vmem:[#allocation7 + $0x20] sm:$0xff]
        %v571 = vld [vmem:[#allocation7 + $0x28] sm:$0xff]
        %v572 = vld [vmem:[#allocation7 + $0x30] sm:$0xff]
        %v573 = vld [vmem:[#allocation7 + $0x38] sm:$0xff]
        %v574 = vld [vmem:[#allocation7 + $0x40] sm:$0xff]
        %v575 = vld [vmem:[#allocation7 + $0x48] sm:$0xff]
        %v576 = vld [vmem:[#allocation7 + $0x50] sm:$0xff]
        %v577 = vld [vmem:[#allocation7 + $0x58] sm:$0xff]
        %v578 = vld [vmem:[#allocation7 + $0x60] sm:$0xff]
        %v579 = vld [vmem:[#allocation7 + $0x68] sm:$0xff]
        %v580 = vld [vmem:[#allocation7 + $0x70] sm:$0xff]
        %v581 = vld [vmem:[#allocation7 + $0x78] sm:$0xff]
        %v582 = vld [vmem:[%s544] sm:$0x3f]
        %v583 = vld [vmem:[%s544 + $0x8] sm:$0x3f]
        %v584 = vld [vmem:[%s467] sm:$0xff]
        %v585 = vld [vmem:[%s467 + $0x8] sm:$0xff]
        %v586 = vld [vmem:[%s467 + $0x10] sm:$0xff]
        %v587 = vld [vmem:[%s467 + $0x18] sm:$0xff]
        %v588 = vld [vmem:[%s467 + $0x20] sm:$0xff]
        %v589 = vld [vmem:[%s467 + $0x28] sm:$0xff]
        %v590 = vld [vmem:[%s467 + $0x30] sm:$0xff]
        %v591 = vld [vmem:[%s467 + $0x38] sm:$0xff]
        %v592 = vld [vmem:[%s467 + $0x40] sm:$0xff]
        %v593 = vld [vmem:[%s467 + $0x48] sm:$0xff]
        %v594 = vld [vmem:[%s467 + $0x50] sm:$0xff]
        %v595 = vld [vmem:[%s467 + $0x58] sm:$0xff]
        %v596 = vld [vmem:[%s467 + $0x60] sm:$0xff]
        %v597 = vld [vmem:[%s467 + $0x68] sm:$0xff]
        %v598 = vld [vmem:[%s467 + $0x70] sm:$0xff]
        %v599 = vld [vmem:[%s467 + $0x78] sm:$0xff]
        %v600 = vadd.f32 %v584, %v585
        %601 = vadd.xlane.f32.xlu0 %v600
        %v602 = vpop.xlane.xlu0 %601
        %v603 = vadd.f32 %v586, %v587
        %604 = vadd.xlane.f32.xlu0 %v603
        %v605 = vpop.xlane.xlu0 %604
        %v606 = vadd.f32 %v588, %v589
        %607 = vadd.xlane.f32.xlu0 %v606
        %v608 = vpop.xlane.xlu0 %607
        %v609 = vadd.f32 %v590, %v591
        %610 = vadd.xlane.f32.xlu0 %v609
        %v611 = vpop.xlane.xlu0 %610
        %v612 = vadd.f32 %v592, %v593
        %613 = vadd.xlane.f32.xlu0 %v612
        %v614 = vpop.xlane.xlu0 %613
        %v615 = vadd.f32 %v594, %v595
        %616 = vadd.xlane.f32.xlu0 %v615
        %v617 = vpop.xlane.xlu0 %616
        %v618 = vadd.f32 %v596, %v597
        %619 = vadd.xlane.f32.xlu0 %v618
        %v620 = vpop.xlane.xlu0 %619
        %v621 = vadd.f32 %v598, %v599
        %622 = vadd.xlane.f32.xlu0 %v621
        %v623 = vpop.xlane.xlu0 %622
        %v624 = vrcp.pop 256.0
        %v625 = vmul.f32 %v602, %v624
        %v626 = vmul.f32 %v605, %v624
        %v627 = vmul.f32 %v608, %v624
        %v628 = vmul.f32 %v611, %v624
        %v629 = vmul.f32 %v614, %v624
        %v630 = vmul.f32 %v617, %v624
        %v631 = vmul.f32 %v620, %v624
        %v632 = vmul.f32 %v623, %v624
        %v633 = vsub.f32 %v584, %v625
        %v634 = vsub.f32 %v585, %v625
        %v635 = vsub.f32 %v586, %v626
        %v636 = vsub.f32 %v587, %v626
        %v637 = vsub.f32 %v588, %v627
        %v638 = vsub.f32 %v589, %v627
        %v639 = vsub.f32 %v590, %v628
        %v640 = vsub.f32 %v591, %v628
        %v641 = vsub.f32 %v592, %v629
        %v642 = vsub.f32 %v593, %v629
        %v643 = vsub.f32 %v594, %v630
        %v644 = vsub.f32 %v595, %v630
        %v645 = vsub.f32 %v596, %v631
        %v646 = vsub.f32 %v597, %v631
        %v647 = vsub.f32 %v598, %v632
        %v648 = vsub.f32 %v599, %v632
        %v649 = vmul.f32 %v633, %v633
        %v650 = vmul.f32 %v634, %v634
        %v651 = vmul.f32 %v635, %v635
        %v652 = vmul.f32 %v636, %v636
        %v653 = vmul.f32 %v637, %v637
        %v654 = vmul.f32 %v638, %v638
        %v655 = vmul.f32 %v639, %v639
        %v656 = vmul.f32 %v640, %v640
        %v657 = vmul.f32 %v641, %v641
        %v658 = vmul.f32 %v642, %v642
        %v659 = vmul.f32 %v643, %v643
        %v660 = vmul.f32 %v644, %v644
        %v661 = vmul.f32 %v645, %v645
        %v662 = vmul.f32 %v646, %v646
        %v663 = vmul.f32 %v647, %v647
        %v664 = vmul.f32 %v648, %v648
        %v665 = vadd.f32 %v649, %v650
        %666 = vadd.xlane.f32.xlu0 %v665
        %v667 = vpop.xlane.xlu0 %666
        %v668 = vadd.f32 %v651, %v652
        %669 = vadd.xlane.f32.xlu0 %v668
        %v670 = vpop.xlane.xlu0 %669
        %v671 = vadd.f32 %v653, %v654
        %672 = vadd.xlane.f32.xlu0 %v671
        %v673 = vpop.xlane.xlu0 %672
        %v674 = vadd.f32 %v655, %v656
        %675 = vadd.xlane.f32.xlu0 %v674
        %v676 = vpop.xlane.xlu0 %675
        %v677 = vadd.f32 %v657, %v658
        %678 = vadd.xlane.f32.xlu0 %v677
        %v679 = vpop.xlane.xlu0 %678
        %v680 = vadd.f32 %v659, %v660
        %681 = vadd.xlane.f32.xlu0 %v680
        %v682 = vpop.xlane.xlu0 %681
        %v683 = vadd.f32 %v661, %v662
        %684 = vadd.xlane.f32.xlu0 %v683
        %v685 = vpop.xlane.xlu0 %684
        %v686 = vadd.f32 %v663, %v664
        %687 = vadd.xlane.f32.xlu0 %v686
        %v688 = vpop.xlane.xlu0 %687
        %v689 = vmul.f32 %v667, %v624
        %v690 = vmul.f32 %v670, %v624
        %v691 = vmul.f32 %v673, %v624
        %v692 = vmul.f32 %v676, %v624
        %v693 = vmul.f32 %v679, %v624
        %v694 = vmul.f32 %v682, %v624
        %v695 = vmul.f32 %v685, %v624
        %v696 = vmul.f32 %v688, %v624
        %v697 = vadd.f32 %v689, 1e-05
        %v698 = vadd.f32 %v690, 1e-05
        %v699 = vadd.f32 %v691, 1e-05
        %v700 = vadd.f32 %v692, 1e-05
        %v701 = vadd.f32 %v693, 1e-05
        %v702 = vadd.f32 %v694, 1e-05
        %v703 = vadd.f32 %v695, 1e-05
        %v704 = vadd.f32 %v696, 1e-05
        %v705 = vrsqrt.pop %v697
        %v706 = vrsqrt.pop %v698
        %v707 = vrsqrt.pop %v699
        %v708 = vrsqrt.pop %v700
        %v709 = vrsqrt.pop %v701
        %v710 = vrsqrt.pop %v702
        %v711 = vrsqrt.pop %v703
        %v712 = vrsqrt.pop %v704
        %v713 = vmul.f32 %v633, %v705
        %v714 = vmul.f32 %v634, %v705
        %v715 = vmul.f32 %v635, %v706
        %v716 = vmul.f32 %v636, %v706
        %v717 = vmul.f32 %v637, %v707
        %v718 = vmul.f32 %v638, %v707
        %v719 = vmul.f32 %v639, %v708
        %v720 = vmul.f32 %v640, %v708
        %v721 = vmul.f32 %v641, %v709
        %v722 = vmul.f32 %v642, %v709
        %v723 = vmul.f32 %v643, %v710
        %v724 = vmul.f32 %v644, %v710
        %v725 = vmul.f32 %v645, %v711
        %v726 = vmul.f32 %v646, %v711
        %v727 = vmul.f32 %v647, %v712
        %v728 = vmul.f32 %v648, %v712
        %v730 = vlaneseq
        %v731 = vshrl.u32 %v730, 7
        %v732 = vsub.s32 0, %v731
        %v733 = vrot.slane %v548, %v732
        %v734 = vlaneseq
        %v735 = vshrl.u32 %v734, 7
        %v736 = vsub.s32 1, %v735
        %v737 = vrot.slane %v548, %v736
        %v740 = vmul.f32 %v713, %v733
        %v741 = vmul.f32 %v714, %v737
        %v742 = vmul.f32 %v715, %v733
        %v743 = vmul.f32 %v716, %v737
        %v744 = vmul.f32 %v717, %v733
        %v745 = vmul.f32 %v718, %v737
        %v746 = vmul.f32 %v719, %v733
        %v747 = vmul.f32 %v720, %v737
        %v748 = vmul.f32 %v721, %v733
        %v749 = vmul.f32 %v722, %v737
        %v750 = vmul.f32 %v723, %v733
        %v751 = vmul.f32 %v724, %v737
        %v752 = vmul.f32 %v725, %v733
        %v753 = vmul.f32 %v726, %v737
        %v754 = vmul.f32 %v727, %v733
        %v755 = vmul.f32 %v728, %v737
        %v756 = vadd.f32 %v582, 1.0
        %v757 = vadd.f32 %v583, 1.0
        %v758 = vlaneseq
        %v759 = vshrl.u32 %v758, 7
        %v760 = vsub.s32 1, %v759
        %v761 = vrot.slane %v756, %v760
        %v762 = vlaneseq
        %v763 = vshrl.u32 %v762, 7
        %v764 = vsub.s32 1, %v763
        %v765 = vrot.slane %v757, %v764
        %v766 = vmul.f32 %v740, %v761
        %v767 = vmul.f32 %v741, %v765
        %v768 = vmul.f32 %v742, %v761
        %v769 = vmul.f32 %v743, %v765
        %v770 = vmul.f32 %v744, %v761
        %v771 = vmul.f32 %v745, %v765
        %v772 = vmul.f32 %v746, %v761
        %v773 = vmul.f32 %v747, %v765
        %v774 = vmul.f32 %v748, %v761
        %v775 = vmul.f32 %v749, %v765
        %v776 = vmul.f32 %v750, %v761
        %v777 = vmul.f32 %v751, %v765
        %v778 = vmul.f32 %v752, %v761
        %v779 = vmul.f32 %v753, %v765
        %v780 = vmul.f32 %v754, %v761
        %v781 = vmul.f32 %v755, %v765
        %v782 = vlaneseq
        %v783 = vshrl.u32 %v782, 7
        %v784 = vsub.s32 0, %v783
        %v785 = vrot.slane %v582, %v784
        %v786 = vlaneseq
        %v787 = vshrl.u32 %v786, 7
        %v788 = vsub.s32 0, %v787
        %v789 = vrot.slane %v583, %v788
        %v790 = vadd.f32 %v766, %v785
        %v791 = vadd.f32 %v767, %v789
        %v792 = vadd.f32 %v768, %v785
        %v793 = vadd.f32 %v769, %v789
        %v794 = vadd.f32 %v770, %v785
        %v795 = vadd.f32 %v771, %v789
        %v796 = vadd.f32 %v772, %v785
        %v797 = vadd.f32 %v773, %v789
        %v798 = vadd.f32 %v774, %v785
        %v799 = vadd.f32 %v775, %v789
        %v800 = vadd.f32 %v776, %v785
        %v801 = vadd.f32 %v777, %v789
        %v802 = vadd.f32 %v778, %v785
        %v803 = vadd.f32 %v779, %v789
        %v804 = vadd.f32 %v780, %v785
        %v805 = vadd.f32 %v781, %v789
        %s806 = scalar_lea.vmem %s544, 16
        %v807 = vld [vmem:[%s806] sm:$0x3f]
        %v808 = vld [vmem:[%s806 + $0x8] sm:$0x3f]
        %s809 = scalar_lea.vmem %s467, 128 [#allocation2]
        %v810 = vld [vmem:[%s809] sm:$0xff]
        %v811 = vld [vmem:[%s809 + $0x8] sm:$0xff]
        %v812 = vld [vmem:[%s809 + $0x10] sm:$0xff]
        %v813 = vld [vmem:[%s809 + $0x18] sm:$0xff]
        %v814 = vld [vmem:[%s809 + $0x20] sm:$0xff]
        %v815 = vld [vmem:[%s809 + $0x28] sm:$0xff]
        %v816 = vld [vmem:[%s809 + $0x30] sm:$0xff]
        %v817 = vld [vmem:[%s809 + $0x38] sm:$0xff]
        %v818 = vld [vmem:[%s809 + $0x40] sm:$0xff]
        %v819 = vld [vmem:[%s809 + $0x48] sm:$0xff]
        %v820 = vld [vmem:[%s809 + $0x50] sm:$0xff]
        %v821 = vld [vmem:[%s809 + $0x58] sm:$0xff]
        %v822 = vld [vmem:[%s809 + $0x60] sm:$0xff]
        %v823 = vld [vmem:[%s809 + $0x68] sm:$0xff]
        %v824 = vld [vmem:[%s809 + $0x70] sm:$0xff]
        %v825 = vld [vmem:[%s809 + $0x78] sm:$0xff]
        %v826 = vadd.f32 %v810, %v811
        %827 = vadd.xlane.f32.xlu0 %v826
        %v828 = vpop.xlane.xlu0 %827
        %v829 = vadd.f32 %v812, %v813
        %830 = vadd.xlane.f32.xlu0 %v829
        %v831 = vpop.xlane.xlu0 %830
        %v832 = vadd.f32 %v814, %v815
        %833 = vadd.xlane.f32.xlu0 %v832
        %v834 = vpop.xlane.xlu0 %833
        %v835 = vadd.f32 %v816, %v817
        %836 = vadd.xlane.f32.xlu0 %v835
        %v837 = vpop.xlane.xlu0 %836
        %v838 = vadd.f32 %v818, %v819
        %839 = vadd.xlane.f32.xlu0 %v838
        %v840 = vpop.xlane.xlu0 %839
        %v841 = vadd.f32 %v820, %v821
        %842 = vadd.xlane.f32.xlu0 %v841
        %v843 = vpop.xlane.xlu0 %842
        %v844 = vadd.f32 %v822, %v823
        %845 = vadd.xlane.f32.xlu0 %v844
        %v846 = vpop.xlane.xlu0 %845
        %v847 = vadd.f32 %v824, %v825
        %848 = vadd.xlane.f32.xlu0 %v847
        %v849 = vpop.xlane.xlu0 %848
        %v850 = vmul.f32 %v828, %v624
        %v851 = vmul.f32 %v831, %v624
        %v852 = vmul.f32 %v834, %v624
        %v853 = vmul.f32 %v837, %v624
        %v854 = vmul.f32 %v840, %v624
        %v855 = vmul.f32 %v843, %v624
        %v856 = vmul.f32 %v846, %v624
        %v857 = vmul.f32 %v849, %v624
        %v858 = vsub.f32 %v810, %v850
        %v859 = vsub.f32 %v811, %v850
        %v860 = vsub.f32 %v812, %v851
        %v861 = vsub.f32 %v813, %v851
        %v862 = vsub.f32 %v814, %v852
        %v863 = vsub.f32 %v815, %v852
        %v864 = vsub.f32 %v816, %v853
        %v865 = vsub.f32 %v817, %v853
        %v866 = vsub.f32 %v818, %v854
        %v867 = vsub.f32 %v819, %v854
        %v868 = vsub.f32 %v820, %v855
        %v869 = vsub.f32 %v821, %v855
        %v870 = vsub.f32 %v822, %v856
        %v871 = vsub.f32 %v823, %v856
        %v872 = vsub.f32 %v824, %v857
        %v873 = vsub.f32 %v825, %v857
        %v874 = vmul.f32 %v858, %v858
        %v875 = vmul.f32 %v859, %v859
        %v876 = vmul.f32 %v860, %v860
        %v877 = vmul.f32 %v861, %v861
        %v878 = vmul.f32 %v862, %v862
        %v879 = vmul.f32 %v863, %v863
        %v880 = vmul.f32 %v864, %v864
        %v881 = vmul.f32 %v865, %v865
        %v882 = vmul.f32 %v866, %v866
        %v883 = vmul.f32 %v867, %v867
        %v884 = vmul.f32 %v868, %v868
        %v885 = vmul.f32 %v869, %v869
        %v886 = vmul.f32 %v870, %v870
        %v887 = vmul.f32 %v871, %v871
        %v888 = vmul.f32 %v872, %v872
        %v889 = vmul.f32 %v873, %v873
        %v890 = vadd.f32 %v874, %v875
        %891 = vadd.xlane.f32.xlu0 %v890
        %v892 = vpop.xlane.xlu0 %891
        %v893 = vadd.f32 %v876, %v877
        %894 = vadd.xlane.f32.xlu0 %v893
        %v895 = vpop.xlane.xlu0 %894
        %v896 = vadd.f32 %v878, %v879
        %897 = vadd.xlane.f32.xlu0 %v896
        %v898 = vpop.xlane.xlu0 %897
        %v899 = vadd.f32 %v880, %v881
        %900 = vadd.xlane.f32.xlu0 %v899
        %v901 = vpop.xlane.xlu0 %900
        %v902 = vadd.f32 %v882, %v883
        %903 = vadd.xlane.f32.xlu0 %v902
        %v904 = vpop.xlane.xlu0 %903
        %v905 = vadd.f32 %v884, %v885
        %906 = vadd.xlane.f32.xlu0 %v905
        %v907 = vpop.xlane.xlu0 %906
        %v908 = vadd.f32 %v886, %v887
        %909 = vadd.xlane.f32.xlu0 %v908
        %v910 = vpop.xlane.xlu0 %909
        %v911 = vadd.f32 %v888, %v889
        %912 = vadd.xlane.f32.xlu0 %v911
        %v913 = vpop.xlane.xlu0 %912
        %v914 = vmul.f32 %v892, %v624
        %v915 = vmul.f32 %v895, %v624
        %v916 = vmul.f32 %v898, %v624
        %v917 = vmul.f32 %v901, %v624
        %v918 = vmul.f32 %v904, %v624
        %v919 = vmul.f32 %v907, %v624
        %v920 = vmul.f32 %v910, %v624
        %v921 = vmul.f32 %v913, %v624
        %v922 = vadd.f32 %v914, 1e-05
        %v923 = vadd.f32 %v915, 1e-05
        %v924 = vadd.f32 %v916, 1e-05
        %v925 = vadd.f32 %v917, 1e-05
        %v926 = vadd.f32 %v918, 1e-05
        %v927 = vadd.f32 %v919, 1e-05
        %v928 = vadd.f32 %v920, 1e-05
        %v929 = vadd.f32 %v921, 1e-05
        %v930 = vrsqrt.pop %v922
        %v931 = vrsqrt.pop %v923
        %v932 = vrsqrt.pop %v924
        %v933 = vrsqrt.pop %v925
        %v934 = vrsqrt.pop %v926
        %v935 = vrsqrt.pop %v927
        %v936 = vrsqrt.pop %v928
        %v937 = vrsqrt.pop %v929
        %v938 = vmul.f32 %v858, %v930
        %v939 = vmul.f32 %v859, %v930
        %v940 = vmul.f32 %v860, %v931
        %v941 = vmul.f32 %v861, %v931
        %v942 = vmul.f32 %v862, %v932
        %v943 = vmul.f32 %v863, %v932
        %v944 = vmul.f32 %v864, %v933
        %v945 = vmul.f32 %v865, %v933
        %v946 = vmul.f32 %v866, %v934
        %v947 = vmul.f32 %v867, %v934
        %v948 = vmul.f32 %v868, %v935
        %v949 = vmul.f32 %v869, %v935
        %v950 = vmul.f32 %v870, %v936
        %v951 = vmul.f32 %v871, %v936
        %v952 = vmul.f32 %v872, %v937
        %v953 = vmul.f32 %v873, %v937
        %v954 = vmul.f32 %v938, %v733
        %v955 = vmul.f32 %v939, %v737
        %v956 = vmul.f32 %v940, %v733
        %v957 = vmul.f32 %v941, %v737
        %v958 = vmul.f32 %v942, %v733
        %v959 = vmul.f32 %v943, %v737
        %v960 = vmul.f32 %v944, %v733
        %v961 = vmul.f32 %v945, %v737
        %v962 = vmul.f32 %v946, %v733
        %v963 = vmul.f32 %v947, %v737
        %v964 = vmul.f32 %v948, %v733
        %v965 = vmul.f32 %v949, %v737
        %v966 = vmul.f32 %v950, %v733
        %v967 = vmul.f32 %v951, %v737
        %v968 = vmul.f32 %v952, %v733
        %v969 = vmul.f32 %v953, %v737
        %v970 = vadd.f32 %v807, 1.0
        %v971 = vadd.f32 %v808, 1.0
        %v972 = vlaneseq
        %v973 = vshrl.u32 %v972, 7
        %v974 = vsub.s32 1, %v973
        %v975 = vrot.slane %v970, %v974
        %v976 = vlaneseq
        %v977 = vshrl.u32 %v976, 7
        %v978 = vsub.s32 1, %v977
        %v979 = vrot.slane %v971, %v978
        %v980 = vmul.f32 %v954, %v975
        %v981 = vmul.f32 %v955, %v979
        %v982 = vmul.f32 %v956, %v975
        %v983 = vmul.f32 %v957, %v979
        %v984 = vmul.f32 %v958, %v975
        %v985 = vmul.f32 %v959, %v979
        %v986 = vmul.f32 %v960, %v975
        %v987 = vmul.f32 %v961, %v979
        %v988 = vmul.f32 %v962, %v975
        %v989 = vmul.f32 %v963, %v979
        %v990 = vmul.f32 %v964, %v975
        %v991 = vmul.f32 %v965, %v979
        %v992 = vmul.f32 %v966, %v975
        %v993 = vmul.f32 %v967, %v979
        %v994 = vmul.f32 %v968, %v975
        %v995 = vmul.f32 %v969, %v979
        %v996 = vlaneseq
        %v997 = vshrl.u32 %v996, 7
        %v998 = vsub.s32 0, %v997
        %v999 = vrot.slane %v807, %v998
        %v1000 = vlaneseq
        %v1001 = vshrl.u32 %v1000, 7
        %v1002 = vsub.s32 0, %v1001
        %v1003 = vrot.slane %v808, %v1002
        %v1004 = vadd.f32 %v980, %v999
        %v1005 = vadd.f32 %v981, %v1003
        %v1006 = vadd.f32 %v982, %v999
        %v1007 = vadd.f32 %v983, %v1003
        %v1008 = vadd.f32 %v984, %v999
        %v1009 = vadd.f32 %v985, %v1003
        %v1010 = vadd.f32 %v986, %v999
        %v1011 = vadd.f32 %v987, %v1003
        %v1012 = vadd.f32 %v988, %v999
        %v1013 = vadd.f32 %v989, %v1003
        %v1014 = vadd.f32 %v990, %v999
        %v1015 = vadd.f32 %v991, %v1003
        %v1016 = vadd.f32 %v992, %v999
        %v1017 = vadd.f32 %v993, %v1003
        %v1018 = vadd.f32 %v994, %v999
        %v1019 = vadd.f32 %v995, %v1003
        %v1020 = vpack.c.bf16 %v792, %v790
        %v1021 = vpack.c.bf16 %v793, %v791
        %v1022 = vpack.c.bf16 %v796, %v794
        %v1023 = vpack.c.bf16 %v797, %v795
        %v1024 = vpack.c.bf16 %v800, %v798
        %v1025 = vpack.c.bf16 %v801, %v799
        %v1026 = vpack.c.bf16 %v804, %v802
        %v1027 = vpack.c.bf16 %v805, %v803
        %v1028 = vpack.c.bf16 %v1006, %v1004
        %v1029 = vpack.c.bf16 %v1007, %v1005
        %v1030 = vpack.c.bf16 %v1010, %v1008
        %v1031 = vpack.c.bf16 %v1011, %v1009
        %v1032 = vpack.c.bf16 %v1014, %v1012
        %v1033 = vpack.c.bf16 %v1015, %v1013
        %v1034 = vpack.c.bf16 %v1018, %v1016
        %v1035 = vpack.c.bf16 %v1019, %v1017
        %v1036 = vld [vmem:[#allocation8] sm:$0xff]
        %v1037 = vld [vmem:[#allocation8 + $0x8] sm:$0xff]
        %v1038 = vld [vmem:[#allocation8 + $0x10] sm:$0xff]
        %v1039 = vld [vmem:[#allocation8 + $0x18] sm:$0xff]
        %v1040 = vld [vmem:[#allocation8 + $0x20] sm:$0xff]
        %v1041 = vld [vmem:[#allocation8 + $0x28] sm:$0xff]
        %v1042 = vld [vmem:[#allocation8 + $0x30] sm:$0xff]
        %v1043 = vld [vmem:[#allocation8 + $0x38] sm:$0xff]
        %v1044 = vld [vmem:[#allocation8 + $0x40] sm:$0xff]
        %v1045 = vld [vmem:[#allocation8 + $0x48] sm:$0xff]
        %v1046 = vld [vmem:[#allocation8 + $0x50] sm:$0xff]
        %v1047 = vld [vmem:[#allocation8 + $0x58] sm:$0xff]
        %v1048 = vld [vmem:[#allocation8 + $0x60] sm:$0xff]
        %v1049 = vld [vmem:[#allocation8 + $0x68] sm:$0xff]
        %v1050 = vld [vmem:[#allocation8 + $0x70] sm:$0xff]
        %v1051 = vld [vmem:[#allocation8 + $0x78] sm:$0xff]
        %v1052 = vld [vmem:[#allocation8 + $0x80] sm:$0xff]
        %v1053 = vld [vmem:[#allocation8 + $0x88] sm:$0xff]
        %v1054 = vld [vmem:[#allocation8 + $0x90] sm:$0xff]
        %v1055 = vld [vmem:[#allocation8 + $0x98] sm:$0xff]
        %v1056 = vld [vmem:[#allocation8 + $0xa0] sm:$0xff]
        %v1057 = vld [vmem:[#allocation8 + $0xa8] sm:$0xff]
        %v1058 = vld [vmem:[#allocation8 + $0xb0] sm:$0xff]
        %v1059 = vld [vmem:[#allocation8 + $0xb8] sm:$0xff]
        %v1060 = vld [vmem:[#allocation8 + $0xc0] sm:$0xff]
        %v1061 = vld [vmem:[#allocation8 + $0xc8] sm:$0xff]
        %v1062 = vld [vmem:[#allocation8 + $0xd0] sm:$0xff]
        %v1063 = vld [vmem:[#allocation8 + $0xd8] sm:$0xff]
        %v1064 = vld [vmem:[#allocation8 + $0xe0] sm:$0xff]
        %v1065 = vld [vmem:[#allocation8 + $0xe8] sm:$0xff]
        %v1066 = vld [vmem:[#allocation8 + $0xf0] sm:$0xff]
        %v1067 = vld [vmem:[#allocation8 + $0xf8] sm:$0xff]
        %v1068 = vld [vmem:[#allocation8 + $0x100] sm:$0xff]
        %v1069 = vld [vmem:[#allocation8 + $0x108] sm:$0xff]
        %v1070 = vld [vmem:[#allocation8 + $0x110] sm:$0xff]
        %v1071 = vld [vmem:[#allocation8 + $0x118] sm:$0xff]
        %v1072 = vld [vmem:[#allocation8 + $0x120] sm:$0xff]
        %v1073 = vld [vmem:[#allocation8 + $0x128] sm:$0xff]
        %v1074 = vld [vmem:[#allocation8 + $0x130] sm:$0xff]
        %v1075 = vld [vmem:[#allocation8 + $0x138] sm:$0xff]
        %v1076 = vld [vmem:[#allocation8 + $0x140] sm:$0xff]
        %v1077 = vld [vmem:[#allocation8 + $0x148] sm:$0xff]
        %v1078 = vld [vmem:[#allocation8 + $0x150] sm:$0xff]
        %v1079 = vld [vmem:[#allocation8 + $0x158] sm:$0xff]
        %v1080 = vld [vmem:[#allocation8 + $0x160] sm:$0xff]
        %v1081 = vld [vmem:[#allocation8 + $0x168] sm:$0xff]
        %v1082 = vld [vmem:[#allocation8 + $0x170] sm:$0xff]
        %v1083 = vld [vmem:[#allocation8 + $0x178] sm:$0xff]
        %v1084 = vld [vmem:[#allocation8 + $0x180] sm:$0xff]
        %v1085 = vld [vmem:[#allocation8 + $0x188] sm:$0xff]
        %v1086 = vld [vmem:[#allocation8 + $0x190] sm:$0xff]
        %v1087 = vld [vmem:[#allocation8 + $0x198] sm:$0xff]
        %v1088 = vld [vmem:[#allocation8 + $0x1a0] sm:$0xff]
        %v1089 = vld [vmem:[#allocation8 + $0x1a8] sm:$0xff]
        %v1090 = vld [vmem:[#allocation8 + $0x1b0] sm:$0xff]
        %v1091 = vld [vmem:[#allocation8 + $0x1b8] sm:$0xff]
        %v1092 = vld [vmem:[#allocation8 + $0x1c0] sm:$0xff]
        %v1093 = vld [vmem:[#allocation8 + $0x1c8] sm:$0xff]
        %v1094 = vld [vmem:[#allocation8 + $0x1d0] sm:$0xff]
        %v1095 = vld [vmem:[#allocation8 + $0x1d8] sm:$0xff]
        %v1096 = vld [vmem:[#allocation8 + $0x1e0] sm:$0xff]
        %v1097 = vld [vmem:[#allocation8 + $0x1e8] sm:$0xff]
        %v1098 = vld [vmem:[#allocation8 + $0x1f0] sm:$0xff]
        %v1099 = vld [vmem:[#allocation8 + $0x1f8] sm:$0xff]
        %v1100 = vld [vmem:[#allocation8 + $0x200] sm:$0xff]
        %v1101 = vld [vmem:[#allocation8 + $0x208] sm:$0xff]
        %v1102 = vld [vmem:[#allocation8 + $0x210] sm:$0xff]
        %v1103 = vld [vmem:[#allocation8 + $0x218] sm:$0xff]
        %v1104 = vld [vmem:[#allocation8 + $0x220] sm:$0xff]
        %v1105 = vld [vmem:[#allocation8 + $0x228] sm:$0xff]
        %v1106 = vld [vmem:[#allocation8 + $0x230] sm:$0xff]
        %v1107 = vld [vmem:[#allocation8 + $0x238] sm:$0xff]
        %v1108 = vld [vmem:[#allocation8 + $0x240] sm:$0xff]
        %v1109 = vld [vmem:[#allocation8 + $0x248] sm:$0xff]
        %v1110 = vld [vmem:[#allocation8 + $0x250] sm:$0xff]
        %v1111 = vld [vmem:[#allocation8 + $0x258] sm:$0xff]
        %v1112 = vld [vmem:[#allocation8 + $0x260] sm:$0xff]
        %v1113 = vld [vmem:[#allocation8 + $0x268] sm:$0xff]
        %v1114 = vld [vmem:[#allocation8 + $0x270] sm:$0xff]
        %v1115 = vld [vmem:[#allocation8 + $0x278] sm:$0xff]
        %v1116 = vld [vmem:[#allocation8 + $0x280] sm:$0xff]
        %v1117 = vld [vmem:[#allocation8 + $0x288] sm:$0xff]
        %v1118 = vld [vmem:[#allocation8 + $0x290] sm:$0xff]
        %v1119 = vld [vmem:[#allocation8 + $0x298] sm:$0xff]
        %v1120 = vld [vmem:[#allocation8 + $0x2a0] sm:$0xff]
        %v1121 = vld [vmem:[#allocation8 + $0x2a8] sm:$0xff]
        %v1122 = vld [vmem:[#allocation8 + $0x2b0] sm:$0xff]
        %v1123 = vld [vmem:[#allocation8 + $0x2b8] sm:$0xff]
        %v1124 = vld [vmem:[#allocation8 + $0x2c0] sm:$0xff]
        %v1125 = vld [vmem:[#allocation8 + $0x2c8] sm:$0xff]
        %v1126 = vld [vmem:[#allocation8 + $0x2d0] sm:$0xff]
        %v1127 = vld [vmem:[#allocation8 + $0x2d8] sm:$0xff]
        %v1128 = vld [vmem:[#allocation8 + $0x2e0] sm:$0xff]
        %v1129 = vld [vmem:[#allocation8 + $0x2e8] sm:$0xff]
        %v1130 = vld [vmem:[#allocation8 + $0x2f0] sm:$0xff]
        %v1131 = vld [vmem:[#allocation8 + $0x2f8] sm:$0xff]
        %v1228 = vunpack.c.l.b16 %v1036
        %v1229 = vunpack.c.h.b16 %v1036
        %v1230 = vunpack.c.l.b16 %v1037
        %v1231 = vunpack.c.h.b16 %v1037
        %v1232 = vunpack.c.l.b16 %v1038
        %v1233 = vunpack.c.h.b16 %v1038
        %v1234 = vunpack.c.l.b16 %v1039
        %v1235 = vunpack.c.h.b16 %v1039
        %v1236 = vunpack.c.l.b16 %v1040
        %v1237 = vunpack.c.h.b16 %v1040
        %v1238 = vunpack.c.l.b16 %v1041
        %v1239 = vunpack.c.h.b16 %v1041
        %v1240 = vunpack.c.l.b16 %v1042
        %v1241 = vunpack.c.h.b16 %v1042
        %v1242 = vunpack.c.l.b16 %v1043
        %v1243 = vunpack.c.h.b16 %v1043
        %v1244 = vunpack.c.l.b16 %v1044
        %v1245 = vunpack.c.h.b16 %v1044
        %v1246 = vunpack.c.l.b16 %v1045
        %v1247 = vunpack.c.h.b16 %v1045
        %v1248 = vunpack.c.l.b16 %v1046
        %v1249 = vunpack.c.h.b16 %v1046
        %v1250 = vunpack.c.l.b16 %v1047
        %v1251 = vunpack.c.h.b16 %v1047
        %v1252 = vunpack.c.l.b16 %v1048
        %v1253 = vunpack.c.h.b16 %v1048
        %v1254 = vunpack.c.l.b16 %v1049
        %v1255 = vunpack.c.h.b16 %v1049
        %v1256 = vunpack.c.l.b16 %v1050
        %v1257 = vunpack.c.h.b16 %v1050
        %v1258 = vunpack.c.l.b16 %v1051
        %v1259 = vunpack.c.h.b16 %v1051
        %v1260 = vunpack.c.l.b16 %v1052
        %v1261 = vunpack.c.h.b16 %v1052
        %v1262 = vunpack.c.l.b16 %v1053
        %v1263 = vunpack.c.h.b16 %v1053
        %v1264 = vunpack.c.l.b16 %v1054
        %v1265 = vunpack.c.h.b16 %v1054
        %v1266 = vunpack.c.l.b16 %v1055
        %v1267 = vunpack.c.h.b16 %v1055
        %v1268 = vunpack.c.l.b16 %v1056
        %v1269 = vunpack.c.h.b16 %v1056
        %v1270 = vunpack.c.l.b16 %v1057
        %v1271 = vunpack.c.h.b16 %v1057
        %v1272 = vunpack.c.l.b16 %v1058
        %v1273 = vunpack.c.h.b16 %v1058
        %v1274 = vunpack.c.l.b16 %v1059
        %v1275 = vunpack.c.h.b16 %v1059
        %v1276 = vunpack.c.l.b16 %v1060
        %v1277 = vunpack.c.h.b16 %v1060
        %v1278 = vunpack.c.l.b16 %v1061
        %v1279 = vunpack.c.h.b16 %v1061
        %v1280 = vunpack.c.l.b16 %v1062
        %v1281 = vunpack.c.h.b16 %v1062
        %v1282 = vunpack.c.l.b16 %v1063
        %v1283 = vunpack.c.h.b16 %v1063
        %v1284 = vunpack.c.l.b16 %v1064
        %v1285 = vunpack.c.h.b16 %v1064
        %v1286 = vunpack.c.l.b16 %v1065
        %v1287 = vunpack.c.h.b16 %v1065
        %v1288 = vunpack.c.l.b16 %v1066
        %v1289 = vunpack.c.h.b16 %v1066
        %v1290 = vunpack.c.l.b16 %v1067
        %v1291 = vunpack.c.h.b16 %v1067
        %v1292 = vunpack.c.l.b16 %v1068
        %v1293 = vunpack.c.h.b16 %v1068
        %v1294 = vunpack.c.l.b16 %v1069
        %v1295 = vunpack.c.h.b16 %v1069
        %v1296 = vunpack.c.l.b16 %v1070
        %v1297 = vunpack.c.h.b16 %v1070
        %v1298 = vunpack.c.l.b16 %v1071
        %v1299 = vunpack.c.h.b16 %v1071
        %v1300 = vunpack.c.l.b16 %v1072
        %v1301 = vunpack.c.h.b16 %v1072
        %v1302 = vunpack.c.l.b16 %v1073
        %v1303 = vunpack.c.h.b16 %v1073
        %v1304 = vunpack.c.l.b16 %v1074
        %v1305 = vunpack.c.h.b16 %v1074
        %v1306 = vunpack.c.l.b16 %v1075
        %v1307 = vunpack.c.h.b16 %v1075
        %v1308 = vunpack.c.l.b16 %v1076
        %v1309 = vunpack.c.h.b16 %v1076
        %v1310 = vunpack.c.l.b16 %v1077
        %v1311 = vunpack.c.h.b16 %v1077
        %v1312 = vunpack.c.l.b16 %v1078
        %v1313 = vunpack.c.h.b16 %v1078
        %v1314 = vunpack.c.l.b16 %v1079
        %v1315 = vunpack.c.h.b16 %v1079
        %v1316 = vunpack.c.l.b16 %v1080
        %v1317 = vunpack.c.h.b16 %v1080
        %v1318 = vunpack.c.l.b16 %v1081
        %v1319 = vunpack.c.h.b16 %v1081
        %v1320 = vunpack.c.l.b16 %v1082
        %v1321 = vunpack.c.h.b16 %v1082
        %v1322 = vunpack.c.l.b16 %v1083
        %v1323 = vunpack.c.h.b16 %v1083
        %v1324 = vunpack.c.l.b16 %v1084
        %v1325 = vunpack.c.h.b16 %v1084
        %v1326 = vunpack.c.l.b16 %v1085
        %v1327 = vunpack.c.h.b16 %v1085
        %v1328 = vunpack.c.l.b16 %v1086
        %v1329 = vunpack.c.h.b16 %v1086
        %v1330 = vunpack.c.l.b16 %v1087
        %v1331 = vunpack.c.h.b16 %v1087
        %v1332 = vunpack.c.l.b16 %v1088
        %v1333 = vunpack.c.h.b16 %v1088
        %v1334 = vunpack.c.l.b16 %v1089
        %v1335 = vunpack.c.h.b16 %v1089
        %v1336 = vunpack.c.l.b16 %v1090
        %v1337 = vunpack.c.h.b16 %v1090
        %v1338 = vunpack.c.l.b16 %v1091
        %v1339 = vunpack.c.h.b16 %v1091
        %v1340 = vunpack.c.l.b16 %v1092
        %v1341 = vunpack.c.h.b16 %v1092
        %v1342 = vunpack.c.l.b16 %v1093
        %v1343 = vunpack.c.h.b16 %v1093
        %v1344 = vunpack.c.l.b16 %v1094
        %v1345 = vunpack.c.h.b16 %v1094
        %v1346 = vunpack.c.l.b16 %v1095
        %v1347 = vunpack.c.h.b16 %v1095
        %v1348 = vunpack.c.l.b16 %v1096
        %v1349 = vunpack.c.h.b16 %v1096
        %v1350 = vunpack.c.l.b16 %v1097
        %v1351 = vunpack.c.h.b16 %v1097
        %v1352 = vunpack.c.l.b16 %v1098
        %v1353 = vunpack.c.h.b16 %v1098
        %v1354 = vunpack.c.l.b16 %v1099
        %v1355 = vunpack.c.h.b16 %v1099
        %v1356 = vunpack.c.l.b16 %v1100
        %v1357 = vunpack.c.h.b16 %v1100
        %v1358 = vunpack.c.l.b16 %v1101
        %v1359 = vunpack.c.h.b16 %v1101
        %v1360 = vunpack.c.l.b16 %v1102
        %v1361 = vunpack.c.h.b16 %v1102
        %v1362 = vunpack.c.l.b16 %v1103
        %v1363 = vunpack.c.h.b16 %v1103
        %v1364 = vunpack.c.l.b16 %v1104
        %v1365 = vunpack.c.h.b16 %v1104
        %v1366 = vunpack.c.l.b16 %v1105
        %v1367 = vunpack.c.h.b16 %v1105
        %v1368 = vunpack.c.l.b16 %v1106
        %v1369 = vunpack.c.h.b16 %v1106
        %v1370 = vunpack.c.l.b16 %v1107
        %v1371 = vunpack.c.h.b16 %v1107
        %v1372 = vunpack.c.l.b16 %v1108
        %v1373 = vunpack.c.h.b16 %v1108
        %v1374 = vunpack.c.l.b16 %v1109
        %v1375 = vunpack.c.h.b16 %v1109
        %v1376 = vunpack.c.l.b16 %v1110
        %v1377 = vunpack.c.h.b16 %v1110
        %v1378 = vunpack.c.l.b16 %v1111
        %v1379 = vunpack.c.h.b16 %v1111
        %v1380 = vunpack.c.l.b16 %v1112
        %v1381 = vunpack.c.h.b16 %v1112
        %v1382 = vunpack.c.l.b16 %v1113
        %v1383 = vunpack.c.h.b16 %v1113
        %v1384 = vunpack.c.l.b16 %v1114
        %v1385 = vunpack.c.h.b16 %v1114
        %v1386 = vunpack.c.l.b16 %v1115
        %v1387 = vunpack.c.h.b16 %v1115
        %v1388 = vunpack.c.l.b16 %v1116
        %v1389 = vunpack.c.h.b16 %v1116
        %v1390 = vunpack.c.l.b16 %v1117
        %v1391 = vunpack.c.h.b16 %v1117
        %v1392 = vunpack.c.l.b16 %v1118
        %v1393 = vunpack.c.h.b16 %v1118
        %v1394 = vunpack.c.l.b16 %v1119
        %v1395 = vunpack.c.h.b16 %v1119
        %v1396 = vunpack.c.l.b16 %v1120
        %v1397 = vunpack.c.h.b16 %v1120
        %v1398 = vunpack.c.l.b16 %v1121
        %v1399 = vunpack.c.h.b16 %v1121
        %v1400 = vunpack.c.l.b16 %v1122
        %v1401 = vunpack.c.h.b16 %v1122
        %v1402 = vunpack.c.l.b16 %v1123
        %v1403 = vunpack.c.h.b16 %v1123
        %v1404 = vunpack.c.l.b16 %v1124
        %v1405 = vunpack.c.h.b16 %v1124
        %v1406 = vunpack.c.l.b16 %v1125
        %v1407 = vunpack.c.h.b16 %v1125
        %v1408 = vunpack.c.l.b16 %v1126
        %v1409 = vunpack.c.h.b16 %v1126
        %v1410 = vunpack.c.l.b16 %v1127
        %v1411 = vunpack.c.h.b16 %v1127
        %v1412 = vunpack.c.l.b16 %v1128
        %v1413 = vunpack.c.h.b16 %v1128
        %v1414 = vunpack.c.l.b16 %v1129
        %v1415 = vunpack.c.h.b16 %v1129
        %v1416 = vunpack.c.l.b16 %v1130
        %v1417 = vunpack.c.h.b16 %v1130
        %v1418 = vunpack.c.l.b16 %v1131
        %v1419 = vunpack.c.h.b16 %v1131
        %v1420 = vpack.c.b16 %v1234, %v1228
        %v1421 = vpack.c.b16 %v1235, %v1229
        %v1422 = vpack.c.b16 %v1236, %v1230
        %v1423 = vpack.c.b16 %v1237, %v1231
        %v1424 = vpack.c.b16 %v1238, %v1232
        %v1425 = vpack.c.b16 %v1239, %v1233
        %v1426 = vpack.c.b16 %v1246, %v1240
        %v1427 = vpack.c.b16 %v1247, %v1241
        %v1428 = vpack.c.b16 %v1248, %v1242
        %v1429 = vpack.c.b16 %v1249, %v1243
        %v1430 = vpack.c.b16 %v1250, %v1244
        %v1431 = vpack.c.b16 %v1251, %v1245
        %v1432 = vpack.c.b16 %v1258, %v1252
        %v1433 = vpack.c.b16 %v1259, %v1253
        %v1434 = vpack.c.b16 %v1260, %v1254
        %v1435 = vpack.c.b16 %v1261, %v1255
        %v1436 = vpack.c.b16 %v1262, %v1256
        %v1437 = vpack.c.b16 %v1263, %v1257
        %v1438 = vpack.c.b16 %v1270, %v1264
        %v1439 = vpack.c.b16 %v1271, %v1265
        %v1440 = vpack.c.b16 %v1272, %v1266
        %v1441 = vpack.c.b16 %v1273, %v1267
        %v1442 = vpack.c.b16 %v1274, %v1268
        %v1443 = vpack.c.b16 %v1275, %v1269
        %v1444 = vpack.c.b16 %v1282, %v1276
        %v1445 = vpack.c.b16 %v1283, %v1277
        %v1446 = vpack.c.b16 %v1284, %v1278
        %v1447 = vpack.c.b16 %v1285, %v1279
        %v1448 = vpack.c.b16 %v1286, %v1280
        %v1449 = vpack.c.b16 %v1287, %v1281
        %v1450 = vpack.c.b16 %v1294, %v1288
        %v1451 = vpack.c.b16 %v1295, %v1289
        %v1452 = vpack.c.b16 %v1296, %v1290
        %v1453 = vpack.c.b16 %v1297, %v1291
        %v1454 = vpack.c.b16 %v1298, %v1292
        %v1455 = vpack.c.b16 %v1299, %v1293
        %v1456 = vpack.c.b16 %v1306, %v1300
        %v1457 = vpack.c.b16 %v1307, %v1301
        %v1458 = vpack.c.b16 %v1308, %v1302
        %v1459 = vpack.c.b16 %v1309, %v1303
        %v1460 = vpack.c.b16 %v1310, %v1304
        %v1461 = vpack.c.b16 %v1311, %v1305
        %v1462 = vpack.c.b16 %v1318, %v1312
        %v1463 = vpack.c.b16 %v1319, %v1313
        %v1464 = vpack.c.b16 %v1320, %v1314
        %v1465 = vpack.c.b16 %v1321, %v1315
        %v1466 = vpack.c.b16 %v1322, %v1316
        %v1467 = vpack.c.b16 %v1323, %v1317
        %v1468 = vpack.c.b16 %v1330, %v1324
        %v1469 = vpack.c.b16 %v1331, %v1325
        %v1470 = vpack.c.b16 %v1332, %v1326
        %v1471 = vpack.c.b16 %v1333, %v1327
        %v1472 = vpack.c.b16 %v1334, %v1328
        %v1473 = vpack.c.b16 %v1335, %v1329
        %v1474 = vpack.c.b16 %v1342, %v1336
        %v1475 = vpack.c.b16 %v1343, %v1337
        %v1476 = vpack.c.b16 %v1344, %v1338
        %v1477 = vpack.c.b16 %v1345, %v1339
        %v1478 = vpack.c.b16 %v1346, %v1340
        %v1479 = vpack.c.b16 %v1347, %v1341
        %v1480 = vpack.c.b16 %v1354, %v1348
        %v1481 = vpack.c.b16 %v1355, %v1349
        %v1482 = vpack.c.b16 %v1356, %v1350
        %v1483 = vpack.c.b16 %v1357, %v1351
        %v1484 = vpack.c.b16 %v1358, %v1352
        %v1485 = vpack.c.b16 %v1359, %v1353
        %v1486 = vpack.c.b16 %v1366, %v1360
        %v1487 = vpack.c.b16 %v1367, %v1361
        %v1488 = vpack.c.b16 %v1368, %v1362
        %v1489 = vpack.c.b16 %v1369, %v1363
        %v1490 = vpack.c.b16 %v1370, %v1364
        %v1491 = vpack.c.b16 %v1371, %v1365
        %v1492 = vpack.c.b16 %v1378, %v1372
        %v1493 = vpack.c.b16 %v1379, %v1373
        %v1494 = vpack.c.b16 %v1380, %v1374
        %v1495 = vpack.c.b16 %v1381, %v1375
        %v1496 = vpack.c.b16 %v1382, %v1376
        %v1497 = vpack.c.b16 %v1383, %v1377
        %v1498 = vpack.c.b16 %v1390, %v1384
        %v1499 = vpack.c.b16 %v1391, %v1385
        %v1500 = vpack.c.b16 %v1392, %v1386
        %v1501 = vpack.c.b16 %v1393, %v1387
        %v1502 = vpack.c.b16 %v1394, %v1388
        %v1503 = vpack.c.b16 %v1395, %v1389
        %v1504 = vpack.c.b16 %v1402, %v1396
        %v1505 = vpack.c.b16 %v1403, %v1397
        %v1506 = vpack.c.b16 %v1404, %v1398
        %v1507 = vpack.c.b16 %v1405, %v1399
        %v1508 = vpack.c.b16 %v1406, %v1400
        %v1509 = vpack.c.b16 %v1407, %v1401
        %v1510 = vpack.c.b16 %v1414, %v1408
        %v1511 = vpack.c.b16 %v1415, %v1409
        %v1512 = vpack.c.b16 %v1416, %v1410
        %v1513 = vpack.c.b16 %v1417, %v1411
        %v1514 = vpack.c.b16 %v1418, %v1412
        %v1515 = vpack.c.b16 %v1419, %v1413
        %1612 = vmatprep.subr.bf16.mxu0 %v1463
        %1613 = vmatpush1.bf16.msra.mxu0 %v1462
        %1614 = vmatprep.subr.bf16.mxu0 %v1457
        %1615 = vmatpush1.bf16.msra.mxu0 %v1456
        %1616 = vmatprep.subr.bf16.mxu0 %v1451
        %1617 = vmatpush1.bf16.msra.mxu0 %v1450
        %1618 = vmatprep.subr.bf16.mxu0 %v1445
        %1619 = vmatpush1.bf16.msra.mxu0 %v1444
        %1620 = vmatprep.subr.bf16.mxu0 %v1439
        %1621 = vmatpush1.bf16.msra.mxu0 %v1438
        %1622 = vmatprep.subr.bf16.mxu0 %v1433
        %1623 = vmatpush1.bf16.msra.mxu0 %v1432
        %1624 = vmatprep.subr.bf16.mxu0 %v1427
        %1625 = vmatpush1.bf16.msra.mxu0 %v1426
        %1626 = vmatprep.subr.bf16.mxu0 %v1421
        %1627 = vmatpush1.bf16.msra.mxu0 %v1420
        %1628 = vmatprep.subr.bf16.mxu0 %v1511
        %1629 = vmatpush2.bf16.msra.mxu0 %v1510
        %1630 = vmatprep.subr.bf16.mxu0 %v1505
        %1631 = vmatpush2.bf16.msra.mxu0 %v1504
        %1632 = vmatprep.subr.bf16.mxu0 %v1499
        %1633 = vmatpush2.bf16.msra.mxu0 %v1498
        %1634 = vmatprep.subr.bf16.mxu0 %v1493
        %1635 = vmatpush2.bf16.msra.mxu0 %v1492
        %1636 = vmatprep.subr.bf16.mxu0 %v1487
        %1637 = vmatpush2.bf16.msra.mxu0 %v1486
        %1638 = vmatprep.subr.bf16.mxu0 %v1481
        %1639 = vmatpush2.bf16.msra.mxu0 %v1480
        %1640 = vmatprep.subr.bf16.mxu0 %v1475
        %1641 = vmatpush2.bf16.msra.mxu0 %v1474
        %1642 = vmatprep.subr.bf16.mxu0 %v1469
        %1643 = vmatpush2.bf16.msra.mxu0 %v1468
        %1644 = vmatprep.mubr.bf16.mxu0 %v1021
        %1645 = vmatmul.mubr.bf16.gmra.mxu0 %v1020
        %v1646 = vpop.f32.mrf.mxu0
        %v1647 = vadd.f32 0.0, %v1646
        %v1648 = vpop.f32.mrf.mxu0
        %v1649 = vadd.f32 0.0, %v1648
        %v1650 = vpop.f32.mrf.mxu0
        %v1651 = vadd.f32 0.0, %v1650
        %v1652 = vpop.f32.mrf.mxu0
        %v1653 = vadd.f32 0.0, %v1652
        %1654 = vmatprep.mubr.bf16.mxu0 %v1023
        %1655 = vmatmul.mubr.bf16.gmra.mxu0 %v1022
        %v1656 = vpop.f32.mrf.mxu0
        %v1657 = vadd.f32 0.0, %v1656
        %v1658 = vpop.f32.mrf.mxu0
        %v1659 = vadd.f32 0.0, %v1658
        %v1660 = vpop.f32.mrf.mxu0
        %v1661 = vadd.f32 0.0, %v1660
        %v1662 = vpop.f32.mrf.mxu0
        %v1663 = vadd.f32 0.0, %v1662
        %1664 = vmatprep.mubr.bf16.mxu0 %v1025
        %1665 = vmatmul.mubr.bf16.gmra.mxu0 %v1024
        %v1666 = vpop.f32.mrf.mxu0
        %v1667 = vadd.f32 0.0, %v1666
        %v1668 = vpop.f32.mrf.mxu0
        %v1669 = vadd.f32 0.0, %v1668
        %v1670 = vpop.f32.mrf.mxu0
        %v1671 = vadd.f32 0.0, %v1670
        %v1672 = vpop.f32.mrf.mxu0
        %v1673 = vadd.f32 0.0, %v1672
        %1674 = vmatprep.mubr.bf16.mxu0 %v1027
        %1675 = vmatmul.mubr.bf16.gmra.mxu0 %v1026
        %v1676 = vpop.f32.mrf.mxu0
        %v1677 = vadd.f32 0.0, %v1676
        %v1678 = vpop.f32.mrf.mxu0
        %v1679 = vadd.f32 0.0, %v1678
        %v1680 = vpop.f32.mrf.mxu0
        %v1681 = vadd.f32 0.0, %v1680
        %v1682 = vpop.f32.mrf.mxu0
        %v1683 = vadd.f32 0.0, %v1682
        %1684 = vmatprep.mubr.bf16.mxu0 %v1029
        %1685 = vmatmul.mubr.bf16.gmra.mxu0 %v1028
        %v1686 = vpop.f32.mrf.mxu0
        %v1687 = vadd.f32 0.0, %v1686
        %v1688 = vpop.f32.mrf.mxu0
        %v1689 = vadd.f32 0.0, %v1688
        %v1690 = vpop.f32.mrf.mxu0
        %v1691 = vadd.f32 0.0, %v1690
        %v1692 = vpop.f32.mrf.mxu0
        %v1693 = vadd.f32 0.0, %v1692
        %1694 = vmatprep.mubr.bf16.mxu0 %v1031
        %1695 = vmatmul.mubr.bf16.gmra.mxu0 %v1030
        %v1696 = vpop.f32.mrf.mxu0
        %v1697 = vadd.f32 0.0, %v1696
        %v1698 = vpop.f32.mrf.mxu0
        %v1699 = vadd.f32 0.0, %v1698
        %v1700 = vpop.f32.mrf.mxu0
        %v1701 = vadd.f32 0.0, %v1700
        %v1702 = vpop.f32.mrf.mxu0
        %v1703 = vadd.f32 0.0, %v1702
        %1704 = vmatprep.mubr.bf16.mxu0 %v1033
        %1705 = vmatmul.mubr.bf16.gmra.mxu0 %v1032
        %v1706 = vpop.f32.mrf.mxu0
        %v1707 = vadd.f32 0.0, %v1706
        %v1708 = vpop.f32.mrf.mxu0
        %v1709 = vadd.f32 0.0, %v1708
        %v1710 = vpop.f32.mrf.mxu0
        %v1711 = vadd.f32 0.0, %v1710
        %v1712 = vpop.f32.mrf.mxu0
        %v1713 = vadd.f32 0.0, %v1712
        %1714 = vmatprep.mubr.bf16.mxu0 %v1035
        %1715 = vmatmul.mubr.bf16.gmra.mxu0 %v1034
        %v1716 = vpop.f32.mrf.mxu0
        %v1717 = vadd.f32 0.0, %v1716
        %v1718 = vpop.f32.mrf.mxu0
        %v1719 = vadd.f32 0.0, %v1718
        %v1720 = vpop.f32.mrf.mxu0
        %v1721 = vadd.f32 0.0, %v1720
        %v1722 = vpop.f32.mrf.mxu0
        %v1723 = vadd.f32 0.0, %v1722
        %1724 = vdwg.mxu0
        %1725 = vmatprep.subr.bf16.mxu0 %v1465
        %1726 = vmatpush1.bf16.msra.mxu0 %v1464
        %1727 = vmatprep.subr.bf16.mxu0 %v1459
        %1728 = vmatpush1.bf16.msra.mxu0 %v1458
        %1729 = vmatprep.subr.bf16.mxu0 %v1453
        %1730 = vmatpush1.bf16.msra.mxu0 %v1452
        %1731 = vmatprep.subr.bf16.mxu0 %v1447
        %1732 = vmatpush1.bf16.msra.mxu0 %v1446
        %1733 = vmatprep.subr.bf16.mxu0 %v1441
        %1734 = vmatpush1.bf16.msra.mxu0 %v1440
        %1735 = vmatprep.subr.bf16.mxu0 %v1435
        %1736 = vmatpush1.bf16.msra.mxu0 %v1434
        %1737 = vmatprep.subr.bf16.mxu0 %v1429
        %1738 = vmatpush1.bf16.msra.mxu0 %v1428
        %1739 = vmatprep.subr.bf16.mxu0 %v1423
        %1740 = vmatpush1.bf16.msra.mxu0 %v1422
        %1741 = vmatprep.subr.bf16.mxu0 %v1513
        %1742 = vmatpush2.bf16.msra.mxu0 %v1512
        %1743 = vmatprep.subr.bf16.mxu0 %v1507
        %1744 = vmatpush2.bf16.msra.mxu0 %v1506
        %1745 = vmatprep.subr.bf16.mxu0 %v1501
        %1746 = vmatpush2.bf16.msra.mxu0 %v1500
        %1747 = vmatprep.subr.bf16.mxu0 %v1495
        %1748 = vmatpush2.bf16.msra.mxu0 %v1494
        %1749 = vmatprep.subr.bf16.mxu0 %v1489
        %1750 = vmatpush2.bf16.msra.mxu0 %v1488
        %1751 = vmatprep.subr.bf16.mxu0 %v1483
        %1752 = vmatpush2.bf16.msra.mxu0 %v1482
        %1753 = vmatprep.subr.bf16.mxu0 %v1477
        %1754 = vmatpush2.bf16.msra.mxu0 %v1476
        %1755 = vmatprep.subr.bf16.mxu0 %v1471
        %1756 = vmatpush2.bf16.msra.mxu0 %v1470
        %1757 = vmatprep.mubr.bf16.mxu0 %v1021
        %1758 = vmatmul.mubr.bf16.gmra.mxu0 %v1020
        %v1759 = vpop.f32.mrf.mxu0
        %v1760 = vadd.f32 0.0, %v1759
        %v1761 = vpop.f32.mrf.mxu0
        %v1762 = vadd.f32 0.0, %v1761
        %v1763 = vpop.f32.mrf.mxu0
        %v1764 = vadd.f32 0.0, %v1763
        %v1765 = vpop.f32.mrf.mxu0
        %v1766 = vadd.f32 0.0, %v1765
        %1767 = vmatprep.mubr.bf16.mxu0 %v1023
        %1768 = vmatmul.mubr.bf16.gmra.mxu0 %v1022
        %v1769 = vpop.f32.mrf.mxu0
        %v1770 = vadd.f32 0.0, %v1769
        %v1771 = vpop.f32.mrf.mxu0
        %v1772 = vadd.f32 0.0, %v1771
        %v1773 = vpop.f32.mrf.mxu0
        %v1774 = vadd.f32 0.0, %v1773
        %v1775 = vpop.f32.mrf.mxu0
        %v1776 = vadd.f32 0.0, %v1775
        %1777 = vmatprep.mubr.bf16.mxu0 %v1025
        %1778 = vmatmul.mubr.bf16.gmra.mxu0 %v1024
        %v1779 = vpop.f32.mrf.mxu0
        %v1780 = vadd.f32 0.0, %v1779
        %v1781 = vpop.f32.mrf.mxu0
        %v1782 = vadd.f32 0.0, %v1781
        %v1783 = vpop.f32.mrf.mxu0
        %v1784 = vadd.f32 0.0, %v1783
        %v1785 = vpop.f32.mrf.mxu0
        %v1786 = vadd.f32 0.0, %v1785
        %1787 = vmatprep.mubr.bf16.mxu0 %v1027
        %1788 = vmatmul.mubr.bf16.gmra.mxu0 %v1026
        %v1789 = vpop.f32.mrf.mxu0
        %v1790 = vadd.f32 0.0, %v1789
        %v1791 = vpop.f32.mrf.mxu0
        %v1792 = vadd.f32 0.0, %v1791
        %v1793 = vpop.f32.mrf.mxu0
        %v1794 = vadd.f32 0.0, %v1793
        %v1795 = vpop.f32.mrf.mxu0
        %v1796 = vadd.f32 0.0, %v1795
        %1797 = vmatprep.mubr.bf16.mxu0 %v1029
        %1798 = vmatmul.mubr.bf16.gmra.mxu0 %v1028
        %v1799 = vpop.f32.mrf.mxu0
        %v1800 = vadd.f32 0.0, %v1799
        %v1801 = vpop.f32.mrf.mxu0
        %v1802 = vadd.f32 0.0, %v1801
        %v1803 = vpop.f32.mrf.mxu0
        %v1804 = vadd.f32 0.0, %v1803
        %v1805 = vpop.f32.mrf.mxu0
        %v1806 = vadd.f32 0.0, %v1805
        %1807 = vmatprep.mubr.bf16.mxu0 %v1031
        %1808 = vmatmul.mubr.bf16.gmra.mxu0 %v1030
        %v1809 = vpop.f32.mrf.mxu0
        %v1810 = vadd.f32 0.0, %v1809
        %v1811 = vpop.f32.mrf.mxu0
        %v1812 = vadd.f32 0.0, %v1811
        %v1813 = vpop.f32.mrf.mxu0
        %v1814 = vadd.f32 0.0, %v1813
        %v1815 = vpop.f32.mrf.mxu0
        %v1816 = vadd.f32 0.0, %v1815
        %1817 = vmatprep.mubr.bf16.mxu0 %v1033
        %1818 = vmatmul.mubr.bf16.gmra.mxu0 %v1032
        %v1819 = vpop.f32.mrf.mxu0
        %v1820 = vadd.f32 0.0, %v1819
        %v1821 = vpop.f32.mrf.mxu0
        %v1822 = vadd.f32 0.0, %v1821
        %v1823 = vpop.f32.mrf.mxu0
        %v1824 = vadd.f32 0.0, %v1823
        %v1825 = vpop.f32.mrf.mxu0
        %v1826 = vadd.f32 0.0, %v1825
        %1827 = vmatprep.mubr.bf16.mxu0 %v1035
        %1828 = vmatmul.mubr.bf16.gmra.mxu0 %v1034
        %v1829 = vpop.f32.mrf.mxu0
        %v1830 = vadd.f32 0.0, %v1829
        %v1831 = vpop.f32.mrf.mxu0
        %v1832 = vadd.f32 0.0, %v1831
        %v1833 = vpop.f32.mrf.mxu0
        %v1834 = vadd.f32 0.0, %v1833
        %v1835 = vpop.f32.mrf.mxu0
        %v1836 = vadd.f32 0.0, %v1835
        %1837 = vdwg.mxu0
        %1838 = vmatprep.subr.bf16.mxu0 %v1467
        %1839 = vmatpush1.bf16.msra.mxu0 %v1466
        %1840 = vmatprep.subr.bf16.mxu0 %v1461
        %1841 = vmatpush1.bf16.msra.mxu0 %v1460
        %1842 = vmatprep.subr.bf16.mxu0 %v1455
        %1843 = vmatpush1.bf16.msra.mxu0 %v1454
        %1844 = vmatprep.subr.bf16.mxu0 %v1449
        %1845 = vmatpush1.bf16.msra.mxu0 %v1448
        %1846 = vmatprep.subr.bf16.mxu0 %v1443
        %1847 = vmatpush1.bf16.msra.mxu0 %v1442
        %1848 = vmatprep.subr.bf16.mxu0 %v1437
        %1849 = vmatpush1.bf16.msra.mxu0 %v1436
        %1850 = vmatprep.subr.bf16.mxu0 %v1431
        %1851 = vmatpush1.bf16.msra.mxu0 %v1430
        %1852 = vmatprep.subr.bf16.mxu0 %v1425
        %1853 = vmatpush1.bf16.msra.mxu0 %v1424
        %1854 = vmatprep.subr.bf16.mxu0 %v1515
        %1855 = vmatpush2.bf16.msra.mxu0 %v1514
        %1856 = vmatprep.subr.bf16.mxu0 %v1509
        %1857 = vmatpush2.bf16.msra.mxu0 %v1508
        %1858 = vmatprep.subr.bf16.mxu0 %v1503
        %1859 = vmatpush2.bf16.msra.mxu0 %v1502
        %1860 = vmatprep.subr.bf16.mxu0 %v1497
        %1861 = vmatpush2.bf16.msra.mxu0 %v1496
        %1862 = vmatprep.subr.bf16.mxu0 %v1491
        %1863 = vmatpush2.bf16.msra.mxu0 %v1490
        %1864 = vmatprep.subr.bf16.mxu0 %v1485
        %1865 = vmatpush2.bf16.msra.mxu0 %v1484
        %1866 = vmatprep.subr.bf16.mxu0 %v1479
        %1867 = vmatpush2.bf16.msra.mxu0 %v1478
        %1868 = vmatprep.subr.bf16.mxu0 %v1473
        %1869 = vmatpush2.bf16.msra.mxu0 %v1472
        %1870 = vmatprep.mubr.bf16.mxu0 %v1021
        %1871 = vmatmul.mubr.bf16.gmra.mxu0 %v1020
        %v1872 = vpop.f32.mrf.mxu0
        %v1873 = vadd.f32 0.0, %v1872
        %v1874 = vpop.f32.mrf.mxu0
        %v1875 = vadd.f32 0.0, %v1874
        %v1876 = vpop.f32.mrf.mxu0
        %v1877 = vadd.f32 0.0, %v1876
        %v1878 = vpop.f32.mrf.mxu0
        %v1879 = vadd.f32 0.0, %v1878
        %1880 = vmatprep.mubr.bf16.mxu0 %v1023
        %1881 = vmatmul.mubr.bf16.gmra.mxu0 %v1022
        %v1882 = vpop.f32.mrf.mxu0
        %v1883 = vadd.f32 0.0, %v1882
        %v1884 = vpop.f32.mrf.mxu0
        %v1885 = vadd.f32 0.0, %v1884
        %v1886 = vpop.f32.mrf.mxu0
        %v1887 = vadd.f32 0.0, %v1886
        %v1888 = vpop.f32.mrf.mxu0
        %v1889 = vadd.f32 0.0, %v1888
        %1890 = vmatprep.mubr.bf16.mxu0 %v1025
        %1891 = vmatmul.mubr.bf16.gmra.mxu0 %v1024
        %v1892 = vpop.f32.mrf.mxu0
        %v1893 = vadd.f32 0.0, %v1892
        %v1894 = vpop.f32.mrf.mxu0
        %v1895 = vadd.f32 0.0, %v1894
        %v1896 = vpop.f32.mrf.mxu0
        %v1897 = vadd.f32 0.0, %v1896
        %v1898 = vpop.f32.mrf.mxu0
        %v1899 = vadd.f32 0.0, %v1898
        %1900 = vmatprep.mubr.bf16.mxu0 %v1027
        %1901 = vmatmul.mubr.bf16.gmra.mxu0 %v1026
        %v1902 = vpop.f32.mrf.mxu0
        %v1903 = vadd.f32 0.0, %v1902
        %v1904 = vpop.f32.mrf.mxu0
        %v1905 = vadd.f32 0.0, %v1904
        %v1906 = vpop.f32.mrf.mxu0
        %v1907 = vadd.f32 0.0, %v1906
        %v1908 = vpop.f32.mrf.mxu0
        %v1909 = vadd.f32 0.0, %v1908
        %1910 = vmatprep.mubr.bf16.mxu0 %v1029
        %1911 = vmatmul.mubr.bf16.gmra.mxu0 %v1028
        %v1912 = vpop.f32.mrf.mxu0
        %v1913 = vadd.f32 0.0, %v1912
        %v1914 = vpop.f32.mrf.mxu0
        %v1915 = vadd.f32 0.0, %v1914
        %v1916 = vpop.f32.mrf.mxu0
        %v1917 = vadd.f32 0.0, %v1916
        %v1918 = vpop.f32.mrf.mxu0
        %v1919 = vadd.f32 0.0, %v1918
        %1920 = vmatprep.mubr.bf16.mxu0 %v1031
        %1921 = vmatmul.mubr.bf16.gmra.mxu0 %v1030
        %v1922 = vpop.f32.mrf.mxu0
        %v1923 = vadd.f32 0.0, %v1922
        %v1924 = vpop.f32.mrf.mxu0
        %v1925 = vadd.f32 0.0, %v1924
        %v1926 = vpop.f32.mrf.mxu0
        %v1927 = vadd.f32 0.0, %v1926
        %v1928 = vpop.f32.mrf.mxu0
        %v1929 = vadd.f32 0.0, %v1928
        %1930 = vmatprep.mubr.bf16.mxu0 %v1033
        %1931 = vmatmul.mubr.bf16.gmra.mxu0 %v1032
        %v1932 = vpop.f32.mrf.mxu0
        %v1933 = vadd.f32 0.0, %v1932
        %v1934 = vpop.f32.mrf.mxu0
        %v1935 = vadd.f32 0.0, %v1934
        %v1936 = vpop.f32.mrf.mxu0
        %v1937 = vadd.f32 0.0, %v1936
        %v1938 = vpop.f32.mrf.mxu0
        %v1939 = vadd.f32 0.0, %v1938
        %1940 = vmatprep.mubr.bf16.mxu0 %v1035
        %1941 = vmatmul.mubr.bf16.gmra.mxu0 %v1034
        %v1942 = vpop.f32.mrf.mxu0
        %v1943 = vadd.f32 0.0, %v1942
        %v1944 = vpop.f32.mrf.mxu0
        %v1945 = vadd.f32 0.0, %v1944
        %v1946 = vpop.f32.mrf.mxu0
        %v1947 = vadd.f32 0.0, %v1946
        %v1948 = vpop.f32.mrf.mxu0
        %v1949 = vadd.f32 0.0, %v1948
        %1950 = vdwg.mxu0
        %v1951 = vpack.c.bf16 %v1877, %v1873
        %v1952 = vpack.c.bf16 %v1879, %v1875
        %v1953 = vpack.c.bf16 %v1887, %v1883
        %v1954 = vpack.c.bf16 %v1889, %v1885
        %v1955 = vpack.c.bf16 %v1897, %v1893
        %v1956 = vpack.c.bf16 %v1899, %v1895
        %v1957 = vpack.c.bf16 %v1907, %v1903
        %v1958 = vpack.c.bf16 %v1909, %v1905
        %v1959 = vpack.c.bf16 %v1917, %v1913
        %v1960 = vpack.c.bf16 %v1919, %v1915
        %v1961 = vpack.c.bf16 %v1927, %v1923
        %v1962 = vpack.c.bf16 %v1929, %v1925
        %v1963 = vpack.c.bf16 %v1937, %v1933
        %v1964 = vpack.c.bf16 %v1939, %v1935
        %v1965 = vpack.c.bf16 %v1947, %v1943
        %v1966 = vpack.c.bf16 %v1949, %v1945
        %v1967 = vmul.f32 %v1647, %v550
        %v1968 = vmul.f32 %v1651, %v551
        %v1969 = vmul.f32 %v1657, %v552
        %v1970 = vmul.f32 %v1661, %v553
        %v1971 = vmul.f32 %v1667, %v554
        %v1972 = vmul.f32 %v1671, %v555
        %v1973 = vmul.f32 %v1677, %v556
        %v1974 = vmul.f32 %v1681, %v557
        %v1975 = vmul.f32 %v1687, %v558
        %v1976 = vmul.f32 %v1691, %v559
        %v1977 = vmul.f32 %v1697, %v560
        %v1978 = vmul.f32 %v1701, %v561
        %v1979 = vmul.f32 %v1707, %v562
        %v1980 = vmul.f32 %v1711, %v563
        %v1981 = vmul.f32 %v1717, %v564
        %v1982 = vmul.f32 %v1721, %v565
        %1983 = vrot.lane.b32.xlu0 %v1647, 64
        %v1984 = vpop.permute.xlu0 %1983
        %1985 = vrot.lane.b32.xlu0 %v1651, 64
        %v1986 = vpop.permute.xlu0 %1985
        %1987 = vrot.lane.b32.xlu0 %v1657, 64
        %v1988 = vpop.permute.xlu0 %1987
        %1989 = vrot.lane.b32.xlu0 %v1661, 64
        %v1990 = vpop.permute.xlu0 %1989
        %1991 = vrot.lane.b32.xlu0 %v1667, 64
        %v1992 = vpop.permute.xlu0 %1991
        %1993 = vrot.lane.b32.xlu0 %v1671, 64
        %v1994 = vpop.permute.xlu0 %1993
        %1995 = vrot.lane.b32.xlu0 %v1677, 64
        %v1996 = vpop.permute.xlu0 %1995
        %1997 = vrot.lane.b32.xlu0 %v1681, 64
        %v1998 = vpop.permute.xlu0 %1997
        %1999 = vrot.lane.b32.xlu0 %v1687, 64
        %v2000 = vpop.permute.xlu0 %1999
        %2001 = vrot.lane.b32.xlu0 %v1691, 64
        %v2002 = vpop.permute.xlu0 %2001
        %2003 = vrot.lane.b32.xlu0 %v1697, 64
        %v2004 = vpop.permute.xlu0 %2003
        %2005 = vrot.lane.b32.xlu0 %v1701, 64
        %v2006 = vpop.permute.xlu0 %2005
        %2007 = vrot.lane.b32.xlu0 %v1707, 64
        %v2008 = vpop.permute.xlu0 %2007
        %2009 = vrot.lane.b32.xlu0 %v1711, 64
        %v2010 = vpop.permute.xlu0 %2009
        %2011 = vrot.lane.b32.xlu0 %v1717, 64
        %v2012 = vpop.permute.xlu0 %2011
        %2013 = vrot.lane.b32.xlu0 %v1721, 64
        %v2014 = vpop.permute.xlu0 %2013
        %v2015 = vmul.f32 %v1984, %v566
        %v2016 = vmul.f32 %v1986, %v567
        %v2017 = vmul.f32 %v1988, %v568
        %v2018 = vmul.f32 %v1990, %v569
        %v2019 = vmul.f32 %v1992, %v570
        %v2020 = vmul.f32 %v1994, %v571
        %v2021 = vmul.f32 %v1996, %v572
        %v2022 = vmul.f32 %v1998, %v573
        %v2023 = vmul.f32 %v2000, %v574
        %v2024 = vmul.f32 %v2002, %v575
        %v2025 = vmul.f32 %v2004, %v576
        %v2026 = vmul.f32 %v2006, %v577
        %v2027 = vmul.f32 %v2008, %v578
        %v2028 = vmul.f32 %v2010, %v579
        %v2029 = vmul.f32 %v2012, %v580
        %v2030 = vmul.f32 %v2014, %v581
        %v2031 = vadd.f32 %v1967, %v2015
        %v2032 = vadd.f32 %v1968, %v2016
        %v2033 = vadd.f32 %v1969, %v2017
        %v2034 = vadd.f32 %v1970, %v2018
        %v2035 = vadd.f32 %v1971, %v2019
        %v2036 = vadd.f32 %v1972, %v2020
        %v2037 = vadd.f32 %v1973, %v2021
        %v2038 = vadd.f32 %v1974, %v2022
        %v2039 = vadd.f32 %v1975, %v2023
        %v2040 = vadd.f32 %v1976, %v2024
        %v2041 = vadd.f32 %v1977, %v2025
        %v2042 = vadd.f32 %v1978, %v2026
        %v2043 = vadd.f32 %v1979, %v2027
        %v2044 = vadd.f32 %v1980, %v2028
        %v2045 = vadd.f32 %v1981, %v2029
        %v2046 = vadd.f32 %v1982, %v2030
        %v2047 = vmul.f32 %v1649, %v550
        %v2048 = vmul.f32 %v1653, %v551
        %v2049 = vmul.f32 %v1659, %v552
        %v2050 = vmul.f32 %v1663, %v553
        %v2051 = vmul.f32 %v1669, %v554
        %v2052 = vmul.f32 %v1673, %v555
        %v2053 = vmul.f32 %v1679, %v556
        %v2054 = vmul.f32 %v1683, %v557
        %v2055 = vmul.f32 %v1689, %v558
        %v2056 = vmul.f32 %v1693, %v559
        %v2057 = vmul.f32 %v1699, %v560
        %v2058 = vmul.f32 %v1703, %v561
        %v2059 = vmul.f32 %v1709, %v562
        %v2060 = vmul.f32 %v1713, %v563
        %v2061 = vmul.f32 %v1719, %v564
        %v2062 = vmul.f32 %v1723, %v565
        %2063 = vrot.lane.b32.xlu0 %v1649, 64
        %v2064 = vpop.permute.xlu0 %2063
        %2065 = vrot.lane.b32.xlu0 %v1653, 64
        %v2066 = vpop.permute.xlu0 %2065
        %2067 = vrot.lane.b32.xlu0 %v1659, 64
        %v2068 = vpop.permute.xlu0 %2067
        %2069 = vrot.lane.b32.xlu0 %v1663, 64
        %v2070 = vpop.permute.xlu0 %2069
        %2071 = vrot.lane.b32.xlu0 %v1669, 64
        %v2072 = vpop.permute.xlu0 %2071
        %2073 = vrot.lane.b32.xlu0 %v1673, 64
        %v2074 = vpop.permute.xlu0 %2073
        %2075 = vrot.lane.b32.xlu0 %v1679, 64
        %v2076 = vpop.permute.xlu0 %2075
        %2077 = vrot.lane.b32.xlu0 %v1683, 64
        %v2078 = vpop.permute.xlu0 %2077
        %2079 = vrot.lane.b32.xlu0 %v1689, 64
        %v2080 = vpop.permute.xlu0 %2079
        %2081 = vrot.lane.b32.xlu0 %v1693, 64
        %v2082 = vpop.permute.xlu0 %2081
        %2083 = vrot.lane.b32.xlu0 %v1699, 64
        %v2084 = vpop.permute.xlu0 %2083
        %2085 = vrot.lane.b32.xlu0 %v1703, 64
        %v2086 = vpop.permute.xlu0 %2085
        %2087 = vrot.lane.b32.xlu0 %v1709, 64
        %v2088 = vpop.permute.xlu0 %2087
        %2089 = vrot.lane.b32.xlu0 %v1713, 64
        %v2090 = vpop.permute.xlu0 %2089
        %2091 = vrot.lane.b32.xlu0 %v1719, 64
        %v2092 = vpop.permute.xlu0 %2091
        %2093 = vrot.lane.b32.xlu0 %v1723, 64
        %v2094 = vpop.permute.xlu0 %2093
        %v2095 = vmul.f32 %v2064, %v566
        %v2096 = vmul.f32 %v2066, %v567
        %v2097 = vmul.f32 %v2068, %v568
        %v2098 = vmul.f32 %v2070, %v569
        %v2099 = vmul.f32 %v2072, %v570
        %v2100 = vmul.f32 %v2074, %v571
        %v2101 = vmul.f32 %v2076, %v572
        %v2102 = vmul.f32 %v2078, %v573
        %v2103 = vmul.f32 %v2080, %v574
        %v2104 = vmul.f32 %v2082, %v575
        %v2105 = vmul.f32 %v2084, %v576
        %v2106 = vmul.f32 %v2086, %v577
        %v2107 = vmul.f32 %v2088, %v578
        %v2108 = vmul.f32 %v2090, %v579
        %v2109 = vmul.f32 %v2092, %v580
        %v2110 = vmul.f32 %v2094, %v581
        %v2111 = vadd.f32 %v2047, %v2095
        %v2112 = vadd.f32 %v2048, %v2096
        %v2113 = vadd.f32 %v2049, %v2097
        %v2114 = vadd.f32 %v2050, %v2098
        %v2115 = vadd.f32 %v2051, %v2099
        %v2116 = vadd.f32 %v2052, %v2100
        %v2117 = vadd.f32 %v2053, %v2101
        %v2118 = vadd.f32 %v2054, %v2102
        %v2119 = vadd.f32 %v2055, %v2103
        %v2120 = vadd.f32 %v2056, %v2104
        %v2121 = vadd.f32 %v2057, %v2105
        %v2122 = vadd.f32 %v2058, %v2106
        %v2123 = vadd.f32 %v2059, %v2107
        %v2124 = vadd.f32 %v2060, %v2108
        %v2125 = vadd.f32 %v2061, %v2109
        %v2126 = vadd.f32 %v2062, %v2110
        %v2127 = vpack.c.bf16 %v2032, %v2031
        %v2128 = vpack.c.bf16 %v2112, %v2111
        %v2129 = vpack.c.bf16 %v2034, %v2033
        %v2130 = vpack.c.bf16 %v2114, %v2113
        %v2131 = vpack.c.bf16 %v2036, %v2035
        %v2132 = vpack.c.bf16 %v2116, %v2115
        %v2133 = vpack.c.bf16 %v2038, %v2037
        %v2134 = vpack.c.bf16 %v2118, %v2117
        %v2135 = vpack.c.bf16 %v2040, %v2039
        %v2136 = vpack.c.bf16 %v2120, %v2119
        %v2137 = vpack.c.bf16 %v2042, %v2041
        %v2138 = vpack.c.bf16 %v2122, %v2121
        %v2139 = vpack.c.bf16 %v2044, %v2043
        %v2140 = vpack.c.bf16 %v2124, %v2123
        %v2141 = vpack.c.bf16 %v2046, %v2045
        %v2142 = vpack.c.bf16 %v2126, %v2125
        %v2143 = vmul.f32 %v1760, %v550
        %v2144 = vmul.f32 %v1764, %v551
        %v2145 = vmul.f32 %v1770, %v552
        %v2146 = vmul.f32 %v1774, %v553
        %v2147 = vmul.f32 %v1780, %v554
        %v2148 = vmul.f32 %v1784, %v555
        %v2149 = vmul.f32 %v1790, %v556
        %v2150 = vmul.f32 %v1794, %v557
        %v2151 = vmul.f32 %v1800, %v558
        %v2152 = vmul.f32 %v1804, %v559
        %v2153 = vmul.f32 %v1810, %v560
        %v2154 = vmul.f32 %v1814, %v561
        %v2155 = vmul.f32 %v1820, %v562
        %v2156 = vmul.f32 %v1824, %v563
        %v2157 = vmul.f32 %v1830, %v564
        %v2158 = vmul.f32 %v1834, %v565
        %2159 = vrot.lane.b32.xlu0 %v1760, 64
        %v2160 = vpop.permute.xlu0 %2159
        %2161 = vrot.lane.b32.xlu0 %v1764, 64
        %v2162 = vpop.permute.xlu0 %2161
        %2163 = vrot.lane.b32.xlu0 %v1770, 64
        %v2164 = vpop.permute.xlu0 %2163
        %2165 = vrot.lane.b32.xlu0 %v1774, 64
        %v2166 = vpop.permute.xlu0 %2165
        %2167 = vrot.lane.b32.xlu0 %v1780, 64
        %v2168 = vpop.permute.xlu0 %2167
        %2169 = vrot.lane.b32.xlu0 %v1784, 64
        %v2170 = vpop.permute.xlu0 %2169
        %2171 = vrot.lane.b32.xlu0 %v1790, 64
        %v2172 = vpop.permute.xlu0 %2171
        %2173 = vrot.lane.b32.xlu0 %v1794, 64
        %v2174 = vpop.permute.xlu0 %2173
        %2175 = vrot.lane.b32.xlu0 %v1800, 64
        %v2176 = vpop.permute.xlu0 %2175
        %2177 = vrot.lane.b32.xlu0 %v1804, 64
        %v2178 = vpop.permute.xlu0 %2177
        %2179 = vrot.lane.b32.xlu0 %v1810, 64
        %v2180 = vpop.permute.xlu0 %2179
        %2181 = vrot.lane.b32.xlu0 %v1814, 64
        %v2182 = vpop.permute.xlu0 %2181
        %2183 = vrot.lane.b32.xlu0 %v1820, 64
        %v2184 = vpop.permute.xlu0 %2183
        %2185 = vrot.lane.b32.xlu0 %v1824, 64
        %v2186 = vpop.permute.xlu0 %2185
        %2187 = vrot.lane.b32.xlu0 %v1830, 64
        %v2188 = vpop.permute.xlu0 %2187
        %2189 = vrot.lane.b32.xlu0 %v1834, 64
        %v2190 = vpop.permute.xlu0 %2189
        %v2191 = vmul.f32 %v2160, %v566
        %v2192 = vmul.f32 %v2162, %v567
        %v2193 = vmul.f32 %v2164, %v568
        %v2194 = vmul.f32 %v2166, %v569
        %v2195 = vmul.f32 %v2168, %v570
        %v2196 = vmul.f32 %v2170, %v571
        %v2197 = vmul.f32 %v2172, %v572
        %v2198 = vmul.f32 %v2174, %v573
        %v2199 = vmul.f32 %v2176, %v574
        %v2200 = vmul.f32 %v2178, %v575
        %v2201 = vmul.f32 %v2180, %v576
        %v2202 = vmul.f32 %v2182, %v577
        %v2203 = vmul.f32 %v2184, %v578
        %v2204 = vmul.f32 %v2186, %v579
        %v2205 = vmul.f32 %v2188, %v580
        %v2206 = vmul.f32 %v2190, %v581
        %v2207 = vadd.f32 %v2143, %v2191
        %v2208 = vadd.f32 %v2144, %v2192
        %v2209 = vadd.f32 %v2145, %v2193
        %v2210 = vadd.f32 %v2146, %v2194
        %v2211 = vadd.f32 %v2147, %v2195
        %v2212 = vadd.f32 %v2148, %v2196
        %v2213 = vadd.f32 %v2149, %v2197
        %v2214 = vadd.f32 %v2150, %v2198
        %v2215 = vadd.f32 %v2151, %v2199
        %v2216 = vadd.f32 %v2152, %v2200
        %v2217 = vadd.f32 %v2153, %v2201
        %v2218 = vadd.f32 %v2154, %v2202
        %v2219 = vadd.f32 %v2155, %v2203
        %v2220 = vadd.f32 %v2156, %v2204
        %v2221 = vadd.f32 %v2157, %v2205
        %v2222 = vadd.f32 %v2158, %v2206
        %v2223 = vmul.f32 %v1762, %v550
        %v2224 = vmul.f32 %v1766, %v551
        %v2225 = vmul.f32 %v1772, %v552
        %v2226 = vmul.f32 %v1776, %v553
        %v2227 = vmul.f32 %v1782, %v554
        %v2228 = vmul.f32 %v1786, %v555
        %v2229 = vmul.f32 %v1792, %v556
        %v2230 = vmul.f32 %v1796, %v557
        %v2231 = vmul.f32 %v1802, %v558
        %v2232 = vmul.f32 %v1806, %v559
        %v2233 = vmul.f32 %v1812, %v560
        %v2234 = vmul.f32 %v1816, %v561
        %v2235 = vmul.f32 %v1822, %v562
        %v2236 = vmul.f32 %v1826, %v563
        %v2237 = vmul.f32 %v1832, %v564
        %v2238 = vmul.f32 %v1836, %v565
        %2239 = vrot.lane.b32.xlu0 %v1762, 64
        %v2240 = vpop.permute.xlu0 %2239
        %2241 = vrot.lane.b32.xlu0 %v1766, 64
        %v2242 = vpop.permute.xlu0 %2241
        %2243 = vrot.lane.b32.xlu0 %v1772, 64
        %v2244 = vpop.permute.xlu0 %2243
        %2245 = vrot.lane.b32.xlu0 %v1776, 64
        %v2246 = vpop.permute.xlu0 %2245
        %2247 = vrot.lane.b32.xlu0 %v1782, 64
        %v2248 = vpop.permute.xlu0 %2247
        %2249 = vrot.lane.b32.xlu0 %v1786, 64
        %v2250 = vpop.permute.xlu0 %2249
        %2251 = vrot.lane.b32.xlu0 %v1792, 64
        %v2252 = vpop.permute.xlu0 %2251
        %2253 = vrot.lane.b32.xlu0 %v1796, 64
        %v2254 = vpop.permute.xlu0 %2253
        %2255 = vrot.lane.b32.xlu0 %v1802, 64
        %v2256 = vpop.permute.xlu0 %2255
        %2257 = vrot.lane.b32.xlu0 %v1806, 64
        %v2258 = vpop.permute.xlu0 %2257
        %2259 = vrot.lane.b32.xlu0 %v1812, 64
        %v2260 = vpop.permute.xlu0 %2259
        %2261 = vrot.lane.b32.xlu0 %v1816, 64
        %v2262 = vpop.permute.xlu0 %2261
        %2263 = vrot.lane.b32.xlu0 %v1822, 64
        %v2264 = vpop.permute.xlu0 %2263
        %2265 = vrot.lane.b32.xlu0 %v1826, 64
        %v2266 = vpop.permute.xlu0 %2265
        %2267 = vrot.lane.b32.xlu0 %v1832, 64
        %v2268 = vpop.permute.xlu0 %2267
        %2269 = vrot.lane.b32.xlu0 %v1836, 64
        %v2270 = vpop.permute.xlu0 %2269
        %v2271 = vmul.f32 %v2240, %v566
        %v2272 = vmul.f32 %v2242, %v567
        %v2273 = vmul.f32 %v2244, %v568
        %v2274 = vmul.f32 %v2246, %v569
        %v2275 = vmul.f32 %v2248, %v570
        %v2276 = vmul.f32 %v2250, %v571
        %v2277 = vmul.f32 %v2252, %v572
        %v2278 = vmul.f32 %v2254, %v573
        %v2279 = vmul.f32 %v2256, %v574
        %v2280 = vmul.f32 %v2258, %v575
        %v2281 = vmul.f32 %v2260, %v576
        %v2282 = vmul.f32 %v2262, %v577
        %v2283 = vmul.f32 %v2264, %v578
        %v2284 = vmul.f32 %v2266, %v579
        %v2285 = vmul.f32 %v2268, %v580
        %v2286 = vmul.f32 %v2270, %v581
        %v2287 = vadd.f32 %v2223, %v2271
        %v2288 = vadd.f32 %v2224, %v2272
        %v2289 = vadd.f32 %v2225, %v2273
        %v2290 = vadd.f32 %v2226, %v2274
        %v2291 = vadd.f32 %v2227, %v2275
        %v2292 = vadd.f32 %v2228, %v2276
        %v2293 = vadd.f32 %v2229, %v2277
        %v2294 = vadd.f32 %v2230, %v2278
        %v2295 = vadd.f32 %v2231, %v2279
        %v2296 = vadd.f32 %v2232, %v2280
        %v2297 = vadd.f32 %v2233, %v2281
        %v2298 = vadd.f32 %v2234, %v2282
        %v2299 = vadd.f32 %v2235, %v2283
        %v2300 = vadd.f32 %v2236, %v2284
        %v2301 = vadd.f32 %v2237, %v2285
        %v2302 = vadd.f32 %v2238, %v2286
        %v2303 = vpack.c.bf16 %v2208, %v2207
        %v2304 = vpack.c.bf16 %v2288, %v2287
        %v2305 = vpack.c.bf16 %v2210, %v2209
        %v2306 = vpack.c.bf16 %v2290, %v2289
        %v2307 = vpack.c.bf16 %v2212, %v2211
        %v2308 = vpack.c.bf16 %v2292, %v2291
        %v2309 = vpack.c.bf16 %v2214, %v2213
        %v2310 = vpack.c.bf16 %v2294, %v2293
        %v2311 = vpack.c.bf16 %v2216, %v2215
        %v2312 = vpack.c.bf16 %v2296, %v2295
        %v2313 = vpack.c.bf16 %v2218, %v2217
        %v2314 = vpack.c.bf16 %v2298, %v2297
        %v2315 = vpack.c.bf16 %v2220, %v2219
        %v2316 = vpack.c.bf16 %v2300, %v2299
        %v2317 = vpack.c.bf16 %v2222, %v2221
        %v2318 = vpack.c.bf16 %v2302, %v2301
        %2319 = vmatprep.subr.bf16.mxu0 0
        %2320 = vmatpush1.bf16.xpose.msra.mxu0 0
        %2321 = vmatprep.subr.bf16.mxu0 0
        %2322 = vmatpush1.bf16.xpose.msra.mxu0 0
        %2323 = vmatprep.subr.bf16.mxu0 0
        %2324 = vmatpush1.bf16.xpose.msra.mxu0 0
        %2325 = vmatprep.subr.bf16.mxu0 0
        %2326 = vmatpush1.bf16.xpose.msra.mxu0 0
        %2327 = vmatprep.subr.bf16.mxu0 0
        %2328 = vmatpush1.bf16.xpose.msra.mxu0 %v2309
        %2329 = vmatprep.subr.bf16.mxu0 0
        %2330 = vmatpush1.bf16.xpose.msra.mxu0 %v2307
        %2331 = vmatprep.subr.bf16.mxu0 0
        %2332 = vmatpush1.bf16.xpose.msra.mxu0 %v2305
        %2333 = vmatprep.subr.bf16.mxu0 0
        %2334 = vmatpush1.bf16.xpose.msra.mxu0 %v2303
        %2335 = vmatprep.subr.bf16.mxu0 0
        %2336 = vmatpush2.bf16.xpose.msra.mxu0 0
        %2337 = vmatprep.subr.bf16.mxu0 0
        %2338 = vmatpush2.bf16.xpose.msra.mxu0 0
        %2339 = vmatprep.subr.bf16.mxu0 0
        %2340 = vmatpush2.bf16.xpose.msra.mxu0 0
        %2341 = vmatprep.subr.bf16.mxu0 0
        %2342 = vmatpush2.bf16.xpose.msra.mxu0 0
        %2343 = vmatprep.subr.bf16.mxu0 0
        %2344 = vmatpush2.bf16.xpose.msra.mxu0 0
        %2345 = vmatprep.subr.bf16.mxu0 0
        %2346 = vmatpush2.bf16.xpose.msra.mxu0 0
        %2347 = vmatprep.subr.bf16.mxu0 0
        %2348 = vmatpush2.bf16.xpose.msra.mxu0 0
        %2349 = vmatprep.subr.bf16.mxu0 0
        %2350 = vmatpush2.bf16.xpose.msra.mxu0 0
        %2351 = vmatprep.mubr.bf16.mxu0 0
        %2352 = vmatmul.mubr.bf16.gmra.mxu0 %v2127
        %v2353 = vpop.f32.mrf.mxu0
        %v2354 = vadd.f32 0.0, %v2353
        %v2355 = vpop.f32.mrf.mxu0
        %v2356 = vpop.f32.mrf.mxu0
        %v2357 = vadd.f32 0.0, %v2356
        %v2358 = vpop.f32.mrf.mxu0
        %2359 = vmatprep.mubr.bf16.mxu0 0
        %2360 = vmatmul.mubr.bf16.gmra.mxu0 %v2129
        %v2361 = vpop.f32.mrf.mxu0
        %v2362 = vadd.f32 0.0, %v2361
        %v2363 = vpop.f32.mrf.mxu0
        %v2364 = vpop.f32.mrf.mxu0
        %v2365 = vadd.f32 0.0, %v2364
        %v2366 = vpop.f32.mrf.mxu0
        %2367 = vmatprep.mubr.bf16.mxu0 0
        %2368 = vmatmul.mubr.bf16.gmra.mxu0 %v2131
        %v2369 = vpop.f32.mrf.mxu0
        %v2370 = vadd.f32 0.0, %v2369
        %v2371 = vpop.f32.mrf.mxu0
        %v2372 = vpop.f32.mrf.mxu0
        %v2373 = vadd.f32 0.0, %v2372
        %v2374 = vpop.f32.mrf.mxu0
        %2375 = vmatprep.mubr.bf16.mxu0 0
        %2376 = vmatmul.mubr.bf16.gmra.mxu0 %v2133
        %v2377 = vpop.f32.mrf.mxu0
        %v2378 = vadd.f32 0.0, %v2377
        %v2379 = vpop.f32.mrf.mxu0
        %v2380 = vpop.f32.mrf.mxu0
        %v2381 = vadd.f32 0.0, %v2380
        %v2382 = vpop.f32.mrf.mxu0
        %2383 = vdwg.mxu0
        %v2384 = vmul.f32 %v2354, 0.088388346
        %v2385 = vmul.f32 %v2357, 0.088388346
        %v2386 = vmul.f32 %v2362, 0.088388346
        %v2387 = vmul.f32 %v2365, 0.088388346
        %v2388 = vmul.f32 %v2370, 0.088388346
        %v2389 = vmul.f32 %v2373, 0.088388346
        %v2390 = vmul.f32 %v2378, 0.088388346
        %v2391 = vmul.f32 %v2381, 0.088388346
        %vm2392 = vcmask 523264
        %v2393 = vsel %vm2392, %v2384, -inf
        %2394 = vmax.xlane.f32.xlu0 %v2393
        %v2395 = vpop.xlane.xlu0 %2394
        %v2396 = vsel %vm2392, %v2385, -inf
        %2397 = vmax.xlane.f32.xlu0 %v2396
        %v2398 = vpop.xlane.xlu0 %2397
        %v2399 = vsel %vm2392, %v2386, -inf
        %2400 = vmax.xlane.f32.xlu0 %v2399
        %v2401 = vpop.xlane.xlu0 %2400
        %v2402 = vsel %vm2392, %v2387, -inf
        %2403 = vmax.xlane.f32.xlu0 %v2402
        %v2404 = vpop.xlane.xlu0 %2403
        %v2405 = vsel %vm2392, %v2388, -inf
        %2406 = vmax.xlane.f32.xlu0 %v2405
        %v2407 = vpop.xlane.xlu0 %2406
        %v2408 = vsel %vm2392, %v2389, -inf
        %2409 = vmax.xlane.f32.xlu0 %v2408
        %v2410 = vpop.xlane.xlu0 %2409
        %v2411 = vsel %vm2392, %v2390, -inf
        %2412 = vmax.xlane.f32.xlu0 %v2411
        %v2413 = vpop.xlane.xlu0 %2412
        %v2414 = vsel %vm2392, %v2391, -inf
        %2415 = vmax.xlane.f32.xlu0 %v2414
        %v2416 = vpop.xlane.xlu0 %2415
        %v2417 = vsub.f32 %v2384, %v2395
        %v2418 = vsub.f32 %v2385, %v2398
        %v2419 = vsub.f32 %v2386, %v2401
        %v2420 = vsub.f32 %v2387, %v2404
        %v2421 = vsub.f32 %v2388, %v2407
        %v2422 = vsub.f32 %v2389, %v2410
        %v2423 = vsub.f32 %v2390, %v2413
        %v2424 = vsub.f32 %v2391, %v2416
        %v2425 = vmul.f32 %v2417, 1.442695
        %v2426 = vpow.pop %v2425
        %v2427 = vmul.f32 %v2418, 1.442695
        %v2428 = vpow.pop %v2427
        %v2429 = vmul.f32 %v2419, 1.442695
        %v2430 = vpow.pop %v2429
        %v2431 = vmul.f32 %v2420, 1.442695
        %v2432 = vpow.pop %v2431
        %v2433 = vmul.f32 %v2421, 1.442695
        %v2434 = vpow.pop %v2433
        %v2435 = vmul.f32 %v2422, 1.442695
        %v2436 = vpow.pop %v2435
        %v2437 = vmul.f32 %v2423, 1.442695
        %v2438 = vpow.pop %v2437
        %v2439 = vmul.f32 %v2424, 1.442695
        %v2440 = vpow.pop %v2439
        %v2441 = vsel %vm2392, %v2426, 0.0
        %2442 = vadd.xlane.f32.xlu0 %v2441
        %v2443 = vpop.xlane.xlu0 %2442
        %v2444 = vsel %vm2392, %v2428, 0.0
        %2445 = vadd.xlane.f32.xlu0 %v2444
        %v2446 = vpop.xlane.xlu0 %2445
        %v2447 = vsel %vm2392, %v2430, 0.0
        %2448 = vadd.xlane.f32.xlu0 %v2447
        %v2449 = vpop.xlane.xlu0 %2448
        %v2450 = vsel %vm2392, %v2432, 0.0
        %2451 = vadd.xlane.f32.xlu0 %v2450
        %v2452 = vpop.xlane.xlu0 %2451
        %v2453 = vsel %vm2392, %v2434, 0.0
        %2454 = vadd.xlane.f32.xlu0 %v2453
        %v2455 = vpop.xlane.xlu0 %2454
        %v2456 = vsel %vm2392, %v2436, 0.0
        %2457 = vadd.xlane.f32.xlu0 %v2456
        %v2458 = vpop.xlane.xlu0 %2457
        %v2459 = vsel %vm2392, %v2438, 0.0
        %2460 = vadd.xlane.f32.xlu0 %v2459
        %v2461 = vpop.xlane.xlu0 %2460
        %v2462 = vsel %vm2392, %v2440, 0.0
        %2463 = vadd.xlane.f32.xlu0 %v2462
        %v2464 = vpop.xlane.xlu0 %2463
        %v2465 = vrcp.pop %v2443
        %v2466 = vrcp.pop %v2446
        %v2467 = vrcp.pop %v2449
        %v2468 = vrcp.pop %v2452
        %v2469 = vrcp.pop %v2455
        %v2470 = vrcp.pop %v2458
        %v2471 = vrcp.pop %v2461
        %v2472 = vrcp.pop %v2464
        %v2473 = vmul.f32 %v2426, %v2465
        %v2474 = vmul.f32 %v2428, %v2466
        %v2475 = vmul.f32 %v2430, %v2467
        %v2476 = vmul.f32 %v2432, %v2468
        %v2477 = vmul.f32 %v2434, %v2469
        %v2478 = vmul.f32 %v2436, %v2470
        %v2479 = vmul.f32 %v2438, %v2471
        %v2480 = vmul.f32 %v2440, %v2472
        %v2481 = vpack.c.bf16 %v2474, %v2473
        %v2482 = vpack.c.bf16 %v2476, %v2475
        %v2483 = vpack.c.bf16 %v2478, %v2477
        %v2484 = vpack.c.bf16 %v2480, %v2479
        %v2486 = vsel %vm2392, %v2481, 0
        %v2489 = vsel %vm2392, %v2482, 0
        %v2492 = vsel %vm2392, %v2483, 0
        %v2495 = vsel %vm2392, %v2484, 0
        %2497 = vmatprep.subr.bf16.mxu0 0
        %2498 = vmatpush1.bf16.msra.mxu0 0
        %2499 = vmatprep.subr.bf16.mxu0 0
        %2500 = vmatpush1.bf16.msra.mxu0 0
        %2501 = vmatprep.subr.bf16.mxu0 0
        %2502 = vmatpush1.bf16.msra.mxu0 0
        %2503 = vmatprep.subr.bf16.mxu0 0
        %2504 = vmatpush1.bf16.msra.mxu0 0
        %2505 = vmatprep.subr.bf16.mxu0 0
        %2506 = vmatpush1.bf16.msra.mxu0 %v1957
        %2507 = vmatprep.subr.bf16.mxu0 0
        %2508 = vmatpush1.bf16.msra.mxu0 %v1955
        %2509 = vmatprep.subr.bf16.mxu0 0
        %2510 = vmatpush1.bf16.msra.mxu0 %v1953
        %2511 = vmatprep.subr.bf16.mxu0 0
        %2512 = vmatpush1.bf16.msra.mxu0 %v1951
        %2513 = vmatprep.subr.bf16.mxu0 0
        %2514 = vmatpush2.bf16.msra.mxu0 0
        %2515 = vmatprep.subr.bf16.mxu0 0
        %2516 = vmatpush2.bf16.msra.mxu0 0
        %2517 = vmatprep.subr.bf16.mxu0 0
        %2518 = vmatpush2.bf16.msra.mxu0 0
        %2519 = vmatprep.subr.bf16.mxu0 0
        %2520 = vmatpush2.bf16.msra.mxu0 0
        %2521 = vmatprep.subr.bf16.mxu0 0
        %2522 = vmatpush2.bf16.msra.mxu0 0
        %2523 = vmatprep.subr.bf16.mxu0 0
        %2524 = vmatpush2.bf16.msra.mxu0 0
        %2525 = vmatprep.subr.bf16.mxu0 0
        %2526 = vmatpush2.bf16.msra.mxu0 0
        %2527 = vmatprep.subr.bf16.mxu0 0
        %2528 = vmatpush2.bf16.msra.mxu0 0
        %2529 = vmatprep.mubr.bf16.mxu0 0
        %2530 = vmatmul.mubr.bf16.gmra.mxu0 %v2486
        %v2531 = vpop.f32.mrf.mxu0
        %v2532 = vadd.f32 0.0, %v2531
        %v2533 = vpop.f32.mrf.mxu0
        %v2534 = vpop.f32.mrf.mxu0
        %v2535 = vadd.f32 0.0, %v2534
        %v2536 = vpop.f32.mrf.mxu0
        %2537 = vmatprep.mubr.bf16.mxu0 0
        %2538 = vmatmul.mubr.bf16.gmra.mxu0 %v2489
        %v2539 = vpop.f32.mrf.mxu0
        %v2540 = vadd.f32 0.0, %v2539
        %v2541 = vpop.f32.mrf.mxu0
        %v2542 = vpop.f32.mrf.mxu0
        %v2543 = vadd.f32 0.0, %v2542
        %v2544 = vpop.f32.mrf.mxu0
        %2545 = vmatprep.mubr.bf16.mxu0 0
        %2546 = vmatmul.mubr.bf16.gmra.mxu0 %v2492
        %v2547 = vpop.f32.mrf.mxu0
        %v2548 = vadd.f32 0.0, %v2547
        %v2549 = vpop.f32.mrf.mxu0
        %v2550 = vpop.f32.mrf.mxu0
        %v2551 = vadd.f32 0.0, %v2550
        %v2552 = vpop.f32.mrf.mxu0
        %2553 = vmatprep.mubr.bf16.mxu0 0
        %2554 = vmatmul.mubr.bf16.gmra.mxu0 %v2495
        %v2555 = vpop.f32.mrf.mxu0
        %v2556 = vadd.f32 0.0, %v2555
        %v2557 = vpop.f32.mrf.mxu0
        %v2558 = vpop.f32.mrf.mxu0
        %v2559 = vadd.f32 0.0, %v2558
        %v2560 = vpop.f32.mrf.mxu0
        %2561 = vdwg.mxu0
        %v2562 = vpack.c.bf16 %v2535, %v2532
        %v2563 = vpack.c.bf16 %v2543, %v2540
        %v2564 = vpack.c.bf16 %v2551, %v2548
        %v2565 = vpack.c.bf16 %v2559, %v2556
        %v2566 = vld [vmem:[#allocation10] sm:$0xff]
        %v2567 = vld [vmem:[#allocation10 + $0x8] sm:$0xff]
        %v2568 = vld [vmem:[#allocation10 + $0x10] sm:$0xff]
        %v2569 = vld [vmem:[#allocation10 + $0x18] sm:$0xff]
        %v2570 = vld [vmem:[#allocation10 + $0x20] sm:$0xff]
        %v2571 = vld [vmem:[#allocation10 + $0x28] sm:$0xff]
        %v2572 = vld [vmem:[#allocation10 + $0x30] sm:$0xff]
        %v2573 = vld [vmem:[#allocation10 + $0x38] sm:$0xff]
        %v2574 = vld [vmem:[#allocation10 + $0x40] sm:$0xff]
        %v2575 = vld [vmem:[#allocation10 + $0x48] sm:$0xff]
        %v2576 = vld [vmem:[#allocation10 + $0x50] sm:$0xff]
        %v2577 = vld [vmem:[#allocation10 + $0x58] sm:$0xff]
        %v2578 = vld [vmem:[#allocation10 + $0x60] sm:$0xff]
        %v2579 = vld [vmem:[#allocation10 + $0x68] sm:$0xff]
        %v2580 = vld [vmem:[#allocation10 + $0x70] sm:$0xff]
        %v2581 = vld [vmem:[#allocation10 + $0x78] sm:$0xff]
        %2582 = vmatprep.subr.bf16.mxu0 0
        %2583 = vmatpush1.bf16.xpose.msra.mxu0 0
        %2584 = vmatprep.subr.bf16.mxu0 0
        %2585 = vmatpush1.bf16.xpose.msra.mxu0 0
        %2586 = vmatprep.subr.bf16.mxu0 0
        %2587 = vmatpush1.bf16.xpose.msra.mxu0 0
        %2588 = vmatprep.subr.bf16.mxu0 0
        %2589 = vmatpush1.bf16.xpose.msra.mxu0 0
        %2590 = vmatprep.subr.bf16.mxu0 0
        %2591 = vmatpush1.bf16.xpose.msra.mxu0 %v2310
        %2592 = vmatprep.subr.bf16.mxu0 0
        %2593 = vmatpush1.bf16.xpose.msra.mxu0 %v2308
        %2594 = vmatprep.subr.bf16.mxu0 0
        %2595 = vmatpush1.bf16.xpose.msra.mxu0 %v2306
        %2596 = vmatprep.subr.bf16.mxu0 0
        %2597 = vmatpush1.bf16.xpose.msra.mxu0 %v2304
        %2598 = vmatprep.subr.bf16.mxu0 0
        %2599 = vmatpush2.bf16.xpose.msra.mxu0 0
        %2600 = vmatprep.subr.bf16.mxu0 0
        %2601 = vmatpush2.bf16.xpose.msra.mxu0 0
        %2602 = vmatprep.subr.bf16.mxu0 0
        %2603 = vmatpush2.bf16.xpose.msra.mxu0 0
        %2604 = vmatprep.subr.bf16.mxu0 0
        %2605 = vmatpush2.bf16.xpose.msra.mxu0 0
        %2606 = vmatprep.subr.bf16.mxu0 0
        %2607 = vmatpush2.bf16.xpose.msra.mxu0 0
        %2608 = vmatprep.subr.bf16.mxu0 0
        %2609 = vmatpush2.bf16.xpose.msra.mxu0 0
        %2610 = vmatprep.subr.bf16.mxu0 0
        %2611 = vmatpush2.bf16.xpose.msra.mxu0 0
        %2612 = vmatprep.subr.bf16.mxu0 0
        %2613 = vmatpush2.bf16.xpose.msra.mxu0 0
        %2614 = vmatprep.mubr.bf16.mxu0 0
        %2615 = vmatmul.mubr.bf16.gmra.mxu0 %v2128
        %v2616 = vpop.f32.mrf.mxu0
        %v2617 = vadd.f32 0.0, %v2616
        %v2618 = vpop.f32.mrf.mxu0
        %v2619 = vpop.f32.mrf.mxu0
        %v2620 = vadd.f32 0.0, %v2619
        %v2621 = vpop.f32.mrf.mxu0
        %2622 = vmatprep.mubr.bf16.mxu0 0
        %2623 = vmatmul.mubr.bf16.gmra.mxu0 %v2130
        %v2624 = vpop.f32.mrf.mxu0
        %v2625 = vadd.f32 0.0, %v2624
        %v2626 = vpop.f32.mrf.mxu0
        %v2627 = vpop.f32.mrf.mxu0
        %v2628 = vadd.f32 0.0, %v2627
        %v2629 = vpop.f32.mrf.mxu0
        %2630 = vmatprep.mubr.bf16.mxu0 0
        %2631 = vmatmul.mubr.bf16.gmra.mxu0 %v2132
        %v2632 = vpop.f32.mrf.mxu0
        %v2633 = vadd.f32 0.0, %v2632
        %v2634 = vpop.f32.mrf.mxu0
        %v2635 = vpop.f32.mrf.mxu0
        %v2636 = vadd.f32 0.0, %v2635
        %v2637 = vpop.f32.mrf.mxu0
        %2638 = vmatprep.mubr.bf16.mxu0 0
        %2639 = vmatmul.mubr.bf16.gmra.mxu0 %v2134
        %v2640 = vpop.f32.mrf.mxu0
        %v2641 = vadd.f32 0.0, %v2640
        %v2642 = vpop.f32.mrf.mxu0
        %v2643 = vpop.f32.mrf.mxu0
        %v2644 = vadd.f32 0.0, %v2643
        %v2645 = vpop.f32.mrf.mxu0
        %2646 = vdwg.mxu0
        %v2647 = vmul.f32 %v2617, 0.088388346
        %v2648 = vmul.f32 %v2620, 0.088388346
        %v2649 = vmul.f32 %v2625, 0.088388346
        %v2650 = vmul.f32 %v2628, 0.088388346
        %v2651 = vmul.f32 %v2633, 0.088388346
        %v2652 = vmul.f32 %v2636, 0.088388346
        %v2653 = vmul.f32 %v2641, 0.088388346
        %v2654 = vmul.f32 %v2644, 0.088388346
        %v2655 = vsel %vm2392, %v2647, -inf
        %2656 = vmax.xlane.f32.xlu0 %v2655
        %v2657 = vpop.xlane.xlu0 %2656
        %v2658 = vsel %vm2392, %v2648, -inf
        %2659 = vmax.xlane.f32.xlu0 %v2658
        %v2660 = vpop.xlane.xlu0 %2659
        %v2661 = vsel %vm2392, %v2649, -inf
        %2662 = vmax.xlane.f32.xlu0 %v2661
        %v2663 = vpop.xlane.xlu0 %2662
        %v2664 = vsel %vm2392, %v2650, -inf
        %2665 = vmax.xlane.f32.xlu0 %v2664
        %v2666 = vpop.xlane.xlu0 %2665
        %v2667 = vsel %vm2392, %v2651, -inf
        %2668 = vmax.xlane.f32.xlu0 %v2667
        %v2669 = vpop.xlane.xlu0 %2668
        %v2670 = vsel %vm2392, %v2652, -inf
        %2671 = vmax.xlane.f32.xlu0 %v2670
        %v2672 = vpop.xlane.xlu0 %2671
        %v2673 = vsel %vm2392, %v2653, -inf
        %2674 = vmax.xlane.f32.xlu0 %v2673
        %v2675 = vpop.xlane.xlu0 %2674
        %v2676 = vsel %vm2392, %v2654, -inf
        %2677 = vmax.xlane.f32.xlu0 %v2676
        %v2678 = vpop.xlane.xlu0 %2677
        %v2679 = vsub.f32 %v2647, %v2657
        %v2680 = vsub.f32 %v2648, %v2660
        %v2681 = vsub.f32 %v2649, %v2663
        %v2682 = vsub.f32 %v2650, %v2666
        %v2683 = vsub.f32 %v2651, %v2669
        %v2684 = vsub.f32 %v2652, %v2672
        %v2685 = vsub.f32 %v2653, %v2675
        %v2686 = vsub.f32 %v2654, %v2678
        %v2687 = vmul.f32 %v2679, 1.442695
        %v2688 = vpow.pop %v2687
        %v2689 = vmul.f32 %v2680, 1.442695
        %v2690 = vpow.pop %v2689
        %v2691 = vmul.f32 %v2681, 1.442695
        %v2692 = vpow.pop %v2691
        %v2693 = vmul.f32 %v2682, 1.442695
        %v2694 = vpow.pop %v2693
        %v2695 = vmul.f32 %v2683, 1.442695
        %v2696 = vpow.pop %v2695
        %v2697 = vmul.f32 %v2684, 1.442695
        %v2698 = vpow.pop %v2697
        %v2699 = vmul.f32 %v2685, 1.442695
        %v2700 = vpow.pop %v2699
        %v2701 = vmul.f32 %v2686, 1.442695
        %v2702 = vpow.pop %v2701
        %v2703 = vsel %vm2392, %v2688, 0.0
        %2704 = vadd.xlane.f32.xlu0 %v2703
        %v2705 = vpop.xlane.xlu0 %2704
        %v2706 = vsel %vm2392, %v2690, 0.0
        %2707 = vadd.xlane.f32.xlu0 %v2706
        %v2708 = vpop.xlane.xlu0 %2707
        %v2709 = vsel %vm2392, %v2692, 0.0
        %2710 = vadd.xlane.f32.xlu0 %v2709
        %v2711 = vpop.xlane.xlu0 %2710
        %v2712 = vsel %vm2392, %v2694, 0.0
        %2713 = vadd.xlane.f32.xlu0 %v2712
        %v2714 = vpop.xlane.xlu0 %2713
        %v2715 = vsel %vm2392, %v2696, 0.0
        %2716 = vadd.xlane.f32.xlu0 %v2715
        %v2717 = vpop.xlane.xlu0 %2716
        %v2718 = vsel %vm2392, %v2698, 0.0
        %2719 = vadd.xlane.f32.xlu0 %v2718
        %v2720 = vpop.xlane.xlu0 %2719
        %v2721 = vsel %vm2392, %v2700, 0.0
        %2722 = vadd.xlane.f32.xlu0 %v2721
        %v2723 = vpop.xlane.xlu0 %2722
        %v2724 = vsel %vm2392, %v2702, 0.0
        %2725 = vadd.xlane.f32.xlu0 %v2724
        %v2726 = vpop.xlane.xlu0 %2725
        %v2727 = vrcp.pop %v2705
        %v2728 = vrcp.pop %v2708
        %v2729 = vrcp.pop %v2711
        %v2730 = vrcp.pop %v2714
        %v2731 = vrcp.pop %v2717
        %v2732 = vrcp.pop %v2720
        %v2733 = vrcp.pop %v2723
        %v2734 = vrcp.pop %v2726
        %v2735 = vmul.f32 %v2688, %v2727
        %v2736 = vmul.f32 %v2690, %v2728
        %v2737 = vmul.f32 %v2692, %v2729
        %v2738 = vmul.f32 %v2694, %v2730
        %v2739 = vmul.f32 %v2696, %v2731
        %v2740 = vmul.f32 %v2698, %v2732
        %v2741 = vmul.f32 %v2700, %v2733
        %v2742 = vmul.f32 %v2702, %v2734
        %v2743 = vpack.c.bf16 %v2736, %v2735
        %v2744 = vpack.c.bf16 %v2738, %v2737
        %v2745 = vpack.c.bf16 %v2740, %v2739
        %v2746 = vpack.c.bf16 %v2742, %v2741
        %v2748 = vsel %vm2392, %v2743, 0
        %v2751 = vsel %vm2392, %v2744, 0
        %v2754 = vsel %vm2392, %v2745, 0
        %v2757 = vsel %vm2392, %v2746, 0
        %2759 = vmatprep.subr.bf16.mxu0 0
        %2760 = vmatpush1.bf16.msra.mxu0 0
        %2761 = vmatprep.subr.bf16.mxu0 0
        %2762 = vmatpush1.bf16.msra.mxu0 0
        %2763 = vmatprep.subr.bf16.mxu0 0
        %2764 = vmatpush1.bf16.msra.mxu0 0
        %2765 = vmatprep.subr.bf16.mxu0 0
        %2766 = vmatpush1.bf16.msra.mxu0 0
        %2767 = vmatprep.subr.bf16.mxu0 0
        %2768 = vmatpush1.bf16.msra.mxu0 %v1958
        %2769 = vmatprep.subr.bf16.mxu0 0
        %2770 = vmatpush1.bf16.msra.mxu0 %v1956
        %2771 = vmatprep.subr.bf16.mxu0 0
        %2772 = vmatpush1.bf16.msra.mxu0 %v1954
        %2773 = vmatprep.subr.bf16.mxu0 0
        %2774 = vmatpush1.bf16.msra.mxu0 %v1952
        %2775 = vmatprep.subr.bf16.mxu0 0
        %2776 = vmatpush2.bf16.msra.mxu0 0
        %2777 = vmatprep.subr.bf16.mxu0 0
        %2778 = vmatpush2.bf16.msra.mxu0 0
        %2779 = vmatprep.subr.bf16.mxu0 0
        %2780 = vmatpush2.bf16.msra.mxu0 0
        %2781 = vmatprep.subr.bf16.mxu0 0
        %2782 = vmatpush2.bf16.msra.mxu0 0
        %2783 = vmatprep.subr.bf16.mxu0 0
        %2784 = vmatpush2.bf16.msra.mxu0 0
        %2785 = vmatprep.subr.bf16.mxu0 0
        %2786 = vmatpush2.bf16.msra.mxu0 0
        %2787 = vmatprep.subr.bf16.mxu0 0
        %2788 = vmatpush2.bf16.msra.mxu0 0
        %2789 = vmatprep.subr.bf16.mxu0 0
        %2790 = vmatpush2.bf16.msra.mxu0 0
        %2791 = vmatprep.mubr.bf16.mxu0 0
        %2792 = vmatmul.mubr.bf16.gmra.mxu0 %v2748
        %v2793 = vpop.f32.mrf.mxu0
        %v2794 = vadd.f32 0.0, %v2793
        %v2795 = vpop.f32.mrf.mxu0
        %v2796 = vpop.f32.mrf.mxu0
        %v2797 = vadd.f32 0.0, %v2796
        %v2798 = vpop.f32.mrf.mxu0
        %2799 = vmatprep.mubr.bf16.mxu0 0
        %2800 = vmatmul.mubr.bf16.gmra.mxu0 %v2751
        %v2801 = vpop.f32.mrf.mxu0
        %v2802 = vadd.f32 0.0, %v2801
        %v2803 = vpop.f32.mrf.mxu0
        %v2804 = vpop.f32.mrf.mxu0
        %v2805 = vadd.f32 0.0, %v2804
        %v2806 = vpop.f32.mrf.mxu0
        %2807 = vmatprep.mubr.bf16.mxu0 0
        %2808 = vmatmul.mubr.bf16.gmra.mxu0 %v2754
        %v2809 = vpop.f32.mrf.mxu0
        %v2810 = vadd.f32 0.0, %v2809
        %v2811 = vpop.f32.mrf.mxu0
        %v2812 = vpop.f32.mrf.mxu0
        %v2813 = vadd.f32 0.0, %v2812
        %v2814 = vpop.f32.mrf.mxu0
        %2815 = vmatprep.mubr.bf16.mxu0 0
        %2816 = vmatmul.mubr.bf16.gmra.mxu0 %v2757
        %v2817 = vpop.f32.mrf.mxu0
        %v2818 = vadd.f32 0.0, %v2817
        %v2819 = vpop.f32.mrf.mxu0
        %v2820 = vpop.f32.mrf.mxu0
        %v2821 = vadd.f32 0.0, %v2820
        %v2822 = vpop.f32.mrf.mxu0
        %2823 = vdwg.mxu0
        %v2824 = vpack.c.bf16 %v2797, %v2794
        %v2825 = vpack.c.bf16 %v2805, %v2802
        %v2826 = vpack.c.bf16 %v2813, %v2810
        %v2827 = vpack.c.bf16 %v2821, %v2818
        %v2828 = vld [vmem:[#allocation10 + $0x80] sm:$0xff]
        %v2829 = vld [vmem:[#allocation10 + $0x88] sm:$0xff]
        %v2830 = vld [vmem:[#allocation10 + $0x90] sm:$0xff]
        %v2831 = vld [vmem:[#allocation10 + $0x98] sm:$0xff]
        %v2832 = vld [vmem:[#allocation10 + $0xa0] sm:$0xff]
        %v2833 = vld [vmem:[#allocation10 + $0xa8] sm:$0xff]
        %v2834 = vld [vmem:[#allocation10 + $0xb0] sm:$0xff]
        %v2835 = vld [vmem:[#allocation10 + $0xb8] sm:$0xff]
        %v2836 = vld [vmem:[#allocation10 + $0xc0] sm:$0xff]
        %v2837 = vld [vmem:[#allocation10 + $0xc8] sm:$0xff]
        %v2838 = vld [vmem:[#allocation10 + $0xd0] sm:$0xff]
        %v2839 = vld [vmem:[#allocation10 + $0xd8] sm:$0xff]
        %v2840 = vld [vmem:[#allocation10 + $0xe0] sm:$0xff]
        %v2841 = vld [vmem:[#allocation10 + $0xe8] sm:$0xff]
        %v2842 = vld [vmem:[#allocation10 + $0xf0] sm:$0xff]
        %v2843 = vld [vmem:[#allocation10 + $0xf8] sm:$0xff]
        %v2860 = vunpack.c.l.b16 %v2828
        %v2861 = vunpack.c.h.b16 %v2828
        %v2862 = vunpack.c.l.b16 %v2829
        %v2863 = vunpack.c.h.b16 %v2829
        %v2864 = vunpack.c.l.b16 %v2830
        %v2865 = vunpack.c.h.b16 %v2830
        %v2866 = vunpack.c.l.b16 %v2831
        %v2867 = vunpack.c.h.b16 %v2831
        %v2868 = vunpack.c.l.b16 %v2832
        %v2869 = vunpack.c.h.b16 %v2832
        %v2870 = vunpack.c.l.b16 %v2833
        %v2871 = vunpack.c.h.b16 %v2833
        %v2872 = vunpack.c.l.b16 %v2834
        %v2873 = vunpack.c.h.b16 %v2834
        %v2874 = vunpack.c.l.b16 %v2835
        %v2875 = vunpack.c.h.b16 %v2835
        %v2876 = vunpack.c.l.b16 %v2836
        %v2877 = vunpack.c.h.b16 %v2836
        %v2878 = vunpack.c.l.b16 %v2837
        %v2879 = vunpack.c.h.b16 %v2837
        %v2880 = vunpack.c.l.b16 %v2838
        %v2881 = vunpack.c.h.b16 %v2838
        %v2882 = vunpack.c.l.b16 %v2839
        %v2883 = vunpack.c.h.b16 %v2839
        %v2884 = vunpack.c.l.b16 %v2840
        %v2885 = vunpack.c.h.b16 %v2840
        %v2886 = vunpack.c.l.b16 %v2841
        %v2887 = vunpack.c.h.b16 %v2841
        %v2888 = vunpack.c.l.b16 %v2842
        %v2889 = vunpack.c.h.b16 %v2842
        %v2890 = vunpack.c.l.b16 %v2843
        %v2891 = vunpack.c.h.b16 %v2843
        %v2892 = vpack.c.b16 %v2862, %v2860
        %v2893 = vpack.c.b16 %v2863, %v2861
        %v2894 = vpack.c.b16 %v2866, %v2864
        %v2895 = vpack.c.b16 %v2867, %v2865
        %v2896 = vpack.c.b16 %v2870, %v2868
        %v2897 = vpack.c.b16 %v2871, %v2869
        %v2898 = vpack.c.b16 %v2874, %v2872
        %v2899 = vpack.c.b16 %v2875, %v2873
        %v2900 = vpack.c.b16 %v2878, %v2876
        %v2901 = vpack.c.b16 %v2879, %v2877
        %v2902 = vpack.c.b16 %v2882, %v2880
        %v2903 = vpack.c.b16 %v2883, %v2881
        %v2904 = vpack.c.b16 %v2886, %v2884
        %v2905 = vpack.c.b16 %v2887, %v2885
        %v2906 = vpack.c.b16 %v2890, %v2888
        %v2907 = vpack.c.b16 %v2891, %v2889
        %2924 = vmatprep.subr.bf16.mxu0 %v2907
        %2925 = vmatpush1.bf16.msra.mxu0 %v2906
        %2926 = vmatprep.subr.bf16.mxu0 %v2905
        %2927 = vmatpush1.bf16.msra.mxu0 %v2904
        %2928 = vmatprep.subr.bf16.mxu0 %v2903
        %2929 = vmatpush1.bf16.msra.mxu0 %v2902
        %2930 = vmatprep.subr.bf16.mxu0 %v2901
        %2931 = vmatpush1.bf16.msra.mxu0 %v2900
        %2932 = vmatprep.subr.bf16.mxu0 %v2899
        %2933 = vmatpush1.bf16.msra.mxu0 %v2898
        %2934 = vmatprep.subr.bf16.mxu0 %v2897
        %2935 = vmatpush1.bf16.msra.mxu0 %v2896
        %2936 = vmatprep.subr.bf16.mxu0 %v2895
        %2937 = vmatpush1.bf16.msra.mxu0 %v2894
        %2938 = vmatprep.subr.bf16.mxu0 %v2893
        %2939 = vmatpush1.bf16.msra.mxu0 %v2892
        %2940 = vmatprep.subr.bf16.mxu0 0
        %2941 = vmatpush2.bf16.msra.mxu0 0
        %2942 = vmatprep.subr.bf16.mxu0 0
        %2943 = vmatpush2.bf16.msra.mxu0 0
        %2944 = vmatprep.subr.bf16.mxu0 0
        %2945 = vmatpush2.bf16.msra.mxu0 0
        %2946 = vmatprep.subr.bf16.mxu0 0
        %2947 = vmatpush2.bf16.msra.mxu0 0
        %2948 = vmatprep.subr.bf16.mxu0 0
        %2949 = vmatpush2.bf16.msra.mxu0 0
        %2950 = vmatprep.subr.bf16.mxu0 0
        %2951 = vmatpush2.bf16.msra.mxu0 0
        %2952 = vmatprep.subr.bf16.mxu0 0
        %2953 = vmatpush2.bf16.msra.mxu0 0
        %2954 = vmatprep.subr.bf16.mxu0 0
        %2955 = vmatpush2.bf16.msra.mxu0 0
        %2956 = vmatprep.mubr.bf16.mxu0 0
        %2957 = vmatmul.mubr.bf16.gmra.mxu0 %v2824
        %v2958 = vpop.f32.mrf.mxu0
        %v2959 = vadd.f32 0.0, %v2958
        %v2960 = vpop.f32.mrf.mxu0
        %v2961 = vadd.f32 0.0, %v2960
        %v2962 = vpop.f32.mrf.mxu0
        %v2963 = vadd.f32 0.0, %v2962
        %v2964 = vpop.f32.mrf.mxu0
        %v2965 = vadd.f32 0.0, %v2964
        %2966 = vmatprep.mubr.bf16.mxu0 0
        %2967 = vmatmul.mubr.bf16.gmra.mxu0 %v2825
        %v2968 = vpop.f32.mrf.mxu0
        %v2969 = vadd.f32 0.0, %v2968
        %v2970 = vpop.f32.mrf.mxu0
        %v2971 = vadd.f32 0.0, %v2970
        %v2972 = vpop.f32.mrf.mxu0
        %v2973 = vadd.f32 0.0, %v2972
        %v2974 = vpop.f32.mrf.mxu0
        %v2975 = vadd.f32 0.0, %v2974
        %2976 = vmatprep.mubr.bf16.mxu0 0
        %2977 = vmatmul.mubr.bf16.gmra.mxu0 %v2826
        %v2978 = vpop.f32.mrf.mxu0
        %v2979 = vadd.f32 0.0, %v2978
        %v2980 = vpop.f32.mrf.mxu0
        %v2981 = vadd.f32 0.0, %v2980
        %v2982 = vpop.f32.mrf.mxu0
        %v2983 = vadd.f32 0.0, %v2982
        %v2984 = vpop.f32.mrf.mxu0
        %v2985 = vadd.f32 0.0, %v2984
        %2986 = vmatprep.mubr.bf16.mxu0 0
        %2987 = vmatmul.mubr.bf16.gmra.mxu0 %v2827
        %v2988 = vpop.f32.mrf.mxu0
        %v2989 = vadd.f32 0.0, %v2988
        %v2990 = vpop.f32.mrf.mxu0
        %v2991 = vadd.f32 0.0, %v2990
        %v2992 = vpop.f32.mrf.mxu0
        %v2993 = vadd.f32 0.0, %v2992
        %v2994 = vpop.f32.mrf.mxu0
        %v2995 = vadd.f32 0.0, %v2994
        %2996 = vdwg.mxu0
        %v3013 = vunpack.c.l.b16 %v2566
        %v3014 = vunpack.c.h.b16 %v2566
        %v3015 = vunpack.c.l.b16 %v2567
        %v3016 = vunpack.c.h.b16 %v2567
        %v3017 = vunpack.c.l.b16 %v2568
        %v3018 = vunpack.c.h.b16 %v2568
        %v3019 = vunpack.c.l.b16 %v2569
        %v3020 = vunpack.c.h.b16 %v2569
        %v3021 = vunpack.c.l.b16 %v2570
        %v3022 = vunpack.c.h.b16 %v2570
        %v3023 = vunpack.c.l.b16 %v2571
        %v3024 = vunpack.c.h.b16 %v2571
        %v3025 = vunpack.c.l.b16 %v2572
        %v3026 = vunpack.c.h.b16 %v2572
        %v3027 = vunpack.c.l.b16 %v2573
        %v3028 = vunpack.c.h.b16 %v2573
        %v3029 = vunpack.c.l.b16 %v2574
        %v3030 = vunpack.c.h.b16 %v2574
        %v3031 = vunpack.c.l.b16 %v2575
        %v3032 = vunpack.c.h.b16 %v2575
        %v3033 = vunpack.c.l.b16 %v2576
        %v3034 = vunpack.c.h.b16 %v2576
        %v3035 = vunpack.c.l.b16 %v2577
        %v3036 = vunpack.c.h.b16 %v2577
        %v3037 = vunpack.c.l.b16 %v2578
        %v3038 = vunpack.c.h.b16 %v2578
        %v3039 = vunpack.c.l.b16 %v2579
        %v3040 = vunpack.c.h.b16 %v2579
        %v3041 = vunpack.c.l.b16 %v2580
        %v3042 = vunpack.c.h.b16 %v2580
        %v3043 = vunpack.c.l.b16 %v2581
        %v3044 = vunpack.c.h.b16 %v2581
        %v3045 = vpack.c.b16 %v3015, %v3013
        %v3046 = vpack.c.b16 %v3016, %v3014
        %v3047 = vpack.c.b16 %v3019, %v3017
        %v3048 = vpack.c.b16 %v3020, %v3018
        %v3049 = vpack.c.b16 %v3023, %v3021
        %v3050 = vpack.c.b16 %v3024, %v3022
        %v3051 = vpack.c.b16 %v3027, %v3025
        %v3052 = vpack.c.b16 %v3028, %v3026
        %v3053 = vpack.c.b16 %v3031, %v3029
        %v3054 = vpack.c.b16 %v3032, %v3030
        %v3055 = vpack.c.b16 %v3035, %v3033
        %v3056 = vpack.c.b16 %v3036, %v3034
        %v3057 = vpack.c.b16 %v3039, %v3037
        %v3058 = vpack.c.b16 %v3040, %v3038
        %v3059 = vpack.c.b16 %v3043, %v3041
        %v3060 = vpack.c.b16 %v3044, %v3042
        %3077 = vmatprep.subr.bf16.mxu0 %v3060
        %3078 = vmatpush1.bf16.msra.mxu0 %v3059
        %3079 = vmatprep.subr.bf16.mxu0 %v3058
        %3080 = vmatpush1.bf16.msra.mxu0 %v3057
        %3081 = vmatprep.subr.bf16.mxu0 %v3056
        %3082 = vmatpush1.bf16.msra.mxu0 %v3055
        %3083 = vmatprep.subr.bf16.mxu0 %v3054
        %3084 = vmatpush1.bf16.msra.mxu0 %v3053
        %3085 = vmatprep.subr.bf16.mxu0 %v3052
        %3086 = vmatpush1.bf16.msra.mxu0 %v3051
        %3087 = vmatprep.subr.bf16.mxu0 %v3050
        %3088 = vmatpush1.bf16.msra.mxu0 %v3049
        %3089 = vmatprep.subr.bf16.mxu0 %v3048
        %3090 = vmatpush1.bf16.msra.mxu0 %v3047
        %3091 = vmatprep.subr.bf16.mxu0 %v3046
        %3092 = vmatpush1.bf16.msra.mxu0 %v3045
        %3093 = vmatprep.subr.bf16.mxu0 0
        %3094 = vmatpush2.bf16.msra.mxu0 0
        %3095 = vmatprep.subr.bf16.mxu0 0
        %3096 = vmatpush2.bf16.msra.mxu0 0
        %3097 = vmatprep.subr.bf16.mxu0 0
        %3098 = vmatpush2.bf16.msra.mxu0 0
        %3099 = vmatprep.subr.bf16.mxu0 0
        %3100 = vmatpush2.bf16.msra.mxu0 0
        %3101 = vmatprep.subr.bf16.mxu0 0
        %3102 = vmatpush2.bf16.msra.mxu0 0
        %3103 = vmatprep.subr.bf16.mxu0 0
        %3104 = vmatpush2.bf16.msra.mxu0 0
        %3105 = vmatprep.subr.bf16.mxu0 0
        %3106 = vmatpush2.bf16.msra.mxu0 0
        %3107 = vmatprep.subr.bf16.mxu0 0
        %3108 = vmatpush2.bf16.msra.mxu0 0
        %3109 = vmatprep.mubr.bf16.mxu0 0
        %3110 = vmatmul.mubr.bf16.gmra.mxu0 %v2562
        %v3111 = vpop.f32.mrf.mxu0
        %v3112 = vadd.f32 %v2959, %v3111
        %v3113 = vpop.f32.mrf.mxu0
        %v3114 = vadd.f32 %v2961, %v3113
        %v3115 = vpop.f32.mrf.mxu0
        %v3116 = vadd.f32 %v2963, %v3115
        %v3117 = vpop.f32.mrf.mxu0
        %v3118 = vadd.f32 %v2965, %v3117
        %3119 = vmatprep.mubr.bf16.mxu0 0
        %3120 = vmatmul.mubr.bf16.gmra.mxu0 %v2563
        %v3121 = vpop.f32.mrf.mxu0
        %v3122 = vadd.f32 %v2969, %v3121
        %v3123 = vpop.f32.mrf.mxu0
        %v3124 = vadd.f32 %v2971, %v3123
        %v3125 = vpop.f32.mrf.mxu0
        %v3126 = vadd.f32 %v2973, %v3125
        %v3127 = vpop.f32.mrf.mxu0
        %v3128 = vadd.f32 %v2975, %v3127
        %3129 = vmatprep.mubr.bf16.mxu0 0
        %3130 = vmatmul.mubr.bf16.gmra.mxu0 %v2564
        %v3131 = vpop.f32.mrf.mxu0
        %v3132 = vadd.f32 %v2979, %v3131
        %v3133 = vpop.f32.mrf.mxu0
        %v3134 = vadd.f32 %v2981, %v3133
        %v3135 = vpop.f32.mrf.mxu0
        %v3136 = vadd.f32 %v2983, %v3135
        %v3137 = vpop.f32.mrf.mxu0
        %v3138 = vadd.f32 %v2985, %v3137
        %3139 = vmatprep.mubr.bf16.mxu0 0
        %3140 = vmatmul.mubr.bf16.gmra.mxu0 %v2565
        %v3141 = vpop.f32.mrf.mxu0
        %v3142 = vadd.f32 %v2989, %v3141
        %v3143 = vpop.f32.mrf.mxu0
        %v3144 = vadd.f32 %v2991, %v3143
        %v3145 = vpop.f32.mrf.mxu0
        %v3146 = vadd.f32 %v2993, %v3145
        %v3147 = vpop.f32.mrf.mxu0
        %v3148 = vadd.f32 %v2995, %v3147
        %3149 = vdwg.mxu0
        %v3150 = vlaneseq
        %v3151 = vshrl.u32 %v3150, 7
        %v3152 = vsub.s32 2, %v3151
        %v3153 = vrot.slane %v582, %v3152
        %v3154 = vlaneseq
        %v3155 = vshrl.u32 %v3154, 7
        %v3156 = vsub.s32 2, %v3155
        %v3157 = vrot.slane %v583, %v3156
        %v3158 = vmul.f32 %v3153, %v3112
        %v3159 = vmul.f32 %v3157, %v3114
        %v3160 = vmul.f32 %v3153, %v3116
        %v3161 = vmul.f32 %v3157, %v3118
        %v3162 = vmul.f32 %v3153, %v3122
        %v3163 = vmul.f32 %v3157, %v3124
        %v3164 = vmul.f32 %v3153, %v3126
        %v3165 = vmul.f32 %v3157, %v3128
        %v3166 = vmul.f32 %v3153, %v3132
        %v3167 = vmul.f32 %v3157, %v3134
        %v3168 = vmul.f32 %v3153, %v3136
        %v3169 = vmul.f32 %v3157, %v3138
        %v3170 = vmul.f32 %v3153, %v3142
        %v3171 = vmul.f32 %v3157, %v3144
        %v3172 = vmul.f32 %v3153, %v3146
        %v3173 = vmul.f32 %v3157, %v3148
        %v3174 = vadd.f32 %v584, %v3158
        %v3175 = vadd.f32 %v585, %v3159
        %v3176 = vadd.f32 %v586, %v3160
        %v3177 = vadd.f32 %v587, %v3161
        %v3178 = vadd.f32 %v588, %v3162
        %v3179 = vadd.f32 %v589, %v3163
        %v3180 = vadd.f32 %v590, %v3164
        %v3181 = vadd.f32 %v591, %v3165
        %v3182 = vadd.f32 %v592, %v3166
        %v3183 = vadd.f32 %v593, %v3167
        %v3184 = vadd.f32 %v594, %v3168
        %v3185 = vadd.f32 %v595, %v3169
        %v3186 = vadd.f32 %v596, %v3170
        %v3187 = vadd.f32 %v597, %v3171
        %v3188 = vadd.f32 %v598, %v3172
        %v3189 = vadd.f32 %v599, %v3173
        %3190 = vmatprep.subr.bf16.mxu0 0
        %3191 = vmatpush1.bf16.xpose.msra.mxu0 0
        %3192 = vmatprep.subr.bf16.mxu0 0
        %3193 = vmatpush1.bf16.xpose.msra.mxu0 0
        %3194 = vmatprep.subr.bf16.mxu0 0
        %3195 = vmatpush1.bf16.xpose.msra.mxu0 0
        %3196 = vmatprep.subr.bf16.mxu0 0
        %3197 = vmatpush1.bf16.xpose.msra.mxu0 0
        %3198 = vmatprep.subr.bf16.mxu0 0
        %3199 = vmatpush1.bf16.xpose.msra.mxu0 %v2317
        %3200 = vmatprep.subr.bf16.mxu0 0
        %3201 = vmatpush1.bf16.xpose.msra.mxu0 %v2315
        %3202 = vmatprep.subr.bf16.mxu0 0
        %3203 = vmatpush1.bf16.xpose.msra.mxu0 %v2313
        %3204 = vmatprep.subr.bf16.mxu0 0
        %3205 = vmatpush1.bf16.xpose.msra.mxu0 %v2311
        %3206 = vmatprep.subr.bf16.mxu0 0
        %3207 = vmatpush2.bf16.xpose.msra.mxu0 0
        %3208 = vmatprep.subr.bf16.mxu0 0
        %3209 = vmatpush2.bf16.xpose.msra.mxu0 0
        %3210 = vmatprep.subr.bf16.mxu0 0
        %3211 = vmatpush2.bf16.xpose.msra.mxu0 0
        %3212 = vmatprep.subr.bf16.mxu0 0
        %3213 = vmatpush2.bf16.xpose.msra.mxu0 0
        %3214 = vmatprep.subr.bf16.mxu0 0
        %3215 = vmatpush2.bf16.xpose.msra.mxu0 0
        %3216 = vmatprep.subr.bf16.mxu0 0
        %3217 = vmatpush2.bf16.xpose.msra.mxu0 0
        %3218 = vmatprep.subr.bf16.mxu0 0
        %3219 = vmatpush2.bf16.xpose.msra.mxu0 0
        %3220 = vmatprep.subr.bf16.mxu0 0
        %3221 = vmatpush2.bf16.xpose.msra.mxu0 0
        %3222 = vmatprep.mubr.bf16.mxu0 0
        %3223 = vmatmul.mubr.bf16.gmra.mxu0 %v2135
        %v3224 = vpop.f32.mrf.mxu0
        %v3225 = vadd.f32 0.0, %v3224
        %v3226 = vpop.f32.mrf.mxu0
        %v3227 = vpop.f32.mrf.mxu0
        %v3228 = vadd.f32 0.0, %v3227
        %v3229 = vpop.f32.mrf.mxu0
        %3230 = vmatprep.mubr.bf16.mxu0 0
        %3231 = vmatmul.mubr.bf16.gmra.mxu0 %v2137
        %v3232 = vpop.f32.mrf.mxu0
        %v3233 = vadd.f32 0.0, %v3232
        %v3234 = vpop.f32.mrf.mxu0
        %v3235 = vpop.f32.mrf.mxu0
        %v3236 = vadd.f32 0.0, %v3235
        %v3237 = vpop.f32.mrf.mxu0
        %3238 = vmatprep.mubr.bf16.mxu0 0
        %3239 = vmatmul.mubr.bf16.gmra.mxu0 %v2139
        %v3240 = vpop.f32.mrf.mxu0
        %v3241 = vadd.f32 0.0, %v3240
        %v3242 = vpop.f32.mrf.mxu0
        %v3243 = vpop.f32.mrf.mxu0
        %v3244 = vadd.f32 0.0, %v3243
        %v3245 = vpop.f32.mrf.mxu0
        %3246 = vmatprep.mubr.bf16.mxu0 0
        %3247 = vmatmul.mubr.bf16.gmra.mxu0 %v2141
        %v3248 = vpop.f32.mrf.mxu0
        %v3249 = vadd.f32 0.0, %v3248
        %v3250 = vpop.f32.mrf.mxu0
        %v3251 = vpop.f32.mrf.mxu0
        %v3252 = vadd.f32 0.0, %v3251
        %v3253 = vpop.f32.mrf.mxu0
        %3254 = vdwg.mxu0
        %v3255 = vmul.f32 %v3225, 0.088388346
        %v3256 = vmul.f32 %v3228, 0.088388346
        %v3257 = vmul.f32 %v3233, 0.088388346
        %v3258 = vmul.f32 %v3236, 0.088388346
        %v3259 = vmul.f32 %v3241, 0.088388346
        %v3260 = vmul.f32 %v3244, 0.088388346
        %v3261 = vmul.f32 %v3249, 0.088388346
        %v3262 = vmul.f32 %v3252, 0.088388346
        %v3263 = vsel %vm2392, %v3255, -inf
        %3264 = vmax.xlane.f32.xlu0 %v3263
        %v3265 = vpop.xlane.xlu0 %3264
        %v3266 = vsel %vm2392, %v3256, -inf
        %3267 = vmax.xlane.f32.xlu0 %v3266
        %v3268 = vpop.xlane.xlu0 %3267
        %v3269 = vsel %vm2392, %v3257, -inf
        %3270 = vmax.xlane.f32.xlu0 %v3269
        %v3271 = vpop.xlane.xlu0 %3270
        %v3272 = vsel %vm2392, %v3258, -inf
        %3273 = vmax.xlane.f32.xlu0 %v3272
        %v3274 = vpop.xlane.xlu0 %3273
        %v3275 = vsel %vm2392, %v3259, -inf
        %3276 = vmax.xlane.f32.xlu0 %v3275
        %v3277 = vpop.xlane.xlu0 %3276
        %v3278 = vsel %vm2392, %v3260, -inf
        %3279 = vmax.xlane.f32.xlu0 %v3278
        %v3280 = vpop.xlane.xlu0 %3279
        %v3281 = vsel %vm2392, %v3261, -inf
        %3282 = vmax.xlane.f32.xlu0 %v3281
        %v3283 = vpop.xlane.xlu0 %3282
        %v3284 = vsel %vm2392, %v3262, -inf
        %3285 = vmax.xlane.f32.xlu0 %v3284
        %v3286 = vpop.xlane.xlu0 %3285
        %v3287 = vsub.f32 %v3255, %v3265
        %v3288 = vsub.f32 %v3256, %v3268
        %v3289 = vsub.f32 %v3257, %v3271
        %v3290 = vsub.f32 %v3258, %v3274
        %v3291 = vsub.f32 %v3259, %v3277
        %v3292 = vsub.f32 %v3260, %v3280
        %v3293 = vsub.f32 %v3261, %v3283
        %v3294 = vsub.f32 %v3262, %v3286
        %v3295 = vmul.f32 %v3287, 1.442695
        %v3296 = vpow.pop %v3295
        %v3297 = vmul.f32 %v3288, 1.442695
        %v3298 = vpow.pop %v3297
        %v3299 = vmul.f32 %v3289, 1.442695
        %v3300 = vpow.pop %v3299
        %v3301 = vmul.f32 %v3290, 1.442695
        %v3302 = vpow.pop %v3301
        %v3303 = vmul.f32 %v3291, 1.442695
        %v3304 = vpow.pop %v3303
        %v3305 = vmul.f32 %v3292, 1.442695
        %v3306 = vpow.pop %v3305
        %v3307 = vmul.f32 %v3293, 1.442695
        %v3308 = vpow.pop %v3307
        %v3309 = vmul.f32 %v3294, 1.442695
        %v3310 = vpow.pop %v3309
        %v3311 = vsel %vm2392, %v3296, 0.0
        %3312 = vadd.xlane.f32.xlu0 %v3311
        %v3313 = vpop.xlane.xlu0 %3312
        %v3314 = vsel %vm2392, %v3298, 0.0
        %3315 = vadd.xlane.f32.xlu0 %v3314
        %v3316 = vpop.xlane.xlu0 %3315
        %v3317 = vsel %vm2392, %v3300, 0.0
        %3318 = vadd.xlane.f32.xlu0 %v3317
        %v3319 = vpop.xlane.xlu0 %3318
        %v3320 = vsel %vm2392, %v3302, 0.0
        %3321 = vadd.xlane.f32.xlu0 %v3320
        %v3322 = vpop.xlane.xlu0 %3321
        %v3323 = vsel %vm2392, %v3304, 0.0
        %3324 = vadd.xlane.f32.xlu0 %v3323
        %v3325 = vpop.xlane.xlu0 %3324
        %v3326 = vsel %vm2392, %v3306, 0.0
        %3327 = vadd.xlane.f32.xlu0 %v3326
        %v3328 = vpop.xlane.xlu0 %3327
        %v3329 = vsel %vm2392, %v3308, 0.0
        %3330 = vadd.xlane.f32.xlu0 %v3329
        %v3331 = vpop.xlane.xlu0 %3330
        %v3332 = vsel %vm2392, %v3310, 0.0
        %3333 = vadd.xlane.f32.xlu0 %v3332
        %v3334 = vpop.xlane.xlu0 %3333
        %v3335 = vrcp.pop %v3313
        %v3336 = vrcp.pop %v3316
        %v3337 = vrcp.pop %v3319
        %v3338 = vrcp.pop %v3322
        %v3339 = vrcp.pop %v3325
        %v3340 = vrcp.pop %v3328
        %v3341 = vrcp.pop %v3331
        %v3342 = vrcp.pop %v3334
        %v3343 = vmul.f32 %v3296, %v3335
        %v3344 = vmul.f32 %v3298, %v3336
        %v3345 = vmul.f32 %v3300, %v3337
        %v3346 = vmul.f32 %v3302, %v3338
        %v3347 = vmul.f32 %v3304, %v3339
        %v3348 = vmul.f32 %v3306, %v3340
        %v3349 = vmul.f32 %v3308, %v3341
        %v3350 = vmul.f32 %v3310, %v3342
        %v3351 = vpack.c.bf16 %v3344, %v3343
        %v3352 = vpack.c.bf16 %v3346, %v3345
        %v3353 = vpack.c.bf16 %v3348, %v3347
        %v3354 = vpack.c.bf16 %v3350, %v3349
        %v3356 = vsel %vm2392, %v3351, 0
        %v3359 = vsel %vm2392, %v3352, 0
        %v3362 = vsel %vm2392, %v3353, 0
        %v3365 = vsel %vm2392, %v3354, 0
        %3367 = vmatprep.subr.bf16.mxu0 0
        %3368 = vmatpush1.bf16.msra.mxu0 0
        %3369 = vmatprep.subr.bf16.mxu0 0
        %3370 = vmatpush1.bf16.msra.mxu0 0
        %3371 = vmatprep.subr.bf16.mxu0 0
        %3372 = vmatpush1.bf16.msra.mxu0 0
        %3373 = vmatprep.subr.bf16.mxu0 0
        %3374 = vmatpush1.bf16.msra.mxu0 0
        %3375 = vmatprep.subr.bf16.mxu0 0
        %3376 = vmatpush1.bf16.msra.mxu0 %v1965
        %3377 = vmatprep.subr.bf16.mxu0 0
        %3378 = vmatpush1.bf16.msra.mxu0 %v1963
        %3379 = vmatprep.subr.bf16.mxu0 0
        %3380 = vmatpush1.bf16.msra.mxu0 %v1961
        %3381 = vmatprep.subr.bf16.mxu0 0
        %3382 = vmatpush1.bf16.msra.mxu0 %v1959
        %3383 = vmatprep.subr.bf16.mxu0 0
        %3384 = vmatpush2.bf16.msra.mxu0 0
        %3385 = vmatprep.subr.bf16.mxu0 0
        %3386 = vmatpush2.bf16.msra.mxu0 0
        %3387 = vmatprep.subr.bf16.mxu0 0
        %3388 = vmatpush2.bf16.msra.mxu0 0
        %3389 = vmatprep.subr.bf16.mxu0 0
        %3390 = vmatpush2.bf16.msra.mxu0 0
        %3391 = vmatprep.subr.bf16.mxu0 0
        %3392 = vmatpush2.bf16.msra.mxu0 0
        %3393 = vmatprep.subr.bf16.mxu0 0
        %3394 = vmatpush2.bf16.msra.mxu0 0
        %3395 = vmatprep.subr.bf16.mxu0 0
        %3396 = vmatpush2.bf16.msra.mxu0 0
        %3397 = vmatprep.subr.bf16.mxu0 0
        %3398 = vmatpush2.bf16.msra.mxu0 0
        %3399 = vmatprep.mubr.bf16.mxu0 0
        %3400 = vmatmul.mubr.bf16.gmra.mxu0 %v3356
        %v3401 = vpop.f32.mrf.mxu0
        %v3402 = vadd.f32 0.0, %v3401
        %v3403 = vpop.f32.mrf.mxu0
        %v3404 = vpop.f32.mrf.mxu0
        %v3405 = vadd.f32 0.0, %v3404
        %v3406 = vpop.f32.mrf.mxu0
        %3407 = vmatprep.mubr.bf16.mxu0 0
        %3408 = vmatmul.mubr.bf16.gmra.mxu0 %v3359
        %v3409 = vpop.f32.mrf.mxu0
        %v3410 = vadd.f32 0.0, %v3409
        %v3411 = vpop.f32.mrf.mxu0
        %v3412 = vpop.f32.mrf.mxu0
        %v3413 = vadd.f32 0.0, %v3412
        %v3414 = vpop.f32.mrf.mxu0
        %3415 = vmatprep.mubr.bf16.mxu0 0
        %3416 = vmatmul.mubr.bf16.gmra.mxu0 %v3362
        %v3417 = vpop.f32.mrf.mxu0
        %v3418 = vadd.f32 0.0, %v3417
        %v3419 = vpop.f32.mrf.mxu0
        %v3420 = vpop.f32.mrf.mxu0
        %v3421 = vadd.f32 0.0, %v3420
        %v3422 = vpop.f32.mrf.mxu0
        %3423 = vmatprep.mubr.bf16.mxu0 0
        %3424 = vmatmul.mubr.bf16.gmra.mxu0 %v3365
        %v3425 = vpop.f32.mrf.mxu0
        %v3426 = vadd.f32 0.0, %v3425
        %v3427 = vpop.f32.mrf.mxu0
        %v3428 = vpop.f32.mrf.mxu0
        %v3429 = vadd.f32 0.0, %v3428
        %v3430 = vpop.f32.mrf.mxu0
        %3431 = vdwg.mxu0
        %v3432 = vpack.c.bf16 %v3405, %v3402
        %v3433 = vpack.c.bf16 %v3413, %v3410
        %v3434 = vpack.c.bf16 %v3421, %v3418
        %v3435 = vpack.c.bf16 %v3429, %v3426
        %3436 = vmatprep.subr.bf16.mxu0 0
        %3437 = vmatpush1.bf16.xpose.msra.mxu0 0
        %3438 = vmatprep.subr.bf16.mxu0 0
        %3439 = vmatpush1.bf16.xpose.msra.mxu0 0
        %3440 = vmatprep.subr.bf16.mxu0 0
        %3441 = vmatpush1.bf16.xpose.msra.mxu0 0
        %3442 = vmatprep.subr.bf16.mxu0 0
        %3443 = vmatpush1.bf16.xpose.msra.mxu0 0
        %3444 = vmatprep.subr.bf16.mxu0 0
        %3445 = vmatpush1.bf16.xpose.msra.mxu0 %v2318
        %3446 = vmatprep.subr.bf16.mxu0 0
        %3447 = vmatpush1.bf16.xpose.msra.mxu0 %v2316
        %3448 = vmatprep.subr.bf16.mxu0 0
        %3449 = vmatpush1.bf16.xpose.msra.mxu0 %v2314
        %3450 = vmatprep.subr.bf16.mxu0 0
        %3451 = vmatpush1.bf16.xpose.msra.mxu0 %v2312
        %3452 = vmatprep.subr.bf16.mxu0 0
        %3453 = vmatpush2.bf16.xpose.msra.mxu0 0
        %3454 = vmatprep.subr.bf16.mxu0 0
        %3455 = vmatpush2.bf16.xpose.msra.mxu0 0
        %3456 = vmatprep.subr.bf16.mxu0 0
        %3457 = vmatpush2.bf16.xpose.msra.mxu0 0
        %3458 = vmatprep.subr.bf16.mxu0 0
        %3459 = vmatpush2.bf16.xpose.msra.mxu0 0
        %3460 = vmatprep.subr.bf16.mxu0 0
        %3461 = vmatpush2.bf16.xpose.msra.mxu0 0
        %3462 = vmatprep.subr.bf16.mxu0 0
        %3463 = vmatpush2.bf16.xpose.msra.mxu0 0
        %3464 = vmatprep.subr.bf16.mxu0 0
        %3465 = vmatpush2.bf16.xpose.msra.mxu0 0
        %3466 = vmatprep.subr.bf16.mxu0 0
        %3467 = vmatpush2.bf16.xpose.msra.mxu0 0
        %3468 = vmatprep.mubr.bf16.mxu0 0
        %3469 = vmatmul.mubr.bf16.gmra.mxu0 %v2136
        %v3470 = vpop.f32.mrf.mxu0
        %v3471 = vadd.f32 0.0, %v3470
        %v3472 = vpop.f32.mrf.mxu0
        %v3473 = vpop.f32.mrf.mxu0
        %v3474 = vadd.f32 0.0, %v3473
        %v3475 = vpop.f32.mrf.mxu0
        %3476 = vmatprep.mubr.bf16.mxu0 0
        %3477 = vmatmul.mubr.bf16.gmra.mxu0 %v2138
        %v3478 = vpop.f32.mrf.mxu0
        %v3479 = vadd.f32 0.0, %v3478
        %v3480 = vpop.f32.mrf.mxu0
        %v3481 = vpop.f32.mrf.mxu0
        %v3482 = vadd.f32 0.0, %v3481
        %v3483 = vpop.f32.mrf.mxu0
        %3484 = vmatprep.mubr.bf16.mxu0 0
        %3485 = vmatmul.mubr.bf16.gmra.mxu0 %v2140
        %v3486 = vpop.f32.mrf.mxu0
        %v3487 = vadd.f32 0.0, %v3486
        %v3488 = vpop.f32.mrf.mxu0
        %v3489 = vpop.f32.mrf.mxu0
        %v3490 = vadd.f32 0.0, %v3489
        %v3491 = vpop.f32.mrf.mxu0
        %3492 = vmatprep.mubr.bf16.mxu0 0
        %3493 = vmatmul.mubr.bf16.gmra.mxu0 %v2142
        %v3494 = vpop.f32.mrf.mxu0
        %v3495 = vadd.f32 0.0, %v3494
        %v3496 = vpop.f32.mrf.mxu0
        %v3497 = vpop.f32.mrf.mxu0
        %v3498 = vadd.f32 0.0, %v3497
        %v3499 = vpop.f32.mrf.mxu0
        %3500 = vdwg.mxu0
        %v3501 = vmul.f32 %v3471, 0.088388346
        %v3502 = vmul.f32 %v3474, 0.088388346
        %v3503 = vmul.f32 %v3479, 0.088388346
        %v3504 = vmul.f32 %v3482, 0.088388346
        %v3505 = vmul.f32 %v3487, 0.088388346
        %v3506 = vmul.f32 %v3490, 0.088388346
        %v3507 = vmul.f32 %v3495, 0.088388346
        %v3508 = vmul.f32 %v3498, 0.088388346
        %v3509 = vsel %vm2392, %v3501, -inf
        %3510 = vmax.xlane.f32.xlu0 %v3509
        %v3511 = vpop.xlane.xlu0 %3510
        %v3512 = vsel %vm2392, %v3502, -inf
        %3513 = vmax.xlane.f32.xlu0 %v3512
        %v3514 = vpop.xlane.xlu0 %3513
        %v3515 = vsel %vm2392, %v3503, -inf
        %3516 = vmax.xlane.f32.xlu0 %v3515
        %v3517 = vpop.xlane.xlu0 %3516
        %v3518 = vsel %vm2392, %v3504, -inf
        %3519 = vmax.xlane.f32.xlu0 %v3518
        %v3520 = vpop.xlane.xlu0 %3519
        %v3521 = vsel %vm2392, %v3505, -inf
        %3522 = vmax.xlane.f32.xlu0 %v3521
        %v3523 = vpop.xlane.xlu0 %3522
        %v3524 = vsel %vm2392, %v3506, -inf
        %3525 = vmax.xlane.f32.xlu0 %v3524
        %v3526 = vpop.xlane.xlu0 %3525
        %v3527 = vsel %vm2392, %v3507, -inf
        %3528 = vmax.xlane.f32.xlu0 %v3527
        %v3529 = vpop.xlane.xlu0 %3528
        %v3530 = vsel %vm2392, %v3508, -inf
        %3531 = vmax.xlane.f32.xlu0 %v3530
        %v3532 = vpop.xlane.xlu0 %3531
        %v3533 = vsub.f32 %v3501, %v3511
        %v3534 = vsub.f32 %v3502, %v3514
        %v3535 = vsub.f32 %v3503, %v3517
        %v3536 = vsub.f32 %v3504, %v3520
        %v3537 = vsub.f32 %v3505, %v3523
        %v3538 = vsub.f32 %v3506, %v3526
        %v3539 = vsub.f32 %v3507, %v3529
        %v3540 = vsub.f32 %v3508, %v3532
        %v3541 = vmul.f32 %v3533, 1.442695
        %v3542 = vpow.pop %v3541
        %v3543 = vmul.f32 %v3534, 1.442695
        %v3544 = vpow.pop %v3543
        %v3545 = vmul.f32 %v3535, 1.442695
        %v3546 = vpow.pop %v3545
        %v3547 = vmul.f32 %v3536, 1.442695
        %v3548 = vpow.pop %v3547
        %v3549 = vmul.f32 %v3537, 1.442695
        %v3550 = vpow.pop %v3549
        %v3551 = vmul.f32 %v3538, 1.442695
        %v3552 = vpow.pop %v3551
        %v3553 = vmul.f32 %v3539, 1.442695
        %v3554 = vpow.pop %v3553
        %v3555 = vmul.f32 %v3540, 1.442695
        %v3556 = vpow.pop %v3555
        %v3557 = vsel %vm2392, %v3542, 0.0
        %3558 = vadd.xlane.f32.xlu0 %v3557
        %v3559 = vpop.xlane.xlu0 %3558
        %v3560 = vsel %vm2392, %v3544, 0.0
        %3561 = vadd.xlane.f32.xlu0 %v3560
        %v3562 = vpop.xlane.xlu0 %3561
        %v3563 = vsel %vm2392, %v3546, 0.0
        %3564 = vadd.xlane.f32.xlu0 %v3563
        %v3565 = vpop.xlane.xlu0 %3564
        %v3566 = vsel %vm2392, %v3548, 0.0
        %3567 = vadd.xlane.f32.xlu0 %v3566
        %v3568 = vpop.xlane.xlu0 %3567
        %v3569 = vsel %vm2392, %v3550, 0.0
        %3570 = vadd.xlane.f32.xlu0 %v3569
        %v3571 = vpop.xlane.xlu0 %3570
        %v3572 = vsel %vm2392, %v3552, 0.0
        %3573 = vadd.xlane.f32.xlu0 %v3572
        %v3574 = vpop.xlane.xlu0 %3573
        %v3575 = vsel %vm2392, %v3554, 0.0
        %3576 = vadd.xlane.f32.xlu0 %v3575
        %v3577 = vpop.xlane.xlu0 %3576
        %v3578 = vsel %vm2392, %v3556, 0.0
        %3579 = vadd.xlane.f32.xlu0 %v3578
        %v3580 = vpop.xlane.xlu0 %3579
        %v3581 = vrcp.pop %v3559
        %v3582 = vrcp.pop %v3562
        %v3583 = vrcp.pop %v3565
        %v3584 = vrcp.pop %v3568
        %v3585 = vrcp.pop %v3571
        %v3586 = vrcp.pop %v3574
        %v3587 = vrcp.pop %v3577
        %v3588 = vrcp.pop %v3580
        %v3589 = vmul.f32 %v3542, %v3581
        %v3590 = vmul.f32 %v3544, %v3582
        %v3591 = vmul.f32 %v3546, %v3583
        %v3592 = vmul.f32 %v3548, %v3584
        %v3593 = vmul.f32 %v3550, %v3585
        %v3594 = vmul.f32 %v3552, %v3586
        %v3595 = vmul.f32 %v3554, %v3587
        %v3596 = vmul.f32 %v3556, %v3588
        %v3597 = vpack.c.bf16 %v3590, %v3589
        %v3598 = vpack.c.bf16 %v3592, %v3591
        %v3599 = vpack.c.bf16 %v3594, %v3593
        %v3600 = vpack.c.bf16 %v3596, %v3595
        %v3602 = vsel %vm2392, %v3597, 0
        %v3605 = vsel %vm2392, %v3598, 0
        %v3608 = vsel %vm2392, %v3599, 0
        %v3611 = vsel %vm2392, %v3600, 0
        %3613 = vmatprep.subr.bf16.mxu0 0
        %3614 = vmatpush1.bf16.msra.mxu0 0
        %3615 = vmatprep.subr.bf16.mxu0 0
        %3616 = vmatpush1.bf16.msra.mxu0 0
        %3617 = vmatprep.subr.bf16.mxu0 0
        %3618 = vmatpush1.bf16.msra.mxu0 0
        %3619 = vmatprep.subr.bf16.mxu0 0
        %3620 = vmatpush1.bf16.msra.mxu0 0
        %3621 = vmatprep.subr.bf16.mxu0 0
        %3622 = vmatpush1.bf16.msra.mxu0 %v1966
        %3623 = vmatprep.subr.bf16.mxu0 0
        %3624 = vmatpush1.bf16.msra.mxu0 %v1964
        %3625 = vmatprep.subr.bf16.mxu0 0
        %3626 = vmatpush1.bf16.msra.mxu0 %v1962
        %3627 = vmatprep.subr.bf16.mxu0 0
        %3628 = vmatpush1.bf16.msra.mxu0 %v1960
        %3629 = vmatprep.subr.bf16.mxu0 0
        %3630 = vmatpush2.bf16.msra.mxu0 0
        %3631 = vmatprep.subr.bf16.mxu0 0
        %3632 = vmatpush2.bf16.msra.mxu0 0
        %3633 = vmatprep.subr.bf16.mxu0 0
        %3634 = vmatpush2.bf16.msra.mxu0 0
        %3635 = vmatprep.subr.bf16.mxu0 0
        %3636 = vmatpush2.bf16.msra.mxu0 0
        %3637 = vmatprep.subr.bf16.mxu0 0
        %3638 = vmatpush2.bf16.msra.mxu0 0
        %3639 = vmatprep.subr.bf16.mxu0 0
        %3640 = vmatpush2.bf16.msra.mxu0 0
        %3641 = vmatprep.subr.bf16.mxu0 0
        %3642 = vmatpush2.bf16.msra.mxu0 0
        %3643 = vmatprep.subr.bf16.mxu0 0
        %3644 = vmatpush2.bf16.msra.mxu0 0
        %3645 = vmatprep.mubr.bf16.mxu0 0
        %3646 = vmatmul.mubr.bf16.gmra.mxu0 %v3602
        %v3647 = vpop.f32.mrf.mxu0
        %v3648 = vadd.f32 0.0, %v3647
        %v3649 = vpop.f32.mrf.mxu0
        %v3650 = vpop.f32.mrf.mxu0
        %v3651 = vadd.f32 0.0, %v3650
        %v3652 = vpop.f32.mrf.mxu0
        %3653 = vmatprep.mubr.bf16.mxu0 0
        %3654 = vmatmul.mubr.bf16.gmra.mxu0 %v3605
        %v3655 = vpop.f32.mrf.mxu0
        %v3656 = vadd.f32 0.0, %v3655
        %v3657 = vpop.f32.mrf.mxu0
        %v3658 = vpop.f32.mrf.mxu0
        %v3659 = vadd.f32 0.0, %v3658
        %v3660 = vpop.f32.mrf.mxu0
        %3661 = vmatprep.mubr.bf16.mxu0 0
        %3662 = vmatmul.mubr.bf16.gmra.mxu0 %v3608
        %v3663 = vpop.f32.mrf.mxu0
        %v3664 = vadd.f32 0.0, %v3663
        %v3665 = vpop.f32.mrf.mxu0
        %v3666 = vpop.f32.mrf.mxu0
        %v3667 = vadd.f32 0.0, %v3666
        %v3668 = vpop.f32.mrf.mxu0
        %3669 = vmatprep.mubr.bf16.mxu0 0
        %3670 = vmatmul.mubr.bf16.gmra.mxu0 %v3611
        %v3671 = vpop.f32.mrf.mxu0
        %v3672 = vadd.f32 0.0, %v3671
        %v3673 = vpop.f32.mrf.mxu0
        %v3674 = vpop.f32.mrf.mxu0
        %v3675 = vadd.f32 0.0, %v3674
        %v3676 = vpop.f32.mrf.mxu0
        %3677 = vdwg.mxu0
        %v3678 = vpack.c.bf16 %v3651, %v3648
        %v3679 = vpack.c.bf16 %v3659, %v3656
        %v3680 = vpack.c.bf16 %v3667, %v3664
        %v3681 = vpack.c.bf16 %v3675, %v3672
        %3682 = vmatprep.subr.bf16.mxu0 %v2907
        %3683 = vmatpush1.bf16.msra.mxu0 %v2906
        %3684 = vmatprep.subr.bf16.mxu0 %v2905
        %3685 = vmatpush1.bf16.msra.mxu0 %v2904
        %3686 = vmatprep.subr.bf16.mxu0 %v2903
        %3687 = vmatpush1.bf16.msra.mxu0 %v2902
        %3688 = vmatprep.subr.bf16.mxu0 %v2901
        %3689 = vmatpush1.bf16.msra.mxu0 %v2900
        %3690 = vmatprep.subr.bf16.mxu0 %v2899
        %3691 = vmatpush1.bf16.msra.mxu0 %v2898
        %3692 = vmatprep.subr.bf16.mxu0 %v2897
        %3693 = vmatpush1.bf16.msra.mxu0 %v2896
        %3694 = vmatprep.subr.bf16.mxu0 %v2895
        %3695 = vmatpush1.bf16.msra.mxu0 %v2894
        %3696 = vmatprep.subr.bf16.mxu0 %v2893
        %3697 = vmatpush1.bf16.msra.mxu0 %v2892
        %3698 = vmatprep.subr.bf16.mxu0 0
        %3699 = vmatpush2.bf16.msra.mxu0 0
        %3700 = vmatprep.subr.bf16.mxu0 0
        %3701 = vmatpush2.bf16.msra.mxu0 0
        %3702 = vmatprep.subr.bf16.mxu0 0
        %3703 = vmatpush2.bf16.msra.mxu0 0
        %3704 = vmatprep.subr.bf16.mxu0 0
        %3705 = vmatpush2.bf16.msra.mxu0 0
        %3706 = vmatprep.subr.bf16.mxu0 0
        %3707 = vmatpush2.bf16.msra.mxu0 0
        %3708 = vmatprep.subr.bf16.mxu0 0
        %3709 = vmatpush2.bf16.msra.mxu0 0
        %3710 = vmatprep.subr.bf16.mxu0 0
        %3711 = vmatpush2.bf16.msra.mxu0 0
        %3712 = vmatprep.subr.bf16.mxu0 0
        %3713 = vmatpush2.bf16.msra.mxu0 0
        %3714 = vmatprep.mubr.bf16.mxu0 0
        %3715 = vmatmul.mubr.bf16.gmra.mxu0 %v3678
        %v3716 = vpop.f32.mrf.mxu0
        %v3717 = vadd.f32 0.0, %v3716
        %v3718 = vpop.f32.mrf.mxu0
        %v3719 = vadd.f32 0.0, %v3718
        %v3720 = vpop.f32.mrf.mxu0
        %v3721 = vadd.f32 0.0, %v3720
        %v3722 = vpop.f32.mrf.mxu0
        %v3723 = vadd.f32 0.0, %v3722
        %3724 = vmatprep.mubr.bf16.mxu0 0
        %3725 = vmatmul.mubr.bf16.gmra.mxu0 %v3679
        %v3726 = vpop.f32.mrf.mxu0
        %v3727 = vadd.f32 0.0, %v3726
        %v3728 = vpop.f32.mrf.mxu0
        %v3729 = vadd.f32 0.0, %v3728
        %v3730 = vpop.f32.mrf.mxu0
        %v3731 = vadd.f32 0.0, %v3730
        %v3732 = vpop.f32.mrf.mxu0
        %v3733 = vadd.f32 0.0, %v3732
        %3734 = vmatprep.mubr.bf16.mxu0 0
        %3735 = vmatmul.mubr.bf16.gmra.mxu0 %v3680
        %v3736 = vpop.f32.mrf.mxu0
        %v3737 = vadd.f32 0.0, %v3736
        %v3738 = vpop.f32.mrf.mxu0
        %v3739 = vadd.f32 0.0, %v3738
        %v3740 = vpop.f32.mrf.mxu0
        %v3741 = vadd.f32 0.0, %v3740
        %v3742 = vpop.f32.mrf.mxu0
        %v3743 = vadd.f32 0.0, %v3742
        %3744 = vmatprep.mubr.bf16.mxu0 0
        %3745 = vmatmul.mubr.bf16.gmra.mxu0 %v3681
        %v3746 = vpop.f32.mrf.mxu0
        %v3747 = vadd.f32 0.0, %v3746
        %v3748 = vpop.f32.mrf.mxu0
        %v3749 = vadd.f32 0.0, %v3748
        %v3750 = vpop.f32.mrf.mxu0
        %v3751 = vadd.f32 0.0, %v3750
        %v3752 = vpop.f32.mrf.mxu0
        %v3753 = vadd.f32 0.0, %v3752
        %3754 = vdwg.mxu0
        %3755 = vmatprep.subr.bf16.mxu0 %v3060
        %3756 = vmatpush1.bf16.msra.mxu0 %v3059
        %3757 = vmatprep.subr.bf16.mxu0 %v3058
        %3758 = vmatpush1.bf16.msra.mxu0 %v3057
        %3759 = vmatprep.subr.bf16.mxu0 %v3056
        %3760 = vmatpush1.bf16.msra.mxu0 %v3055
        %3761 = vmatprep.subr.bf16.mxu0 %v3054
        %3762 = vmatpush1.bf16.msra.mxu0 %v3053
        %3763 = vmatprep.subr.bf16.mxu0 %v3052
        %3764 = vmatpush1.bf16.msra.mxu0 %v3051
        %3765 = vmatprep.subr.bf16.mxu0 %v3050
        %3766 = vmatpush1.bf16.msra.mxu0 %v3049
        %3767 = vmatprep.subr.bf16.mxu0 %v3048
        %3768 = vmatpush1.bf16.msra.mxu0 %v3047
        %3769 = vmatprep.subr.bf16.mxu0 %v3046
        %3770 = vmatpush1.bf16.msra.mxu0 %v3045
        %3771 = vmatprep.subr.bf16.mxu0 0
        %3772 = vmatpush2.bf16.msra.mxu0 0
        %3773 = vmatprep.subr.bf16.mxu0 0
        %3774 = vmatpush2.bf16.msra.mxu0 0
        %3775 = vmatprep.subr.bf16.mxu0 0
        %3776 = vmatpush2.bf16.msra.mxu0 0
        %3777 = vmatprep.subr.bf16.mxu0 0
        %3778 = vmatpush2.bf16.msra.mxu0 0
        %3779 = vmatprep.subr.bf16.mxu0 0
        %3780 = vmatpush2.bf16.msra.mxu0 0
        %3781 = vmatprep.subr.bf16.mxu0 0
        %3782 = vmatpush2.bf16.msra.mxu0 0
        %3783 = vmatprep.subr.bf16.mxu0 0
        %3784 = vmatpush2.bf16.msra.mxu0 0
        %3785 = vmatprep.subr.bf16.mxu0 0
        %3786 = vmatpush2.bf16.msra.mxu0 0
        %3787 = vmatprep.mubr.bf16.mxu0 0
        %3788 = vmatmul.mubr.bf16.gmra.mxu0 %v3432
        %v3789 = vpop.f32.mrf.mxu0
        %v3790 = vadd.f32 %v3717, %v3789
        %v3791 = vpop.f32.mrf.mxu0
        %v3792 = vadd.f32 %v3719, %v3791
        %v3793 = vpop.f32.mrf.mxu0
        %v3794 = vadd.f32 %v3721, %v3793
        %v3795 = vpop.f32.mrf.mxu0
        %v3796 = vadd.f32 %v3723, %v3795
        %3797 = vmatprep.mubr.bf16.mxu0 0
        %3798 = vmatmul.mubr.bf16.gmra.mxu0 %v3433
        %v3799 = vpop.f32.mrf.mxu0
        %v3800 = vadd.f32 %v3727, %v3799
        %v3801 = vpop.f32.mrf.mxu0
        %v3802 = vadd.f32 %v3729, %v3801
        %v3803 = vpop.f32.mrf.mxu0
        %v3804 = vadd.f32 %v3731, %v3803
        %v3805 = vpop.f32.mrf.mxu0
        %v3806 = vadd.f32 %v3733, %v3805
        %3807 = vmatprep.mubr.bf16.mxu0 0
        %3808 = vmatmul.mubr.bf16.gmra.mxu0 %v3434
        %v3809 = vpop.f32.mrf.mxu0
        %v3810 = vadd.f32 %v3737, %v3809
        %v3811 = vpop.f32.mrf.mxu0
        %v3812 = vadd.f32 %v3739, %v3811
        %v3813 = vpop.f32.mrf.mxu0
        %v3814 = vadd.f32 %v3741, %v3813
        %v3815 = vpop.f32.mrf.mxu0
        %v3816 = vadd.f32 %v3743, %v3815
        %3817 = vmatprep.mubr.bf16.mxu0 0
        %3818 = vmatmul.mubr.bf16.gmra.mxu0 %v3435
        %v3819 = vpop.f32.mrf.mxu0
        %v3820 = vadd.f32 %v3747, %v3819
        %v3821 = vpop.f32.mrf.mxu0
        %v3822 = vadd.f32 %v3749, %v3821
        %v3823 = vpop.f32.mrf.mxu0
        %v3824 = vadd.f32 %v3751, %v3823
        %v3825 = vpop.f32.mrf.mxu0
        %v3826 = vadd.f32 %v3753, %v3825
        %3827 = vdwg.mxu0
        %v3828 = vlaneseq
        %v3829 = vshrl.u32 %v3828, 7
        %v3830 = vsub.s32 2, %v3829
        %v3831 = vrot.slane %v807, %v3830
        %v3832 = vlaneseq
        %v3833 = vshrl.u32 %v3832, 7
        %v3834 = vsub.s32 2, %v3833
        %v3835 = vrot.slane %v808, %v3834
        %v3836 = vmul.f32 %v3831, %v3790
        %v3837 = vmul.f32 %v3835, %v3792
        %v3838 = vmul.f32 %v3831, %v3794
        %v3839 = vmul.f32 %v3835, %v3796
        %v3840 = vmul.f32 %v3831, %v3800
        %v3841 = vmul.f32 %v3835, %v3802
        %v3842 = vmul.f32 %v3831, %v3804
        %v3843 = vmul.f32 %v3835, %v3806
        %v3844 = vmul.f32 %v3831, %v3810
        %v3845 = vmul.f32 %v3835, %v3812
        %v3846 = vmul.f32 %v3831, %v3814
        %v3847 = vmul.f32 %v3835, %v3816
        %v3848 = vmul.f32 %v3831, %v3820
        %v3849 = vmul.f32 %v3835, %v3822
        %v3850 = vmul.f32 %v3831, %v3824
        %v3851 = vmul.f32 %v3835, %v3826
        %v3852 = vadd.f32 %v810, %v3836
        %v3853 = vadd.f32 %v811, %v3837
        %v3854 = vadd.f32 %v812, %v3838
        %v3855 = vadd.f32 %v813, %v3839
        %v3856 = vadd.f32 %v814, %v3840
        %v3857 = vadd.f32 %v815, %v3841
        %v3858 = vadd.f32 %v816, %v3842
        %v3859 = vadd.f32 %v817, %v3843
        %v3860 = vadd.f32 %v818, %v3844
        %v3861 = vadd.f32 %v819, %v3845
        %v3862 = vadd.f32 %v820, %v3846
        %v3863 = vadd.f32 %v821, %v3847
        %v3864 = vadd.f32 %v822, %v3848
        %v3865 = vadd.f32 %v823, %v3849
        %v3866 = vadd.f32 %v824, %v3850
        %v3867 = vadd.f32 %v825, %v3851
        %v3868 = vadd.f32 %v3174, %v3175
        %3869 = vadd.xlane.f32.xlu0 %v3868
        %v3870 = vpop.xlane.xlu0 %3869
        %v3871 = vadd.f32 %v3176, %v3177
        %3872 = vadd.xlane.f32.xlu0 %v3871
        %v3873 = vpop.xlane.xlu0 %3872
        %v3874 = vadd.f32 %v3178, %v3179
        %3875 = vadd.xlane.f32.xlu0 %v3874
        %v3876 = vpop.xlane.xlu0 %3875
        %v3877 = vadd.f32 %v3180, %v3181
        %3878 = vadd.xlane.f32.xlu0 %v3877
        %v3879 = vpop.xlane.xlu0 %3878
        %v3880 = vadd.f32 %v3182, %v3183
        %3881 = vadd.xlane.f32.xlu0 %v3880
        %v3882 = vpop.xlane.xlu0 %3881
        %v3883 = vadd.f32 %v3184, %v3185
        %3884 = vadd.xlane.f32.xlu0 %v3883
        %v3885 = vpop.xlane.xlu0 %3884
        %v3886 = vadd.f32 %v3186, %v3187
        %3887 = vadd.xlane.f32.xlu0 %v3886
        %v3888 = vpop.xlane.xlu0 %3887
        %v3889 = vadd.f32 %v3188, %v3189
        %3890 = vadd.xlane.f32.xlu0 %v3889
        %v3891 = vpop.xlane.xlu0 %3890
        %v3892 = vmul.f32 %v3870, %v624
        %v3893 = vmul.f32 %v3873, %v624
        %v3894 = vmul.f32 %v3876, %v624
        %v3895 = vmul.f32 %v3879, %v624
        %v3896 = vmul.f32 %v3882, %v624
        %v3897 = vmul.f32 %v3885, %v624
        %v3898 = vmul.f32 %v3888, %v624
        %v3899 = vmul.f32 %v3891, %v624
        %v3900 = vsub.f32 %v3174, %v3892
        %v3901 = vsub.f32 %v3175, %v3892
        %v3902 = vsub.f32 %v3176, %v3893
        %v3903 = vsub.f32 %v3177, %v3893
        %v3904 = vsub.f32 %v3178, %v3894
        %v3905 = vsub.f32 %v3179, %v3894
        %v3906 = vsub.f32 %v3180, %v3895
        %v3907 = vsub.f32 %v3181, %v3895
        %v3908 = vsub.f32 %v3182, %v3896
        %v3909 = vsub.f32 %v3183, %v3896
        %v3910 = vsub.f32 %v3184, %v3897
        %v3911 = vsub.f32 %v3185, %v3897
        %v3912 = vsub.f32 %v3186, %v3898
        %v3913 = vsub.f32 %v3187, %v3898
        %v3914 = vsub.f32 %v3188, %v3899
        %v3915 = vsub.f32 %v3189, %v3899
        %v3916 = vmul.f32 %v3900, %v3900
        %v3917 = vmul.f32 %v3901, %v3901
        %v3918 = vmul.f32 %v3902, %v3902
        %v3919 = vmul.f32 %v3903, %v3903
        %v3920 = vmul.f32 %v3904, %v3904
        %v3921 = vmul.f32 %v3905, %v3905
        %v3922 = vmul.f32 %v3906, %v3906
        %v3923 = vmul.f32 %v3907, %v3907
        %v3924 = vmul.f32 %v3908, %v3908
        %v3925 = vmul.f32 %v3909, %v3909
        %v3926 = vmul.f32 %v3910, %v3910
        %v3927 = vmul.f32 %v3911, %v3911
        %v3928 = vmul.f32 %v3912, %v3912
        %v3929 = vmul.f32 %v3913, %v3913
        %v3930 = vmul.f32 %v3914, %v3914
        %v3931 = vmul.f32 %v3915, %v3915
        %v3932 = vadd.f32 %v3916, %v3917
        %3933 = vadd.xlane.f32.xlu0 %v3932
        %v3934 = vpop.xlane.xlu0 %3933
        %v3935 = vadd.f32 %v3918, %v3919
        %3936 = vadd.xlane.f32.xlu0 %v3935
        %v3937 = vpop.xlane.xlu0 %3936
        %v3938 = vadd.f32 %v3920, %v3921
        %3939 = vadd.xlane.f32.xlu0 %v3938
        %v3940 = vpop.xlane.xlu0 %3939
        %v3941 = vadd.f32 %v3922, %v3923
        %3942 = vadd.xlane.f32.xlu0 %v3941
        %v3943 = vpop.xlane.xlu0 %3942
        %v3944 = vadd.f32 %v3924, %v3925
        %3945 = vadd.xlane.f32.xlu0 %v3944
        %v3946 = vpop.xlane.xlu0 %3945
        %v3947 = vadd.f32 %v3926, %v3927
        %3948 = vadd.xlane.f32.xlu0 %v3947
        %v3949 = vpop.xlane.xlu0 %3948
        %v3950 = vadd.f32 %v3928, %v3929
        %3951 = vadd.xlane.f32.xlu0 %v3950
        %v3952 = vpop.xlane.xlu0 %3951
        %v3953 = vadd.f32 %v3930, %v3931
        %3954 = vadd.xlane.f32.xlu0 %v3953
        %v3955 = vpop.xlane.xlu0 %3954
        %v3956 = vmul.f32 %v3934, %v624
        %v3957 = vmul.f32 %v3937, %v624
        %v3958 = vmul.f32 %v3940, %v624
        %v3959 = vmul.f32 %v3943, %v624
        %v3960 = vmul.f32 %v3946, %v624
        %v3961 = vmul.f32 %v3949, %v624
        %v3962 = vmul.f32 %v3952, %v624
        %v3963 = vmul.f32 %v3955, %v624
        %v3964 = vadd.f32 %v3956, 1e-05
        %v3965 = vadd.f32 %v3957, 1e-05
        %v3966 = vadd.f32 %v3958, 1e-05
        %v3967 = vadd.f32 %v3959, 1e-05
        %v3968 = vadd.f32 %v3960, 1e-05
        %v3969 = vadd.f32 %v3961, 1e-05
        %v3970 = vadd.f32 %v3962, 1e-05
        %v3971 = vadd.f32 %v3963, 1e-05
        %v3972 = vrsqrt.pop %v3964
        %v3973 = vrsqrt.pop %v3965
        %v3974 = vrsqrt.pop %v3966
        %v3975 = vrsqrt.pop %v3967
        %v3976 = vrsqrt.pop %v3968
        %v3977 = vrsqrt.pop %v3969
        %v3978 = vrsqrt.pop %v3970
        %v3979 = vrsqrt.pop %v3971
        %v3980 = vmul.f32 %v3900, %v3972
        %v3981 = vmul.f32 %v3901, %v3972
        %v3982 = vmul.f32 %v3902, %v3973
        %v3983 = vmul.f32 %v3903, %v3973
        %v3984 = vmul.f32 %v3904, %v3974
        %v3985 = vmul.f32 %v3905, %v3974
        %v3986 = vmul.f32 %v3906, %v3975
        %v3987 = vmul.f32 %v3907, %v3975
        %v3988 = vmul.f32 %v3908, %v3976
        %v3989 = vmul.f32 %v3909, %v3976
        %v3990 = vmul.f32 %v3910, %v3977
        %v3991 = vmul.f32 %v3911, %v3977
        %v3992 = vmul.f32 %v3912, %v3978
        %v3993 = vmul.f32 %v3913, %v3978
        %v3994 = vmul.f32 %v3914, %v3979
        %v3995 = vmul.f32 %v3915, %v3979
        %v3997 = vlaneseq
        %v3998 = vshrl.u32 %v3997, 7
        %v3999 = vsub.s32 0, %v3998
        %v4000 = vrot.slane %v549, %v3999
        %v4001 = vlaneseq
        %v4002 = vshrl.u32 %v4001, 7
        %v4003 = vsub.s32 1, %v4002
        %v4004 = vrot.slane %v549, %v4003
        %v4007 = vmul.f32 %v3980, %v4000
        %v4008 = vmul.f32 %v3981, %v4004
        %v4009 = vmul.f32 %v3982, %v4000
        %v4010 = vmul.f32 %v3983, %v4004
        %v4011 = vmul.f32 %v3984, %v4000
        %v4012 = vmul.f32 %v3985, %v4004
        %v4013 = vmul.f32 %v3986, %v4000
        %v4014 = vmul.f32 %v3987, %v4004
        %v4015 = vmul.f32 %v3988, %v4000
        %v4016 = vmul.f32 %v3989, %v4004
        %v4017 = vmul.f32 %v3990, %v4000
        %v4018 = vmul.f32 %v3991, %v4004
        %v4019 = vmul.f32 %v3992, %v4000
        %v4020 = vmul.f32 %v3993, %v4004
        %v4021 = vmul.f32 %v3994, %v4000
        %v4022 = vmul.f32 %v3995, %v4004
        %v4023 = vlaneseq
        %v4024 = vshrl.u32 %v4023, 7
        %v4025 = vsub.s32 4, %v4024
        %v4026 = vrot.slane %v756, %v4025
        %v4027 = vlaneseq
        %v4028 = vshrl.u32 %v4027, 7
        %v4029 = vsub.s32 4, %v4028
        %v4030 = vrot.slane %v757, %v4029
        %v4031 = vmul.f32 %v4007, %v4026
        %v4032 = vmul.f32 %v4008, %v4030
        %v4033 = vmul.f32 %v4009, %v4026
        %v4034 = vmul.f32 %v4010, %v4030
        %v4035 = vmul.f32 %v4011, %v4026
        %v4036 = vmul.f32 %v4012, %v4030
        %v4037 = vmul.f32 %v4013, %v4026
        %v4038 = vmul.f32 %v4014, %v4030
        %v4039 = vmul.f32 %v4015, %v4026
        %v4040 = vmul.f32 %v4016, %v4030
        %v4041 = vmul.f32 %v4017, %v4026
        %v4042 = vmul.f32 %v4018, %v4030
        %v4043 = vmul.f32 %v4019, %v4026
        %v4044 = vmul.f32 %v4020, %v4030
        %v4045 = vmul.f32 %v4021, %v4026
        %v4046 = vmul.f32 %v4022, %v4030
        %v4047 = vlaneseq
        %v4048 = vshrl.u32 %v4047, 7
        %v4049 = vsub.s32 3, %v4048
        %v4050 = vrot.slane %v582, %v4049
        %v4051 = vlaneseq
        %v4052 = vshrl.u32 %v4051, 7
        %v4053 = vsub.s32 3, %v4052
        %v4054 = vrot.slane %v583, %v4053
        %v4055 = vadd.f32 %v4031, %v4050
        %v4056 = vadd.f32 %v4032, %v4054
        %v4057 = vadd.f32 %v4033, %v4050
        %v4058 = vadd.f32 %v4034, %v4054
        %v4059 = vadd.f32 %v4035, %v4050
        %v4060 = vadd.f32 %v4036, %v4054
        %v4061 = vadd.f32 %v4037, %v4050
        %v4062 = vadd.f32 %v4038, %v4054
        %v4063 = vadd.f32 %v4039, %v4050
        %v4064 = vadd.f32 %v4040, %v4054
        %v4065 = vadd.f32 %v4041, %v4050
        %v4066 = vadd.f32 %v4042, %v4054
        %v4067 = vadd.f32 %v4043, %v4050
        %v4068 = vadd.f32 %v4044, %v4054
        %v4069 = vadd.f32 %v4045, %v4050
        %v4070 = vadd.f32 %v4046, %v4054
        %v4071 = vadd.f32 %v3852, %v3853
        %4072 = vadd.xlane.f32.xlu0 %v4071
        %v4073 = vpop.xlane.xlu0 %4072
        %v4074 = vadd.f32 %v3854, %v3855
        %4075 = vadd.xlane.f32.xlu0 %v4074
        %v4076 = vpop.xlane.xlu0 %4075
        %v4077 = vadd.f32 %v3856, %v3857
        %4078 = vadd.xlane.f32.xlu0 %v4077
        %v4079 = vpop.xlane.xlu0 %4078
        %v4080 = vadd.f32 %v3858, %v3859
        %4081 = vadd.xlane.f32.xlu0 %v4080
        %v4082 = vpop.xlane.xlu0 %4081
        %v4083 = vadd.f32 %v3860, %v3861
        %4084 = vadd.xlane.f32.xlu0 %v4083
        %v4085 = vpop.xlane.xlu0 %4084
        %v4086 = vadd.f32 %v3862, %v3863
        %4087 = vadd.xlane.f32.xlu0 %v4086
        %v4088 = vpop.xlane.xlu0 %4087
        %v4089 = vadd.f32 %v3864, %v3865
        %4090 = vadd.xlane.f32.xlu0 %v4089
        %v4091 = vpop.xlane.xlu0 %4090
        %v4092 = vadd.f32 %v3866, %v3867
        %4093 = vadd.xlane.f32.xlu0 %v4092
        %v4094 = vpop.xlane.xlu0 %4093
        %v4095 = vmul.f32 %v4073, %v624
        %v4096 = vmul.f32 %v4076, %v624
        %v4097 = vmul.f32 %v4079, %v624
        %v4098 = vmul.f32 %v4082, %v624
        %v4099 = vmul.f32 %v4085, %v624
        %v4100 = vmul.f32 %v4088, %v624
        %v4101 = vmul.f32 %v4091, %v624
        %v4102 = vmul.f32 %v4094, %v624
        %v4103 = vsub.f32 %v3852, %v4095
        %v4104 = vsub.f32 %v3853, %v4095
        %v4105 = vsub.f32 %v3854, %v4096
        %v4106 = vsub.f32 %v3855, %v4096
        %v4107 = vsub.f32 %v3856, %v4097
        %v4108 = vsub.f32 %v3857, %v4097
        %v4109 = vsub.f32 %v3858, %v4098
        %v4110 = vsub.f32 %v3859, %v4098
        %v4111 = vsub.f32 %v3860, %v4099
        %v4112 = vsub.f32 %v3861, %v4099
        %v4113 = vsub.f32 %v3862, %v4100
        %v4114 = vsub.f32 %v3863, %v4100
        %v4115 = vsub.f32 %v3864, %v4101
        %v4116 = vsub.f32 %v3865, %v4101
        %v4117 = vsub.f32 %v3866, %v4102
        %v4118 = vsub.f32 %v3867, %v4102
        %v4119 = vmul.f32 %v4103, %v4103
        %v4120 = vmul.f32 %v4104, %v4104
        %v4121 = vmul.f32 %v4105, %v4105
        %v4122 = vmul.f32 %v4106, %v4106
        %v4123 = vmul.f32 %v4107, %v4107
        %v4124 = vmul.f32 %v4108, %v4108
        %v4125 = vmul.f32 %v4109, %v4109
        %v4126 = vmul.f32 %v4110, %v4110
        %v4127 = vmul.f32 %v4111, %v4111
        %v4128 = vmul.f32 %v4112, %v4112
        %v4129 = vmul.f32 %v4113, %v4113
        %v4130 = vmul.f32 %v4114, %v4114
        %v4131 = vmul.f32 %v4115, %v4115
        %v4132 = vmul.f32 %v4116, %v4116
        %v4133 = vmul.f32 %v4117, %v4117
        %v4134 = vmul.f32 %v4118, %v4118
        %v4135 = vadd.f32 %v4119, %v4120
        %4136 = vadd.xlane.f32.xlu0 %v4135
        %v4137 = vpop.xlane.xlu0 %4136
        %v4138 = vadd.f32 %v4121, %v4122
        %4139 = vadd.xlane.f32.xlu0 %v4138
        %v4140 = vpop.xlane.xlu0 %4139
        %v4141 = vadd.f32 %v4123, %v4124
        %4142 = vadd.xlane.f32.xlu0 %v4141
        %v4143 = vpop.xlane.xlu0 %4142
        %v4144 = vadd.f32 %v4125, %v4126
        %4145 = vadd.xlane.f32.xlu0 %v4144
        %v4146 = vpop.xlane.xlu0 %4145
        %v4147 = vadd.f32 %v4127, %v4128
        %4148 = vadd.xlane.f32.xlu0 %v4147
        %v4149 = vpop.xlane.xlu0 %4148
        %v4150 = vadd.f32 %v4129, %v4130
        %4151 = vadd.xlane.f32.xlu0 %v4150
        %v4152 = vpop.xlane.xlu0 %4151
        %v4153 = vadd.f32 %v4131, %v4132
        %4154 = vadd.xlane.f32.xlu0 %v4153
        %v4155 = vpop.xlane.xlu0 %4154
        %v4156 = vadd.f32 %v4133, %v4134
        %4157 = vadd.xlane.f32.xlu0 %v4156
        %v4158 = vpop.xlane.xlu0 %4157
        %v4159 = vmul.f32 %v4137, %v624
        %v4160 = vmul.f32 %v4140, %v624
        %v4161 = vmul.f32 %v4143, %v624
        %v4162 = vmul.f32 %v4146, %v624
        %v4163 = vmul.f32 %v4149, %v624
        %v4164 = vmul.f32 %v4152, %v624
        %v4165 = vmul.f32 %v4155, %v624
        %v4166 = vmul.f32 %v4158, %v624
        %v4167 = vadd.f32 %v4159, 1e-05
        %v4168 = vadd.f32 %v4160, 1e-05
        %v4169 = vadd.f32 %v4161, 1e-05
        %v4170 = vadd.f32 %v4162, 1e-05
        %v4171 = vadd.f32 %v4163, 1e-05
        %v4172 = vadd.f32 %v4164, 1e-05
        %v4173 = vadd.f32 %v4165, 1e-05
        %v4174 = vadd.f32 %v4166, 1e-05
        %v4175 = vrsqrt.pop %v4167
        %v4176 = vrsqrt.pop %v4168
        %v4177 = vrsqrt.pop %v4169
        %v4178 = vrsqrt.pop %v4170
        %v4179 = vrsqrt.pop %v4171
        %v4180 = vrsqrt.pop %v4172
        %v4181 = vrsqrt.pop %v4173
        %v4182 = vrsqrt.pop %v4174
        %v4183 = vmul.f32 %v4103, %v4175
        %v4184 = vmul.f32 %v4104, %v4175
        %v4185 = vmul.f32 %v4105, %v4176
        %v4186 = vmul.f32 %v4106, %v4176
        %v4187 = vmul.f32 %v4107, %v4177
        %v4188 = vmul.f32 %v4108, %v4177
        %v4189 = vmul.f32 %v4109, %v4178
        %v4190 = vmul.f32 %v4110, %v4178
        %v4191 = vmul.f32 %v4111, %v4179
        %v4192 = vmul.f32 %v4112, %v4179
        %v4193 = vmul.f32 %v4113, %v4180
        %v4194 = vmul.f32 %v4114, %v4180
        %v4195 = vmul.f32 %v4115, %v4181
        %v4196 = vmul.f32 %v4116, %v4181
        %v4197 = vmul.f32 %v4117, %v4182
        %v4198 = vmul.f32 %v4118, %v4182
        %v4199 = vmul.f32 %v4183, %v4000
        %v4200 = vmul.f32 %v4184, %v4004
        %v4201 = vmul.f32 %v4185, %v4000
        %v4202 = vmul.f32 %v4186, %v4004
        %v4203 = vmul.f32 %v4187, %v4000
        %v4204 = vmul.f32 %v4188, %v4004
        %v4205 = vmul.f32 %v4189, %v4000
        %v4206 = vmul.f32 %v4190, %v4004
        %v4207 = vmul.f32 %v4191, %v4000
        %v4208 = vmul.f32 %v4192, %v4004
        %v4209 = vmul.f32 %v4193, %v4000
        %v4210 = vmul.f32 %v4194, %v4004
        %v4211 = vmul.f32 %v4195, %v4000
        %v4212 = vmul.f32 %v4196, %v4004
        %v4213 = vmul.f32 %v4197, %v4000
        %v4214 = vmul.f32 %v4198, %v4004
        %v4215 = vlaneseq
        %v4216 = vshrl.u32 %v4215, 7
        %v4217 = vsub.s32 4, %v4216
        %v4218 = vrot.slane %v970, %v4217
        %v4219 = vlaneseq
        %v4220 = vshrl.u32 %v4219, 7
        %v4221 = vsub.s32 4, %v4220
        %v4222 = vrot.slane %v971, %v4221
        %v4223 = vmul.f32 %v4199, %v4218
        %v4224 = vmul.f32 %v4200, %v4222
        %v4225 = vmul.f32 %v4201, %v4218
        %v4226 = vmul.f32 %v4202, %v4222
        %v4227 = vmul.f32 %v4203, %v4218
        %v4228 = vmul.f32 %v4204, %v4222
        %v4229 = vmul.f32 %v4205, %v4218
        %v4230 = vmul.f32 %v4206, %v4222
        %v4231 = vmul.f32 %v4207, %v4218
        %v4232 = vmul.f32 %v4208, %v4222
        %v4233 = vmul.f32 %v4209, %v4218
        %v4234 = vmul.f32 %v4210, %v4222
        %v4235 = vmul.f32 %v4211, %v4218
        %v4236 = vmul.f32 %v4212, %v4222
        %v4237 = vmul.f32 %v4213, %v4218
        %v4238 = vmul.f32 %v4214, %v4222
        %v4239 = vlaneseq
        %v4240 = vshrl.u32 %v4239, 7
        %v4241 = vsub.s32 3, %v4240
        %v4242 = vrot.slane %v807, %v4241
        %v4243 = vlaneseq
        %v4244 = vshrl.u32 %v4243, 7
        %v4245 = vsub.s32 3, %v4244
        %v4246 = vrot.slane %v808, %v4245
        %v4247 = vadd.f32 %v4223, %v4242
        %v4248 = vadd.f32 %v4224, %v4246
        %v4249 = vadd.f32 %v4225, %v4242
        %v4250 = vadd.f32 %v4226, %v4246
        %v4251 = vadd.f32 %v4227, %v4242
        %v4252 = vadd.f32 %v4228, %v4246
        %v4253 = vadd.f32 %v4229, %v4242
        %v4254 = vadd.f32 %v4230, %v4246
        %v4255 = vadd.f32 %v4231, %v4242
        %v4256 = vadd.f32 %v4232, %v4246
        %v4257 = vadd.f32 %v4233, %v4242
        %v4258 = vadd.f32 %v4234, %v4246
        %v4259 = vadd.f32 %v4235, %v4242
        %v4260 = vadd.f32 %v4236, %v4246
        %v4261 = vadd.f32 %v4237, %v4242
        %v4262 = vadd.f32 %v4238, %v4246
        %v4263 = vpack.c.bf16 %v4057, %v4055
        %v4264 = vpack.c.bf16 %v4058, %v4056
        %v4265 = vpack.c.bf16 %v4061, %v4059
        %v4266 = vpack.c.bf16 %v4062, %v4060
        %v4267 = vpack.c.bf16 %v4065, %v4063
        %v4268 = vpack.c.bf16 %v4066, %v4064
        %v4269 = vpack.c.bf16 %v4069, %v4067
        %v4270 = vpack.c.bf16 %v4070, %v4068
        %v4271 = vpack.c.bf16 %v4249, %v4247
        %v4272 = vpack.c.bf16 %v4250, %v4248
        %v4273 = vpack.c.bf16 %v4253, %v4251
        %v4274 = vpack.c.bf16 %v4254, %v4252
        %v4275 = vpack.c.bf16 %v4257, %v4255
        %v4276 = vpack.c.bf16 %v4258, %v4256
        %v4277 = vpack.c.bf16 %v4261, %v4259
        %v4278 = vpack.c.bf16 %v4262, %v4260
        %v4279 = vld [vmem:[#allocation11] sm:$0xff]
        %v4280 = vld [vmem:[#allocation11 + $0x8] sm:$0xff]
        %v4281 = vld [vmem:[#allocation11 + $0x20] sm:$0xff]
        %v4282 = vld [vmem:[#allocation11 + $0x28] sm:$0xff]
        %v4283 = vld [vmem:[#allocation11 + $0x40] sm:$0xff]
        %v4284 = vld [vmem:[#allocation11 + $0x48] sm:$0xff]
        %v4285 = vld [vmem:[#allocation11 + $0x60] sm:$0xff]
        %v4286 = vld [vmem:[#allocation11 + $0x68] sm:$0xff]
        %v4287 = vld [vmem:[#allocation11 + $0x80] sm:$0xff]
        %v4288 = vld [vmem:[#allocation11 + $0x88] sm:$0xff]
        %v4289 = vld [vmem:[#allocation11 + $0xa0] sm:$0xff]
        %v4290 = vld [vmem:[#allocation11 + $0xa8] sm:$0xff]
        %v4291 = vld [vmem:[#allocation11 + $0xc0] sm:$0xff]
        %v4292 = vld [vmem:[#allocation11 + $0xc8] sm:$0xff]
        %v4293 = vld [vmem:[#allocation11 + $0xe0] sm:$0xff]
        %v4294 = vld [vmem:[#allocation11 + $0xe8] sm:$0xff]
        %v4295 = vld [vmem:[#allocation11 + $0x100] sm:$0xff]
        %v4296 = vld [vmem:[#allocation11 + $0x108] sm:$0xff]
        %v4297 = vld [vmem:[#allocation11 + $0x120] sm:$0xff]
        %v4298 = vld [vmem:[#allocation11 + $0x128] sm:$0xff]
        %v4299 = vld [vmem:[#allocation11 + $0x140] sm:$0xff]
        %v4300 = vld [vmem:[#allocation11 + $0x148] sm:$0xff]
        %v4301 = vld [vmem:[#allocation11 + $0x160] sm:$0xff]
        %v4302 = vld [vmem:[#allocation11 + $0x168] sm:$0xff]
        %v4303 = vld [vmem:[#allocation11 + $0x180] sm:$0xff]
        %v4304 = vld [vmem:[#allocation11 + $0x188] sm:$0xff]
        %v4305 = vld [vmem:[#allocation11 + $0x1a0] sm:$0xff]
        %v4306 = vld [vmem:[#allocation11 + $0x1a8] sm:$0xff]
        %v4307 = vld [vmem:[#allocation11 + $0x1c0] sm:$0xff]
        %v4308 = vld [vmem:[#allocation11 + $0x1c8] sm:$0xff]
        %v4309 = vld [vmem:[#allocation11 + $0x1e0] sm:$0xff]
        %v4310 = vld [vmem:[#allocation11 + $0x1e8] sm:$0xff]
        %v4311 = vld [vmem:[#allocation11 + $0x200] sm:$0xff]
        %v4312 = vld [vmem:[#allocation11 + $0x208] sm:$0xff]
        %v4313 = vld [vmem:[#allocation11 + $0x220] sm:$0xff]
        %v4314 = vld [vmem:[#allocation11 + $0x228] sm:$0xff]
        %v4315 = vld [vmem:[#allocation11 + $0x240] sm:$0xff]
        %v4316 = vld [vmem:[#allocation11 + $0x248] sm:$0xff]
        %v4317 = vld [vmem:[#allocation11 + $0x260] sm:$0xff]
        %v4318 = vld [vmem:[#allocation11 + $0x268] sm:$0xff]
        %v4319 = vld [vmem:[#allocation11 + $0x280] sm:$0xff]
        %v4320 = vld [vmem:[#allocation11 + $0x288] sm:$0xff]
        %v4321 = vld [vmem:[#allocation11 + $0x2a0] sm:$0xff]
        %v4322 = vld [vmem:[#allocation11 + $0x2a8] sm:$0xff]
        %v4323 = vld [vmem:[#allocation11 + $0x2c0] sm:$0xff]
        %v4324 = vld [vmem:[#allocation11 + $0x2c8] sm:$0xff]
        %v4325 = vld [vmem:[#allocation11 + $0x2e0] sm:$0xff]
        %v4326 = vld [vmem:[#allocation11 + $0x2e8] sm:$0xff]
        %v4327 = vld [vmem:[#allocation11 + $0x300] sm:$0xff]
        %v4328 = vld [vmem:[#allocation11 + $0x308] sm:$0xff]
        %v4329 = vld [vmem:[#allocation11 + $0x320] sm:$0xff]
        %v4330 = vld [vmem:[#allocation11 + $0x328] sm:$0xff]
        %v4331 = vld [vmem:[#allocation11 + $0x340] sm:$0xff]
        %v4332 = vld [vmem:[#allocation11 + $0x348] sm:$0xff]
        %v4333 = vld [vmem:[#allocation11 + $0x360] sm:$0xff]
        %v4334 = vld [vmem:[#allocation11 + $0x368] sm:$0xff]
        %v4335 = vld [vmem:[#allocation11 + $0x380] sm:$0xff]
        %v4336 = vld [vmem:[#allocation11 + $0x388] sm:$0xff]
        %v4337 = vld [vmem:[#allocation11 + $0x3a0] sm:$0xff]
        %v4338 = vld [vmem:[#allocation11 + $0x3a8] sm:$0xff]
        %v4339 = vld [vmem:[#allocation11 + $0x3c0] sm:$0xff]
        %v4340 = vld [vmem:[#allocation11 + $0x3c8] sm:$0xff]
        %v4341 = vld [vmem:[#allocation11 + $0x3e0] sm:$0xff]
        %v4342 = vld [vmem:[#allocation11 + $0x3e8] sm:$0xff]
        %v4343 = vld [vmem:[%s9] sm:$0xf]
        %v4345 = vlaneseq
        %v4346 = vshrl.u32 %v4345, 7
        %v4347 = vsub.s32 0, %v4346
        %v4348 = vrot.slane %v4343, %v4347
        %v4349 = vlaneseq
        %v4350 = vshrl.u32 %v4349, 7
        %v4351 = vsub.s32 1, %v4350
        %v4352 = vrot.slane %v4343, %v4351
        %v4353 = vlaneseq
        %v4354 = vshrl.u32 %v4353, 7
        %v4355 = vsub.s32 2, %v4354
        %v4356 = vrot.slane %v4343, %v4355
        %v4357 = vlaneseq
        %v4358 = vshrl.u32 %v4357, 7
        %v4359 = vsub.s32 3, %v4358
        %v4360 = vrot.slane %v4343, %v4359
        %v4429 = vunpack.c.l.b16 %v4279
        %v4430 = vunpack.c.h.b16 %v4279
        %v4431 = vunpack.c.l.b16 %v4280
        %v4432 = vunpack.c.h.b16 %v4280
        %v4433 = vunpack.c.l.b16 %v4281
        %v4434 = vunpack.c.h.b16 %v4281
        %v4435 = vunpack.c.l.b16 %v4282
        %v4436 = vunpack.c.h.b16 %v4282
        %v4437 = vunpack.c.l.b16 %v4283
        %v4438 = vunpack.c.h.b16 %v4283
        %v4439 = vunpack.c.l.b16 %v4284
        %v4440 = vunpack.c.h.b16 %v4284
        %v4441 = vunpack.c.l.b16 %v4285
        %v4442 = vunpack.c.h.b16 %v4285
        %v4443 = vunpack.c.l.b16 %v4286
        %v4444 = vunpack.c.h.b16 %v4286
        %v4445 = vunpack.c.l.b16 %v4287
        %v4446 = vunpack.c.h.b16 %v4287
        %v4447 = vunpack.c.l.b16 %v4288
        %v4448 = vunpack.c.h.b16 %v4288
        %v4449 = vunpack.c.l.b16 %v4289
        %v4450 = vunpack.c.h.b16 %v4289
        %v4451 = vunpack.c.l.b16 %v4290
        %v4452 = vunpack.c.h.b16 %v4290
        %v4453 = vunpack.c.l.b16 %v4291
        %v4454 = vunpack.c.h.b16 %v4291
        %v4455 = vunpack.c.l.b16 %v4292
        %v4456 = vunpack.c.h.b16 %v4292
        %v4457 = vunpack.c.l.b16 %v4293
        %v4458 = vunpack.c.h.b16 %v4293
        %v4459 = vunpack.c.l.b16 %v4294
        %v4460 = vunpack.c.h.b16 %v4294
        %v4461 = vunpack.c.l.b16 %v4295
        %v4462 = vunpack.c.h.b16 %v4295
        %v4463 = vunpack.c.l.b16 %v4296
        %v4464 = vunpack.c.h.b16 %v4296
        %v4465 = vunpack.c.l.b16 %v4297
        %v4466 = vunpack.c.h.b16 %v4297
        %v4467 = vunpack.c.l.b16 %v4298
        %v4468 = vunpack.c.h.b16 %v4298
        %v4469 = vunpack.c.l.b16 %v4299
        %v4470 = vunpack.c.h.b16 %v4299
        %v4471 = vunpack.c.l.b16 %v4300
        %v4472 = vunpack.c.h.b16 %v4300
        %v4473 = vunpack.c.l.b16 %v4301
        %v4474 = vunpack.c.h.b16 %v4301
        %v4475 = vunpack.c.l.b16 %v4302
        %v4476 = vunpack.c.h.b16 %v4302
        %v4477 = vunpack.c.l.b16 %v4303
        %v4478 = vunpack.c.h.b16 %v4303
        %v4479 = vunpack.c.l.b16 %v4304
        %v4480 = vunpack.c.h.b16 %v4304
        %v4481 = vunpack.c.l.b16 %v4305
        %v4482 = vunpack.c.h.b16 %v4305
        %v4483 = vunpack.c.l.b16 %v4306
        %v4484 = vunpack.c.h.b16 %v4306
        %v4485 = vunpack.c.l.b16 %v4307
        %v4486 = vunpack.c.h.b16 %v4307
        %v4487 = vunpack.c.l.b16 %v4308
        %v4488 = vunpack.c.h.b16 %v4308
        %v4489 = vunpack.c.l.b16 %v4309
        %v4490 = vunpack.c.h.b16 %v4309
        %v4491 = vunpack.c.l.b16 %v4310
        %v4492 = vunpack.c.h.b16 %v4310
        %v4493 = vunpack.c.l.b16 %v4311
        %v4494 = vunpack.c.h.b16 %v4311
        %v4495 = vunpack.c.l.b16 %v4312
        %v4496 = vunpack.c.h.b16 %v4312
        %v4497 = vunpack.c.l.b16 %v4313
        %v4498 = vunpack.c.h.b16 %v4313
        %v4499 = vunpack.c.l.b16 %v4314
        %v4500 = vunpack.c.h.b16 %v4314
        %v4501 = vunpack.c.l.b16 %v4315
        %v4502 = vunpack.c.h.b16 %v4315
        %v4503 = vunpack.c.l.b16 %v4316
        %v4504 = vunpack.c.h.b16 %v4316
        %v4505 = vunpack.c.l.b16 %v4317
        %v4506 = vunpack.c.h.b16 %v4317
        %v4507 = vunpack.c.l.b16 %v4318
        %v4508 = vunpack.c.h.b16 %v4318
        %v4509 = vunpack.c.l.b16 %v4319
        %v4510 = vunpack.c.h.b16 %v4319
        %v4511 = vunpack.c.l.b16 %v4320
        %v4512 = vunpack.c.h.b16 %v4320
        %v4513 = vunpack.c.l.b16 %v4321
        %v4514 = vunpack.c.h.b16 %v4321
        %v4515 = vunpack.c.l.b16 %v4322
        %v4516 = vunpack.c.h.b16 %v4322
        %v4517 = vunpack.c.l.b16 %v4323
        %v4518 = vunpack.c.h.b16 %v4323
        %v4519 = vunpack.c.l.b16 %v4324
        %v4520 = vunpack.c.h.b16 %v4324
        %v4521 = vunpack.c.l.b16 %v4325
        %v4522 = vunpack.c.h.b16 %v4325
        %v4523 = vunpack.c.l.b16 %v4326
        %v4524 = vunpack.c.h.b16 %v4326
        %v4525 = vunpack.c.l.b16 %v4327
        %v4526 = vunpack.c.h.b16 %v4327
        %v4527 = vunpack.c.l.b16 %v4328
        %v4528 = vunpack.c.h.b16 %v4328
        %v4529 = vunpack.c.l.b16 %v4329
        %v4530 = vunpack.c.h.b16 %v4329
        %v4531 = vunpack.c.l.b16 %v4330
        %v4532 = vunpack.c.h.b16 %v4330
        %v4533 = vunpack.c.l.b16 %v4331
        %v4534 = vunpack.c.h.b16 %v4331
        %v4535 = vunpack.c.l.b16 %v4332
        %v4536 = vunpack.c.h.b16 %v4332
        %v4537 = vunpack.c.l.b16 %v4333
        %v4538 = vunpack.c.h.b16 %v4333
        %v4539 = vunpack.c.l.b16 %v4334
        %v4540 = vunpack.c.h.b16 %v4334
        %v4541 = vunpack.c.l.b16 %v4335
        %v4542 = vunpack.c.h.b16 %v4335
        %v4543 = vunpack.c.l.b16 %v4336
        %v4544 = vunpack.c.h.b16 %v4336
        %v4545 = vunpack.c.l.b16 %v4337
        %v4546 = vunpack.c.h.b16 %v4337
        %v4547 = vunpack.c.l.b16 %v4338
        %v4548 = vunpack.c.h.b16 %v4338
        %v4549 = vunpack.c.l.b16 %v4339
        %v4550 = vunpack.c.h.b16 %v4339
        %v4551 = vunpack.c.l.b16 %v4340
        %v4552 = vunpack.c.h.b16 %v4340
        %v4553 = vunpack.c.l.b16 %v4341
        %v4554 = vunpack.c.h.b16 %v4341
        %v4555 = vunpack.c.l.b16 %v4342
        %v4556 = vunpack.c.h.b16 %v4342
        %v4557 = vpack.c.b16 %v4433, %v4429
        %v4558 = vpack.c.b16 %v4434, %v4430
        %v4559 = vpack.c.b16 %v4435, %v4431
        %v4560 = vpack.c.b16 %v4436, %v4432
        %v4561 = vpack.c.b16 %v4441, %v4437
        %v4562 = vpack.c.b16 %v4442, %v4438
        %v4563 = vpack.c.b16 %v4443, %v4439
        %v4564 = vpack.c.b16 %v4444, %v4440
        %v4565 = vpack.c.b16 %v4449, %v4445
        %v4566 = vpack.c.b16 %v4450, %v4446
        %v4567 = vpack.c.b16 %v4451, %v4447
        %v4568 = vpack.c.b16 %v4452, %v4448
        %v4569 = vpack.c.b16 %v4457, %v4453
        %v4570 = vpack.c.b16 %v4458, %v4454
        %v4571 = vpack.c.b16 %v4459, %v4455
        %v4572 = vpack.c.b16 %v4460, %v4456
        %v4573 = vpack.c.b16 %v4465, %v4461
        %v4574 = vpack.c.b16 %v4466, %v4462
        %v4575 = vpack.c.b16 %v4467, %v4463
        %v4576 = vpack.c.b16 %v4468, %v4464
        %v4577 = vpack.c.b16 %v4473, %v4469
        %v4578 = vpack.c.b16 %v4474, %v4470
        %v4579 = vpack.c.b16 %v4475, %v4471
        %v4580 = vpack.c.b16 %v4476, %v4472
        %v4581 = vpack.c.b16 %v4481, %v4477
        %v4582 = vpack.c.b16 %v4482, %v4478
        %v4583 = vpack.c.b16 %v4483, %v4479
        %v4584 = vpack.c.b16 %v4484, %v4480
        %v4585 = vpack.c.b16 %v4489, %v4485
        %v4586 = vpack.c.b16 %v4490, %v4486
        %v4587 = vpack.c.b16 %v4491, %v4487
        %v4588 = vpack.c.b16 %v4492, %v4488
        %v4589 = vpack.c.b16 %v4497, %v4493
        %v4590 = vpack.c.b16 %v4498, %v4494
        %v4591 = vpack.c.b16 %v4499, %v4495
        %v4592 = vpack.c.b16 %v4500, %v4496
        %v4593 = vpack.c.b16 %v4505, %v4501
        %v4594 = vpack.c.b16 %v4506, %v4502
        %v4595 = vpack.c.b16 %v4507, %v4503
        %v4596 = vpack.c.b16 %v4508, %v4504
        %v4597 = vpack.c.b16 %v4513, %v4509
        %v4598 = vpack.c.b16 %v4514, %v4510
        %v4599 = vpack.c.b16 %v4515, %v4511
        %v4600 = vpack.c.b16 %v4516, %v4512
        %v4601 = vpack.c.b16 %v4521, %v4517
        %v4602 = vpack.c.b16 %v4522, %v4518
        %v4603 = vpack.c.b16 %v4523, %v4519
        %v4604 = vpack.c.b16 %v4524, %v4520
        %v4605 = vpack.c.b16 %v4529, %v4525
        %v4606 = vpack.c.b16 %v4530, %v4526
        %v4607 = vpack.c.b16 %v4531, %v4527
        %v4608 = vpack.c.b16 %v4532, %v4528
        %v4609 = vpack.c.b16 %v4537, %v4533
        %v4610 = vpack.c.b16 %v4538, %v4534
        %v4611 = vpack.c.b16 %v4539, %v4535
        %v4612 = vpack.c.b16 %v4540, %v4536
        %v4613 = vpack.c.b16 %v4545, %v4541
        %v4614 = vpack.c.b16 %v4546, %v4542
        %v4615 = vpack.c.b16 %v4547, %v4543
        %v4616 = vpack.c.b16 %v4548, %v4544
        %v4617 = vpack.c.b16 %v4553, %v4549
        %v4618 = vpack.c.b16 %v4554, %v4550
        %v4619 = vpack.c.b16 %v4555, %v4551
        %v4620 = vpack.c.b16 %v4556, %v4552
        %4685 = vmatprep.subr.bf16.mxu0 %v4586
        %4686 = vmatpush1.bf16.msra.mxu0 %v4585
        %4687 = vmatprep.subr.bf16.mxu0 %v4582
        %4688 = vmatpush1.bf16.msra.mxu0 %v4581
        %4689 = vmatprep.subr.bf16.mxu0 %v4578
        %4690 = vmatpush1.bf16.msra.mxu0 %v4577
        %4691 = vmatprep.subr.bf16.mxu0 %v4574
        %4692 = vmatpush1.bf16.msra.mxu0 %v4573
        %4693 = vmatprep.subr.bf16.mxu0 %v4570
        %4694 = vmatpush1.bf16.msra.mxu0 %v4569
        %4695 = vmatprep.subr.bf16.mxu0 %v4566
        %4696 = vmatpush1.bf16.msra.mxu0 %v4565
        %4697 = vmatprep.subr.bf16.mxu0 %v4562
        %4698 = vmatpush1.bf16.msra.mxu0 %v4561
        %4699 = vmatprep.subr.bf16.mxu0 %v4558
        %4700 = vmatpush1.bf16.msra.mxu0 %v4557
        %4701 = vmatprep.subr.bf16.mxu0 %v4618
        %4702 = vmatpush2.bf16.msra.mxu0 %v4617
        %4703 = vmatprep.subr.bf16.mxu0 %v4614
        %4704 = vmatpush2.bf16.msra.mxu0 %v4613
        %4705 = vmatprep.subr.bf16.mxu0 %v4610
        %4706 = vmatpush2.bf16.msra.mxu0 %v4609
        %4707 = vmatprep.subr.bf16.mxu0 %v4606
        %4708 = vmatpush2.bf16.msra.mxu0 %v4605
        %4709 = vmatprep.subr.bf16.mxu0 %v4602
        %4710 = vmatpush2.bf16.msra.mxu0 %v4601
        %4711 = vmatprep.subr.bf16.mxu0 %v4598
        %4712 = vmatpush2.bf16.msra.mxu0 %v4597
        %4713 = vmatprep.subr.bf16.mxu0 %v4594
        %4714 = vmatpush2.bf16.msra.mxu0 %v4593
        %4715 = vmatprep.subr.bf16.mxu0 %v4590
        %4716 = vmatpush2.bf16.msra.mxu0 %v4589
        %4717 = vmatprep.mubr.bf16.mxu0 %v4264
        %4718 = vmatmul.mubr.bf16.gmra.mxu0 %v4263
        %v4719 = vpop.f32.mrf.mxu0
        %v4720 = vadd.f32 %v4348, %v4719
        %v4721 = vpop.f32.mrf.mxu0
        %v4722 = vadd.f32 %v4352, %v4721
        %v4723 = vpop.f32.mrf.mxu0
        %v4724 = vadd.f32 %v4348, %v4723
        %v4725 = vpop.f32.mrf.mxu0
        %v4726 = vadd.f32 %v4352, %v4725
        %4727 = vmatprep.mubr.bf16.mxu0 %v4266
        %4728 = vmatmul.mubr.bf16.gmra.mxu0 %v4265
        %v4729 = vpop.f32.mrf.mxu0
        %v4730 = vadd.f32 %v4348, %v4729
        %v4731 = vpop.f32.mrf.mxu0
        %v4732 = vadd.f32 %v4352, %v4731
        %v4733 = vpop.f32.mrf.mxu0
        %v4734 = vadd.f32 %v4348, %v4733
        %v4735 = vpop.f32.mrf.mxu0
        %v4736 = vadd.f32 %v4352, %v4735
        %4737 = vmatprep.mubr.bf16.mxu0 %v4268
        %4738 = vmatmul.mubr.bf16.gmra.mxu0 %v4267
        %v4739 = vpop.f32.mrf.mxu0
        %v4740 = vadd.f32 %v4348, %v4739
        %v4741 = vpop.f32.mrf.mxu0
        %v4742 = vadd.f32 %v4352, %v4741
        %v4743 = vpop.f32.mrf.mxu0
        %v4744 = vadd.f32 %v4348, %v4743
        %v4745 = vpop.f32.mrf.mxu0
        %v4746 = vadd.f32 %v4352, %v4745
        %4747 = vmatprep.mubr.bf16.mxu0 %v4270
        %4748 = vmatmul.mubr.bf16.gmra.mxu0 %v4269
        %v4749 = vpop.f32.mrf.mxu0
        %v4750 = vadd.f32 %v4348, %v4749
        %v4751 = vpop.f32.mrf.mxu0
        %v4752 = vadd.f32 %v4352, %v4751
        %v4753 = vpop.f32.mrf.mxu0
        %v4754 = vadd.f32 %v4348, %v4753
        %v4755 = vpop.f32.mrf.mxu0
        %v4756 = vadd.f32 %v4352, %v4755
        %4757 = vmatprep.mubr.bf16.mxu0 %v4272
        %4758 = vmatmul.mubr.bf16.gmra.mxu0 %v4271
        %v4759 = vpop.f32.mrf.mxu0
        %v4760 = vadd.f32 %v4348, %v4759
        %v4761 = vpop.f32.mrf.mxu0
        %v4762 = vadd.f32 %v4352, %v4761
        %v4763 = vpop.f32.mrf.mxu0
        %v4764 = vadd.f32 %v4348, %v4763
        %v4765 = vpop.f32.mrf.mxu0
        %v4766 = vadd.f32 %v4352, %v4765
        %4767 = vmatprep.mubr.bf16.mxu0 %v4274
        %4768 = vmatmul.mubr.bf16.gmra.mxu0 %v4273
        %v4769 = vpop.f32.mrf.mxu0
        %v4770 = vadd.f32 %v4348, %v4769
        %v4771 = vpop.f32.mrf.mxu0
        %v4772 = vadd.f32 %v4352, %v4771
        %v4773 = vpop.f32.mrf.mxu0
        %v4774 = vadd.f32 %v4348, %v4773
        %v4775 = vpop.f32.mrf.mxu0
        %v4776 = vadd.f32 %v4352, %v4775
        %4777 = vmatprep.mubr.bf16.mxu0 %v4276
        %4778 = vmatmul.mubr.bf16.gmra.mxu0 %v4275
        %v4779 = vpop.f32.mrf.mxu0
        %v4780 = vadd.f32 %v4348, %v4779
        %v4781 = vpop.f32.mrf.mxu0
        %v4782 = vadd.f32 %v4352, %v4781
        %v4783 = vpop.f32.mrf.mxu0
        %v4784 = vadd.f32 %v4348, %v4783
        %v4785 = vpop.f32.mrf.mxu0
        %v4786 = vadd.f32 %v4352, %v4785
        %4787 = vmatprep.mubr.bf16.mxu0 %v4278
        %4788 = vmatmul.mubr.bf16.gmra.mxu0 %v4277
        %v4789 = vpop.f32.mrf.mxu0
        %v4790 = vadd.f32 %v4348, %v4789
        %v4791 = vpop.f32.mrf.mxu0
        %v4792 = vadd.f32 %v4352, %v4791
        %v4793 = vpop.f32.mrf.mxu0
        %v4794 = vadd.f32 %v4348, %v4793
        %v4795 = vpop.f32.mrf.mxu0
        %v4796 = vadd.f32 %v4352, %v4795
        %4797 = vdwg.mxu0
        %4798 = vmatprep.subr.bf16.mxu0 %v4588
        %4799 = vmatpush1.bf16.msra.mxu0 %v4587
        %4800 = vmatprep.subr.bf16.mxu0 %v4584
        %4801 = vmatpush1.bf16.msra.mxu0 %v4583
        %4802 = vmatprep.subr.bf16.mxu0 %v4580
        %4803 = vmatpush1.bf16.msra.mxu0 %v4579
        %4804 = vmatprep.subr.bf16.mxu0 %v4576
        %4805 = vmatpush1.bf16.msra.mxu0 %v4575
        %4806 = vmatprep.subr.bf16.mxu0 %v4572
        %4807 = vmatpush1.bf16.msra.mxu0 %v4571
        %4808 = vmatprep.subr.bf16.mxu0 %v4568
        %4809 = vmatpush1.bf16.msra.mxu0 %v4567
        %4810 = vmatprep.subr.bf16.mxu0 %v4564
        %4811 = vmatpush1.bf16.msra.mxu0 %v4563
        %4812 = vmatprep.subr.bf16.mxu0 %v4560
        %4813 = vmatpush1.bf16.msra.mxu0 %v4559
        %4814 = vmatprep.subr.bf16.mxu0 %v4620
        %4815 = vmatpush2.bf16.msra.mxu0 %v4619
        %4816 = vmatprep.subr.bf16.mxu0 %v4616
        %4817 = vmatpush2.bf16.msra.mxu0 %v4615
        %4818 = vmatprep.subr.bf16.mxu0 %v4612
        %4819 = vmatpush2.bf16.msra.mxu0 %v4611
        %4820 = vmatprep.subr.bf16.mxu0 %v4608
        %4821 = vmatpush2.bf16.msra.mxu0 %v4607
        %4822 = vmatprep.subr.bf16.mxu0 %v4604
        %4823 = vmatpush2.bf16.msra.mxu0 %v4603
        %4824 = vmatprep.subr.bf16.mxu0 %v4600
        %4825 = vmatpush2.bf16.msra.mxu0 %v4599
        %4826 = vmatprep.subr.bf16.mxu0 %v4596
        %4827 = vmatpush2.bf16.msra.mxu0 %v4595
        %4828 = vmatprep.subr.bf16.mxu0 %v4592
        %4829 = vmatpush2.bf16.msra.mxu0 %v4591
        %4830 = vmatprep.mubr.bf16.mxu0 %v4264
        %4831 = vmatmul.mubr.bf16.gmra.mxu0 %v4263
        %v4832 = vpop.f32.mrf.mxu0
        %v4833 = vadd.f32 %v4356, %v4832
        %v4834 = vpop.f32.mrf.mxu0
        %v4835 = vadd.f32 %v4360, %v4834
        %v4836 = vpop.f32.mrf.mxu0
        %v4837 = vadd.f32 %v4356, %v4836
        %v4838 = vpop.f32.mrf.mxu0
        %v4839 = vadd.f32 %v4360, %v4838
        %4840 = vmatprep.mubr.bf16.mxu0 %v4266
        %4841 = vmatmul.mubr.bf16.gmra.mxu0 %v4265
        %v4842 = vpop.f32.mrf.mxu0
        %v4843 = vadd.f32 %v4356, %v4842
        %v4844 = vpop.f32.mrf.mxu0
        %v4845 = vadd.f32 %v4360, %v4844
        %v4846 = vpop.f32.mrf.mxu0
        %v4847 = vadd.f32 %v4356, %v4846
        %v4848 = vpop.f32.mrf.mxu0
        %v4849 = vadd.f32 %v4360, %v4848
        %4850 = vmatprep.mubr.bf16.mxu0 %v4268
        %4851 = vmatmul.mubr.bf16.gmra.mxu0 %v4267
        %v4852 = vpop.f32.mrf.mxu0
        %v4853 = vadd.f32 %v4356, %v4852
        %v4854 = vpop.f32.mrf.mxu0
        %v4855 = vadd.f32 %v4360, %v4854
        %v4856 = vpop.f32.mrf.mxu0
        %v4857 = vadd.f32 %v4356, %v4856
        %v4858 = vpop.f32.mrf.mxu0
        %v4859 = vadd.f32 %v4360, %v4858
        %4860 = vmatprep.mubr.bf16.mxu0 %v4270
        %4861 = vmatmul.mubr.bf16.gmra.mxu0 %v4269
        %v4862 = vpop.f32.mrf.mxu0
        %v4863 = vadd.f32 %v4356, %v4862
        %v4864 = vpop.f32.mrf.mxu0
        %v4865 = vadd.f32 %v4360, %v4864
        %v4866 = vpop.f32.mrf.mxu0
        %v4867 = vadd.f32 %v4356, %v4866
        %v4868 = vpop.f32.mrf.mxu0
        %v4869 = vadd.f32 %v4360, %v4868
        %4870 = vmatprep.mubr.bf16.mxu0 %v4272
        %4871 = vmatmul.mubr.bf16.gmra.mxu0 %v4271
        %v4872 = vpop.f32.mrf.mxu0
        %v4873 = vadd.f32 %v4356, %v4872
        %v4874 = vpop.f32.mrf.mxu0
        %v4875 = vadd.f32 %v4360, %v4874
        %v4876 = vpop.f32.mrf.mxu0
        %v4877 = vadd.f32 %v4356, %v4876
        %v4878 = vpop.f32.mrf.mxu0
        %v4879 = vadd.f32 %v4360, %v4878
        %4880 = vmatprep.mubr.bf16.mxu0 %v4274
        %4881 = vmatmul.mubr.bf16.gmra.mxu0 %v4273
        %v4882 = vpop.f32.mrf.mxu0
        %v4883 = vadd.f32 %v4356, %v4882
        %v4884 = vpop.f32.mrf.mxu0
        %v4885 = vadd.f32 %v4360, %v4884
        %v4886 = vpop.f32.mrf.mxu0
        %v4887 = vadd.f32 %v4356, %v4886
        %v4888 = vpop.f32.mrf.mxu0
        %v4889 = vadd.f32 %v4360, %v4888
        %4890 = vmatprep.mubr.bf16.mxu0 %v4276
        %4891 = vmatmul.mubr.bf16.gmra.mxu0 %v4275
        %v4892 = vpop.f32.mrf.mxu0
        %v4893 = vadd.f32 %v4356, %v4892
        %v4894 = vpop.f32.mrf.mxu0
        %v4895 = vadd.f32 %v4360, %v4894
        %v4896 = vpop.f32.mrf.mxu0
        %v4897 = vadd.f32 %v4356, %v4896
        %v4898 = vpop.f32.mrf.mxu0
        %v4899 = vadd.f32 %v4360, %v4898
        %4900 = vmatprep.mubr.bf16.mxu0 %v4278
        %4901 = vmatmul.mubr.bf16.gmra.mxu0 %v4277
        %v4902 = vpop.f32.mrf.mxu0
        %v4903 = vadd.f32 %v4356, %v4902
        %v4904 = vpop.f32.mrf.mxu0
        %v4905 = vadd.f32 %v4360, %v4904
        %v4906 = vpop.f32.mrf.mxu0
        %v4907 = vadd.f32 %v4356, %v4906
        %v4908 = vpop.f32.mrf.mxu0
        %v4909 = vadd.f32 %v4360, %v4908
        %4910 = vdwg.mxu0
        %v4911 = vmul.f32 %v4720, %v4720
        %v4912 = vmul.f32 %v4722, %v4722
        %v4913 = vmul.f32 %v4833, %v4833
        %v4914 = vmul.f32 %v4835, %v4835
        %v4915 = vmul.f32 %v4724, %v4724
        %v4916 = vmul.f32 %v4726, %v4726
        %v4917 = vmul.f32 %v4837, %v4837
        %v4918 = vmul.f32 %v4839, %v4839
        %v4919 = vmul.f32 %v4730, %v4730
        %v4920 = vmul.f32 %v4732, %v4732
        %v4921 = vmul.f32 %v4843, %v4843
        %v4922 = vmul.f32 %v4845, %v4845
        %v4923 = vmul.f32 %v4734, %v4734
        %v4924 = vmul.f32 %v4736, %v4736
        %v4925 = vmul.f32 %v4847, %v4847
        %v4926 = vmul.f32 %v4849, %v4849
        %v4927 = vmul.f32 %v4740, %v4740
        %v4928 = vmul.f32 %v4742, %v4742
        %v4929 = vmul.f32 %v4853, %v4853
        %v4930 = vmul.f32 %v4855, %v4855
        %v4931 = vmul.f32 %v4744, %v4744
        %v4932 = vmul.f32 %v4746, %v4746
        %v4933 = vmul.f32 %v4857, %v4857
        %v4934 = vmul.f32 %v4859, %v4859
        %v4935 = vmul.f32 %v4750, %v4750
        %v4936 = vmul.f32 %v4752, %v4752
        %v4937 = vmul.f32 %v4863, %v4863
        %v4938 = vmul.f32 %v4865, %v4865
        %v4939 = vmul.f32 %v4754, %v4754
        %v4940 = vmul.f32 %v4756, %v4756
        %v4941 = vmul.f32 %v4867, %v4867
        %v4942 = vmul.f32 %v4869, %v4869
        %v4943 = vmul.f32 %v4760, %v4760
        %v4944 = vmul.f32 %v4762, %v4762
        %v4945 = vmul.f32 %v4873, %v4873
        %v4946 = vmul.f32 %v4875, %v4875
        %v4947 = vmul.f32 %v4764, %v4764
        %v4948 = vmul.f32 %v4766, %v4766
        %v4949 = vmul.f32 %v4877, %v4877
        %v4950 = vmul.f32 %v4879, %v4879
        %v4951 = vmul.f32 %v4770, %v4770
        %v4952 = vmul.f32 %v4772, %v4772
        %v4953 = vmul.f32 %v4883, %v4883
        %v4954 = vmul.f32 %v4885, %v4885
        %v4955 = vmul.f32 %v4774, %v4774
        %v4956 = vmul.f32 %v4776, %v4776
        %v4957 = vmul.f32 %v4887, %v4887
        %v4958 = vmul.f32 %v4889, %v4889
        %v4959 = vmul.f32 %v4780, %v4780
        %v4960 = vmul.f32 %v4782, %v4782
        %v4961 = vmul.f32 %v4893, %v4893
        %v4962 = vmul.f32 %v4895, %v4895
        %v4963 = vmul.f32 %v4784, %v4784
        %v4964 = vmul.f32 %v4786, %v4786
        %v4965 = vmul.f32 %v4897, %v4897
        %v4966 = vmul.f32 %v4899, %v4899
        %v4967 = vmul.f32 %v4790, %v4790
        %v4968 = vmul.f32 %v4792, %v4792
        %v4969 = vmul.f32 %v4903, %v4903
        %v4970 = vmul.f32 %v4905, %v4905
        %v4971 = vmul.f32 %v4794, %v4794
        %v4972 = vmul.f32 %v4796, %v4796
        %v4973 = vmul.f32 %v4907, %v4907
        %v4974 = vmul.f32 %v4909, %v4909
        %v4975 = vmul.f32 %v4720, %v4911
        %v4976 = vmul.f32 %v4722, %v4912
        %v4977 = vmul.f32 %v4833, %v4913
        %v4978 = vmul.f32 %v4835, %v4914
        %v4979 = vmul.f32 %v4724, %v4915
        %v4980 = vmul.f32 %v4726, %v4916
        %v4981 = vmul.f32 %v4837, %v4917
        %v4982 = vmul.f32 %v4839, %v4918
        %v4983 = vmul.f32 %v4730, %v4919
        %v4984 = vmul.f32 %v4732, %v4920
        %v4985 = vmul.f32 %v4843, %v4921
        %v4986 = vmul.f32 %v4845, %v4922
        %v4987 = vmul.f32 %v4734, %v4923
        %v4988 = vmul.f32 %v4736, %v4924
        %v4989 = vmul.f32 %v4847, %v4925
        %v4990 = vmul.f32 %v4849, %v4926
        %v4991 = vmul.f32 %v4740, %v4927
        %v4992 = vmul.f32 %v4742, %v4928
        %v4993 = vmul.f32 %v4853, %v4929
        %v4994 = vmul.f32 %v4855, %v4930
        %v4995 = vmul.f32 %v4744, %v4931
        %v4996 = vmul.f32 %v4746, %v4932
        %v4997 = vmul.f32 %v4857, %v4933
        %v4998 = vmul.f32 %v4859, %v4934
        %v4999 = vmul.f32 %v4750, %v4935
        %v5000 = vmul.f32 %v4752, %v4936
        %v5001 = vmul.f32 %v4863, %v4937
        %v5002 = vmul.f32 %v4865, %v4938
        %v5003 = vmul.f32 %v4754, %v4939
        %v5004 = vmul.f32 %v4756, %v4940
        %v5005 = vmul.f32 %v4867, %v4941
        %v5006 = vmul.f32 %v4869, %v4942
        %v5007 = vmul.f32 %v4760, %v4943
        %v5008 = vmul.f32 %v4762, %v4944
        %v5009 = vmul.f32 %v4873, %v4945
        %v5010 = vmul.f32 %v4875, %v4946
        %v5011 = vmul.f32 %v4764, %v4947
        %v5012 = vmul.f32 %v4766, %v4948
        %v5013 = vmul.f32 %v4877, %v4949
        %v5014 = vmul.f32 %v4879, %v4950
        %v5015 = vmul.f32 %v4770, %v4951
        %v5016 = vmul.f32 %v4772, %v4952
        %v5017 = vmul.f32 %v4883, %v4953
        %v5018 = vmul.f32 %v4885, %v4954
        %v5019 = vmul.f32 %v4774, %v4955
        %v5020 = vmul.f32 %v4776, %v4956
        %v5021 = vmul.f32 %v4887, %v4957
        %v5022 = vmul.f32 %v4889, %v4958
        %v5023 = vmul.f32 %v4780, %v4959
        %v5024 = vmul.f32 %v4782, %v4960
        %v5025 = vmul.f32 %v4893, %v4961
        %v5026 = vmul.f32 %v4895, %v4962
        %v5027 = vmul.f32 %v4784, %v4963
        %v5028 = vmul.f32 %v4786, %v4964
        %v5029 = vmul.f32 %v4897, %v4965
        %v5030 = vmul.f32 %v4899, %v4966
        %v5031 = vmul.f32 %v4790, %v4967
        %v5032 = vmul.f32 %v4792, %v4968
        %v5033 = vmul.f32 %v4903, %v4969
        %v5034 = vmul.f32 %v4905, %v4970
        %v5035 = vmul.f32 %v4794, %v4971
        %v5036 = vmul.f32 %v4796, %v4972
        %v5037 = vmul.f32 %v4907, %v4973
        %v5038 = vmul.f32 %v4909, %v4974
        %v5039 = vmul.f32 %v4975, 0.044715
        %v5040 = vmul.f32 %v4976, 0.044715
        %v5041 = vmul.f32 %v4977, 0.044715
        %v5042 = vmul.f32 %v4978, 0.044715
        %v5043 = vmul.f32 %v4979, 0.044715
        %v5044 = vmul.f32 %v4980, 0.044715
        %v5045 = vmul.f32 %v4981, 0.044715
        %v5046 = vmul.f32 %v4982, 0.044715
        %v5047 = vmul.f32 %v4983, 0.044715
        %v5048 = vmul.f32 %v4984, 0.044715
        %v5049 = vmul.f32 %v4985, 0.044715
        %v5050 = vmul.f32 %v4986, 0.044715
        %v5051 = vmul.f32 %v4987, 0.044715
        %v5052 = vmul.f32 %v4988, 0.044715
        %v5053 = vmul.f32 %v4989, 0.044715
        %v5054 = vmul.f32 %v4990, 0.044715
        %v5055 = vmul.f32 %v4991, 0.044715
        %v5056 = vmul.f32 %v4992, 0.044715
        %v5057 = vmul.f32 %v4993, 0.044715
        %v5058 = vmul.f32 %v4994, 0.044715
        %v5059 = vmul.f32 %v4995, 0.044715
        %v5060 = vmul.f32 %v4996, 0.044715
        %v5061 = vmul.f32 %v4997, 0.044715
        %v5062 = vmul.f32 %v4998, 0.044715
        %v5063 = vmul.f32 %v4999, 0.044715
        %v5064 = vmul.f32 %v5000, 0.044715
        %v5065 = vmul.f32 %v5001, 0.044715
        %v5066 = vmul.f32 %v5002, 0.044715
        %v5067 = vmul.f32 %v5003, 0.044715
        %v5068 = vmul.f32 %v5004, 0.044715
        %v5069 = vmul.f32 %v5005, 0.044715
        %v5070 = vmul.f32 %v5006, 0.044715
        %v5071 = vmul.f32 %v5007, 0.044715
        %v5072 = vmul.f32 %v5008, 0.044715
        %v5073 = vmul.f32 %v5009, 0.044715
        %v5074 = vmul.f32 %v5010, 0.044715
        %v5075 = vmul.f32 %v5011, 0.044715
        %v5076 = vmul.f32 %v5012, 0.044715
        %v5077 = vmul.f32 %v5013, 0.044715
        %v5078 = vmul.f32 %v5014, 0.044715
        %v5079 = vmul.f32 %v5015, 0.044715
        %v5080 = vmul.f32 %v5016, 0.044715
        %v5081 = vmul.f32 %v5017, 0.044715
        %v5082 = vmul.f32 %v5018, 0.044715
        %v5083 = vmul.f32 %v5019, 0.044715
        %v5084 = vmul.f32 %v5020, 0.044715
        %v5085 = vmul.f32 %v5021, 0.044715
        %v5086 = vmul.f32 %v5022, 0.044715
        %v5087 = vmul.f32 %v5023, 0.044715
        %v5088 = vmul.f32 %v5024, 0.044715
        %v5089 = vmul.f32 %v5025, 0.044715
        %v5090 = vmul.f32 %v5026, 0.044715
        %v5091 = vmul.f32 %v5027, 0.044715
        %v5092 = vmul.f32 %v5028, 0.044715
        %v5093 = vmul.f32 %v5029, 0.044715
        %v5094 = vmul.f32 %v5030, 0.044715
        %v5095 = vmul.f32 %v5031, 0.044715
        %v5096 = vmul.f32 %v5032, 0.044715
        %v5097 = vmul.f32 %v5033, 0.044715
        %v5098 = vmul.f32 %v5034, 0.044715
        %v5099 = vmul.f32 %v5035, 0.044715
        %v5100 = vmul.f32 %v5036, 0.044715
        %v5101 = vmul.f32 %v5037, 0.044715
        %v5102 = vmul.f32 %v5038, 0.044715
        %v5103 = vadd.f32 %v4720, %v5039
        %v5104 = vadd.f32 %v4722, %v5040
        %v5105 = vadd.f32 %v4833, %v5041
        %v5106 = vadd.f32 %v4835, %v5042
        %v5107 = vadd.f32 %v4724, %v5043
        %v5108 = vadd.f32 %v4726, %v5044
        %v5109 = vadd.f32 %v4837, %v5045
        %v5110 = vadd.f32 %v4839, %v5046
        %v5111 = vadd.f32 %v4730, %v5047
        %v5112 = vadd.f32 %v4732, %v5048
        %v5113 = vadd.f32 %v4843, %v5049
        %v5114 = vadd.f32 %v4845, %v5050
        %v5115 = vadd.f32 %v4734, %v5051
        %v5116 = vadd.f32 %v4736, %v5052
        %v5117 = vadd.f32 %v4847, %v5053
        %v5118 = vadd.f32 %v4849, %v5054
        %v5119 = vadd.f32 %v4740, %v5055
        %v5120 = vadd.f32 %v4742, %v5056
        %v5121 = vadd.f32 %v4853, %v5057
        %v5122 = vadd.f32 %v4855, %v5058
        %v5123 = vadd.f32 %v4744, %v5059
        %v5124 = vadd.f32 %v4746, %v5060
        %v5125 = vadd.f32 %v4857, %v5061
        %v5126 = vadd.f32 %v4859, %v5062
        %v5127 = vadd.f32 %v4750, %v5063
        %v5128 = vadd.f32 %v4752, %v5064
        %v5129 = vadd.f32 %v4863, %v5065
        %v5130 = vadd.f32 %v4865, %v5066
        %v5131 = vadd.f32 %v4754, %v5067
        %v5132 = vadd.f32 %v4756, %v5068
        %v5133 = vadd.f32 %v4867, %v5069
        %v5134 = vadd.f32 %v4869, %v5070
        %v5135 = vadd.f32 %v4760, %v5071
        %v5136 = vadd.f32 %v4762, %v5072
        %v5137 = vadd.f32 %v4873, %v5073
        %v5138 = vadd.f32 %v4875, %v5074
        %v5139 = vadd.f32 %v4764, %v5075
        %v5140 = vadd.f32 %v4766, %v5076
        %v5141 = vadd.f32 %v4877, %v5077
        %v5142 = vadd.f32 %v4879, %v5078
        %v5143 = vadd.f32 %v4770, %v5079
        %v5144 = vadd.f32 %v4772, %v5080
        %v5145 = vadd.f32 %v4883, %v5081
        %v5146 = vadd.f32 %v4885, %v5082
        %v5147 = vadd.f32 %v4774, %v5083
        %v5148 = vadd.f32 %v4776, %v5084
        %v5149 = vadd.f32 %v4887, %v5085
        %v5150 = vadd.f32 %v4889, %v5086
        %v5151 = vadd.f32 %v4780, %v5087
        %v5152 = vadd.f32 %v4782, %v5088
        %v5153 = vadd.f32 %v4893, %v5089
        %v5154 = vadd.f32 %v4895, %v5090
        %v5155 = vadd.f32 %v4784, %v5091
        %v5156 = vadd.f32 %v4786, %v5092
        %v5157 = vadd.f32 %v4897, %v5093
        %v5158 = vadd.f32 %v4899, %v5094
        %v5159 = vadd.f32 %v4790, %v5095
        %v5160 = vadd.f32 %v4792, %v5096
        %v5161 = vadd.f32 %v4903, %v5097
        %v5162 = vadd.f32 %v4905, %v5098
        %v5163 = vadd.f32 %v4794, %v5099
        %v5164 = vadd.f32 %v4796, %v5100
        %v5165 = vadd.f32 %v4907, %v5101
        %v5166 = vadd.f32 %v4909, %v5102
        %v5167 = vmul.f32 %v5103, 0.7978846
        %v5168 = vmul.f32 %v5104, 0.7978846
        %v5169 = vmul.f32 %v5105, 0.7978846
        %v5170 = vmul.f32 %v5106, 0.7978846
        %v5171 = vmul.f32 %v5107, 0.7978846
        %v5172 = vmul.f32 %v5108, 0.7978846
        %v5173 = vmul.f32 %v5109, 0.7978846
        %v5174 = vmul.f32 %v5110, 0.7978846
        %v5175 = vmul.f32 %v5111, 0.7978846
        %v5176 = vmul.f32 %v5112, 0.7978846
        %v5177 = vmul.f32 %v5113, 0.7978846
        %v5178 = vmul.f32 %v5114, 0.7978846
        %v5179 = vmul.f32 %v5115, 0.7978846
        %v5180 = vmul.f32 %v5116, 0.7978846
        %v5181 = vmul.f32 %v5117, 0.7978846
        %v5182 = vmul.f32 %v5118, 0.7978846
        %v5183 = vmul.f32 %v5119, 0.7978846
        %v5184 = vmul.f32 %v5120, 0.7978846
        %v5185 = vmul.f32 %v5121, 0.7978846
        %v5186 = vmul.f32 %v5122, 0.7978846
        %v5187 = vmul.f32 %v5123, 0.7978846
        %v5188 = vmul.f32 %v5124, 0.7978846
        %v5189 = vmul.f32 %v5125, 0.7978846
        %v5190 = vmul.f32 %v5126, 0.7978846
        %v5191 = vmul.f32 %v5127, 0.7978846
        %v5192 = vmul.f32 %v5128, 0.7978846
        %v5193 = vmul.f32 %v5129, 0.7978846
        %v5194 = vmul.f32 %v5130, 0.7978846
        %v5195 = vmul.f32 %v5131, 0.7978846
        %v5196 = vmul.f32 %v5132, 0.7978846
        %v5197 = vmul.f32 %v5133, 0.7978846
        %v5198 = vmul.f32 %v5134, 0.7978846
        %v5199 = vmul.f32 %v5135, 0.7978846
        %v5200 = vmul.f32 %v5136, 0.7978846
        %v5201 = vmul.f32 %v5137, 0.7978846
        %v5202 = vmul.f32 %v5138, 0.7978846
        %v5203 = vmul.f32 %v5139, 0.7978846
        %v5204 = vmul.f32 %v5140, 0.7978846
        %v5205 = vmul.f32 %v5141, 0.7978846
        %v5206 = vmul.f32 %v5142, 0.7978846
        %v5207 = vmul.f32 %v5143, 0.7978846
        %v5208 = vmul.f32 %v5144, 0.7978846
        %v5209 = vmul.f32 %v5145, 0.7978846
        %v5210 = vmul.f32 %v5146, 0.7978846
        %v5211 = vmul.f32 %v5147, 0.7978846
        %v5212 = vmul.f32 %v5148, 0.7978846
        %v5213 = vmul.f32 %v5149, 0.7978846
        %v5214 = vmul.f32 %v5150, 0.7978846
        %v5215 = vmul.f32 %v5151, 0.7978846
        %v5216 = vmul.f32 %v5152, 0.7978846
        %v5217 = vmul.f32 %v5153, 0.7978846
        %v5218 = vmul.f32 %v5154, 0.7978846
        %v5219 = vmul.f32 %v5155, 0.7978846
        %v5220 = vmul.f32 %v5156, 0.7978846
        %v5221 = vmul.f32 %v5157, 0.7978846
        %v5222 = vmul.f32 %v5158, 0.7978846
        %v5223 = vmul.f32 %v5159, 0.7978846
        %v5224 = vmul.f32 %v5160, 0.7978846
        %v5225 = vmul.f32 %v5161, 0.7978846
        %v5226 = vmul.f32 %v5162, 0.7978846
        %v5227 = vmul.f32 %v5163, 0.7978846
        %v5228 = vmul.f32 %v5164, 0.7978846
        %v5229 = vmul.f32 %v5165, 0.7978846
        %v5230 = vmul.f32 %v5166, 0.7978846
        %v5231 = vtanh.pop %v5167
        %v5232 = vtanh.pop %v5168
        %v5233 = vtanh.pop %v5169
        %v5234 = vtanh.pop %v5170
        %v5235 = vtanh.pop %v5171
        %v5236 = vtanh.pop %v5172
        %v5237 = vtanh.pop %v5173
        %v5238 = vtanh.pop %v5174
        %v5239 = vtanh.pop %v5175
        %v5240 = vtanh.pop %v5176
        %v5241 = vtanh.pop %v5177
        %v5242 = vtanh.pop %v5178
        %v5243 = vtanh.pop %v5179
        %v5244 = vtanh.pop %v5180
        %v5245 = vtanh.pop %v5181
        %v5246 = vtanh.pop %v5182
        %v5247 = vtanh.pop %v5183
        %v5248 = vtanh.pop %v5184
        %v5249 = vtanh.pop %v5185
        %v5250 = vtanh.pop %v5186
        %v5251 = vtanh.pop %v5187
        %v5252 = vtanh.pop %v5188
        %v5253 = vtanh.pop %v5189
        %v5254 = vtanh.pop %v5190
        %v5255 = vtanh.pop %v5191
        %v5256 = vtanh.pop %v5192
        %v5257 = vtanh.pop %v5193
        %v5258 = vtanh.pop %v5194
        %v5259 = vtanh.pop %v5195
        %v5260 = vtanh.pop %v5196
        %v5261 = vtanh.pop %v5197
        %v5262 = vtanh.pop %v5198
        %v5263 = vtanh.pop %v5199
        %v5264 = vtanh.pop %v5200
        %v5265 = vtanh.pop %v5201
        %v5266 = vtanh.pop %v5202
        %v5267 = vtanh.pop %v5203
        %v5268 = vtanh.pop %v5204
        %v5269 = vtanh.pop %v5205
        %v5270 = vtanh.pop %v5206
        %v5271 = vtanh.pop %v5207
        %v5272 = vtanh.pop %v5208
        %v5273 = vtanh.pop %v5209
        %v5274 = vtanh.pop %v5210
        %v5275 = vtanh.pop %v5211
        %v5276 = vtanh.pop %v5212
        %v5277 = vtanh.pop %v5213
        %v5278 = vtanh.pop %v5214
        %v5279 = vtanh.pop %v5215
        %v5280 = vtanh.pop %v5216
        %v5281 = vtanh.pop %v5217
        %v5282 = vtanh.pop %v5218
        %v5283 = vtanh.pop %v5219
        %v5284 = vtanh.pop %v5220
        %v5285 = vtanh.pop %v5221
        %v5286 = vtanh.pop %v5222
        %v5287 = vtanh.pop %v5223
        %v5288 = vtanh.pop %v5224
        %v5289 = vtanh.pop %v5225
        %v5290 = vtanh.pop %v5226
        %v5291 = vtanh.pop %v5227
        %v5292 = vtanh.pop %v5228
        %v5293 = vtanh.pop %v5229
        %v5294 = vtanh.pop %v5230
        %v5295 = vadd.f32 %v5231, 1.0
        %v5296 = vadd.f32 %v5232, 1.0
        %v5297 = vadd.f32 %v5233, 1.0
        %v5298 = vadd.f32 %v5234, 1.0
        %v5299 = vadd.f32 %v5235, 1.0
        %v5300 = vadd.f32 %v5236, 1.0
        %v5301 = vadd.f32 %v5237, 1.0
        %v5302 = vadd.f32 %v5238, 1.0
        %v5303 = vadd.f32 %v5239, 1.0
        %v5304 = vadd.f32 %v5240, 1.0
        %v5305 = vadd.f32 %v5241, 1.0
        %v5306 = vadd.f32 %v5242, 1.0
        %v5307 = vadd.f32 %v5243, 1.0
        %v5308 = vadd.f32 %v5244, 1.0
        %v5309 = vadd.f32 %v5245, 1.0
        %v5310 = vadd.f32 %v5246, 1.0
        %v5311 = vadd.f32 %v5247, 1.0
        %v5312 = vadd.f32 %v5248, 1.0
        %v5313 = vadd.f32 %v5249, 1.0
        %v5314 = vadd.f32 %v5250, 1.0
        %v5315 = vadd.f32 %v5251, 1.0
        %v5316 = vadd.f32 %v5252, 1.0
        %v5317 = vadd.f32 %v5253, 1.0
        %v5318 = vadd.f32 %v5254, 1.0
        %v5319 = vadd.f32 %v5255, 1.0
        %v5320 = vadd.f32 %v5256, 1.0
        %v5321 = vadd.f32 %v5257, 1.0
        %v5322 = vadd.f32 %v5258, 1.0
        %v5323 = vadd.f32 %v5259, 1.0
        %v5324 = vadd.f32 %v5260, 1.0
        %v5325 = vadd.f32 %v5261, 1.0
        %v5326 = vadd.f32 %v5262, 1.0
        %v5327 = vadd.f32 %v5263, 1.0
        %v5328 = vadd.f32 %v5264, 1.0
        %v5329 = vadd.f32 %v5265, 1.0
        %v5330 = vadd.f32 %v5266, 1.0
        %v5331 = vadd.f32 %v5267, 1.0
        %v5332 = vadd.f32 %v5268, 1.0
        %v5333 = vadd.f32 %v5269, 1.0
        %v5334 = vadd.f32 %v5270, 1.0
        %v5335 = vadd.f32 %v5271, 1.0
        %v5336 = vadd.f32 %v5272, 1.0
        %v5337 = vadd.f32 %v5273, 1.0
        %v5338 = vadd.f32 %v5274, 1.0
        %v5339 = vadd.f32 %v5275, 1.0
        %v5340 = vadd.f32 %v5276, 1.0
        %v5341 = vadd.f32 %v5277, 1.0
        %v5342 = vadd.f32 %v5278, 1.0
        %v5343 = vadd.f32 %v5279, 1.0
        %v5344 = vadd.f32 %v5280, 1.0
        %v5345 = vadd.f32 %v5281, 1.0
        %v5346 = vadd.f32 %v5282, 1.0
        %v5347 = vadd.f32 %v5283, 1.0
        %v5348 = vadd.f32 %v5284, 1.0
        %v5349 = vadd.f32 %v5285, 1.0
        %v5350 = vadd.f32 %v5286, 1.0
        %v5351 = vadd.f32 %v5287, 1.0
        %v5352 = vadd.f32 %v5288, 1.0
        %v5353 = vadd.f32 %v5289, 1.0
        %v5354 = vadd.f32 %v5290, 1.0
        %v5355 = vadd.f32 %v5291, 1.0
        %v5356 = vadd.f32 %v5292, 1.0
        %v5357 = vadd.f32 %v5293, 1.0
        %v5358 = vadd.f32 %v5294, 1.0
        %v5359 = vmul.f32 %v5295, 0.5
        %v5360 = vmul.f32 %v5296, 0.5
        %v5361 = vmul.f32 %v5297, 0.5
        %v5362 = vmul.f32 %v5298, 0.5
        %v5363 = vmul.f32 %v5299, 0.5
        %v5364 = vmul.f32 %v5300, 0.5
        %v5365 = vmul.f32 %v5301, 0.5
        %v5366 = vmul.f32 %v5302, 0.5
        %v5367 = vmul.f32 %v5303, 0.5
        %v5368 = vmul.f32 %v5304, 0.5
        %v5369 = vmul.f32 %v5305, 0.5
        %v5370 = vmul.f32 %v5306, 0.5
        %v5371 = vmul.f32 %v5307, 0.5
        %v5372 = vmul.f32 %v5308, 0.5
        %v5373 = vmul.f32 %v5309, 0.5
        %v5374 = vmul.f32 %v5310, 0.5
        %v5375 = vmul.f32 %v5311, 0.5
        %v5376 = vmul.f32 %v5312, 0.5
        %v5377 = vmul.f32 %v5313, 0.5
        %v5378 = vmul.f32 %v5314, 0.5
        %v5379 = vmul.f32 %v5315, 0.5
        %v5380 = vmul.f32 %v5316, 0.5
        %v5381 = vmul.f32 %v5317, 0.5
        %v5382 = vmul.f32 %v5318, 0.5
        %v5383 = vmul.f32 %v5319, 0.5
        %v5384 = vmul.f32 %v5320, 0.5
        %v5385 = vmul.f32 %v5321, 0.5
        %v5386 = vmul.f32 %v5322, 0.5
        %v5387 = vmul.f32 %v5323, 0.5
        %v5388 = vmul.f32 %v5324, 0.5
        %v5389 = vmul.f32 %v5325, 0.5
        %v5390 = vmul.f32 %v5326, 0.5
        %v5391 = vmul.f32 %v5327, 0.5
        %v5392 = vmul.f32 %v5328, 0.5
        %v5393 = vmul.f32 %v5329, 0.5
        %v5394 = vmul.f32 %v5330, 0.5
        %v5395 = vmul.f32 %v5331, 0.5
        %v5396 = vmul.f32 %v5332, 0.5
        %v5397 = vmul.f32 %v5333, 0.5
        %v5398 = vmul.f32 %v5334, 0.5
        %v5399 = vmul.f32 %v5335, 0.5
        %v5400 = vmul.f32 %v5336, 0.5
        %v5401 = vmul.f32 %v5337, 0.5
        %v5402 = vmul.f32 %v5338, 0.5
        %v5403 = vmul.f32 %v5339, 0.5
        %v5404 = vmul.f32 %v5340, 0.5
        %v5405 = vmul.f32 %v5341, 0.5
        %v5406 = vmul.f32 %v5342, 0.5
        %v5407 = vmul.f32 %v5343, 0.5
        %v5408 = vmul.f32 %v5344, 0.5
        %v5409 = vmul.f32 %v5345, 0.5
        %v5410 = vmul.f32 %v5346, 0.5
        %v5411 = vmul.f32 %v5347, 0.5
        %v5412 = vmul.f32 %v5348, 0.5
        %v5413 = vmul.f32 %v5349, 0.5
        %v5414 = vmul.f32 %v5350, 0.5
        %v5415 = vmul.f32 %v5351, 0.5
        %v5416 = vmul.f32 %v5352, 0.5
        %v5417 = vmul.f32 %v5353, 0.5
        %v5418 = vmul.f32 %v5354, 0.5
        %v5419 = vmul.f32 %v5355, 0.5
        %v5420 = vmul.f32 %v5356, 0.5
        %v5421 = vmul.f32 %v5357, 0.5
        %v5422 = vmul.f32 %v5358, 0.5
        %v5423 = vmul.f32 %v4720, %v5359
        %v5424 = vmul.f32 %v4722, %v5360
        %v5425 = vmul.f32 %v4833, %v5361
        %v5426 = vmul.f32 %v4835, %v5362
        %v5427 = vmul.f32 %v4724, %v5363
        %v5428 = vmul.f32 %v4726, %v5364
        %v5429 = vmul.f32 %v4837, %v5365
        %v5430 = vmul.f32 %v4839, %v5366
        %v5431 = vmul.f32 %v4730, %v5367
        %v5432 = vmul.f32 %v4732, %v5368
        %v5433 = vmul.f32 %v4843, %v5369
        %v5434 = vmul.f32 %v4845, %v5370
        %v5435 = vmul.f32 %v4734, %v5371
        %v5436 = vmul.f32 %v4736, %v5372
        %v5437 = vmul.f32 %v4847, %v5373
        %v5438 = vmul.f32 %v4849, %v5374
        %v5439 = vmul.f32 %v4740, %v5375
        %v5440 = vmul.f32 %v4742, %v5376
        %v5441 = vmul.f32 %v4853, %v5377
        %v5442 = vmul.f32 %v4855, %v5378
        %v5443 = vmul.f32 %v4744, %v5379
        %v5444 = vmul.f32 %v4746, %v5380
        %v5445 = vmul.f32 %v4857, %v5381
        %v5446 = vmul.f32 %v4859, %v5382
        %v5447 = vmul.f32 %v4750, %v5383
        %v5448 = vmul.f32 %v4752, %v5384
        %v5449 = vmul.f32 %v4863, %v5385
        %v5450 = vmul.f32 %v4865, %v5386
        %v5451 = vmul.f32 %v4754, %v5387
        %v5452 = vmul.f32 %v4756, %v5388
        %v5453 = vmul.f32 %v4867, %v5389
        %v5454 = vmul.f32 %v4869, %v5390
        %v5455 = vmul.f32 %v4760, %v5391
        %v5456 = vmul.f32 %v4762, %v5392
        %v5457 = vmul.f32 %v4873, %v5393
        %v5458 = vmul.f32 %v4875, %v5394
        %v5459 = vmul.f32 %v4764, %v5395
        %v5460 = vmul.f32 %v4766, %v5396
        %v5461 = vmul.f32 %v4877, %v5397
        %v5462 = vmul.f32 %v4879, %v5398
        %v5463 = vmul.f32 %v4770, %v5399
        %v5464 = vmul.f32 %v4772, %v5400
        %v5465 = vmul.f32 %v4883, %v5401
        %v5466 = vmul.f32 %v4885, %v5402
        %v5467 = vmul.f32 %v4774, %v5403
        %v5468 = vmul.f32 %v4776, %v5404
        %v5469 = vmul.f32 %v4887, %v5405
        %v5470 = vmul.f32 %v4889, %v5406
        %v5471 = vmul.f32 %v4780, %v5407
        %v5472 = vmul.f32 %v4782, %v5408
        %v5473 = vmul.f32 %v4893, %v5409
        %v5474 = vmul.f32 %v4895, %v5410
        %v5475 = vmul.f32 %v4784, %v5411
        %v5476 = vmul.f32 %v4786, %v5412
        %v5477 = vmul.f32 %v4897, %v5413
        %v5478 = vmul.f32 %v4899, %v5414
        %v5479 = vmul.f32 %v4790, %v5415
        %v5480 = vmul.f32 %v4792, %v5416
        %v5481 = vmul.f32 %v4903, %v5417
        %v5482 = vmul.f32 %v4905, %v5418
        %v5483 = vmul.f32 %v4794, %v5419
        %v5484 = vmul.f32 %v4796, %v5420
        %v5485 = vmul.f32 %v4907, %v5421
        %v5486 = vmul.f32 %v4909, %v5422
        %v5487 = vpack.c.bf16 %v5427, %v5423
        %v5488 = vpack.c.bf16 %v5428, %v5424
        %v5489 = vpack.c.bf16 %v5429, %v5425
        %v5490 = vpack.c.bf16 %v5430, %v5426
        %v5491 = vpack.c.bf16 %v5435, %v5431
        %v5492 = vpack.c.bf16 %v5436, %v5432
        %v5493 = vpack.c.bf16 %v5437, %v5433
        %v5494 = vpack.c.bf16 %v5438, %v5434
        %v5495 = vpack.c.bf16 %v5443, %v5439
        %v5496 = vpack.c.bf16 %v5444, %v5440
        %v5497 = vpack.c.bf16 %v5445, %v5441
        %v5498 = vpack.c.bf16 %v5446, %v5442
        %v5499 = vpack.c.bf16 %v5451, %v5447
        %v5500 = vpack.c.bf16 %v5452, %v5448
        %v5501 = vpack.c.bf16 %v5453, %v5449
        %v5502 = vpack.c.bf16 %v5454, %v5450
        %v5503 = vpack.c.bf16 %v5459, %v5455
        %v5504 = vpack.c.bf16 %v5460, %v5456
        %v5505 = vpack.c.bf16 %v5461, %v5457
        %v5506 = vpack.c.bf16 %v5462, %v5458
        %v5507 = vpack.c.bf16 %v5467, %v5463
        %v5508 = vpack.c.bf16 %v5468, %v5464
        %v5509 = vpack.c.bf16 %v5469, %v5465
        %v5510 = vpack.c.bf16 %v5470, %v5466
        %v5511 = vpack.c.bf16 %v5475, %v5471
        %v5512 = vpack.c.bf16 %v5476, %v5472
        %v5513 = vpack.c.bf16 %v5477, %v5473
        %v5514 = vpack.c.bf16 %v5478, %v5474
        %v5515 = vpack.c.bf16 %v5483, %v5479
        %v5516 = vpack.c.bf16 %v5484, %v5480
        %v5517 = vpack.c.bf16 %v5485, %v5481
        %v5518 = vpack.c.bf16 %v5486, %v5482
        %v5519 = vld [vmem:[#allocation13] sm:$0xff]
        %v5520 = vld [vmem:[#allocation13 + $0x8] sm:$0xff]
        %v5521 = vld [vmem:[#allocation13 + $0x10] sm:$0xff]
        %v5522 = vld [vmem:[#allocation13 + $0x18] sm:$0xff]
        %v5523 = vld [vmem:[#allocation13 + $0x20] sm:$0xff]
        %v5524 = vld [vmem:[#allocation13 + $0x28] sm:$0xff]
        %v5525 = vld [vmem:[#allocation13 + $0x30] sm:$0xff]
        %v5526 = vld [vmem:[#allocation13 + $0x38] sm:$0xff]
        %v5527 = vld [vmem:[#allocation13 + $0x40] sm:$0xff]
        %v5528 = vld [vmem:[#allocation13 + $0x48] sm:$0xff]
        %v5529 = vld [vmem:[#allocation13 + $0x50] sm:$0xff]
        %v5530 = vld [vmem:[#allocation13 + $0x58] sm:$0xff]
        %v5531 = vld [vmem:[#allocation13 + $0x60] sm:$0xff]
        %v5532 = vld [vmem:[#allocation13 + $0x68] sm:$0xff]
        %v5533 = vld [vmem:[#allocation13 + $0x70] sm:$0xff]
        %v5534 = vld [vmem:[#allocation13 + $0x78] sm:$0xff]
        %v5535 = vld [vmem:[#allocation13 + $0x80] sm:$0xff]
        %v5536 = vld [vmem:[#allocation13 + $0x88] sm:$0xff]
        %v5537 = vld [vmem:[#allocation13 + $0x90] sm:$0xff]
        %v5538 = vld [vmem:[#allocation13 + $0x98] sm:$0xff]
        %v5539 = vld [vmem:[#allocation13 + $0xa0] sm:$0xff]
        %v5540 = vld [vmem:[#allocation13 + $0xa8] sm:$0xff]
        %v5541 = vld [vmem:[#allocation13 + $0xb0] sm:$0xff]
        %v5542 = vld [vmem:[#allocation13 + $0xb8] sm:$0xff]
        %v5543 = vld [vmem:[#allocation13 + $0xc0] sm:$0xff]
        %v5544 = vld [vmem:[#allocation13 + $0xc8] sm:$0xff]
        %v5545 = vld [vmem:[#allocation13 + $0xd0] sm:$0xff]
        %v5546 = vld [vmem:[#allocation13 + $0xd8] sm:$0xff]
        %v5547 = vld [vmem:[#allocation13 + $0xe0] sm:$0xff]
        %v5548 = vld [vmem:[#allocation13 + $0xe8] sm:$0xff]
        %v5549 = vld [vmem:[#allocation13 + $0xf0] sm:$0xff]
        %v5550 = vld [vmem:[#allocation13 + $0xf8] sm:$0xff]
        %v5551 = vld [vmem:[#allocation13 + $0x100] sm:$0xff]
        %v5552 = vld [vmem:[#allocation13 + $0x108] sm:$0xff]
        %v5553 = vld [vmem:[#allocation13 + $0x110] sm:$0xff]
        %v5554 = vld [vmem:[#allocation13 + $0x118] sm:$0xff]
        %v5555 = vld [vmem:[#allocation13 + $0x120] sm:$0xff]
        %v5556 = vld [vmem:[#allocation13 + $0x128] sm:$0xff]
        %v5557 = vld [vmem:[#allocation13 + $0x130] sm:$0xff]
        %v5558 = vld [vmem:[#allocation13 + $0x138] sm:$0xff]
        %v5559 = vld [vmem:[#allocation13 + $0x140] sm:$0xff]
        %v5560 = vld [vmem:[#allocation13 + $0x148] sm:$0xff]
        %v5561 = vld [vmem:[#allocation13 + $0x150] sm:$0xff]
        %v5562 = vld [vmem:[#allocation13 + $0x158] sm:$0xff]
        %v5563 = vld [vmem:[#allocation13 + $0x160] sm:$0xff]
        %v5564 = vld [vmem:[#allocation13 + $0x168] sm:$0xff]
        %v5565 = vld [vmem:[#allocation13 + $0x170] sm:$0xff]
        %v5566 = vld [vmem:[#allocation13 + $0x178] sm:$0xff]
        %v5567 = vld [vmem:[#allocation13 + $0x180] sm:$0xff]
        %v5568 = vld [vmem:[#allocation13 + $0x188] sm:$0xff]
        %v5569 = vld [vmem:[#allocation13 + $0x190] sm:$0xff]
        %v5570 = vld [vmem:[#allocation13 + $0x198] sm:$0xff]
        %v5571 = vld [vmem:[#allocation13 + $0x1a0] sm:$0xff]
        %v5572 = vld [vmem:[#allocation13 + $0x1a8] sm:$0xff]
        %v5573 = vld [vmem:[#allocation13 + $0x1b0] sm:$0xff]
        %v5574 = vld [vmem:[#allocation13 + $0x1b8] sm:$0xff]
        %v5575 = vld [vmem:[#allocation13 + $0x1c0] sm:$0xff]
        %v5576 = vld [vmem:[#allocation13 + $0x1c8] sm:$0xff]
        %v5577 = vld [vmem:[#allocation13 + $0x1d0] sm:$0xff]
        %v5578 = vld [vmem:[#allocation13 + $0x1d8] sm:$0xff]
        %v5579 = vld [vmem:[#allocation13 + $0x1e0] sm:$0xff]
        %v5580 = vld [vmem:[#allocation13 + $0x1e8] sm:$0xff]
        %v5581 = vld [vmem:[#allocation13 + $0x1f0] sm:$0xff]
        %v5582 = vld [vmem:[#allocation13 + $0x1f8] sm:$0xff]
        %v5583 = vld [vmem:[#allocation11 + $0x10] sm:$0xff]
        %v5584 = vld [vmem:[#allocation11 + $0x18] sm:$0xff]
        %v5585 = vld [vmem:[#allocation11 + $0x30] sm:$0xff]
        %v5586 = vld [vmem:[#allocation11 + $0x38] sm:$0xff]
        %v5587 = vld [vmem:[#allocation11 + $0x50] sm:$0xff]
        %v5588 = vld [vmem:[#allocation11 + $0x58] sm:$0xff]
        %v5589 = vld [vmem:[#allocation11 + $0x70] sm:$0xff]
        %v5590 = vld [vmem:[#allocation11 + $0x78] sm:$0xff]
        %v5591 = vld [vmem:[#allocation11 + $0x90] sm:$0xff]
        %v5592 = vld [vmem:[#allocation11 + $0x98] sm:$0xff]
        %v5593 = vld [vmem:[#allocation11 + $0xb0] sm:$0xff]
        %v5594 = vld [vmem:[#allocation11 + $0xb8] sm:$0xff]
        %v5595 = vld [vmem:[#allocation11 + $0xd0] sm:$0xff]
        %v5596 = vld [vmem:[#allocation11 + $0xd8] sm:$0xff]
        %v5597 = vld [vmem:[#allocation11 + $0xf0] sm:$0xff]
        %v5598 = vld [vmem:[#allocation11 + $0xf8] sm:$0xff]
        %v5599 = vld [vmem:[#allocation11 + $0x110] sm:$0xff]
        %v5600 = vld [vmem:[#allocation11 + $0x118] sm:$0xff]
        %v5601 = vld [vmem:[#allocation11 + $0x130] sm:$0xff]
        %v5602 = vld [vmem:[#allocation11 + $0x138] sm:$0xff]
        %v5603 = vld [vmem:[#allocation11 + $0x150] sm:$0xff]
        %v5604 = vld [vmem:[#allocation11 + $0x158] sm:$0xff]
        %v5605 = vld [vmem:[#allocation11 + $0x170] sm:$0xff]
        %v5606 = vld [vmem:[#allocation11 + $0x178] sm:$0xff]
        %v5607 = vld [vmem:[#allocation11 + $0x190] sm:$0xff]
        %v5608 = vld [vmem:[#allocation11 + $0x198] sm:$0xff]
        %v5609 = vld [vmem:[#allocation11 + $0x1b0] sm:$0xff]
        %v5610 = vld [vmem:[#allocation11 + $0x1b8] sm:$0xff]
        %v5611 = vld [vmem:[#allocation11 + $0x1d0] sm:$0xff]
        %v5612 = vld [vmem:[#allocation11 + $0x1d8] sm:$0xff]
        %v5613 = vld [vmem:[#allocation11 + $0x1f0] sm:$0xff]
        %v5614 = vld [vmem:[#allocation11 + $0x1f8] sm:$0xff]
        %v5615 = vld [vmem:[#allocation11 + $0x210] sm:$0xff]
        %v5616 = vld [vmem:[#allocation11 + $0x218] sm:$0xff]
        %v5617 = vld [vmem:[#allocation11 + $0x230] sm:$0xff]
        %v5618 = vld [vmem:[#allocation11 + $0x238] sm:$0xff]
        %v5619 = vld [vmem:[#allocation11 + $0x250] sm:$0xff]
        %v5620 = vld [vmem:[#allocation11 + $0x258] sm:$0xff]
        %v5621 = vld [vmem:[#allocation11 + $0x270] sm:$0xff]
        %v5622 = vld [vmem:[#allocation11 + $0x278] sm:$0xff]
        %v5623 = vld [vmem:[#allocation11 + $0x290] sm:$0xff]
        %v5624 = vld [vmem:[#allocation11 + $0x298] sm:$0xff]
        %v5625 = vld [vmem:[#allocation11 + $0x2b0] sm:$0xff]
        %v5626 = vld [vmem:[#allocation11 + $0x2b8] sm:$0xff]
        %v5627 = vld [vmem:[#allocation11 + $0x2d0] sm:$0xff]
        %v5628 = vld [vmem:[#allocation11 + $0x2d8] sm:$0xff]
        %v5629 = vld [vmem:[#allocation11 + $0x2f0] sm:$0xff]
        %v5630 = vld [vmem:[#allocation11 + $0x2f8] sm:$0xff]
        %v5631 = vld [vmem:[#allocation11 + $0x310] sm:$0xff]
        %v5632 = vld [vmem:[#allocation11 + $0x318] sm:$0xff]
        %v5633 = vld [vmem:[#allocation11 + $0x330] sm:$0xff]
        %v5634 = vld [vmem:[#allocation11 + $0x338] sm:$0xff]
        %v5635 = vld [vmem:[#allocation11 + $0x350] sm:$0xff]
        %v5636 = vld [vmem:[#allocation11 + $0x358] sm:$0xff]
        %v5637 = vld [vmem:[#allocation11 + $0x370] sm:$0xff]
        %v5638 = vld [vmem:[#allocation11 + $0x378] sm:$0xff]
        %v5639 = vld [vmem:[#allocation11 + $0x390] sm:$0xff]
        %v5640 = vld [vmem:[#allocation11 + $0x398] sm:$0xff]
        %v5641 = vld [vmem:[#allocation11 + $0x3b0] sm:$0xff]
        %v5642 = vld [vmem:[#allocation11 + $0x3b8] sm:$0xff]
        %v5643 = vld [vmem:[#allocation11 + $0x3d0] sm:$0xff]
        %v5644 = vld [vmem:[#allocation11 + $0x3d8] sm:$0xff]
        %v5645 = vld [vmem:[#allocation11 + $0x3f0] sm:$0xff]
        %v5646 = vld [vmem:[#allocation11 + $0x3f8] sm:$0xff]
        %v5647 = vld [vmem:[%s9 + $0x4] sm:$0xf]
        %v5649 = vlaneseq
        %v5650 = vshrl.u32 %v5649, 7
        %v5651 = vsub.s32 0, %v5650
        %v5652 = vrot.slane %v5647, %v5651
        %v5653 = vlaneseq
        %v5654 = vshrl.u32 %v5653, 7
        %v5655 = vsub.s32 1, %v5654
        %v5656 = vrot.slane %v5647, %v5655
        %v5657 = vlaneseq
        %v5658 = vshrl.u32 %v5657, 7
        %v5659 = vsub.s32 2, %v5658
        %v5660 = vrot.slane %v5647, %v5659
        %v5661 = vlaneseq
        %v5662 = vshrl.u32 %v5661, 7
        %v5663 = vsub.s32 3, %v5662
        %v5664 = vrot.slane %v5647, %v5663
        %v5733 = vunpack.c.l.b16 %v5583
        %v5734 = vunpack.c.h.b16 %v5583
        %v5735 = vunpack.c.l.b16 %v5584
        %v5736 = vunpack.c.h.b16 %v5584
        %v5737 = vunpack.c.l.b16 %v5585
        %v5738 = vunpack.c.h.b16 %v5585
        %v5739 = vunpack.c.l.b16 %v5586
        %v5740 = vunpack.c.h.b16 %v5586
        %v5741 = vunpack.c.l.b16 %v5587
        %v5742 = vunpack.c.h.b16 %v5587
        %v5743 = vunpack.c.l.b16 %v5588
        %v5744 = vunpack.c.h.b16 %v5588
        %v5745 = vunpack.c.l.b16 %v5589
        %v5746 = vunpack.c.h.b16 %v5589
        %v5747 = vunpack.c.l.b16 %v5590
        %v5748 = vunpack.c.h.b16 %v5590
        %v5749 = vunpack.c.l.b16 %v5591
        %v5750 = vunpack.c.h.b16 %v5591
        %v5751 = vunpack.c.l.b16 %v5592
        %v5752 = vunpack.c.h.b16 %v5592
        %v5753 = vunpack.c.l.b16 %v5593
        %v5754 = vunpack.c.h.b16 %v5593
        %v5755 = vunpack.c.l.b16 %v5594
        %v5756 = vunpack.c.h.b16 %v5594
        %v5757 = vunpack.c.l.b16 %v5595
        %v5758 = vunpack.c.h.b16 %v5595
        %v5759 = vunpack.c.l.b16 %v5596
        %v5760 = vunpack.c.h.b16 %v5596
        %v5761 = vunpack.c.l.b16 %v5597
        %v5762 = vunpack.c.h.b16 %v5597
        %v5763 = vunpack.c.l.b16 %v5598
        %v5764 = vunpack.c.h.b16 %v5598
        %v5765 = vunpack.c.l.b16 %v5599
        %v5766 = vunpack.c.h.b16 %v5599
        %v5767 = vunpack.c.l.b16 %v5600
        %v5768 = vunpack.c.h.b16 %v5600
        %v5769 = vunpack.c.l.b16 %v5601
        %v5770 = vunpack.c.h.b16 %v5601
        %v5771 = vunpack.c.l.b16 %v5602
        %v5772 = vunpack.c.h.b16 %v5602
        %v5773 = vunpack.c.l.b16 %v5603
        %v5774 = vunpack.c.h.b16 %v5603
        %v5775 = vunpack.c.l.b16 %v5604
        %v5776 = vunpack.c.h.b16 %v5604
        %v5777 = vunpack.c.l.b16 %v5605
        %v5778 = vunpack.c.h.b16 %v5605
        %v5779 = vunpack.c.l.b16 %v5606
        %v5780 = vunpack.c.h.b16 %v5606
        %v5781 = vunpack.c.l.b16 %v5607
        %v5782 = vunpack.c.h.b16 %v5607
        %v5783 = vunpack.c.l.b16 %v5608
        %v5784 = vunpack.c.h.b16 %v5608
        %v5785 = vunpack.c.l.b16 %v5609
        %v5786 = vunpack.c.h.b16 %v5609
        %v5787 = vunpack.c.l.b16 %v5610
        %v5788 = vunpack.c.h.b16 %v5610
        %v5789 = vunpack.c.l.b16 %v5611
        %v5790 = vunpack.c.h.b16 %v5611
        %v5791 = vunpack.c.l.b16 %v5612
        %v5792 = vunpack.c.h.b16 %v5612
        %v5793 = vunpack.c.l.b16 %v5613
        %v5794 = vunpack.c.h.b16 %v5613
        %v5795 = vunpack.c.l.b16 %v5614
        %v5796 = vunpack.c.h.b16 %v5614
        %v5797 = vunpack.c.l.b16 %v5615
        %v5798 = vunpack.c.h.b16 %v5615
        %v5799 = vunpack.c.l.b16 %v5616
        %v5800 = vunpack.c.h.b16 %v5616
        %v5801 = vunpack.c.l.b16 %v5617
        %v5802 = vunpack.c.h.b16 %v5617
        %v5803 = vunpack.c.l.b16 %v5618
        %v5804 = vunpack.c.h.b16 %v5618
        %v5805 = vunpack.c.l.b16 %v5619
        %v5806 = vunpack.c.h.b16 %v5619
        %v5807 = vunpack.c.l.b16 %v5620
        %v5808 = vunpack.c.h.b16 %v5620
        %v5809 = vunpack.c.l.b16 %v5621
        %v5810 = vunpack.c.h.b16 %v5621
        %v5811 = vunpack.c.l.b16 %v5622
        %v5812 = vunpack.c.h.b16 %v5622
        %v5813 = vunpack.c.l.b16 %v5623
        %v5814 = vunpack.c.h.b16 %v5623
        %v5815 = vunpack.c.l.b16 %v5624
        %v5816 = vunpack.c.h.b16 %v5624
        %v5817 = vunpack.c.l.b16 %v5625
        %v5818 = vunpack.c.h.b16 %v5625
        %v5819 = vunpack.c.l.b16 %v5626
        %v5820 = vunpack.c.h.b16 %v5626
        %v5821 = vunpack.c.l.b16 %v5627
        %v5822 = vunpack.c.h.b16 %v5627
        %v5823 = vunpack.c.l.b16 %v5628
        %v5824 = vunpack.c.h.b16 %v5628
        %v5825 = vunpack.c.l.b16 %v5629
        %v5826 = vunpack.c.h.b16 %v5629
        %v5827 = vunpack.c.l.b16 %v5630
        %v5828 = vunpack.c.h.b16 %v5630
        %v5829 = vunpack.c.l.b16 %v5631
        %v5830 = vunpack.c.h.b16 %v5631
        %v5831 = vunpack.c.l.b16 %v5632
        %v5832 = vunpack.c.h.b16 %v5632
        %v5833 = vunpack.c.l.b16 %v5633
        %v5834 = vunpack.c.h.b16 %v5633
        %v5835 = vunpack.c.l.b16 %v5634
        %v5836 = vunpack.c.h.b16 %v5634
        %v5837 = vunpack.c.l.b16 %v5635
        %v5838 = vunpack.c.h.b16 %v5635
        %v5839 = vunpack.c.l.b16 %v5636
        %v5840 = vunpack.c.h.b16 %v5636
        %v5841 = vunpack.c.l.b16 %v5637
        %v5842 = vunpack.c.h.b16 %v5637
        %v5843 = vunpack.c.l.b16 %v5638
        %v5844 = vunpack.c.h.b16 %v5638
        %v5845 = vunpack.c.l.b16 %v5639
        %v5846 = vunpack.c.h.b16 %v5639
        %v5847 = vunpack.c.l.b16 %v5640
        %v5848 = vunpack.c.h.b16 %v5640
        %v5849 = vunpack.c.l.b16 %v5641
        %v5850 = vunpack.c.h.b16 %v5641
        %v5851 = vunpack.c.l.b16 %v5642
        %v5852 = vunpack.c.h.b16 %v5642
        %v5853 = vunpack.c.l.b16 %v5643
        %v5854 = vunpack.c.h.b16 %v5643
        %v5855 = vunpack.c.l.b16 %v5644
        %v5856 = vunpack.c.h.b16 %v5644
        %v5857 = vunpack.c.l.b16 %v5645
        %v5858 = vunpack.c.h.b16 %v5645
        %v5859 = vunpack.c.l.b16 %v5646
        %v5860 = vunpack.c.h.b16 %v5646
        %v5861 = vpack.c.b16 %v5737, %v5733
        %v5862 = vpack.c.b16 %v5738, %v5734
        %v5863 = vpack.c.b16 %v5739, %v5735
        %v5864 = vpack.c.b16 %v5740, %v5736
        %v5865 = vpack.c.b16 %v5745, %v5741
        %v5866 = vpack.c.b16 %v5746, %v5742
        %v5867 = vpack.c.b16 %v5747, %v5743
        %v5868 = vpack.c.b16 %v5748, %v5744
        %v5869 = vpack.c.b16 %v5753, %v5749
        %v5870 = vpack.c.b16 %v5754, %v5750
        %v5871 = vpack.c.b16 %v5755, %v5751
        %v5872 = vpack.c.b16 %v5756, %v5752
        %v5873 = vpack.c.b16 %v5761, %v5757
        %v5874 = vpack.c.b16 %v5762, %v5758
        %v5875 = vpack.c.b16 %v5763, %v5759
        %v5876 = vpack.c.b16 %v5764, %v5760
        %v5877 = vpack.c.b16 %v5769, %v5765
        %v5878 = vpack.c.b16 %v5770, %v5766
        %v5879 = vpack.c.b16 %v5771, %v5767
        %v5880 = vpack.c.b16 %v5772, %v5768
        %v5881 = vpack.c.b16 %v5777, %v5773
        %v5882 = vpack.c.b16 %v5778, %v5774
        %v5883 = vpack.c.b16 %v5779, %v5775
        %v5884 = vpack.c.b16 %v5780, %v5776
        %v5885 = vpack.c.b16 %v5785, %v5781
        %v5886 = vpack.c.b16 %v5786, %v5782
        %v5887 = vpack.c.b16 %v5787, %v5783
        %v5888 = vpack.c.b16 %v5788, %v5784
        %v5889 = vpack.c.b16 %v5793, %v5789
        %v5890 = vpack.c.b16 %v5794, %v5790
        %v5891 = vpack.c.b16 %v5795, %v5791
        %v5892 = vpack.c.b16 %v5796, %v5792
        %v5893 = vpack.c.b16 %v5801, %v5797
        %v5894 = vpack.c.b16 %v5802, %v5798
        %v5895 = vpack.c.b16 %v5803, %v5799
        %v5896 = vpack.c.b16 %v5804, %v5800
        %v5897 = vpack.c.b16 %v5809, %v5805
        %v5898 = vpack.c.b16 %v5810, %v5806
        %v5899 = vpack.c.b16 %v5811, %v5807
        %v5900 = vpack.c.b16 %v5812, %v5808
        %v5901 = vpack.c.b16 %v5817, %v5813
        %v5902 = vpack.c.b16 %v5818, %v5814
        %v5903 = vpack.c.b16 %v5819, %v5815
        %v5904 = vpack.c.b16 %v5820, %v5816
        %v5905 = vpack.c.b16 %v5825, %v5821
        %v5906 = vpack.c.b16 %v5826, %v5822
        %v5907 = vpack.c.b16 %v5827, %v5823
        %v5908 = vpack.c.b16 %v5828, %v5824
        %v5909 = vpack.c.b16 %v5833, %v5829
        %v5910 = vpack.c.b16 %v5834, %v5830
        %v5911 = vpack.c.b16 %v5835, %v5831
        %v5912 = vpack.c.b16 %v5836, %v5832
        %v5913 = vpack.c.b16 %v5841, %v5837
        %v5914 = vpack.c.b16 %v5842, %v5838
        %v5915 = vpack.c.b16 %v5843, %v5839
        %v5916 = vpack.c.b16 %v5844, %v5840
        %v5917 = vpack.c.b16 %v5849, %v5845
        %v5918 = vpack.c.b16 %v5850, %v5846
        %v5919 = vpack.c.b16 %v5851, %v5847
        %v5920 = vpack.c.b16 %v5852, %v5848
        %v5921 = vpack.c.b16 %v5857, %v5853
        %v5922 = vpack.c.b16 %v5858, %v5854
        %v5923 = vpack.c.b16 %v5859, %v5855
        %v5924 = vpack.c.b16 %v5860, %v5856
        %5989 = vmatprep.subr.bf16.mxu0 %v5890
        %5990 = vmatpush1.bf16.msra.mxu0 %v5889
        %5991 = vmatprep.subr.bf16.mxu0 %v5886
        %5992 = vmatpush1.bf16.msra.mxu0 %v5885
        %5993 = vmatprep.subr.bf16.mxu0 %v5882
        %5994 = vmatpush1.bf16.msra.mxu0 %v5881
        %5995 = vmatprep.subr.bf16.mxu0 %v5878
        %5996 = vmatpush1.bf16.msra.mxu0 %v5877
        %5997 = vmatprep.subr.bf16.mxu0 %v5874
        %5998 = vmatpush1.bf16.msra.mxu0 %v5873
        %5999 = vmatprep.subr.bf16.mxu0 %v5870
        %6000 = vmatpush1.bf16.msra.mxu0 %v5869
        %6001 = vmatprep.subr.bf16.mxu0 %v5866
        %6002 = vmatpush1.bf16.msra.mxu0 %v5865
        %6003 = vmatprep.subr.bf16.mxu0 %v5862
        %6004 = vmatpush1.bf16.msra.mxu0 %v5861
        %6005 = vmatprep.subr.bf16.mxu0 %v5922
        %6006 = vmatpush2.bf16.msra.mxu0 %v5921
        %6007 = vmatprep.subr.bf16.mxu0 %v5918
        %6008 = vmatpush2.bf16.msra.mxu0 %v5917
        %6009 = vmatprep.subr.bf16.mxu0 %v5914
        %6010 = vmatpush2.bf16.msra.mxu0 %v5913
        %6011 = vmatprep.subr.bf16.mxu0 %v5910
        %6012 = vmatpush2.bf16.msra.mxu0 %v5909
        %6013 = vmatprep.subr.bf16.mxu0 %v5906
        %6014 = vmatpush2.bf16.msra.mxu0 %v5905
        %6015 = vmatprep.subr.bf16.mxu0 %v5902
        %6016 = vmatpush2.bf16.msra.mxu0 %v5901
        %6017 = vmatprep.subr.bf16.mxu0 %v5898
        %6018 = vmatpush2.bf16.msra.mxu0 %v5897
        %6019 = vmatprep.subr.bf16.mxu0 %v5894
        %6020 = vmatpush2.bf16.msra.mxu0 %v5893
        %6021 = vmatprep.mubr.bf16.mxu0 %v4264
        %6022 = vmatmul.mubr.bf16.gmra.mxu0 %v4263
        %v6023 = vpop.f32.mrf.mxu0
        %v6024 = vadd.f32 %v5652, %v6023
        %v6025 = vpop.f32.mrf.mxu0
        %v6026 = vadd.f32 %v5656, %v6025
        %v6027 = vpop.f32.mrf.mxu0
        %v6028 = vadd.f32 %v5652, %v6027
        %v6029 = vpop.f32.mrf.mxu0
        %v6030 = vadd.f32 %v5656, %v6029
        %6031 = vmatprep.mubr.bf16.mxu0 %v4266
        %6032 = vmatmul.mubr.bf16.gmra.mxu0 %v4265
        %v6033 = vpop.f32.mrf.mxu0
        %v6034 = vadd.f32 %v5652, %v6033
        %v6035 = vpop.f32.mrf.mxu0
        %v6036 = vadd.f32 %v5656, %v6035
        %v6037 = vpop.f32.mrf.mxu0
        %v6038 = vadd.f32 %v5652, %v6037
        %v6039 = vpop.f32.mrf.mxu0
        %v6040 = vadd.f32 %v5656, %v6039
        %6041 = vmatprep.mubr.bf16.mxu0 %v4268
        %6042 = vmatmul.mubr.bf16.gmra.mxu0 %v4267
        %v6043 = vpop.f32.mrf.mxu0
        %v6044 = vadd.f32 %v5652, %v6043
        %v6045 = vpop.f32.mrf.mxu0
        %v6046 = vadd.f32 %v5656, %v6045
        %v6047 = vpop.f32.mrf.mxu0
        %v6048 = vadd.f32 %v5652, %v6047
        %v6049 = vpop.f32.mrf.mxu0
        %v6050 = vadd.f32 %v5656, %v6049
        %6051 = vmatprep.mubr.bf16.mxu0 %v4270
        %6052 = vmatmul.mubr.bf16.gmra.mxu0 %v4269
        %v6053 = vpop.f32.mrf.mxu0
        %v6054 = vadd.f32 %v5652, %v6053
        %v6055 = vpop.f32.mrf.mxu0
        %v6056 = vadd.f32 %v5656, %v6055
        %v6057 = vpop.f32.mrf.mxu0
        %v6058 = vadd.f32 %v5652, %v6057
        %v6059 = vpop.f32.mrf.mxu0
        %v6060 = vadd.f32 %v5656, %v6059
        %6061 = vmatprep.mubr.bf16.mxu0 %v4272
        %6062 = vmatmul.mubr.bf16.gmra.mxu0 %v4271
        %v6063 = vpop.f32.mrf.mxu0
        %v6064 = vadd.f32 %v5652, %v6063
        %v6065 = vpop.f32.mrf.mxu0
        %v6066 = vadd.f32 %v5656, %v6065
        %v6067 = vpop.f32.mrf.mxu0
        %v6068 = vadd.f32 %v5652, %v6067
        %v6069 = vpop.f32.mrf.mxu0
        %v6070 = vadd.f32 %v5656, %v6069
        %6071 = vmatprep.mubr.bf16.mxu0 %v4274
        %6072 = vmatmul.mubr.bf16.gmra.mxu0 %v4273
        %v6073 = vpop.f32.mrf.mxu0
        %v6074 = vadd.f32 %v5652, %v6073
        %v6075 = vpop.f32.mrf.mxu0
        %v6076 = vadd.f32 %v5656, %v6075
        %v6077 = vpop.f32.mrf.mxu0
        %v6078 = vadd.f32 %v5652, %v6077
        %v6079 = vpop.f32.mrf.mxu0
        %v6080 = vadd.f32 %v5656, %v6079
        %6081 = vmatprep.mubr.bf16.mxu0 %v4276
        %6082 = vmatmul.mubr.bf16.gmra.mxu0 %v4275
        %v6083 = vpop.f32.mrf.mxu0
        %v6084 = vadd.f32 %v5652, %v6083
        %v6085 = vpop.f32.mrf.mxu0
        %v6086 = vadd.f32 %v5656, %v6085
        %v6087 = vpop.f32.mrf.mxu0
        %v6088 = vadd.f32 %v5652, %v6087
        %v6089 = vpop.f32.mrf.mxu0
        %v6090 = vadd.f32 %v5656, %v6089
        %6091 = vmatprep.mubr.bf16.mxu0 %v4278
        %6092 = vmatmul.mubr.bf16.gmra.mxu0 %v4277
        %v6093 = vpop.f32.mrf.mxu0
        %v6094 = vadd.f32 %v5652, %v6093
        %v6095 = vpop.f32.mrf.mxu0
        %v6096 = vadd.f32 %v5656, %v6095
        %v6097 = vpop.f32.mrf.mxu0
        %v6098 = vadd.f32 %v5652, %v6097
        %v6099 = vpop.f32.mrf.mxu0
        %v6100 = vadd.f32 %v5656, %v6099
        %6101 = vdwg.mxu0
        %6102 = vmatprep.subr.bf16.mxu0 %v5892
        %6103 = vmatpush1.bf16.msra.mxu0 %v5891
        %6104 = vmatprep.subr.bf16.mxu0 %v5888
        %6105 = vmatpush1.bf16.msra.mxu0 %v5887
        %6106 = vmatprep.subr.bf16.mxu0 %v5884
        %6107 = vmatpush1.bf16.msra.mxu0 %v5883
        %6108 = vmatprep.subr.bf16.mxu0 %v5880
        %6109 = vmatpush1.bf16.msra.mxu0 %v5879
        %6110 = vmatprep.subr.bf16.mxu0 %v5876
        %6111 = vmatpush1.bf16.msra.mxu0 %v5875
        %6112 = vmatprep.subr.bf16.mxu0 %v5872
        %6113 = vmatpush1.bf16.msra.mxu0 %v5871
        %6114 = vmatprep.subr.bf16.mxu0 %v5868
        %6115 = vmatpush1.bf16.msra.mxu0 %v5867
        %6116 = vmatprep.subr.bf16.mxu0 %v5864
        %6117 = vmatpush1.bf16.msra.mxu0 %v5863
        %6118 = vmatprep.subr.bf16.mxu0 %v5924
        %6119 = vmatpush2.bf16.msra.mxu0 %v5923
        %6120 = vmatprep.subr.bf16.mxu0 %v5920
        %6121 = vmatpush2.bf16.msra.mxu0 %v5919
        %6122 = vmatprep.subr.bf16.mxu0 %v5916
        %6123 = vmatpush2.bf16.msra.mxu0 %v5915
        %6124 = vmatprep.subr.bf16.mxu0 %v5912
        %6125 = vmatpush2.bf16.msra.mxu0 %v5911
        %6126 = vmatprep.subr.bf16.mxu0 %v5908
        %6127 = vmatpush2.bf16.msra.mxu0 %v5907
        %6128 = vmatprep.subr.bf16.mxu0 %v5904
        %6129 = vmatpush2.bf16.msra.mxu0 %v5903
        %6130 = vmatprep.subr.bf16.mxu0 %v5900
        %6131 = vmatpush2.bf16.msra.mxu0 %v5899
        %6132 = vmatprep.subr.bf16.mxu0 %v5896
        %6133 = vmatpush2.bf16.msra.mxu0 %v5895
        %6134 = vmatprep.mubr.bf16.mxu0 %v4264
        %6135 = vmatmul.mubr.bf16.gmra.mxu0 %v4263
        %v6136 = vpop.f32.mrf.mxu0
        %v6137 = vadd.f32 %v5660, %v6136
        %v6138 = vpop.f32.mrf.mxu0
        %v6139 = vadd.f32 %v5664, %v6138
        %v6140 = vpop.f32.mrf.mxu0
        %v6141 = vadd.f32 %v5660, %v6140
        %v6142 = vpop.f32.mrf.mxu0
        %v6143 = vadd.f32 %v5664, %v6142
        %6144 = vmatprep.mubr.bf16.mxu0 %v4266
        %6145 = vmatmul.mubr.bf16.gmra.mxu0 %v4265
        %v6146 = vpop.f32.mrf.mxu0
        %v6147 = vadd.f32 %v5660, %v6146
        %v6148 = vpop.f32.mrf.mxu0
        %v6149 = vadd.f32 %v5664, %v6148
        %v6150 = vpop.f32.mrf.mxu0
        %v6151 = vadd.f32 %v5660, %v6150
        %v6152 = vpop.f32.mrf.mxu0
        %v6153 = vadd.f32 %v5664, %v6152
        %6154 = vmatprep.mubr.bf16.mxu0 %v4268
        %6155 = vmatmul.mubr.bf16.gmra.mxu0 %v4267
        %v6156 = vpop.f32.mrf.mxu0
        %v6157 = vadd.f32 %v5660, %v6156
        %v6158 = vpop.f32.mrf.mxu0
        %v6159 = vadd.f32 %v5664, %v6158
        %v6160 = vpop.f32.mrf.mxu0
        %v6161 = vadd.f32 %v5660, %v6160
        %v6162 = vpop.f32.mrf.mxu0
        %v6163 = vadd.f32 %v5664, %v6162
        %6164 = vmatprep.mubr.bf16.mxu0 %v4270
        %6165 = vmatmul.mubr.bf16.gmra.mxu0 %v4269
        %v6166 = vpop.f32.mrf.mxu0
        %v6167 = vadd.f32 %v5660, %v6166
        %v6168 = vpop.f32.mrf.mxu0
        %v6169 = vadd.f32 %v5664, %v6168
        %v6170 = vpop.f32.mrf.mxu0
        %v6171 = vadd.f32 %v5660, %v6170
        %v6172 = vpop.f32.mrf.mxu0
        %v6173 = vadd.f32 %v5664, %v6172
        %6174 = vmatprep.mubr.bf16.mxu0 %v4272
        %6175 = vmatmul.mubr.bf16.gmra.mxu0 %v4271
        %v6176 = vpop.f32.mrf.mxu0
        %v6177 = vadd.f32 %v5660, %v6176
        %v6178 = vpop.f32.mrf.mxu0
        %v6179 = vadd.f32 %v5664, %v6178
        %v6180 = vpop.f32.mrf.mxu0
        %v6181 = vadd.f32 %v5660, %v6180
        %v6182 = vpop.f32.mrf.mxu0
        %v6183 = vadd.f32 %v5664, %v6182
        %6184 = vmatprep.mubr.bf16.mxu0 %v4274
        %6185 = vmatmul.mubr.bf16.gmra.mxu0 %v4273
        %v6186 = vpop.f32.mrf.mxu0
        %v6187 = vadd.f32 %v5660, %v6186
        %v6188 = vpop.f32.mrf.mxu0
        %v6189 = vadd.f32 %v5664, %v6188
        %v6190 = vpop.f32.mrf.mxu0
        %v6191 = vadd.f32 %v5660, %v6190
        %v6192 = vpop.f32.mrf.mxu0
        %v6193 = vadd.f32 %v5664, %v6192
        %6194 = vmatprep.mubr.bf16.mxu0 %v4276
        %6195 = vmatmul.mubr.bf16.gmra.mxu0 %v4275
        %v6196 = vpop.f32.mrf.mxu0
        %v6197 = vadd.f32 %v5660, %v6196
        %v6198 = vpop.f32.mrf.mxu0
        %v6199 = vadd.f32 %v5664, %v6198
        %v6200 = vpop.f32.mrf.mxu0
        %v6201 = vadd.f32 %v5660, %v6200
        %v6202 = vpop.f32.mrf.mxu0
        %v6203 = vadd.f32 %v5664, %v6202
        %6204 = vmatprep.mubr.bf16.mxu0 %v4278
        %6205 = vmatmul.mubr.bf16.gmra.mxu0 %v4277
        %v6206 = vpop.f32.mrf.mxu0
        %v6207 = vadd.f32 %v5660, %v6206
        %v6208 = vpop.f32.mrf.mxu0
        %v6209 = vadd.f32 %v5664, %v6208
        %v6210 = vpop.f32.mrf.mxu0
        %v6211 = vadd.f32 %v5660, %v6210
        %v6212 = vpop.f32.mrf.mxu0
        %v6213 = vadd.f32 %v5664, %v6212
        %6214 = vdwg.mxu0
        %v6215 = vmul.f32 %v6024, %v6024
        %v6216 = vmul.f32 %v6026, %v6026
        %v6217 = vmul.f32 %v6137, %v6137
        %v6218 = vmul.f32 %v6139, %v6139
        %v6219 = vmul.f32 %v6028, %v6028
        %v6220 = vmul.f32 %v6030, %v6030
        %v6221 = vmul.f32 %v6141, %v6141
        %v6222 = vmul.f32 %v6143, %v6143
        %v6223 = vmul.f32 %v6034, %v6034
        %v6224 = vmul.f32 %v6036, %v6036
        %v6225 = vmul.f32 %v6147, %v6147
        %v6226 = vmul.f32 %v6149, %v6149
        %v6227 = vmul.f32 %v6038, %v6038
        %v6228 = vmul.f32 %v6040, %v6040
        %v6229 = vmul.f32 %v6151, %v6151
        %v6230 = vmul.f32 %v6153, %v6153
        %v6231 = vmul.f32 %v6044, %v6044
        %v6232 = vmul.f32 %v6046, %v6046
        %v6233 = vmul.f32 %v6157, %v6157
        %v6234 = vmul.f32 %v6159, %v6159
        %v6235 = vmul.f32 %v6048, %v6048
        %v6236 = vmul.f32 %v6050, %v6050
        %v6237 = vmul.f32 %v6161, %v6161
        %v6238 = vmul.f32 %v6163, %v6163
        %v6239 = vmul.f32 %v6054, %v6054
        %v6240 = vmul.f32 %v6056, %v6056
        %v6241 = vmul.f32 %v6167, %v6167
        %v6242 = vmul.f32 %v6169, %v6169
        %v6243 = vmul.f32 %v6058, %v6058
        %v6244 = vmul.f32 %v6060, %v6060
        %v6245 = vmul.f32 %v6171, %v6171
        %v6246 = vmul.f32 %v6173, %v6173
        %v6247 = vmul.f32 %v6064, %v6064
        %v6248 = vmul.f32 %v6066, %v6066
        %v6249 = vmul.f32 %v6177, %v6177
        %v6250 = vmul.f32 %v6179, %v6179
        %v6251 = vmul.f32 %v6068, %v6068
        %v6252 = vmul.f32 %v6070, %v6070
        %v6253 = vmul.f32 %v6181, %v6181
        %v6254 = vmul.f32 %v6183, %v6183
        %v6255 = vmul.f32 %v6074, %v6074
        %v6256 = vmul.f32 %v6076, %v6076
        %v6257 = vmul.f32 %v6187, %v6187
        %v6258 = vmul.f32 %v6189, %v6189
        %v6259 = vmul.f32 %v6078, %v6078
        %v6260 = vmul.f32 %v6080, %v6080
        %v6261 = vmul.f32 %v6191, %v6191
        %v6262 = vmul.f32 %v6193, %v6193
        %v6263 = vmul.f32 %v6084, %v6084
        %v6264 = vmul.f32 %v6086, %v6086
        %v6265 = vmul.f32 %v6197, %v6197
        %v6266 = vmul.f32 %v6199, %v6199
        %v6267 = vmul.f32 %v6088, %v6088
        %v6268 = vmul.f32 %v6090, %v6090
        %v6269 = vmul.f32 %v6201, %v6201
        %v6270 = vmul.f32 %v6203, %v6203
        %v6271 = vmul.f32 %v6094, %v6094
        %v6272 = vmul.f32 %v6096, %v6096
        %v6273 = vmul.f32 %v6207, %v6207
        %v6274 = vmul.f32 %v6209, %v6209
        %v6275 = vmul.f32 %v6098, %v6098
        %v6276 = vmul.f32 %v6100, %v6100
        %v6277 = vmul.f32 %v6211, %v6211
        %v6278 = vmul.f32 %v6213, %v6213
        %v6279 = vmul.f32 %v6024, %v6215
        %v6280 = vmul.f32 %v6026, %v6216
        %v6281 = vmul.f32 %v6137, %v6217
        %v6282 = vmul.f32 %v6139, %v6218
        %v6283 = vmul.f32 %v6028, %v6219
        %v6284 = vmul.f32 %v6030, %v6220
        %v6285 = vmul.f32 %v6141, %v6221
        %v6286 = vmul.f32 %v6143, %v6222
        %v6287 = vmul.f32 %v6034, %v6223
        %v6288 = vmul.f32 %v6036, %v6224
        %v6289 = vmul.f32 %v6147, %v6225
        %v6290 = vmul.f32 %v6149, %v6226
        %v6291 = vmul.f32 %v6038, %v6227
        %v6292 = vmul.f32 %v6040, %v6228
        %v6293 = vmul.f32 %v6151, %v6229
        %v6294 = vmul.f32 %v6153, %v6230
        %v6295 = vmul.f32 %v6044, %v6231
        %v6296 = vmul.f32 %v6046, %v6232
        %v6297 = vmul.f32 %v6157, %v6233
        %v6298 = vmul.f32 %v6159, %v6234
        %v6299 = vmul.f32 %v6048, %v6235
        %v6300 = vmul.f32 %v6050, %v6236
        %v6301 = vmul.f32 %v6161, %v6237
        %v6302 = vmul.f32 %v6163, %v6238
        %v6303 = vmul.f32 %v6054, %v6239
        %v6304 = vmul.f32 %v6056, %v6240
        %v6305 = vmul.f32 %v6167, %v6241
        %v6306 = vmul.f32 %v6169, %v6242
        %v6307 = vmul.f32 %v6058, %v6243
        %v6308 = vmul.f32 %v6060, %v6244
        %v6309 = vmul.f32 %v6171, %v6245
        %v6310 = vmul.f32 %v6173, %v6246
        %v6311 = vmul.f32 %v6064, %v6247
        %v6312 = vmul.f32 %v6066, %v6248
        %v6313 = vmul.f32 %v6177, %v6249
        %v6314 = vmul.f32 %v6179, %v6250
        %v6315 = vmul.f32 %v6068, %v6251
        %v6316 = vmul.f32 %v6070, %v6252
        %v6317 = vmul.f32 %v6181, %v6253
        %v6318 = vmul.f32 %v6183, %v6254
        %v6319 = vmul.f32 %v6074, %v6255
        %v6320 = vmul.f32 %v6076, %v6256
        %v6321 = vmul.f32 %v6187, %v6257
        %v6322 = vmul.f32 %v6189, %v6258
        %v6323 = vmul.f32 %v6078, %v6259
        %v6324 = vmul.f32 %v6080, %v6260
        %v6325 = vmul.f32 %v6191, %v6261
        %v6326 = vmul.f32 %v6193, %v6262
        %v6327 = vmul.f32 %v6084, %v6263
        %v6328 = vmul.f32 %v6086, %v6264
        %v6329 = vmul.f32 %v6197, %v6265
        %v6330 = vmul.f32 %v6199, %v6266
        %v6331 = vmul.f32 %v6088, %v6267
        %v6332 = vmul.f32 %v6090, %v6268
        %v6333 = vmul.f32 %v6201, %v6269
        %v6334 = vmul.f32 %v6203, %v6270
        %v6335 = vmul.f32 %v6094, %v6271
        %v6336 = vmul.f32 %v6096, %v6272
        %v6337 = vmul.f32 %v6207, %v6273
        %v6338 = vmul.f32 %v6209, %v6274
        %v6339 = vmul.f32 %v6098, %v6275
        %v6340 = vmul.f32 %v6100, %v6276
        %v6341 = vmul.f32 %v6211, %v6277
        %v6342 = vmul.f32 %v6213, %v6278
        %v6343 = vmul.f32 %v6279, 0.044715
        %v6344 = vmul.f32 %v6280, 0.044715
        %v6345 = vmul.f32 %v6281, 0.044715
        %v6346 = vmul.f32 %v6282, 0.044715
        %v6347 = vmul.f32 %v6283, 0.044715
        %v6348 = vmul.f32 %v6284, 0.044715
        %v6349 = vmul.f32 %v6285, 0.044715
        %v6350 = vmul.f32 %v6286, 0.044715
        %v6351 = vmul.f32 %v6287, 0.044715
        %v6352 = vmul.f32 %v6288, 0.044715
        %v6353 = vmul.f32 %v6289, 0.044715
        %v6354 = vmul.f32 %v6290, 0.044715
        %v6355 = vmul.f32 %v6291, 0.044715
        %v6356 = vmul.f32 %v6292, 0.044715
        %v6357 = vmul.f32 %v6293, 0.044715
        %v6358 = vmul.f32 %v6294, 0.044715
        %v6359 = vmul.f32 %v6295, 0.044715
        %v6360 = vmul.f32 %v6296, 0.044715
        %v6361 = vmul.f32 %v6297, 0.044715
        %v6362 = vmul.f32 %v6298, 0.044715
        %v6363 = vmul.f32 %v6299, 0.044715
        %v6364 = vmul.f32 %v6300, 0.044715
        %v6365 = vmul.f32 %v6301, 0.044715
        %v6366 = vmul.f32 %v6302, 0.044715
        %v6367 = vmul.f32 %v6303, 0.044715
        %v6368 = vmul.f32 %v6304, 0.044715
        %v6369 = vmul.f32 %v6305, 0.044715
        %v6370 = vmul.f32 %v6306, 0.044715
        %v6371 = vmul.f32 %v6307, 0.044715
        %v6372 = vmul.f32 %v6308, 0.044715
        %v6373 = vmul.f32 %v6309, 0.044715
        %v6374 = vmul.f32 %v6310, 0.044715
        %v6375 = vmul.f32 %v6311, 0.044715
        %v6376 = vmul.f32 %v6312, 0.044715
        %v6377 = vmul.f32 %v6313, 0.044715
        %v6378 = vmul.f32 %v6314, 0.044715
        %v6379 = vmul.f32 %v6315, 0.044715
        %v6380 = vmul.f32 %v6316, 0.044715
        %v6381 = vmul.f32 %v6317, 0.044715
        %v6382 = vmul.f32 %v6318, 0.044715
        %v6383 = vmul.f32 %v6319, 0.044715
        %v6384 = vmul.f32 %v6320, 0.044715
        %v6385 = vmul.f32 %v6321, 0.044715
        %v6386 = vmul.f32 %v6322, 0.044715
        %v6387 = vmul.f32 %v6323, 0.044715
        %v6388 = vmul.f32 %v6324, 0.044715
        %v6389 = vmul.f32 %v6325, 0.044715
        %v6390 = vmul.f32 %v6326, 0.044715
        %v6391 = vmul.f32 %v6327, 0.044715
        %v6392 = vmul.f32 %v6328, 0.044715
        %v6393 = vmul.f32 %v6329, 0.044715
        %v6394 = vmul.f32 %v6330, 0.044715
        %v6395 = vmul.f32 %v6331, 0.044715
        %v6396 = vmul.f32 %v6332, 0.044715
        %v6397 = vmul.f32 %v6333, 0.044715
        %v6398 = vmul.f32 %v6334, 0.044715
        %v6399 = vmul.f32 %v6335, 0.044715
        %v6400 = vmul.f32 %v6336, 0.044715
        %v6401 = vmul.f32 %v6337, 0.044715
        %v6402 = vmul.f32 %v6338, 0.044715
        %v6403 = vmul.f32 %v6339, 0.044715
        %v6404 = vmul.f32 %v6340, 0.044715
        %v6405 = vmul.f32 %v6341, 0.044715
        %v6406 = vmul.f32 %v6342, 0.044715
        %v6407 = vadd.f32 %v6024, %v6343
        %v6408 = vadd.f32 %v6026, %v6344
        %v6409 = vadd.f32 %v6137, %v6345
        %v6410 = vadd.f32 %v6139, %v6346
        %v6411 = vadd.f32 %v6028, %v6347
        %v6412 = vadd.f32 %v6030, %v6348
        %v6413 = vadd.f32 %v6141, %v6349
        %v6414 = vadd.f32 %v6143, %v6350
        %v6415 = vadd.f32 %v6034, %v6351
        %v6416 = vadd.f32 %v6036, %v6352
        %v6417 = vadd.f32 %v6147, %v6353
        %v6418 = vadd.f32 %v6149, %v6354
        %v6419 = vadd.f32 %v6038, %v6355
        %v6420 = vadd.f32 %v6040, %v6356
        %v6421 = vadd.f32 %v6151, %v6357
        %v6422 = vadd.f32 %v6153, %v6358
        %v6423 = vadd.f32 %v6044, %v6359
        %v6424 = vadd.f32 %v6046, %v6360
        %v6425 = vadd.f32 %v6157, %v6361
        %v6426 = vadd.f32 %v6159, %v6362
        %v6427 = vadd.f32 %v6048, %v6363
        %v6428 = vadd.f32 %v6050, %v6364
        %v6429 = vadd.f32 %v6161, %v6365
        %v6430 = vadd.f32 %v6163, %v6366
        %v6431 = vadd.f32 %v6054, %v6367
        %v6432 = vadd.f32 %v6056, %v6368
        %v6433 = vadd.f32 %v6167, %v6369
        %v6434 = vadd.f32 %v6169, %v6370
        %v6435 = vadd.f32 %v6058, %v6371
        %v6436 = vadd.f32 %v6060, %v6372
        %v6437 = vadd.f32 %v6171, %v6373
        %v6438 = vadd.f32 %v6173, %v6374
        %v6439 = vadd.f32 %v6064, %v6375
        %v6440 = vadd.f32 %v6066, %v6376
        %v6441 = vadd.f32 %v6177, %v6377
        %v6442 = vadd.f32 %v6179, %v6378
        %v6443 = vadd.f32 %v6068, %v6379
        %v6444 = vadd.f32 %v6070, %v6380
        %v6445 = vadd.f32 %v6181, %v6381
        %v6446 = vadd.f32 %v6183, %v6382
        %v6447 = vadd.f32 %v6074, %v6383
        %v6448 = vadd.f32 %v6076, %v6384
        %v6449 = vadd.f32 %v6187, %v6385
        %v6450 = vadd.f32 %v6189, %v6386
        %v6451 = vadd.f32 %v6078, %v6387
        %v6452 = vadd.f32 %v6080, %v6388
        %v6453 = vadd.f32 %v6191, %v6389
        %v6454 = vadd.f32 %v6193, %v6390
        %v6455 = vadd.f32 %v6084, %v6391
        %v6456 = vadd.f32 %v6086, %v6392
        %v6457 = vadd.f32 %v6197, %v6393
        %v6458 = vadd.f32 %v6199, %v6394
        %v6459 = vadd.f32 %v6088, %v6395
        %v6460 = vadd.f32 %v6090, %v6396
        %v6461 = vadd.f32 %v6201, %v6397
        %v6462 = vadd.f32 %v6203, %v6398
        %v6463 = vadd.f32 %v6094, %v6399
        %v6464 = vadd.f32 %v6096, %v6400
        %v6465 = vadd.f32 %v6207, %v6401
        %v6466 = vadd.f32 %v6209, %v6402
        %v6467 = vadd.f32 %v6098, %v6403
        %v6468 = vadd.f32 %v6100, %v6404
        %v6469 = vadd.f32 %v6211, %v6405
        %v6470 = vadd.f32 %v6213, %v6406
        %v6471 = vmul.f32 %v6407, 0.7978846
        %v6472 = vmul.f32 %v6408, 0.7978846
        %v6473 = vmul.f32 %v6409, 0.7978846
        %v6474 = vmul.f32 %v6410, 0.7978846
        %v6475 = vmul.f32 %v6411, 0.7978846
        %v6476 = vmul.f32 %v6412, 0.7978846
        %v6477 = vmul.f32 %v6413, 0.7978846
        %v6478 = vmul.f32 %v6414, 0.7978846
        %v6479 = vmul.f32 %v6415, 0.7978846
        %v6480 = vmul.f32 %v6416, 0.7978846
        %v6481 = vmul.f32 %v6417, 0.7978846
        %v6482 = vmul.f32 %v6418, 0.7978846
        %v6483 = vmul.f32 %v6419, 0.7978846
        %v6484 = vmul.f32 %v6420, 0.7978846
        %v6485 = vmul.f32 %v6421, 0.7978846
        %v6486 = vmul.f32 %v6422, 0.7978846
        %v6487 = vmul.f32 %v6423, 0.7978846
        %v6488 = vmul.f32 %v6424, 0.7978846
        %v6489 = vmul.f32 %v6425, 0.7978846
        %v6490 = vmul.f32 %v6426, 0.7978846
        %v6491 = vmul.f32 %v6427, 0.7978846
        %v6492 = vmul.f32 %v6428, 0.7978846
        %v6493 = vmul.f32 %v6429, 0.7978846
        %v6494 = vmul.f32 %v6430, 0.7978846
        %v6495 = vmul.f32 %v6431, 0.7978846
        %v6496 = vmul.f32 %v6432, 0.7978846
        %v6497 = vmul.f32 %v6433, 0.7978846
        %v6498 = vmul.f32 %v6434, 0.7978846
        %v6499 = vmul.f32 %v6435, 0.7978846
        %v6500 = vmul.f32 %v6436, 0.7978846
        %v6501 = vmul.f32 %v6437, 0.7978846
        %v6502 = vmul.f32 %v6438, 0.7978846
        %v6503 = vmul.f32 %v6439, 0.7978846
        %v6504 = vmul.f32 %v6440, 0.7978846
        %v6505 = vmul.f32 %v6441, 0.7978846
        %v6506 = vmul.f32 %v6442, 0.7978846
        %v6507 = vmul.f32 %v6443, 0.7978846
        %v6508 = vmul.f32 %v6444, 0.7978846
        %v6509 = vmul.f32 %v6445, 0.7978846
        %v6510 = vmul.f32 %v6446, 0.7978846
        %v6511 = vmul.f32 %v6447, 0.7978846
        %v6512 = vmul.f32 %v6448, 0.7978846
        %v6513 = vmul.f32 %v6449, 0.7978846
        %v6514 = vmul.f32 %v6450, 0.7978846
        %v6515 = vmul.f32 %v6451, 0.7978846
        %v6516 = vmul.f32 %v6452, 0.7978846
        %v6517 = vmul.f32 %v6453, 0.7978846
        %v6518 = vmul.f32 %v6454, 0.7978846
        %v6519 = vmul.f32 %v6455, 0.7978846
        %v6520 = vmul.f32 %v6456, 0.7978846
        %v6521 = vmul.f32 %v6457, 0.7978846
        %v6522 = vmul.f32 %v6458, 0.7978846
        %v6523 = vmul.f32 %v6459, 0.7978846
        %v6524 = vmul.f32 %v6460, 0.7978846
        %v6525 = vmul.f32 %v6461, 0.7978846
        %v6526 = vmul.f32 %v6462, 0.7978846
        %v6527 = vmul.f32 %v6463, 0.7978846
        %v6528 = vmul.f32 %v6464, 0.7978846
        %v6529 = vmul.f32 %v6465, 0.7978846
        %v6530 = vmul.f32 %v6466, 0.7978846
        %v6531 = vmul.f32 %v6467, 0.7978846
        %v6532 = vmul.f32 %v6468, 0.7978846
        %v6533 = vmul.f32 %v6469, 0.7978846
        %v6534 = vmul.f32 %v6470, 0.7978846
        %v6535 = vtanh.pop %v6471
        %v6536 = vtanh.pop %v6472
        %v6537 = vtanh.pop %v6473
        %v6538 = vtanh.pop %v6474
        %v6539 = vtanh.pop %v6475
        %v6540 = vtanh.pop %v6476
        %v6541 = vtanh.pop %v6477
        %v6542 = vtanh.pop %v6478
        %v6543 = vtanh.pop %v6479
        %v6544 = vtanh.pop %v6480
        %v6545 = vtanh.pop %v6481
        %v6546 = vtanh.pop %v6482
        %v6547 = vtanh.pop %v6483
        %v6548 = vtanh.pop %v6484
        %v6549 = vtanh.pop %v6485
        %v6550 = vtanh.pop %v6486
        %v6551 = vtanh.pop %v6487
        %v6552 = vtanh.pop %v6488
        %v6553 = vtanh.pop %v6489
        %v6554 = vtanh.pop %v6490
        %v6555 = vtanh.pop %v6491
        %v6556 = vtanh.pop %v6492
        %v6557 = vtanh.pop %v6493
        %v6558 = vtanh.pop %v6494
        %v6559 = vtanh.pop %v6495
        %v6560 = vtanh.pop %v6496
        %v6561 = vtanh.pop %v6497
        %v6562 = vtanh.pop %v6498
        %v6563 = vtanh.pop %v6499
        %v6564 = vtanh.pop %v6500
        %v6565 = vtanh.pop %v6501
        %v6566 = vtanh.pop %v6502
        %v6567 = vtanh.pop %v6503
        %v6568 = vtanh.pop %v6504
        %v6569 = vtanh.pop %v6505
        %v6570 = vtanh.pop %v6506
        %v6571 = vtanh.pop %v6507
        %v6572 = vtanh.pop %v6508
        %v6573 = vtanh.pop %v6509
        %v6574 = vtanh.pop %v6510
        %v6575 = vtanh.pop %v6511
        %v6576 = vtanh.pop %v6512
        %v6577 = vtanh.pop %v6513
        %v6578 = vtanh.pop %v6514
        %v6579 = vtanh.pop %v6515
        %v6580 = vtanh.pop %v6516
        %v6581 = vtanh.pop %v6517
        %v6582 = vtanh.pop %v6518
        %v6583 = vtanh.pop %v6519
        %v6584 = vtanh.pop %v6520
        %v6585 = vtanh.pop %v6521
        %v6586 = vtanh.pop %v6522
        %v6587 = vtanh.pop %v6523
        %v6588 = vtanh.pop %v6524
        %v6589 = vtanh.pop %v6525
        %v6590 = vtanh.pop %v6526
        %v6591 = vtanh.pop %v6527
        %v6592 = vtanh.pop %v6528
        %v6593 = vtanh.pop %v6529
        %v6594 = vtanh.pop %v6530
        %v6595 = vtanh.pop %v6531
        %v6596 = vtanh.pop %v6532
        %v6597 = vtanh.pop %v6533
        %v6598 = vtanh.pop %v6534
        %v6599 = vadd.f32 %v6535, 1.0
        %v6600 = vadd.f32 %v6536, 1.0
        %v6601 = vadd.f32 %v6537, 1.0
        %v6602 = vadd.f32 %v6538, 1.0
        %v6603 = vadd.f32 %v6539, 1.0
        %v6604 = vadd.f32 %v6540, 1.0
        %v6605 = vadd.f32 %v6541, 1.0
        %v6606 = vadd.f32 %v6542, 1.0
        %v6607 = vadd.f32 %v6543, 1.0
        %v6608 = vadd.f32 %v6544, 1.0
        %v6609 = vadd.f32 %v6545, 1.0
        %v6610 = vadd.f32 %v6546, 1.0
        %v6611 = vadd.f32 %v6547, 1.0
        %v6612 = vadd.f32 %v6548, 1.0
        %v6613 = vadd.f32 %v6549, 1.0
        %v6614 = vadd.f32 %v6550, 1.0
        %v6615 = vadd.f32 %v6551, 1.0
        %v6616 = vadd.f32 %v6552, 1.0
        %v6617 = vadd.f32 %v6553, 1.0
        %v6618 = vadd.f32 %v6554, 1.0
        %v6619 = vadd.f32 %v6555, 1.0
        %v6620 = vadd.f32 %v6556, 1.0
        %v6621 = vadd.f32 %v6557, 1.0
        %v6622 = vadd.f32 %v6558, 1.0
        %v6623 = vadd.f32 %v6559, 1.0
        %v6624 = vadd.f32 %v6560, 1.0
        %v6625 = vadd.f32 %v6561, 1.0
        %v6626 = vadd.f32 %v6562, 1.0
        %v6627 = vadd.f32 %v6563, 1.0
        %v6628 = vadd.f32 %v6564, 1.0
        %v6629 = vadd.f32 %v6565, 1.0
        %v6630 = vadd.f32 %v6566, 1.0
        %v6631 = vadd.f32 %v6567, 1.0
        %v6632 = vadd.f32 %v6568, 1.0
        %v6633 = vadd.f32 %v6569, 1.0
        %v6634 = vadd.f32 %v6570, 1.0
        %v6635 = vadd.f32 %v6571, 1.0
        %v6636 = vadd.f32 %v6572, 1.0
        %v6637 = vadd.f32 %v6573, 1.0
        %v6638 = vadd.f32 %v6574, 1.0
        %v6639 = vadd.f32 %v6575, 1.0
        %v6640 = vadd.f32 %v6576, 1.0
        %v6641 = vadd.f32 %v6577, 1.0
        %v6642 = vadd.f32 %v6578, 1.0
        %v6643 = vadd.f32 %v6579, 1.0
        %v6644 = vadd.f32 %v6580, 1.0
        %v6645 = vadd.f32 %v6581, 1.0
        %v6646 = vadd.f32 %v6582, 1.0
        %v6647 = vadd.f32 %v6583, 1.0
        %v6648 = vadd.f32 %v6584, 1.0
        %v6649 = vadd.f32 %v6585, 1.0
        %v6650 = vadd.f32 %v6586, 1.0
        %v6651 = vadd.f32 %v6587, 1.0
        %v6652 = vadd.f32 %v6588, 1.0
        %v6653 = vadd.f32 %v6589, 1.0
        %v6654 = vadd.f32 %v6590, 1.0
        %v6655 = vadd.f32 %v6591, 1.0
        %v6656 = vadd.f32 %v6592, 1.0
        %v6657 = vadd.f32 %v6593, 1.0
        %v6658 = vadd.f32 %v6594, 1.0
        %v6659 = vadd.f32 %v6595, 1.0
        %v6660 = vadd.f32 %v6596, 1.0
        %v6661 = vadd.f32 %v6597, 1.0
        %v6662 = vadd.f32 %v6598, 1.0
        %v6663 = vmul.f32 %v6599, 0.5
        %v6664 = vmul.f32 %v6600, 0.5
        %v6665 = vmul.f32 %v6601, 0.5
        %v6666 = vmul.f32 %v6602, 0.5
        %v6667 = vmul.f32 %v6603, 0.5
        %v6668 = vmul.f32 %v6604, 0.5
        %v6669 = vmul.f32 %v6605, 0.5
        %v6670 = vmul.f32 %v6606, 0.5
        %v6671 = vmul.f32 %v6607, 0.5
        %v6672 = vmul.f32 %v6608, 0.5
        %v6673 = vmul.f32 %v6609, 0.5
        %v6674 = vmul.f32 %v6610, 0.5
        %v6675 = vmul.f32 %v6611, 0.5
        %v6676 = vmul.f32 %v6612, 0.5
        %v6677 = vmul.f32 %v6613, 0.5
        %v6678 = vmul.f32 %v6614, 0.5
        %v6679 = vmul.f32 %v6615, 0.5
        %v6680 = vmul.f32 %v6616, 0.5
        %v6681 = vmul.f32 %v6617, 0.5
        %v6682 = vmul.f32 %v6618, 0.5
        %v6683 = vmul.f32 %v6619, 0.5
        %v6684 = vmul.f32 %v6620, 0.5
        %v6685 = vmul.f32 %v6621, 0.5
        %v6686 = vmul.f32 %v6622, 0.5
        %v6687 = vmul.f32 %v6623, 0.5
        %v6688 = vmul.f32 %v6624, 0.5
        %v6689 = vmul.f32 %v6625, 0.5
        %v6690 = vmul.f32 %v6626, 0.5
        %v6691 = vmul.f32 %v6627, 0.5
        %v6692 = vmul.f32 %v6628, 0.5
        %v6693 = vmul.f32 %v6629, 0.5
        %v6694 = vmul.f32 %v6630, 0.5
        %v6695 = vmul.f32 %v6631, 0.5
        %v6696 = vmul.f32 %v6632, 0.5
        %v6697 = vmul.f32 %v6633, 0.5
        %v6698 = vmul.f32 %v6634, 0.5
        %v6699 = vmul.f32 %v6635, 0.5
        %v6700 = vmul.f32 %v6636, 0.5
        %v6701 = vmul.f32 %v6637, 0.5
        %v6702 = vmul.f32 %v6638, 0.5
        %v6703 = vmul.f32 %v6639, 0.5
        %v6704 = vmul.f32 %v6640, 0.5
        %v6705 = vmul.f32 %v6641, 0.5
        %v6706 = vmul.f32 %v6642, 0.5
        %v6707 = vmul.f32 %v6643, 0.5
        %v6708 = vmul.f32 %v6644, 0.5
        %v6709 = vmul.f32 %v6645, 0.5
        %v6710 = vmul.f32 %v6646, 0.5
        %v6711 = vmul.f32 %v6647, 0.5
        %v6712 = vmul.f32 %v6648, 0.5
        %v6713 = vmul.f32 %v6649, 0.5
        %v6714 = vmul.f32 %v6650, 0.5
        %v6715 = vmul.f32 %v6651, 0.5
        %v6716 = vmul.f32 %v6652, 0.5
        %v6717 = vmul.f32 %v6653, 0.5
        %v6718 = vmul.f32 %v6654, 0.5
        %v6719 = vmul.f32 %v6655, 0.5
        %v6720 = vmul.f32 %v6656, 0.5
        %v6721 = vmul.f32 %v6657, 0.5
        %v6722 = vmul.f32 %v6658, 0.5
        %v6723 = vmul.f32 %v6659, 0.5
        %v6724 = vmul.f32 %v6660, 0.5
        %v6725 = vmul.f32 %v6661, 0.5
        %v6726 = vmul.f32 %v6662, 0.5
        %v6727 = vmul.f32 %v6024, %v6663
        %v6728 = vmul.f32 %v6026, %v6664
        %v6729 = vmul.f32 %v6137, %v6665
        %v6730 = vmul.f32 %v6139, %v6666
        %v6731 = vmul.f32 %v6028, %v6667
        %v6732 = vmul.f32 %v6030, %v6668
        %v6733 = vmul.f32 %v6141, %v6669
        %v6734 = vmul.f32 %v6143, %v6670
        %v6735 = vmul.f32 %v6034, %v6671
        %v6736 = vmul.f32 %v6036, %v6672
        %v6737 = vmul.f32 %v6147, %v6673
        %v6738 = vmul.f32 %v6149, %v6674
        %v6739 = vmul.f32 %v6038, %v6675
        %v6740 = vmul.f32 %v6040, %v6676
        %v6741 = vmul.f32 %v6151, %v6677
        %v6742 = vmul.f32 %v6153, %v6678
        %v6743 = vmul.f32 %v6044, %v6679
        %v6744 = vmul.f32 %v6046, %v6680
        %v6745 = vmul.f32 %v6157, %v6681
        %v6746 = vmul.f32 %v6159, %v6682
        %v6747 = vmul.f32 %v6048, %v6683
        %v6748 = vmul.f32 %v6050, %v6684
        %v6749 = vmul.f32 %v6161, %v6685
        %v6750 = vmul.f32 %v6163, %v6686
        %v6751 = vmul.f32 %v6054, %v6687
        %v6752 = vmul.f32 %v6056, %v6688
        %v6753 = vmul.f32 %v6167, %v6689
        %v6754 = vmul.f32 %v6169, %v6690
        %v6755 = vmul.f32 %v6058, %v6691
        %v6756 = vmul.f32 %v6060, %v6692
        %v6757 = vmul.f32 %v6171, %v6693
        %v6758 = vmul.f32 %v6173, %v6694
        %v6759 = vmul.f32 %v6064, %v6695
        %v6760 = vmul.f32 %v6066, %v6696
        %v6761 = vmul.f32 %v6177, %v6697
        %v6762 = vmul.f32 %v6179, %v6698
        %v6763 = vmul.f32 %v6068, %v6699
        %v6764 = vmul.f32 %v6070, %v6700
        %v6765 = vmul.f32 %v6181, %v6701
        %v6766 = vmul.f32 %v6183, %v6702
        %v6767 = vmul.f32 %v6074, %v6703
        %v6768 = vmul.f32 %v6076, %v6704
        %v6769 = vmul.f32 %v6187, %v6705
        %v6770 = vmul.f32 %v6189, %v6706
        %v6771 = vmul.f32 %v6078, %v6707
        %v6772 = vmul.f32 %v6080, %v6708
        %v6773 = vmul.f32 %v6191, %v6709
        %v6774 = vmul.f32 %v6193, %v6710
        %v6775 = vmul.f32 %v6084, %v6711
        %v6776 = vmul.f32 %v6086, %v6712
        %v6777 = vmul.f32 %v6197, %v6713
        %v6778 = vmul.f32 %v6199, %v6714
        %v6779 = vmul.f32 %v6088, %v6715
        %v6780 = vmul.f32 %v6090, %v6716
        %v6781 = vmul.f32 %v6201, %v6717
        %v6782 = vmul.f32 %v6203, %v6718
        %v6783 = vmul.f32 %v6094, %v6719
        %v6784 = vmul.f32 %v6096, %v6720
        %v6785 = vmul.f32 %v6207, %v6721
        %v6786 = vmul.f32 %v6209, %v6722
        %v6787 = vmul.f32 %v6098, %v6723
        %v6788 = vmul.f32 %v6100, %v6724
        %v6789 = vmul.f32 %v6211, %v6725
        %v6790 = vmul.f32 %v6213, %v6726
        %v6791 = vpack.c.bf16 %v6731, %v6727
        %v6792 = vpack.c.bf16 %v6732, %v6728
        %v6793 = vpack.c.bf16 %v6733, %v6729
        %v6794 = vpack.c.bf16 %v6734, %v6730
        %v6795 = vpack.c.bf16 %v6739, %v6735
        %v6796 = vpack.c.bf16 %v6740, %v6736
        %v6797 = vpack.c.bf16 %v6741, %v6737
        %v6798 = vpack.c.bf16 %v6742, %v6738
        %v6799 = vpack.c.bf16 %v6747, %v6743
        %v6800 = vpack.c.bf16 %v6748, %v6744
        %v6801 = vpack.c.bf16 %v6749, %v6745
        %v6802 = vpack.c.bf16 %v6750, %v6746
        %v6803 = vpack.c.bf16 %v6755, %v6751
        %v6804 = vpack.c.bf16 %v6756, %v6752
        %v6805 = vpack.c.bf16 %v6757, %v6753
        %v6806 = vpack.c.bf16 %v6758, %v6754
        %v6807 = vpack.c.bf16 %v6763, %v6759
        %v6808 = vpack.c.bf16 %v6764, %v6760
        %v6809 = vpack.c.bf16 %v6765, %v6761
        %v6810 = vpack.c.bf16 %v6766, %v6762
        %v6811 = vpack.c.bf16 %v6771, %v6767
        %v6812 = vpack.c.bf16 %v6772, %v6768
        %v6813 = vpack.c.bf16 %v6773, %v6769
        %v6814 = vpack.c.bf16 %v6774, %v6770
        %v6815 = vpack.c.bf16 %v6779, %v6775
        %v6816 = vpack.c.bf16 %v6780, %v6776
        %v6817 = vpack.c.bf16 %v6781, %v6777
        %v6818 = vpack.c.bf16 %v6782, %v6778
        %v6819 = vpack.c.bf16 %v6787, %v6783
        %v6820 = vpack.c.bf16 %v6788, %v6784
        %v6821 = vpack.c.bf16 %v6789, %v6785
        %v6822 = vpack.c.bf16 %v6790, %v6786
        %v6823 = vld [vmem:[#allocation13 + $0x200] sm:$0xff]
        %v6824 = vld [vmem:[#allocation13 + $0x208] sm:$0xff]
        %v6825 = vld [vmem:[#allocation13 + $0x210] sm:$0xff]
        %v6826 = vld [vmem:[#allocation13 + $0x218] sm:$0xff]
        %v6827 = vld [vmem:[#allocation13 + $0x220] sm:$0xff]
        %v6828 = vld [vmem:[#allocation13 + $0x228] sm:$0xff]
        %v6829 = vld [vmem:[#allocation13 + $0x230] sm:$0xff]
        %v6830 = vld [vmem:[#allocation13 + $0x238] sm:$0xff]
        %v6831 = vld [vmem:[#allocation13 + $0x240] sm:$0xff]
        %v6832 = vld [vmem:[#allocation13 + $0x248] sm:$0xff]
        %v6833 = vld [vmem:[#allocation13 + $0x250] sm:$0xff]
        %v6834 = vld [vmem:[#allocation13 + $0x258] sm:$0xff]
        %v6835 = vld [vmem:[#allocation13 + $0x260] sm:$0xff]
        %v6836 = vld [vmem:[#allocation13 + $0x268] sm:$0xff]
        %v6837 = vld [vmem:[#allocation13 + $0x270] sm:$0xff]
        %v6838 = vld [vmem:[#allocation13 + $0x278] sm:$0xff]
        %v6839 = vld [vmem:[#allocation13 + $0x280] sm:$0xff]
        %v6840 = vld [vmem:[#allocation13 + $0x288] sm:$0xff]
        %v6841 = vld [vmem:[#allocation13 + $0x290] sm:$0xff]
        %v6842 = vld [vmem:[#allocation13 + $0x298] sm:$0xff]
        %v6843 = vld [vmem:[#allocation13 + $0x2a0] sm:$0xff]
        %v6844 = vld [vmem:[#allocation13 + $0x2a8] sm:$0xff]
        %v6845 = vld [vmem:[#allocation13 + $0x2b0] sm:$0xff]
        %v6846 = vld [vmem:[#allocation13 + $0x2b8] sm:$0xff]
        %v6847 = vld [vmem:[#allocation13 + $0x2c0] sm:$0xff]
        %v6848 = vld [vmem:[#allocation13 + $0x2c8] sm:$0xff]
        %v6849 = vld [vmem:[#allocation13 + $0x2d0] sm:$0xff]
        %v6850 = vld [vmem:[#allocation13 + $0x2d8] sm:$0xff]
        %v6851 = vld [vmem:[#allocation13 + $0x2e0] sm:$0xff]
        %v6852 = vld [vmem:[#allocation13 + $0x2e8] sm:$0xff]
        %v6853 = vld [vmem:[#allocation13 + $0x2f0] sm:$0xff]
        %v6854 = vld [vmem:[#allocation13 + $0x2f8] sm:$0xff]
        %v6855 = vld [vmem:[#allocation13 + $0x300] sm:$0xff]
        %v6856 = vld [vmem:[#allocation13 + $0x308] sm:$0xff]
        %v6857 = vld [vmem:[#allocation13 + $0x310] sm:$0xff]
        %v6858 = vld [vmem:[#allocation13 + $0x318] sm:$0xff]
        %v6859 = vld [vmem:[#allocation13 + $0x320] sm:$0xff]
        %v6860 = vld [vmem:[#allocation13 + $0x328] sm:$0xff]
        %v6861 = vld [vmem:[#allocation13 + $0x330] sm:$0xff]
        %v6862 = vld [vmem:[#allocation13 + $0x338] sm:$0xff]
        %v6863 = vld [vmem:[#allocation13 + $0x340] sm:$0xff]
        %v6864 = vld [vmem:[#allocation13 + $0x348] sm:$0xff]
        %v6865 = vld [vmem:[#allocation13 + $0x350] sm:$0xff]
        %v6866 = vld [vmem:[#allocation13 + $0x358] sm:$0xff]
        %v6867 = vld [vmem:[#allocation13 + $0x360] sm:$0xff]
        %v6868 = vld [vmem:[#allocation13 + $0x368] sm:$0xff]
        %v6869 = vld [vmem:[#allocation13 + $0x370] sm:$0xff]
        %v6870 = vld [vmem:[#allocation13 + $0x378] sm:$0xff]
        %v6871 = vld [vmem:[#allocation13 + $0x380] sm:$0xff]
        %v6872 = vld [vmem:[#allocation13 + $0x388] sm:$0xff]
        %v6873 = vld [vmem:[#allocation13 + $0x390] sm:$0xff]
        %v6874 = vld [vmem:[#allocation13 + $0x398] sm:$0xff]
        %v6875 = vld [vmem:[#allocation13 + $0x3a0] sm:$0xff]
        %v6876 = vld [vmem:[#allocation13 + $0x3a8] sm:$0xff]
        %v6877 = vld [vmem:[#allocation13 + $0x3b0] sm:$0xff]
        %v6878 = vld [vmem:[#allocation13 + $0x3b8] sm:$0xff]
        %v6879 = vld [vmem:[#allocation13 + $0x3c0] sm:$0xff]
        %v6880 = vld [vmem:[#allocation13 + $0x3c8] sm:$0xff]
        %v6881 = vld [vmem:[#allocation13 + $0x3d0] sm:$0xff]
        %v6882 = vld [vmem:[#allocation13 + $0x3d8] sm:$0xff]
        %v6883 = vld [vmem:[#allocation13 + $0x3e0] sm:$0xff]
        %v6884 = vld [vmem:[#allocation13 + $0x3e8] sm:$0xff]
        %v6885 = vld [vmem:[#allocation13 + $0x3f0] sm:$0xff]
        %v6886 = vld [vmem:[#allocation13 + $0x3f8] sm:$0xff]
        %v6951 = vunpack.c.l.b16 %v6823
        %v6952 = vunpack.c.h.b16 %v6823
        %v6953 = vunpack.c.l.b16 %v6824
        %v6954 = vunpack.c.h.b16 %v6824
        %v6955 = vunpack.c.l.b16 %v6825
        %v6956 = vunpack.c.h.b16 %v6825
        %v6957 = vunpack.c.l.b16 %v6826
        %v6958 = vunpack.c.h.b16 %v6826
        %v6959 = vunpack.c.l.b16 %v6827
        %v6960 = vunpack.c.h.b16 %v6827
        %v6961 = vunpack.c.l.b16 %v6828
        %v6962 = vunpack.c.h.b16 %v6828
        %v6963 = vunpack.c.l.b16 %v6829
        %v6964 = vunpack.c.h.b16 %v6829
        %v6965 = vunpack.c.l.b16 %v6830
        %v6966 = vunpack.c.h.b16 %v6830
        %v6967 = vunpack.c.l.b16 %v6831
        %v6968 = vunpack.c.h.b16 %v6831
        %v6969 = vunpack.c.l.b16 %v6832
        %v6970 = vunpack.c.h.b16 %v6832
        %v6971 = vunpack.c.l.b16 %v6833
        %v6972 = vunpack.c.h.b16 %v6833
        %v6973 = vunpack.c.l.b16 %v6834
        %v6974 = vunpack.c.h.b16 %v6834
        %v6975 = vunpack.c.l.b16 %v6835
        %v6976 = vunpack.c.h.b16 %v6835
        %v6977 = vunpack.c.l.b16 %v6836
        %v6978 = vunpack.c.h.b16 %v6836
        %v6979 = vunpack.c.l.b16 %v6837
        %v6980 = vunpack.c.h.b16 %v6837
        %v6981 = vunpack.c.l.b16 %v6838
        %v6982 = vunpack.c.h.b16 %v6838
        %v6983 = vunpack.c.l.b16 %v6839
        %v6984 = vunpack.c.h.b16 %v6839
        %v6985 = vunpack.c.l.b16 %v6840
        %v6986 = vunpack.c.h.b16 %v6840
        %v6987 = vunpack.c.l.b16 %v6841
        %v6988 = vunpack.c.h.b16 %v6841
        %v6989 = vunpack.c.l.b16 %v6842
        %v6990 = vunpack.c.h.b16 %v6842
        %v6991 = vunpack.c.l.b16 %v6843
        %v6992 = vunpack.c.h.b16 %v6843
        %v6993 = vunpack.c.l.b16 %v6844
        %v6994 = vunpack.c.h.b16 %v6844
        %v6995 = vunpack.c.l.b16 %v6845
        %v6996 = vunpack.c.h.b16 %v6845
        %v6997 = vunpack.c.l.b16 %v6846
        %v6998 = vunpack.c.h.b16 %v6846
        %v6999 = vunpack.c.l.b16 %v6847
        %v7000 = vunpack.c.h.b16 %v6847
        %v7001 = vunpack.c.l.b16 %v6848
        %v7002 = vunpack.c.h.b16 %v6848
        %v7003 = vunpack.c.l.b16 %v6849
        %v7004 = vunpack.c.h.b16 %v6849
        %v7005 = vunpack.c.l.b16 %v6850
        %v7006 = vunpack.c.h.b16 %v6850
        %v7007 = vunpack.c.l.b16 %v6851
        %v7008 = vunpack.c.h.b16 %v6851
        %v7009 = vunpack.c.l.b16 %v6852
        %v7010 = vunpack.c.h.b16 %v6852
        %v7011 = vunpack.c.l.b16 %v6853
        %v7012 = vunpack.c.h.b16 %v6853
        %v7013 = vunpack.c.l.b16 %v6854
        %v7014 = vunpack.c.h.b16 %v6854
        %v7015 = vunpack.c.l.b16 %v6855
        %v7016 = vunpack.c.h.b16 %v6855
        %v7017 = vunpack.c.l.b16 %v6856
        %v7018 = vunpack.c.h.b16 %v6856
        %v7019 = vunpack.c.l.b16 %v6857
        %v7020 = vunpack.c.h.b16 %v6857
        %v7021 = vunpack.c.l.b16 %v6858
        %v7022 = vunpack.c.h.b16 %v6858
        %v7023 = vunpack.c.l.b16 %v6859
        %v7024 = vunpack.c.h.b16 %v6859
        %v7025 = vunpack.c.l.b16 %v6860
        %v7026 = vunpack.c.h.b16 %v6860
        %v7027 = vunpack.c.l.b16 %v6861
        %v7028 = vunpack.c.h.b16 %v6861
        %v7029 = vunpack.c.l.b16 %v6862
        %v7030 = vunpack.c.h.b16 %v6862
        %v7031 = vunpack.c.l.b16 %v6863
        %v7032 = vunpack.c.h.b16 %v6863
        %v7033 = vunpack.c.l.b16 %v6864
        %v7034 = vunpack.c.h.b16 %v6864
        %v7035 = vunpack.c.l.b16 %v6865
        %v7036 = vunpack.c.h.b16 %v6865
        %v7037 = vunpack.c.l.b16 %v6866
        %v7038 = vunpack.c.h.b16 %v6866
        %v7039 = vunpack.c.l.b16 %v6867
        %v7040 = vunpack.c.h.b16 %v6867
        %v7041 = vunpack.c.l.b16 %v6868
        %v7042 = vunpack.c.h.b16 %v6868
        %v7043 = vunpack.c.l.b16 %v6869
        %v7044 = vunpack.c.h.b16 %v6869
        %v7045 = vunpack.c.l.b16 %v6870
        %v7046 = vunpack.c.h.b16 %v6870
        %v7047 = vunpack.c.l.b16 %v6871
        %v7048 = vunpack.c.h.b16 %v6871
        %v7049 = vunpack.c.l.b16 %v6872
        %v7050 = vunpack.c.h.b16 %v6872
        %v7051 = vunpack.c.l.b16 %v6873
        %v7052 = vunpack.c.h.b16 %v6873
        %v7053 = vunpack.c.l.b16 %v6874
        %v7054 = vunpack.c.h.b16 %v6874
        %v7055 = vunpack.c.l.b16 %v6875
        %v7056 = vunpack.c.h.b16 %v6875
        %v7057 = vunpack.c.l.b16 %v6876
        %v7058 = vunpack.c.h.b16 %v6876
        %v7059 = vunpack.c.l.b16 %v6877
        %v7060 = vunpack.c.h.b16 %v6877
        %v7061 = vunpack.c.l.b16 %v6878
        %v7062 = vunpack.c.h.b16 %v6878
        %v7063 = vunpack.c.l.b16 %v6879
        %v7064 = vunpack.c.h.b16 %v6879
        %v7065 = vunpack.c.l.b16 %v6880
        %v7066 = vunpack.c.h.b16 %v6880
        %v7067 = vunpack.c.l.b16 %v6881
        %v7068 = vunpack.c.h.b16 %v6881
        %v7069 = vunpack.c.l.b16 %v6882
        %v7070 = vunpack.c.h.b16 %v6882
        %v7071 = vunpack.c.l.b16 %v6883
        %v7072 = vunpack.c.h.b16 %v6883
        %v7073 = vunpack.c.l.b16 %v6884
        %v7074 = vunpack.c.h.b16 %v6884
        %v7075 = vunpack.c.l.b16 %v6885
        %v7076 = vunpack.c.h.b16 %v6885
        %v7077 = vunpack.c.l.b16 %v6886
        %v7078 = vunpack.c.h.b16 %v6886
        %v7079 = vpack.c.b16 %v6953, %v6951
        %v7080 = vpack.c.b16 %v6954, %v6952
        %v7081 = vpack.c.b16 %v6957, %v6955
        %v7082 = vpack.c.b16 %v6958, %v6956
        %v7083 = vpack.c.b16 %v6961, %v6959
        %v7084 = vpack.c.b16 %v6962, %v6960
        %v7085 = vpack.c.b16 %v6965, %v6963
        %v7086 = vpack.c.b16 %v6966, %v6964
        %v7087 = vpack.c.b16 %v6969, %v6967
        %v7088 = vpack.c.b16 %v6970, %v6968
        %v7089 = vpack.c.b16 %v6973, %v6971
        %v7090 = vpack.c.b16 %v6974, %v6972
        %v7091 = vpack.c.b16 %v6977, %v6975
        %v7092 = vpack.c.b16 %v6978, %v6976
        %v7093 = vpack.c.b16 %v6981, %v6979
        %v7094 = vpack.c.b16 %v6982, %v6980
        %v7095 = vpack.c.b16 %v6985, %v6983
        %v7096 = vpack.c.b16 %v6986, %v6984
        %v7097 = vpack.c.b16 %v6989, %v6987
        %v7098 = vpack.c.b16 %v6990, %v6988
        %v7099 = vpack.c.b16 %v6993, %v6991
        %v7100 = vpack.c.b16 %v6994, %v6992
        %v7101 = vpack.c.b16 %v6997, %v6995
        %v7102 = vpack.c.b16 %v6998, %v6996
        %v7103 = vpack.c.b16 %v7001, %v6999
        %v7104 = vpack.c.b16 %v7002, %v7000
        %v7105 = vpack.c.b16 %v7005, %v7003
        %v7106 = vpack.c.b16 %v7006, %v7004
        %v7107 = vpack.c.b16 %v7009, %v7007
        %v7108 = vpack.c.b16 %v7010, %v7008
        %v7109 = vpack.c.b16 %v7013, %v7011
        %v7110 = vpack.c.b16 %v7014, %v7012
        %v7111 = vpack.c.b16 %v7017, %v7015
        %v7112 = vpack.c.b16 %v7018, %v7016
        %v7113 = vpack.c.b16 %v7021, %v7019
        %v7114 = vpack.c.b16 %v7022, %v7020
        %v7115 = vpack.c.b16 %v7025, %v7023
        %v7116 = vpack.c.b16 %v7026, %v7024
        %v7117 = vpack.c.b16 %v7029, %v7027
        %v7118 = vpack.c.b16 %v7030, %v7028
        %v7119 = vpack.c.b16 %v7033, %v7031
        %v7120 = vpack.c.b16 %v7034, %v7032
        %v7121 = vpack.c.b16 %v7037, %v7035
        %v7122 = vpack.c.b16 %v7038, %v7036
        %v7123 = vpack.c.b16 %v7041, %v7039
        %v7124 = vpack.c.b16 %v7042, %v7040
        %v7125 = vpack.c.b16 %v7045, %v7043
        %v7126 = vpack.c.b16 %v7046, %v7044
        %v7127 = vpack.c.b16 %v7049, %v7047
        %v7128 = vpack.c.b16 %v7050, %v7048
        %v7129 = vpack.c.b16 %v7053, %v7051
        %v7130 = vpack.c.b16 %v7054, %v7052
        %v7131 = vpack.c.b16 %v7057, %v7055
        %v7132 = vpack.c.b16 %v7058, %v7056
        %v7133 = vpack.c.b16 %v7061, %v7059
        %v7134 = vpack.c.b16 %v7062, %v7060
        %v7135 = vpack.c.b16 %v7065, %v7063
        %v7136 = vpack.c.b16 %v7066, %v7064
        %v7137 = vpack.c.b16 %v7069, %v7067
        %v7138 = vpack.c.b16 %v7070, %v7068
        %v7139 = vpack.c.b16 %v7073, %v7071
        %v7140 = vpack.c.b16 %v7074, %v7072
        %v7141 = vpack.c.b16 %v7077, %v7075
        %v7142 = vpack.c.b16 %v7078, %v7076
        %7207 = vmatprep.subr.bf16.mxu0 %v7094
        %7208 = vmatpush1.bf16.msra.mxu0 %v7093
        %7209 = vmatprep.subr.bf16.mxu0 %v7092
        %7210 = vmatpush1.bf16.msra.mxu0 %v7091
        %7211 = vmatprep.subr.bf16.mxu0 %v7090
        %7212 = vmatpush1.bf16.msra.mxu0 %v7089
        %7213 = vmatprep.subr.bf16.mxu0 %v7088
        %7214 = vmatpush1.bf16.msra.mxu0 %v7087
        %7215 = vmatprep.subr.bf16.mxu0 %v7086
        %7216 = vmatpush1.bf16.msra.mxu0 %v7085
        %7217 = vmatprep.subr.bf16.mxu0 %v7084
        %7218 = vmatpush1.bf16.msra.mxu0 %v7083
        %7219 = vmatprep.subr.bf16.mxu0 %v7082
        %7220 = vmatpush1.bf16.msra.mxu0 %v7081
        %7221 = vmatprep.subr.bf16.mxu0 %v7080
        %7222 = vmatpush1.bf16.msra.mxu0 %v7079
        %7223 = vmatprep.subr.bf16.mxu0 %v7110
        %7224 = vmatpush2.bf16.msra.mxu0 %v7109
        %7225 = vmatprep.subr.bf16.mxu0 %v7108
        %7226 = vmatpush2.bf16.msra.mxu0 %v7107
        %7227 = vmatprep.subr.bf16.mxu0 %v7106
        %7228 = vmatpush2.bf16.msra.mxu0 %v7105
        %7229 = vmatprep.subr.bf16.mxu0 %v7104
        %7230 = vmatpush2.bf16.msra.mxu0 %v7103
        %7231 = vmatprep.subr.bf16.mxu0 %v7102
        %7232 = vmatpush2.bf16.msra.mxu0 %v7101
        %7233 = vmatprep.subr.bf16.mxu0 %v7100
        %7234 = vmatpush2.bf16.msra.mxu0 %v7099
        %7235 = vmatprep.subr.bf16.mxu0 %v7098
        %7236 = vmatpush2.bf16.msra.mxu0 %v7097
        %7237 = vmatprep.subr.bf16.mxu0 %v7096
        %7238 = vmatpush2.bf16.msra.mxu0 %v7095
        %7239 = vmatprep.mubr.bf16.mxu0 %v6792
        %7240 = vmatmul.mubr.bf16.gmra.mxu0 %v6791
        %v7241 = vpop.f32.mrf.mxu0
        %v7242 = vadd.f32 0.0, %v7241
        %v7243 = vpop.f32.mrf.mxu0
        %v7244 = vadd.f32 0.0, %v7243
        %v7245 = vpop.f32.mrf.mxu0
        %v7246 = vadd.f32 0.0, %v7245
        %v7247 = vpop.f32.mrf.mxu0
        %v7248 = vadd.f32 0.0, %v7247
        %7249 = vmatprep.mubr.bf16.mxu0 %v6796
        %7250 = vmatmul.mubr.bf16.gmra.mxu0 %v6795
        %v7251 = vpop.f32.mrf.mxu0
        %v7252 = vadd.f32 0.0, %v7251
        %v7253 = vpop.f32.mrf.mxu0
        %v7254 = vadd.f32 0.0, %v7253
        %v7255 = vpop.f32.mrf.mxu0
        %v7256 = vadd.f32 0.0, %v7255
        %v7257 = vpop.f32.mrf.mxu0
        %v7258 = vadd.f32 0.0, %v7257
        %7259 = vmatprep.mubr.bf16.mxu0 %v6800
        %7260 = vmatmul.mubr.bf16.gmra.mxu0 %v6799
        %v7261 = vpop.f32.mrf.mxu0
        %v7262 = vadd.f32 0.0, %v7261
        %v7263 = vpop.f32.mrf.mxu0
        %v7264 = vadd.f32 0.0, %v7263
        %v7265 = vpop.f32.mrf.mxu0
        %v7266 = vadd.f32 0.0, %v7265
        %v7267 = vpop.f32.mrf.mxu0
        %v7268 = vadd.f32 0.0, %v7267
        %7269 = vmatprep.mubr.bf16.mxu0 %v6804
        %7270 = vmatmul.mubr.bf16.gmra.mxu0 %v6803
        %v7271 = vpop.f32.mrf.mxu0
        %v7272 = vadd.f32 0.0, %v7271
        %v7273 = vpop.f32.mrf.mxu0
        %v7274 = vadd.f32 0.0, %v7273
        %v7275 = vpop.f32.mrf.mxu0
        %v7276 = vadd.f32 0.0, %v7275
        %v7277 = vpop.f32.mrf.mxu0
        %v7278 = vadd.f32 0.0, %v7277
        %7279 = vmatprep.mubr.bf16.mxu0 %v6808
        %7280 = vmatmul.mubr.bf16.gmra.mxu0 %v6807
        %v7281 = vpop.f32.mrf.mxu0
        %v7282 = vadd.f32 0.0, %v7281
        %v7283 = vpop.f32.mrf.mxu0
        %v7284 = vadd.f32 0.0, %v7283
        %v7285 = vpop.f32.mrf.mxu0
        %v7286 = vadd.f32 0.0, %v7285
        %v7287 = vpop.f32.mrf.mxu0
        %v7288 = vadd.f32 0.0, %v7287
        %7289 = vmatprep.mubr.bf16.mxu0 %v6812
        %7290 = vmatmul.mubr.bf16.gmra.mxu0 %v6811
        %v7291 = vpop.f32.mrf.mxu0
        %v7292 = vadd.f32 0.0, %v7291
        %v7293 = vpop.f32.mrf.mxu0
        %v7294 = vadd.f32 0.0, %v7293
        %v7295 = vpop.f32.mrf.mxu0
        %v7296 = vadd.f32 0.0, %v7295
        %v7297 = vpop.f32.mrf.mxu0
        %v7298 = vadd.f32 0.0, %v7297
        %7299 = vmatprep.mubr.bf16.mxu0 %v6816
        %7300 = vmatmul.mubr.bf16.gmra.mxu0 %v6815
        %v7301 = vpop.f32.mrf.mxu0
        %v7302 = vadd.f32 0.0, %v7301
        %v7303 = vpop.f32.mrf.mxu0
        %v7304 = vadd.f32 0.0, %v7303
        %v7305 = vpop.f32.mrf.mxu0
        %v7306 = vadd.f32 0.0, %v7305
        %v7307 = vpop.f32.mrf.mxu0
        %v7308 = vadd.f32 0.0, %v7307
        %7309 = vmatprep.mubr.bf16.mxu0 %v6820
        %7310 = vmatmul.mubr.bf16.gmra.mxu0 %v6819
        %v7311 = vpop.f32.mrf.mxu0
        %v7312 = vadd.f32 0.0, %v7311
        %v7313 = vpop.f32.mrf.mxu0
        %v7314 = vadd.f32 0.0, %v7313
        %v7315 = vpop.f32.mrf.mxu0
        %v7316 = vadd.f32 0.0, %v7315
        %v7317 = vpop.f32.mrf.mxu0
        %v7318 = vadd.f32 0.0, %v7317
        %7319 = vdwg.mxu0
        %7320 = vmatprep.subr.bf16.mxu0 %v7126
        %7321 = vmatpush1.bf16.msra.mxu0 %v7125
        %7322 = vmatprep.subr.bf16.mxu0 %v7124
        %7323 = vmatpush1.bf16.msra.mxu0 %v7123
        %7324 = vmatprep.subr.bf16.mxu0 %v7122
        %7325 = vmatpush1.bf16.msra.mxu0 %v7121
        %7326 = vmatprep.subr.bf16.mxu0 %v7120
        %7327 = vmatpush1.bf16.msra.mxu0 %v7119
        %7328 = vmatprep.subr.bf16.mxu0 %v7118
        %7329 = vmatpush1.bf16.msra.mxu0 %v7117
        %7330 = vmatprep.subr.bf16.mxu0 %v7116
        %7331 = vmatpush1.bf16.msra.mxu0 %v7115
        %7332 = vmatprep.subr.bf16.mxu0 %v7114
        %7333 = vmatpush1.bf16.msra.mxu0 %v7113
        %7334 = vmatprep.subr.bf16.mxu0 %v7112
        %7335 = vmatpush1.bf16.msra.mxu0 %v7111
        %7336 = vmatprep.subr.bf16.mxu0 %v7142
        %7337 = vmatpush2.bf16.msra.mxu0 %v7141
        %7338 = vmatprep.subr.bf16.mxu0 %v7140
        %7339 = vmatpush2.bf16.msra.mxu0 %v7139
        %7340 = vmatprep.subr.bf16.mxu0 %v7138
        %7341 = vmatpush2.bf16.msra.mxu0 %v7137
        %7342 = vmatprep.subr.bf16.mxu0 %v7136
        %7343 = vmatpush2.bf16.msra.mxu0 %v7135
        %7344 = vmatprep.subr.bf16.mxu0 %v7134
        %7345 = vmatpush2.bf16.msra.mxu0 %v7133
        %7346 = vmatprep.subr.bf16.mxu0 %v7132
        %7347 = vmatpush2.bf16.msra.mxu0 %v7131
        %7348 = vmatprep.subr.bf16.mxu0 %v7130
        %7349 = vmatpush2.bf16.msra.mxu0 %v7129
        %7350 = vmatprep.subr.bf16.mxu0 %v7128
        %7351 = vmatpush2.bf16.msra.mxu0 %v7127
        %7352 = vmatprep.mubr.bf16.mxu0 %v6794
        %7353 = vmatmul.mubr.bf16.gmra.mxu0 %v6793
        %v7354 = vpop.f32.mrf.mxu0
        %v7355 = vadd.f32 %v7242, %v7354
        %v7356 = vpop.f32.mrf.mxu0
        %v7357 = vadd.f32 %v7244, %v7356
        %v7358 = vpop.f32.mrf.mxu0
        %v7359 = vadd.f32 %v7246, %v7358
        %v7360 = vpop.f32.mrf.mxu0
        %v7361 = vadd.f32 %v7248, %v7360
        %7362 = vmatprep.mubr.bf16.mxu0 %v6798
        %7363 = vmatmul.mubr.bf16.gmra.mxu0 %v6797
        %v7364 = vpop.f32.mrf.mxu0
        %v7365 = vadd.f32 %v7252, %v7364
        %v7366 = vpop.f32.mrf.mxu0
        %v7367 = vadd.f32 %v7254, %v7366
        %v7368 = vpop.f32.mrf.mxu0
        %v7369 = vadd.f32 %v7256, %v7368
        %v7370 = vpop.f32.mrf.mxu0
        %v7371 = vadd.f32 %v7258, %v7370
        %7372 = vmatprep.mubr.bf16.mxu0 %v6802
        %7373 = vmatmul.mubr.bf16.gmra.mxu0 %v6801
        %v7374 = vpop.f32.mrf.mxu0
        %v7375 = vadd.f32 %v7262, %v7374
        %v7376 = vpop.f32.mrf.mxu0
        %v7377 = vadd.f32 %v7264, %v7376
        %v7378 = vpop.f32.mrf.mxu0
        %v7379 = vadd.f32 %v7266, %v7378
        %v7380 = vpop.f32.mrf.mxu0
        %v7381 = vadd.f32 %v7268, %v7380
        %7382 = vmatprep.mubr.bf16.mxu0 %v6806
        %7383 = vmatmul.mubr.bf16.gmra.mxu0 %v6805
        %v7384 = vpop.f32.mrf.mxu0
        %v7385 = vadd.f32 %v7272, %v7384
        %v7386 = vpop.f32.mrf.mxu0
        %v7387 = vadd.f32 %v7274, %v7386
        %v7388 = vpop.f32.mrf.mxu0
        %v7389 = vadd.f32 %v7276, %v7388
        %v7390 = vpop.f32.mrf.mxu0
        %v7391 = vadd.f32 %v7278, %v7390
        %7392 = vmatprep.mubr.bf16.mxu0 %v6810
        %7393 = vmatmul.mubr.bf16.gmra.mxu0 %v6809
        %v7394 = vpop.f32.mrf.mxu0
        %v7395 = vadd.f32 %v7282, %v7394
        %v7396 = vpop.f32.mrf.mxu0
        %v7397 = vadd.f32 %v7284, %v7396
        %v7398 = vpop.f32.mrf.mxu0
        %v7399 = vadd.f32 %v7286, %v7398
        %v7400 = vpop.f32.mrf.mxu0
        %v7401 = vadd.f32 %v7288, %v7400
        %7402 = vmatprep.mubr.bf16.mxu0 %v6814
        %7403 = vmatmul.mubr.bf16.gmra.mxu0 %v6813
        %v7404 = vpop.f32.mrf.mxu0
        %v7405 = vadd.f32 %v7292, %v7404
        %v7406 = vpop.f32.mrf.mxu0
        %v7407 = vadd.f32 %v7294, %v7406
        %v7408 = vpop.f32.mrf.mxu0
        %v7409 = vadd.f32 %v7296, %v7408
        %v7410 = vpop.f32.mrf.mxu0
        %v7411 = vadd.f32 %v7298, %v7410
        %7412 = vmatprep.mubr.bf16.mxu0 %v6818
        %7413 = vmatmul.mubr.bf16.gmra.mxu0 %v6817
        %v7414 = vpop.f32.mrf.mxu0
        %v7415 = vadd.f32 %v7302, %v7414
        %v7416 = vpop.f32.mrf.mxu0
        %v7417 = vadd.f32 %v7304, %v7416
        %v7418 = vpop.f32.mrf.mxu0
        %v7419 = vadd.f32 %v7306, %v7418
        %v7420 = vpop.f32.mrf.mxu0
        %v7421 = vadd.f32 %v7308, %v7420
        %7422 = vmatprep.mubr.bf16.mxu0 %v6822
        %7423 = vmatmul.mubr.bf16.gmra.mxu0 %v6821
        %v7424 = vpop.f32.mrf.mxu0
        %v7425 = vadd.f32 %v7312, %v7424
        %v7426 = vpop.f32.mrf.mxu0
        %v7427 = vadd.f32 %v7314, %v7426
        %v7428 = vpop.f32.mrf.mxu0
        %v7429 = vadd.f32 %v7316, %v7428
        %v7430 = vpop.f32.mrf.mxu0
        %v7431 = vadd.f32 %v7318, %v7430
        %7432 = vdwg.mxu0
        %v7497 = vunpack.c.l.b16 %v5519
        %v7498 = vunpack.c.h.b16 %v5519
        %v7499 = vunpack.c.l.b16 %v5520
        %v7500 = vunpack.c.h.b16 %v5520
        %v7501 = vunpack.c.l.b16 %v5521
        %v7502 = vunpack.c.h.b16 %v5521
        %v7503 = vunpack.c.l.b16 %v5522
        %v7504 = vunpack.c.h.b16 %v5522
        %v7505 = vunpack.c.l.b16 %v5523
        %v7506 = vunpack.c.h.b16 %v5523
        %v7507 = vunpack.c.l.b16 %v5524
        %v7508 = vunpack.c.h.b16 %v5524
        %v7509 = vunpack.c.l.b16 %v5525
        %v7510 = vunpack.c.h.b16 %v5525
        %v7511 = vunpack.c.l.b16 %v5526
        %v7512 = vunpack.c.h.b16 %v5526
        %v7513 = vunpack.c.l.b16 %v5527
        %v7514 = vunpack.c.h.b16 %v5527
        %v7515 = vunpack.c.l.b16 %v5528
        %v7516 = vunpack.c.h.b16 %v5528
        %v7517 = vunpack.c.l.b16 %v5529
        %v7518 = vunpack.c.h.b16 %v5529
        %v7519 = vunpack.c.l.b16 %v5530
        %v7520 = vunpack.c.h.b16 %v5530
        %v7521 = vunpack.c.l.b16 %v5531
        %v7522 = vunpack.c.h.b16 %v5531
        %v7523 = vunpack.c.l.b16 %v5532
        %v7524 = vunpack.c.h.b16 %v5532
        %v7525 = vunpack.c.l.b16 %v5533
        %v7526 = vunpack.c.h.b16 %v5533
        %v7527 = vunpack.c.l.b16 %v5534
        %v7528 = vunpack.c.h.b16 %v5534
        %v7529 = vunpack.c.l.b16 %v5535
        %v7530 = vunpack.c.h.b16 %v5535
        %v7531 = vunpack.c.l.b16 %v5536
        %v7532 = vunpack.c.h.b16 %v5536
        %v7533 = vunpack.c.l.b16 %v5537
        %v7534 = vunpack.c.h.b16 %v5537
        %v7535 = vunpack.c.l.b16 %v5538
        %v7536 = vunpack.c.h.b16 %v5538
        %v7537 = vunpack.c.l.b16 %v5539
        %v7538 = vunpack.c.h.b16 %v5539
        %v7539 = vunpack.c.l.b16 %v5540
        %v7540 = vunpack.c.h.b16 %v5540
        %v7541 = vunpack.c.l.b16 %v5541
        %v7542 = vunpack.c.h.b16 %v5541
        %v7543 = vunpack.c.l.b16 %v5542
        %v7544 = vunpack.c.h.b16 %v5542
        %v7545 = vunpack.c.l.b16 %v5543
        %v7546 = vunpack.c.h.b16 %v5543
        %v7547 = vunpack.c.l.b16 %v5544
        %v7548 = vunpack.c.h.b16 %v5544
        %v7549 = vunpack.c.l.b16 %v5545
        %v7550 = vunpack.c.h.b16 %v5545
        %v7551 = vunpack.c.l.b16 %v5546
        %v7552 = vunpack.c.h.b16 %v5546
        %v7553 = vunpack.c.l.b16 %v5547
        %v7554 = vunpack.c.h.b16 %v5547
        %v7555 = vunpack.c.l.b16 %v5548
        %v7556 = vunpack.c.h.b16 %v5548
        %v7557 = vunpack.c.l.b16 %v5549
        %v7558 = vunpack.c.h.b16 %v5549
        %v7559 = vunpack.c.l.b16 %v5550
        %v7560 = vunpack.c.h.b16 %v5550
        %v7561 = vunpack.c.l.b16 %v5551
        %v7562 = vunpack.c.h.b16 %v5551
        %v7563 = vunpack.c.l.b16 %v5552
        %v7564 = vunpack.c.h.b16 %v5552
        %v7565 = vunpack.c.l.b16 %v5553
        %v7566 = vunpack.c.h.b16 %v5553
        %v7567 = vunpack.c.l.b16 %v5554
        %v7568 = vunpack.c.h.b16 %v5554
        %v7569 = vunpack.c.l.b16 %v5555
        %v7570 = vunpack.c.h.b16 %v5555
        %v7571 = vunpack.c.l.b16 %v5556
        %v7572 = vunpack.c.h.b16 %v5556
        %v7573 = vunpack.c.l.b16 %v5557
        %v7574 = vunpack.c.h.b16 %v5557
        %v7575 = vunpack.c.l.b16 %v5558
        %v7576 = vunpack.c.h.b16 %v5558
        %v7577 = vunpack.c.l.b16 %v5559
        %v7578 = vunpack.c.h.b16 %v5559
        %v7579 = vunpack.c.l.b16 %v5560
        %v7580 = vunpack.c.h.b16 %v5560
        %v7581 = vunpack.c.l.b16 %v5561
        %v7582 = vunpack.c.h.b16 %v5561
        %v7583 = vunpack.c.l.b16 %v5562
        %v7584 = vunpack.c.h.b16 %v5562
        %v7585 = vunpack.c.l.b16 %v5563
        %v7586 = vunpack.c.h.b16 %v5563
        %v7587 = vunpack.c.l.b16 %v5564
        %v7588 = vunpack.c.h.b16 %v5564
        %v7589 = vunpack.c.l.b16 %v5565
        %v7590 = vunpack.c.h.b16 %v5565
        %v7591 = vunpack.c.l.b16 %v5566
        %v7592 = vunpack.c.h.b16 %v5566
        %v7593 = vunpack.c.l.b16 %v5567
        %v7594 = vunpack.c.h.b16 %v5567
        %v7595 = vunpack.c.l.b16 %v5568
        %v7596 = vunpack.c.h.b16 %v5568
        %v7597 = vunpack.c.l.b16 %v5569
        %v7598 = vunpack.c.h.b16 %v5569
        %v7599 = vunpack.c.l.b16 %v5570
        %v7600 = vunpack.c.h.b16 %v5570
        %v7601 = vunpack.c.l.b16 %v5571
        %v7602 = vunpack.c.h.b16 %v5571
        %v7603 = vunpack.c.l.b16 %v5572
        %v7604 = vunpack.c.h.b16 %v5572
        %v7605 = vunpack.c.l.b16 %v5573
        %v7606 = vunpack.c.h.b16 %v5573
        %v7607 = vunpack.c.l.b16 %v5574
        %v7608 = vunpack.c.h.b16 %v5574
        %v7609 = vunpack.c.l.b16 %v5575
        %v7610 = vunpack.c.h.b16 %v5575
        %v7611 = vunpack.c.l.b16 %v5576
        %v7612 = vunpack.c.h.b16 %v5576
        %v7613 = vunpack.c.l.b16 %v5577
        %v7614 = vunpack.c.h.b16 %v5577
        %v7615 = vunpack.c.l.b16 %v5578
        %v7616 = vunpack.c.h.b16 %v5578
        %v7617 = vunpack.c.l.b16 %v5579
        %v7618 = vunpack.c.h.b16 %v5579
        %v7619 = vunpack.c.l.b16 %v5580
        %v7620 = vunpack.c.h.b16 %v5580
        %v7621 = vunpack.c.l.b16 %v5581
        %v7622 = vunpack.c.h.b16 %v5581
        %v7623 = vunpack.c.l.b16 %v5582
        %v7624 = vunpack.c.h.b16 %v5582
        %v7625 = vpack.c.b16 %v7499, %v7497
        %v7626 = vpack.c.b16 %v7500, %v7498
        %v7627 = vpack.c.b16 %v7503, %v7501
        %v7628 = vpack.c.b16 %v7504, %v7502
        %v7629 = vpack.c.b16 %v7507, %v7505
        %v7630 = vpack.c.b16 %v7508, %v7506
        %v7631 = vpack.c.b16 %v7511, %v7509
        %v7632 = vpack.c.b16 %v7512, %v7510
        %v7633 = vpack.c.b16 %v7515, %v7513
        %v7634 = vpack.c.b16 %v7516, %v7514
        %v7635 = vpack.c.b16 %v7519, %v7517
        %v7636 = vpack.c.b16 %v7520, %v7518
        %v7637 = vpack.c.b16 %v7523, %v7521
        %v7638 = vpack.c.b16 %v7524, %v7522
        %v7639 = vpack.c.b16 %v7527, %v7525
        %v7640 = vpack.c.b16 %v7528, %v7526
        %v7641 = vpack.c.b16 %v7531, %v7529
        %v7642 = vpack.c.b16 %v7532, %v7530
        %v7643 = vpack.c.b16 %v7535, %v7533
        %v7644 = vpack.c.b16 %v7536, %v7534
        %v7645 = vpack.c.b16 %v7539, %v7537
        %v7646 = vpack.c.b16 %v7540, %v7538
        %v7647 = vpack.c.b16 %v7543, %v7541
        %v7648 = vpack.c.b16 %v7544, %v7542
        %v7649 = vpack.c.b16 %v7547, %v7545
        %v7650 = vpack.c.b16 %v7548, %v7546
        %v7651 = vpack.c.b16 %v7551, %v7549
        %v7652 = vpack.c.b16 %v7552, %v7550
        %v7653 = vpack.c.b16 %v7555, %v7553
        %v7654 = vpack.c.b16 %v7556, %v7554
        %v7655 = vpack.c.b16 %v7559, %v7557
        %v7656 = vpack.c.b16 %v7560, %v7558
        %v7657 = vpack.c.b16 %v7563, %v7561
        %v7658 = vpack.c.b16 %v7564, %v7562
        %v7659 = vpack.c.b16 %v7567, %v7565
        %v7660 = vpack.c.b16 %v7568, %v7566
        %v7661 = vpack.c.b16 %v7571, %v7569
        %v7662 = vpack.c.b16 %v7572, %v7570
        %v7663 = vpack.c.b16 %v7575, %v7573
        %v7664 = vpack.c.b16 %v7576, %v7574
        %v7665 = vpack.c.b16 %v7579, %v7577
        %v7666 = vpack.c.b16 %v7580, %v7578
        %v7667 = vpack.c.b16 %v7583, %v7581
        %v7668 = vpack.c.b16 %v7584, %v7582
        %v7669 = vpack.c.b16 %v7587, %v7585
        %v7670 = vpack.c.b16 %v7588, %v7586
        %v7671 = vpack.c.b16 %v7591, %v7589
        %v7672 = vpack.c.b16 %v7592, %v7590
        %v7673 = vpack.c.b16 %v7595, %v7593
        %v7674 = vpack.c.b16 %v7596, %v7594
        %v7675 = vpack.c.b16 %v7599, %v7597
        %v7676 = vpack.c.b16 %v7600, %v7598
        %v7677 = vpack.c.b16 %v7603, %v7601
        %v7678 = vpack.c.b16 %v7604, %v7602
        %v7679 = vpack.c.b16 %v7607, %v7605
        %v7680 = vpack.c.b16 %v7608, %v7606
        %v7681 = vpack.c.b16 %v7611, %v7609
        %v7682 = vpack.c.b16 %v7612, %v7610
        %v7683 = vpack.c.b16 %v7615, %v7613
        %v7684 = vpack.c.b16 %v7616, %v7614
        %v7685 = vpack.c.b16 %v7619, %v7617
        %v7686 = vpack.c.b16 %v7620, %v7618
        %v7687 = vpack.c.b16 %v7623, %v7621
        %v7688 = vpack.c.b16 %v7624, %v7622
        %7753 = vmatprep.subr.bf16.mxu0 %v7640
        %7754 = vmatpush1.bf16.msra.mxu0 %v7639
        %7755 = vmatprep.subr.bf16.mxu0 %v7638
        %7756 = vmatpush1.bf16.msra.mxu0 %v7637
        %7757 = vmatprep.subr.bf16.mxu0 %v7636
        %7758 = vmatpush1.bf16.msra.mxu0 %v7635
        %7759 = vmatprep.subr.bf16.mxu0 %v7634
        %7760 = vmatpush1.bf16.msra.mxu0 %v7633
        %7761 = vmatprep.subr.bf16.mxu0 %v7632
        %7762 = vmatpush1.bf16.msra.mxu0 %v7631
        %7763 = vmatprep.subr.bf16.mxu0 %v7630
        %7764 = vmatpush1.bf16.msra.mxu0 %v7629
        %7765 = vmatprep.subr.bf16.mxu0 %v7628
        %7766 = vmatpush1.bf16.msra.mxu0 %v7627
        %7767 = vmatprep.subr.bf16.mxu0 %v7626
        %7768 = vmatpush1.bf16.msra.mxu0 %v7625
        %7769 = vmatprep.subr.bf16.mxu0 %v7656
        %7770 = vmatpush2.bf16.msra.mxu0 %v7655
        %7771 = vmatprep.subr.bf16.mxu0 %v7654
        %7772 = vmatpush2.bf16.msra.mxu0 %v7653
        %7773 = vmatprep.subr.bf16.mxu0 %v7652
        %7774 = vmatpush2.bf16.msra.mxu0 %v7651
        %7775 = vmatprep.subr.bf16.mxu0 %v7650
        %7776 = vmatpush2.bf16.msra.mxu0 %v7649
        %7777 = vmatprep.subr.bf16.mxu0 %v7648
        %7778 = vmatpush2.bf16.msra.mxu0 %v7647
        %7779 = vmatprep.subr.bf16.mxu0 %v7646
        %7780 = vmatpush2.bf16.msra.mxu0 %v7645
        %7781 = vmatprep.subr.bf16.mxu0 %v7644
        %7782 = vmatpush2.bf16.msra.mxu0 %v7643
        %7783 = vmatprep.subr.bf16.mxu0 %v7642
        %7784 = vmatpush2.bf16.msra.mxu0 %v7641
        %7785 = vmatprep.mubr.bf16.mxu0 %v5488
        %7786 = vmatmul.mubr.bf16.gmra.mxu0 %v5487
        %v7787 = vpop.f32.mrf.mxu0
        %v7788 = vadd.f32 %v7355, %v7787
        %v7789 = vpop.f32.mrf.mxu0
        %v7790 = vadd.f32 %v7357, %v7789
        %v7791 = vpop.f32.mrf.mxu0
        %v7792 = vadd.f32 %v7359, %v7791
        %v7793 = vpop.f32.mrf.mxu0
        %v7794 = vadd.f32 %v7361, %v7793
        %7795 = vmatprep.mubr.bf16.mxu0 %v5492
        %7796 = vmatmul.mubr.bf16.gmra.mxu0 %v5491
        %v7797 = vpop.f32.mrf.mxu0
        %v7798 = vadd.f32 %v7365, %v7797
        %v7799 = vpop.f32.mrf.mxu0
        %v7800 = vadd.f32 %v7367, %v7799
        %v7801 = vpop.f32.mrf.mxu0
        %v7802 = vadd.f32 %v7369, %v7801
        %v7803 = vpop.f32.mrf.mxu0
        %v7804 = vadd.f32 %v7371, %v7803
        %7805 = vmatprep.mubr.bf16.mxu0 %v5496
        %7806 = vmatmul.mubr.bf16.gmra.mxu0 %v5495
        %v7807 = vpop.f32.mrf.mxu0
        %v7808 = vadd.f32 %v7375, %v7807
        %v7809 = vpop.f32.mrf.mxu0
        %v7810 = vadd.f32 %v7377, %v7809
        %v7811 = vpop.f32.mrf.mxu0
        %v7812 = vadd.f32 %v7379, %v7811
        %v7813 = vpop.f32.mrf.mxu0
        %v7814 = vadd.f32 %v7381, %v7813
        %7815 = vmatprep.mubr.bf16.mxu0 %v5500
        %7816 = vmatmul.mubr.bf16.gmra.mxu0 %v5499
        %v7817 = vpop.f32.mrf.mxu0
        %v7818 = vadd.f32 %v7385, %v7817
        %v7819 = vpop.f32.mrf.mxu0
        %v7820 = vadd.f32 %v7387, %v7819
        %v7821 = vpop.f32.mrf.mxu0
        %v7822 = vadd.f32 %v7389, %v7821
        %v7823 = vpop.f32.mrf.mxu0
        %v7824 = vadd.f32 %v7391, %v7823
        %7825 = vmatprep.mubr.bf16.mxu0 %v5504
        %7826 = vmatmul.mubr.bf16.gmra.mxu0 %v5503
        %v7827 = vpop.f32.mrf.mxu0
        %v7828 = vadd.f32 %v7395, %v7827
        %v7829 = vpop.f32.mrf.mxu0
        %v7830 = vadd.f32 %v7397, %v7829
        %v7831 = vpop.f32.mrf.mxu0
        %v7832 = vadd.f32 %v7399, %v7831
        %v7833 = vpop.f32.mrf.mxu0
        %v7834 = vadd.f32 %v7401, %v7833
        %7835 = vmatprep.mubr.bf16.mxu0 %v5508
        %7836 = vmatmul.mubr.bf16.gmra.mxu0 %v5507
        %v7837 = vpop.f32.mrf.mxu0
        %v7838 = vadd.f32 %v7405, %v7837
        %v7839 = vpop.f32.mrf.mxu0
        %v7840 = vadd.f32 %v7407, %v7839
        %v7841 = vpop.f32.mrf.mxu0
        %v7842 = vadd.f32 %v7409, %v7841
        %v7843 = vpop.f32.mrf.mxu0
        %v7844 = vadd.f32 %v7411, %v7843
        %7845 = vmatprep.mubr.bf16.mxu0 %v5512
        %7846 = vmatmul.mubr.bf16.gmra.mxu0 %v5511
        %v7847 = vpop.f32.mrf.mxu0
        %v7848 = vadd.f32 %v7415, %v7847
        %v7849 = vpop.f32.mrf.mxu0
        %v7850 = vadd.f32 %v7417, %v7849
        %v7851 = vpop.f32.mrf.mxu0
        %v7852 = vadd.f32 %v7419, %v7851
        %v7853 = vpop.f32.mrf.mxu0
        %v7854 = vadd.f32 %v7421, %v7853
        %7855 = vmatprep.mubr.bf16.mxu0 %v5516
        %7856 = vmatmul.mubr.bf16.gmra.mxu0 %v5515
        %v7857 = vpop.f32.mrf.mxu0
        %v7858 = vadd.f32 %v7425, %v7857
        %v7859 = vpop.f32.mrf.mxu0
        %v7860 = vadd.f32 %v7427, %v7859
        %v7861 = vpop.f32.mrf.mxu0
        %v7862 = vadd.f32 %v7429, %v7861
        %v7863 = vpop.f32.mrf.mxu0
        %v7864 = vadd.f32 %v7431, %v7863
        %7865 = vdwg.mxu0
        %7866 = vmatprep.subr.bf16.mxu0 %v7672
        %7867 = vmatpush1.bf16.msra.mxu0 %v7671
        %7868 = vmatprep.subr.bf16.mxu0 %v7670
        %7869 = vmatpush1.bf16.msra.mxu0 %v7669
        %7870 = vmatprep.subr.bf16.mxu0 %v7668
        %7871 = vmatpush1.bf16.msra.mxu0 %v7667
        %7872 = vmatprep.subr.bf16.mxu0 %v7666
        %7873 = vmatpush1.bf16.msra.mxu0 %v7665
        %7874 = vmatprep.subr.bf16.mxu0 %v7664
        %7875 = vmatpush1.bf16.msra.mxu0 %v7663
        %7876 = vmatprep.subr.bf16.mxu0 %v7662
        %7877 = vmatpush1.bf16.msra.mxu0 %v7661
        %7878 = vmatprep.subr.bf16.mxu0 %v7660
        %7879 = vmatpush1.bf16.msra.mxu0 %v7659
        %7880 = vmatprep.subr.bf16.mxu0 %v7658
        %7881 = vmatpush1.bf16.msra.mxu0 %v7657
        %7882 = vmatprep.subr.bf16.mxu0 %v7688
        %7883 = vmatpush2.bf16.msra.mxu0 %v7687
        %7884 = vmatprep.subr.bf16.mxu0 %v7686
        %7885 = vmatpush2.bf16.msra.mxu0 %v7685
        %7886 = vmatprep.subr.bf16.mxu0 %v7684
        %7887 = vmatpush2.bf16.msra.mxu0 %v7683
        %7888 = vmatprep.subr.bf16.mxu0 %v7682
        %7889 = vmatpush2.bf16.msra.mxu0 %v7681
        %7890 = vmatprep.subr.bf16.mxu0 %v7680
        %7891 = vmatpush2.bf16.msra.mxu0 %v7679
        %7892 = vmatprep.subr.bf16.mxu0 %v7678
        %7893 = vmatpush2.bf16.msra.mxu0 %v7677
        %7894 = vmatprep.subr.bf16.mxu0 %v7676
        %7895 = vmatpush2.bf16.msra.mxu0 %v7675
        %7896 = vmatprep.subr.bf16.mxu0 %v7674
        %7897 = vmatpush2.bf16.msra.mxu0 %v7673
        %7898 = vmatprep.mubr.bf16.mxu0 %v5490
        %7899 = vmatmul.mubr.bf16.gmra.mxu0 %v5489
        %v7900 = vpop.f32.mrf.mxu0
        %v7901 = vadd.f32 %v7788, %v7900
        %v7902 = vpop.f32.mrf.mxu0
        %v7903 = vadd.f32 %v7790, %v7902
        %v7904 = vpop.f32.mrf.mxu0
        %v7905 = vadd.f32 %v7792, %v7904
        %v7906 = vpop.f32.mrf.mxu0
        %v7907 = vadd.f32 %v7794, %v7906
        %7908 = vmatprep.mubr.bf16.mxu0 %v5494
        %7909 = vmatmul.mubr.bf16.gmra.mxu0 %v5493
        %v7910 = vpop.f32.mrf.mxu0
        %v7911 = vadd.f32 %v7798, %v7910
        %v7912 = vpop.f32.mrf.mxu0
        %v7913 = vadd.f32 %v7800, %v7912
        %v7914 = vpop.f32.mrf.mxu0
        %v7915 = vadd.f32 %v7802, %v7914
        %v7916 = vpop.f32.mrf.mxu0
        %v7917 = vadd.f32 %v7804, %v7916
        %7918 = vmatprep.mubr.bf16.mxu0 %v5498
        %7919 = vmatmul.mubr.bf16.gmra.mxu0 %v5497
        %v7920 = vpop.f32.mrf.mxu0
        %v7921 = vadd.f32 %v7808, %v7920
        %v7922 = vpop.f32.mrf.mxu0
        %v7923 = vadd.f32 %v7810, %v7922
        %v7924 = vpop.f32.mrf.mxu0
        %v7925 = vadd.f32 %v7812, %v7924
        %v7926 = vpop.f32.mrf.mxu0
        %v7927 = vadd.f32 %v7814, %v7926
        %7928 = vmatprep.mubr.bf16.mxu0 %v5502
        %7929 = vmatmul.mubr.bf16.gmra.mxu0 %v5501
        %v7930 = vpop.f32.mrf.mxu0
        %v7931 = vadd.f32 %v7818, %v7930
        %v7932 = vpop.f32.mrf.mxu0
        %v7933 = vadd.f32 %v7820, %v7932
        %v7934 = vpop.f32.mrf.mxu0
        %v7935 = vadd.f32 %v7822, %v7934
        %v7936 = vpop.f32.mrf.mxu0
        %v7937 = vadd.f32 %v7824, %v7936
        %7938 = vmatprep.mubr.bf16.mxu0 %v5506
        %7939 = vmatmul.mubr.bf16.gmra.mxu0 %v5505
        %v7940 = vpop.f32.mrf.mxu0
        %v7941 = vadd.f32 %v7828, %v7940
        %v7942 = vpop.f32.mrf.mxu0
        %v7943 = vadd.f32 %v7830, %v7942
        %v7944 = vpop.f32.mrf.mxu0
        %v7945 = vadd.f32 %v7832, %v7944
        %v7946 = vpop.f32.mrf.mxu0
        %v7947 = vadd.f32 %v7834, %v7946
        %7948 = vmatprep.mubr.bf16.mxu0 %v5510
        %7949 = vmatmul.mubr.bf16.gmra.mxu0 %v5509
        %v7950 = vpop.f32.mrf.mxu0
        %v7951 = vadd.f32 %v7838, %v7950
        %v7952 = vpop.f32.mrf.mxu0
        %v7953 = vadd.f32 %v7840, %v7952
        %v7954 = vpop.f32.mrf.mxu0
        %v7955 = vadd.f32 %v7842, %v7954
        %v7956 = vpop.f32.mrf.mxu0
        %v7957 = vadd.f32 %v7844, %v7956
        %7958 = vmatprep.mubr.bf16.mxu0 %v5514
        %7959 = vmatmul.mubr.bf16.gmra.mxu0 %v5513
        %v7960 = vpop.f32.mrf.mxu0
        %v7961 = vadd.f32 %v7848, %v7960
        %v7962 = vpop.f32.mrf.mxu0
        %v7963 = vadd.f32 %v7850, %v7962
        %v7964 = vpop.f32.mrf.mxu0
        %v7965 = vadd.f32 %v7852, %v7964
        %v7966 = vpop.f32.mrf.mxu0
        %v7967 = vadd.f32 %v7854, %v7966
        %7968 = vmatprep.mubr.bf16.mxu0 %v5518
        %7969 = vmatmul.mubr.bf16.gmra.mxu0 %v5517
        %v7970 = vpop.f32.mrf.mxu0
        %v7971 = vadd.f32 %v7858, %v7970
        %v7972 = vpop.f32.mrf.mxu0
        %v7973 = vadd.f32 %v7860, %v7972
        %v7974 = vpop.f32.mrf.mxu0
        %v7975 = vadd.f32 %v7862, %v7974
        %v7976 = vpop.f32.mrf.mxu0
        %v7977 = vadd.f32 %v7864, %v7976
        %7978 = vdwg.mxu0
        %v7979 = vld [vmem:[%s11] sm:$0x3]
        %v7981 = vlaneseq
        %v7982 = vshrl.u32 %v7981, 7
        %v7983 = vsub.s32 0, %v7982
        %v7984 = vrot.slane %v7979, %v7983
        %v7985 = vlaneseq
        %v7986 = vshrl.u32 %v7985, 7
        %v7987 = vsub.s32 1, %v7986
        %v7988 = vrot.slane %v7979, %v7987
        %v7991 = vadd.f32 %v7901, %v7984
        %v7992 = vadd.f32 %v7903, %v7988
        %v7993 = vadd.f32 %v7905, %v7984
        %v7994 = vadd.f32 %v7907, %v7988
        %v7995 = vadd.f32 %v7911, %v7984
        %v7996 = vadd.f32 %v7913, %v7988
        %v7997 = vadd.f32 %v7915, %v7984
        %v7998 = vadd.f32 %v7917, %v7988
        %v7999 = vadd.f32 %v7921, %v7984
        %v8000 = vadd.f32 %v7923, %v7988
        %v8001 = vadd.f32 %v7925, %v7984
        %v8002 = vadd.f32 %v7927, %v7988
        %v8003 = vadd.f32 %v7931, %v7984
        %v8004 = vadd.f32 %v7933, %v7988
        %v8005 = vadd.f32 %v7935, %v7984
        %v8006 = vadd.f32 %v7937, %v7988
        %v8007 = vadd.f32 %v7941, %v7984
        %v8008 = vadd.f32 %v7943, %v7988
        %v8009 = vadd.f32 %v7945, %v7984
        %v8010 = vadd.f32 %v7947, %v7988
        %v8011 = vadd.f32 %v7951, %v7984
        %v8012 = vadd.f32 %v7953, %v7988
        %v8013 = vadd.f32 %v7955, %v7984
        %v8014 = vadd.f32 %v7957, %v7988
        %v8015 = vadd.f32 %v7961, %v7984
        %v8016 = vadd.f32 %v7963, %v7988
        %v8017 = vadd.f32 %v7965, %v7984
        %v8018 = vadd.f32 %v7967, %v7988
        %v8019 = vadd.f32 %v7971, %v7984
        %v8020 = vadd.f32 %v7973, %v7988
        %v8021 = vadd.f32 %v7975, %v7984
        %v8022 = vadd.f32 %v7977, %v7988
        %v8023 = vlaneseq
        %v8024 = vshrl.u32 %v8023, 7
        %v8025 = vsub.s32 5, %v8024
        %v8026 = vrot.slane %v582, %v8025
        %v8027 = vlaneseq
        %v8028 = vshrl.u32 %v8027, 7
        %v8029 = vsub.s32 5, %v8028
        %v8030 = vrot.slane %v583, %v8029
        %v8031 = vmul.f32 %v8026, %v7991
        %v8032 = vmul.f32 %v8030, %v7992
        %v8033 = vmul.f32 %v8026, %v7993
        %v8034 = vmul.f32 %v8030, %v7994
        %v8035 = vmul.f32 %v8026, %v7995
        %v8036 = vmul.f32 %v8030, %v7996
        %v8037 = vmul.f32 %v8026, %v7997
        %v8038 = vmul.f32 %v8030, %v7998
        %v8039 = vmul.f32 %v8026, %v7999
        %v8040 = vmul.f32 %v8030, %v8000
        %v8041 = vmul.f32 %v8026, %v8001
        %v8042 = vmul.f32 %v8030, %v8002
        %v8043 = vmul.f32 %v8026, %v8003
        %v8044 = vmul.f32 %v8030, %v8004
        %v8045 = vmul.f32 %v8026, %v8005
        %v8046 = vmul.f32 %v8030, %v8006
        %v8047 = vadd.f32 %v3174, %v8031
        %v8048 = vadd.f32 %v3175, %v8032
        %v8049 = vadd.f32 %v3176, %v8033
        %v8050 = vadd.f32 %v3177, %v8034
        %v8051 = vadd.f32 %v3178, %v8035
        %v8052 = vadd.f32 %v3179, %v8036
        %v8053 = vadd.f32 %v3180, %v8037
        %v8054 = vadd.f32 %v3181, %v8038
        %v8055 = vadd.f32 %v3182, %v8039
        %v8056 = vadd.f32 %v3183, %v8040
        %v8057 = vadd.f32 %v3184, %v8041
        %v8058 = vadd.f32 %v3185, %v8042
        %v8059 = vadd.f32 %v3186, %v8043
        %v8060 = vadd.f32 %v3187, %v8044
        %v8061 = vadd.f32 %v3188, %v8045
        %v8062 = vadd.f32 %v3189, %v8046
        %8063 = vst [vmem:[%s537] sm:$0xff] %v8047
        %8064 = vst [vmem:[%s537 + $0x8] sm:$0xff] %v8048
        %8065 = vst [vmem:[%s537 + $0x10] sm:$0xff] %v8049
        %8066 = vst [vmem:[%s537 + $0x18] sm:$0xff] %v8050
        %8067 = vst [vmem:[%s537 + $0x20] sm:$0xff] %v8051
        %8068 = vst [vmem:[%s537 + $0x28] sm:$0xff] %v8052
        %8069 = vst [vmem:[%s537 + $0x30] sm:$0xff] %v8053
        %8070 = vst [vmem:[%s537 + $0x38] sm:$0xff] %v8054
        %8071 = vst [vmem:[%s537 + $0x40] sm:$0xff] %v8055
        %8072 = vst [vmem:[%s537 + $0x48] sm:$0xff] %v8056
        %8073 = vst [vmem:[%s537 + $0x50] sm:$0xff] %v8057
        %8074 = vst [vmem:[%s537 + $0x58] sm:$0xff] %v8058
        %8075 = vst [vmem:[%s537 + $0x60] sm:$0xff] %v8059
        %8076 = vst [vmem:[%s537 + $0x68] sm:$0xff] %v8060
        %8077 = vst [vmem:[%s537 + $0x70] sm:$0xff] %v8061
        %8078 = vst [vmem:[%s537 + $0x78] sm:$0xff] %v8062
        %v8079 = vld [vmem:[%s806] sm:$0x3f]
        %v8080 = vld [vmem:[%s806 + $0x8] sm:$0x3f]
        %v8081 = vlaneseq
        %v8082 = vshrl.u32 %v8081, 7
        %v8083 = vsub.s32 5, %v8082
        %v8084 = vrot.slane %v8079, %v8083
        %v8085 = vlaneseq
        %v8086 = vshrl.u32 %v8085, 7
        %v8087 = vsub.s32 5, %v8086
        %v8088 = vrot.slane %v8080, %v8087
        %v8089 = vmul.f32 %v8084, %v8007
        %v8090 = vmul.f32 %v8088, %v8008
        %v8091 = vmul.f32 %v8084, %v8009
        %v8092 = vmul.f32 %v8088, %v8010
        %v8093 = vmul.f32 %v8084, %v8011
        %v8094 = vmul.f32 %v8088, %v8012
        %v8095 = vmul.f32 %v8084, %v8013
        %v8096 = vmul.f32 %v8088, %v8014
        %v8097 = vmul.f32 %v8084, %v8015
        %v8098 = vmul.f32 %v8088, %v8016
        %v8099 = vmul.f32 %v8084, %v8017
        %v8100 = vmul.f32 %v8088, %v8018
        %v8101 = vmul.f32 %v8084, %v8019
        %v8102 = vmul.f32 %v8088, %v8020
        %v8103 = vmul.f32 %v8084, %v8021
        %v8104 = vmul.f32 %v8088, %v8022
        %v8105 = vadd.f32 %v3852, %v8089
        %v8106 = vadd.f32 %v3853, %v8090
        %v8107 = vadd.f32 %v3854, %v8091
        %v8108 = vadd.f32 %v3855, %v8092
        %v8109 = vadd.f32 %v3856, %v8093
        %v8110 = vadd.f32 %v3857, %v8094
        %v8111 = vadd.f32 %v3858, %v8095
        %v8112 = vadd.f32 %v3859, %v8096
        %v8113 = vadd.f32 %v3860, %v8097
        %v8114 = vadd.f32 %v3861, %v8098
        %v8115 = vadd.f32 %v3862, %v8099
        %v8116 = vadd.f32 %v3863, %v8100
        %v8117 = vadd.f32 %v3864, %v8101
        %v8118 = vadd.f32 %v3865, %v8102
        %v8119 = vadd.f32 %v3866, %v8103
        %v8120 = vadd.f32 %v3867, %v8104
        %s8121 = scalar_lea.vmem %s537, 128 [#allocation14]
        %8122 = vst [vmem:[%s8121] sm:$0xff] %v8105
        %8123 = vst [vmem:[%s8121 + $0x8] sm:$0xff] %v8106
        %8124 = vst [vmem:[%s8121 + $0x10] sm:$0xff] %v8107
        %8125 = vst [vmem:[%s8121 + $0x18] sm:$0xff] %v8108
        %8126 = vst [vmem:[%s8121 + $0x20] sm:$0xff] %v8109
        %8127 = vst [vmem:[%s8121 + $0x28] sm:$0xff] %v8110
        %8128 = vst [vmem:[%s8121 + $0x30] sm:$0xff] %v8111
        %8129 = vst [vmem:[%s8121 + $0x38] sm:$0xff] %v8112
        %8130 = vst [vmem:[%s8121 + $0x40] sm:$0xff] %v8113
        %8131 = vst [vmem:[%s8121 + $0x48] sm:$0xff] %v8114
        %8132 = vst [vmem:[%s8121 + $0x50] sm:$0xff] %v8115
        %8133 = vst [vmem:[%s8121 + $0x58] sm:$0xff] %v8116
        %8134 = vst [vmem:[%s8121 + $0x60] sm:$0xff] %v8117
        %8135 = vst [vmem:[%s8121 + $0x68] sm:$0xff] %v8118
        %8136 = vst [vmem:[%s8121 + $0x70] sm:$0xff] %v8119
        %8137 = vst [vmem:[%s8121 + $0x78] sm:$0xff] %v8120
        %s8138 = sand.u32 %s302, 1
        %s8139 = scalar_lea.sflag [#allocation4], %s8138
        %s8140 = sand.u32 %s302, 1
        %s8141 = smul.addr %s8140, 256
        %s8142 = scalar_lea.vmem [#allocation14], %s8141
        // Predicated region
        $region97: #{tpu_custom_call.1} parent=67 // pred_check
          %p8143 = pneg %p312
        $region98: #{tpu_custom_call.1} parent=67 // pred_check_branch
          %8145 = sbr.rel (%p8143) target = $region100
        $region99: #{tpu_custom_call.1} parent=67 // pred_region
          %s8146 = smul.u32 2, %s32
          %s8148 = ssub.s32 4096, 4096
          %8149 = vsyncadd %s8139, %s8148
          %s8150 = smul.addr %s8146, 16
          %s8151 = smul.addr %s8150, 128
          %s8152 = scalar_lea.hbm %s12, %s8151
          %s8153 = sshll.u32 %s8142, 4
          %s8154 = int_to_ptr.vmem [resolvable:$true] %s8153
          %8159 = dma.vmem_to_hbm [thread:$0]  %s8154, 4096, %s8152, %s8139, 256, 256, 16
        $region100: #{tpu_custom_call.1} parent=67 // pred_fallthru
          _
      $region68: #{tpu_custom_call.1} parent=5 // pred_fallthru
        _
      %p8160 = scmp.le.s32.totalorder 2, %s27
      // Predicated region
      $region101: #{tpu_custom_call.1} parent=5 // pred_check
        %p8161 = pneg %p8160
      $region102: #{tpu_custom_call.1} parent=5 // pred_check_branch
        %8163 = sbr.rel (%p8161) target = $region104
      $region103: #{tpu_custom_call.1} parent=5 // pred_region
        %s8164 = ssub.s32 %s27, 2
        // Predicated region
        $region105: #{tpu_custom_call.1} parent=103 // pred_check
          %p8165 = pneg %p318
        $region106: #{tpu_custom_call.1} parent=103 // pred_check_branch
          %8167 = sbr.rel (%p8165) target = $region108
        $region107: #{tpu_custom_call.1} parent=103 // pred_region
          %s8168 = sand.u32 %s303, 1
          %s8169 = scalar_lea.sflag [#allocation4], %s8168
          %s8170 = sand.u32 %s303, 1
          %s8171 = smul.addr %s8170, 256
          %s8172 = scalar_lea.vmem [#allocation14], %s8171
          %8173 = dma.done %s8169, 4096
        $region108: #{tpu_custom_call.1} parent=103 // pred_fallthru
          _
      $region104: #{tpu_custom_call.1} parent=5 // pred_fallthru
        _
    $region6: #{tpu_custom_call.1} parent=1 // loop_footer
      %s31 = sadd.s32 1, %s27
    $region7: #{tpu_custom_call.1} parent=1 // loop_footer_branch
      %26 = sbr.rel target = $region3
    $region8: #{tpu_custom_call.1} parent=1 // loop_exit
      _
    %8174 = vsyncpa [#allocation3], 1
    %s8175 = scalar_lea.sflag [#allocation3], 1
    %8176 = vsyncpa %s8175, 1
    %8177 = vsyncpa [#allocation6], 1
    %8178 = vsyncpa [#allocation9], 1
    %8179 = vsyncpa [#allocation12], 1
    %8180 = vsyncpa [#allocation4], 1
    %s8181 = scalar_lea.sflag [#allocation4], 1
    %8182 = vsyncpa %s8181, 1

</llo_original>
